<compile_context>
chip_gen: v6e
topology: v6e:2x2x1
jax: 0.10.0
libtpu: 0.0.40
codegen_flags: <defaults>
</compile_context>

<pallas_src>
from functools import partial

import jax
import jax.numpy as jnp
from jax.experimental import pallas as pl
from jax.experimental.pallas import tpu as pltpu


# ----------------------------------------------------------------------------
# Fused kernel: VAE encode + 2-layer bidirectional LSTM + fc -> relu -> fc_out
# ----------------------------------------------------------------------------
def _vae_bilstm_fused_kernel(
    x_ref,                                  # [T*B, IMG] bf16 (time-major frames)
    enc_w_ref, enc_b_ref,                   # [IMG, D] bf16, [1, D] f32
    wih0_ref, b0_ref,                       # [D, 8H] bf16 (fwd|bwd), [1, 8H] f32
    whh_f0_ref, whh_b0_ref,                 # [H, 4H] bf16 each
    wih_f1_ref, whh_f1_ref, b_f1_ref,       # [2H, 4H] bf16, [H, 4H] bf16, [1, 4H] f32
    wih_b1_ref, b_b1_ref,                   # [2H, 4H] bf16, [1, 4H] f32
    w_fc_ref, b_fc_ref,                     # [2H, H] bf16, [1, H] f32
    w_out_ref, b_out_ref,                   # [H, OUT] f32, [1, OUT] f32
    out_ref,                                # [B, OUT] f32
    gx0_ref, y0_ref, gx1_ref,               # VMEM scratch
    *, batch, seq_len, hidden_dim,
):
    B, T, H = batch, seq_len, hidden_dim

    def bdot(a, w):
        # bf16 MXU matmul with f32 accumulation (weights are already bf16).
        return jnp.dot(a.astype(jnp.bfloat16), w,
                       preferred_element_type=jnp.float32)

    def sigmoid(v):
        # Numerically-stable sigmoid: (1 + tanh(v/2)) / 2; tanh runs on the EUP slot.
        return 0.5 * jnp.tanh(0.5 * v) + 0.5

    def lstm_cell(gates, c):
        # PyTorch LSTM gate order: i, f, g, o
        i = sigmoid(gates[:, 0 * H:1 * H])
        f = sigmoid(gates[:, 1 * H:2 * H])
        g = jnp.tanh(gates[:, 2 * H:3 * H])
        o = sigmoid(gates[:, 3 * H:4 * H])
        c_new = f * c + i * g
        return o * jnp.tanh(c_new), c_new

    # ---- 1. VAE encode (stand-in linear): mu = x @ W_enc + b_enc  [T*B, D] ----
    mu = jnp.dot(x_ref[...], enc_w_ref[...],
                 preferred_element_type=jnp.float32) + enc_b_ref[...]

    # ---- 2. ALL layer-0 input-to-hidden gates (both dirs, all timesteps) -----
    gx0_ref[...] = bdot(mu, wih0_ref[...]) + b0_ref[...]

    zeros = jnp.zeros((B, H), jnp.float32)

    # ---- 3. Layer-0 recurrence: forward (t) and backward (T-1-t) interleaved --
    #      Two independent chains give the scheduler back-to-back MXU pushes.
    h_f, c_f = zeros, zeros
    h_b, c_b = zeros, zeros
    for t in range(T):
        tb = T - 1 - t
        g_f = gx0_ref[pl.ds(t * B, B), pl.ds(0, 4 * H)] + bdot(h_f, whh_f0_ref[...])
        g_b = gx0_ref[pl.ds(tb * B, B), pl.ds(4 * H, 4 * H)] + bdot(h_b, whh_b0_ref[...])
        h_f, c_f = lstm_cell(g_f, c_f)
        h_b, c_b = lstm_cell(g_b, c_b)
        y0_ref[pl.ds(t * B, B), pl.ds(0, H)] = h_f
        y0_ref[pl.ds(tb * B, B), pl.ds(H, H)] = h_b

    # ---- 4. Layer-1 forward input gates for all timesteps: one K=2H matmul ----
    gx1_ref[...] = bdot(y0_ref[...], wih_f1_ref[...]) + b_f1_ref[...]

    # ---- 5. Layer-1 forward recurrence (only final hidden state is needed) ----
    h1, c1 = zeros, zeros
    for t in range(T):
        g1 = gx1_ref[pl.ds(t * B, B), :] + bdot(h1, whh_f1_ref[...])
        h1, c1 = lstm_cell(g1, c1)
    h_fwd_last = h1

    # ---- 6. Layer-1 backward hidden at t = T-1 (its FIRST reverse step, zero
    #      initial state) == lstm_out[:, -1, H:].  h=0 => the whh_b1 recurrent
    #      dot is identically zero and is skipped. ----
    y_last = y0_ref[pl.ds((T - 1) * B, B), :]
    g1b = bdot(y_last, wih_b1_ref[...]) + b_b1_ref[...]
    h_bwd_last, _ = lstm_cell(g1b, zeros)

    # ---- 7. Head: fc -> relu -> (dropout = identity in eval) -> fc_out -------
    h_cat = jnp.concatenate([h_fwd_last, h_bwd_last], axis=1)      # [B, 2H]
    z = bdot(h_cat, w_fc_ref[...]) + b_fc_ref[...]                 # K = 2H single dot
    z = jnp.maximum(z, 0.0)
    out_ref[...] = jnp.dot(z, w_out_ref[...],
                           preferred_element_type=jnp.float32) + b_out_ref[...]


# ----------------------------------------------------------------------------
# Wrapper
# ----------------------------------------------------------------------------
def vae_bilstm_forward(x_seq, params):
    """x_seq: [B, T, 1, 32, 32] float32 -> [B, output_dim] float32."""
    B, T = x_seq.shape[0], x_seq.shape[1]
    img_dim = x_seq.shape[2] * x_seq.shape[3] * x_seq.shape[4]
    D = params["enc_w"].shape[1]
    H = params["whh_f0"].shape[0]
    out_dim = params["w_out"].shape[1]

    # Time-major flatten so each timestep occupies a contiguous row block
    # [t*B : (t+1)*B] inside the kernel. Cast activations + weights to bf16
    # (halves DMA bytes, native MXU input); accumulation stays f32.
    x_tb = jnp.transpose(x_seq, (1, 0, 2, 3, 4)).reshape(T * B, img_dim)
    x_tb = x_tb.astype(jnp.bfloat16)

    bf16 = lambda a: a.astype(jnp.bfloat16)
    # Fuse layer-0 fwd/bwd input weights -> ONE [T*B, D] @ [D, 8H] matmul for
    # all input-to-hidden gate pre-activations of both directions.
    wih0 = bf16(jnp.concatenate([params["wih_f0"], params["wih_b0"]], axis=1))
    b0 = jnp.concatenate([params["b_f0"], params["b_b0"]], axis=1)

    args = [
        x_tb,
        bf16(params["enc_w"]), params["enc_b"],
        wih0, b0,
        bf16(params["whh_f0"]), bf16(params["whh_b0"]),
        bf16(params["wih_f1"]), bf16(params["whh_f1"]), params["b_f1"],
        bf16(params["wih_b1"]), params["b_b1"],
        bf16(params["w_fc"]), params["b_fc"],
        params["w_out"], params["b_out"],      # tiny, N=50 (not lane-aligned): keep f32
    ]

    # Rough cost hints for XLA's scheduler around the custom call.
    TB = T * B
    flops = 2 * (TB * img_dim * D + TB * D * 8 * H
                 + 2 * T * B * H * 4 * H + TB * 2 * H * 4 * H
                 + T * B * H * 4 * H + B * 2 * H * 4 * H
                 + B * 2 * H * H + B * H * out_dim)
    transcendentals = (3 * T + 1) * 5 * B * H
    bytes_accessed = sum(int(a.size) * a.dtype.itemsize for a in args) + B * out_dim * 4

    vmem = pl.BlockSpec(memory_space=pltpu.MemorySpace.VMEM)
    return pl.pallas_call(
        partial(_vae_bilstm_fused_kernel, batch=B, seq_len=T, hidden_dim=H),
        out_shape=jax.ShapeDtypeStruct((B, out_dim), jnp.float32),
        in_specs=[vmem] * len(args),
        out_specs=vmem,
        scratch_shapes=[
            pltpu.VMEM((T * B, 8 * H), jnp.float32),   # gx0: layer-0 gates, both dirs
            pltpu.VMEM((T * B, 2 * H), jnp.float32),   # y0 : layer-0 outputs (fwd|bwd)
            pltpu.VMEM((T * B, 4 * H), jnp.float32),   # gx1: layer-1 fwd gates
        ],
        cost_estimate=pl.CostEstimate(flops=flops,
                                      transcendentals=transcendentals,
                                      bytes_accessed=bytes_accessed),
    )(*args)


# ----------------------------------------------------------------------------
# Deterministic parameter initialization (shapes follow the nn.Module.__init__;
# all weights stored pre-transposed as [in_dim, out_dim])
# ----------------------------------------------------------------------------
def init_params(key, *, img_dim=32 * 32, input_dim=128, hidden_dim=128,
                output_dim=50):
    H = hidden_dim
    keys = list(jax.random.split(key, 24))
    it = iter(keys)

    def u(shape, scale):
        return jax.random.uniform(next(it), shape, jnp.float32, -scale, scale)

    s_enc = img_dim ** -0.5
    s_lstm = H ** -0.5
    return {
        # stand-in VAE encoder (frozen)
        "enc_w": u((img_dim, input_dim), s_enc),
        "enc_b": u((1, input_dim), s_enc),
        # LSTM layer 0 (input_dim -> H), forward / backward
        "wih_f0": u((input_dim, 4 * H), s_lstm),
        "whh_f0": u((H, 4 * H), s_lstm),
        "b_f0": u((1, 4 * H), s_lstm),
        "wih_b0": u((input_dim, 4 * H), s_lstm),
        "whh_b0": u((H, 4 * H), s_lstm),
        "b_b0": u((1, 4 * H), s_lstm),
        # LSTM layer 1 (2H -> H), forward / backward
        "wih_f1": u((2 * H, 4 * H), s_lstm),
        "whh_f1": u((H, 4 * H), s_lstm),
        "b_f1": u((1, 4 * H), s_lstm),
        "wih_b1": u((2 * H, 4 * H), s_lstm),
        "whh_b1": u((H, 4 * H), s_lstm),   # unused by the head (zero initial state)
        "b_b1": u((1, 4 * H), s_lstm),
        # fc: 2H -> H,  fc_out: H -> output_dim
        "w_fc": u((2 * H, H), (2 * H) ** -0.5),
        "b_fc": u((1, H), (2 * H) ** -0.5),
        "w_out": u((H, output_dim), H ** -0.5),
        "b_out": u((1, output_dim), H ** -0.5),
    }


if __name__ == "__main__":
    key = jax.random.PRNGKey(0)
    k_params, k_x = jax.random.split(key)

    B, T = 2, 8                       # batch, sequence length
    x_seq = jax.random.normal(k_x, (B, T, 1, 32, 32), jnp.float32)
    params = init_params(k_params, img_dim=32 * 32, input_dim=128,
                         hidden_dim=128, output_dim=50)

    out = jax.jit(vae_bilstm_forward)(x_seq, params)
    out = jax.block_until_ready(out)
    assert out.shape == (B, 50) and out.dtype == jnp.float32
    assert bool(jnp.all(jnp.isfinite(out)))
    print("KERNEL_OK")
</pallas_src>

<mosaic_0001>
module attributes {stable_mosaic.version = 11 : i64} {
  func.func @_vae_bilstm_fused_kernel(%arg0: memref<16x1024xbf16, #tpu.memory_space<vmem>>, %arg1: memref<1024x128xbf16, #tpu.memory_space<vmem>>, %arg2: memref<1x128xf32, #tpu.memory_space<vmem>>, %arg3: memref<128x1024xbf16, #tpu.memory_space<vmem>>, %arg4: memref<1x1024xf32, #tpu.memory_space<vmem>>, %arg5: memref<128x512xbf16, #tpu.memory_space<vmem>>, %arg6: memref<128x512xbf16, #tpu.memory_space<vmem>>, %arg7: memref<256x512xbf16, #tpu.memory_space<vmem>>, %arg8: memref<128x512xbf16, #tpu.memory_space<vmem>>, %arg9: memref<1x512xf32, #tpu.memory_space<vmem>>, %arg10: memref<256x512xbf16, #tpu.memory_space<vmem>>, %arg11: memref<1x512xf32, #tpu.memory_space<vmem>>, %arg12: memref<256x128xbf16, #tpu.memory_space<vmem>>, %arg13: memref<1x128xf32, #tpu.memory_space<vmem>>, %arg14: memref<128x50xf32, #tpu.memory_space<vmem>>, %arg15: memref<1x50xf32, #tpu.memory_space<vmem>>, %arg16: memref<2x50xf32, #tpu.memory_space<vmem>>, %arg17: memref<16x1024xf32, #tpu.memory_space<vmem>>, %arg18: memref<16x256xf32, #tpu.memory_space<vmem>>, %arg19: memref<16x512xf32, #tpu.memory_space<vmem>>) attributes {dimension_semantics = [], scalar_prefetch = 0 : i64, scratch_operands = 3 : i64, tpu.core_type = #tpu.core_type<tc>} {
    %c0 = arith.constant 0 : index
    %c0_0 = arith.constant 0 : index
    %0 = vector.load %arg0[%c0, %c0_0] : memref<16x1024xbf16, #tpu.memory_space<vmem>>, vector<16x1024xbf16>
    %c0_1 = arith.constant 0 : index
    %c0_2 = arith.constant 0 : index
    %1 = vector.load %arg1[%c0_1, %c0_2] : memref<1024x128xbf16, #tpu.memory_space<vmem>>, vector<1024x128xbf16>
    %cst = arith.constant dense<0.000000e+00> : vector<16x128xf32>
    %2 = tpu.matmul %0, %1, %cst {dimension_numbers = #tpu.dot_dimension_numbers<[1], [0], [0], [1], [0, 0, 1, 1], [], []>} : vector<16x1024xbf16>, vector<1024x128xbf16>, vector<16x128xf32> -> vector<16x128xf32>
    %c0_3 = arith.constant 0 : index
    %c0_4 = arith.constant 0 : index
    %3 = vector.load %arg2[%c0_3, %c0_4] : memref<1x128xf32, #tpu.memory_space<vmem>>, vector<1x128xf32>
    %4 = vector.broadcast %3 : vector<1x128xf32> to vector<16x128xf32>
    %5 = arith.addf %2, %4 : vector<16x128xf32>
    %c0_5 = arith.constant 0 : index
    %c0_6 = arith.constant 0 : index
    %6 = vector.load %arg3[%c0_5, %c0_6] : memref<128x1024xbf16, #tpu.memory_space<vmem>>, vector<128x1024xbf16>
    %7 = arith.truncf %5 : vector<16x128xf32> to vector<16x128xbf16>
    %cst_7 = arith.constant dense<0.000000e+00> : vector<16x1024xf32>
    %8 = tpu.matmul %7, %6, %cst_7 {dimension_numbers = #tpu.dot_dimension_numbers<[1], [0], [0], [1], [0, 0, 1, 1], [], []>} : vector<16x128xbf16>, vector<128x1024xbf16>, vector<16x1024xf32> -> vector<16x1024xf32>
    %c0_8 = arith.constant 0 : index
    %c0_9 = arith.constant 0 : index
    %9 = vector.load %arg4[%c0_8, %c0_9] : memref<1x1024xf32, #tpu.memory_space<vmem>>, vector<1x1024xf32>
    %10 = vector.broadcast %9 : vector<1x1024xf32> to vector<16x1024xf32>
    %11 = arith.addf %8, %10 : vector<16x1024xf32>
    %c0_10 = arith.constant 0 : index
    %c0_11 = arith.constant 0 : index
    %12 = vector.load %arg17[%c0_10, %c0_11] : memref<16x1024xf32, #tpu.memory_space<vmem>>, vector<16x1024xf32>
    tpu.vector_store %arg17[%c0_10, %c0_11], %11 {strides = array<i32>} : memref<16x1024xf32, #tpu.memory_space<vmem>>, vector<16x1024xf32>,
    %cst_12 = arith.constant 0.000000e+00 : f32
    %13 = vector.broadcast %cst_12 : f32 to vector<2x128xf32>
    %c0_13 = arith.constant 0 : index
    %c0_14 = arith.constant 0 : index
    %14 = vector.load %arg17[%c0_13, %c0_14] : memref<16x1024xf32, #tpu.memory_space<vmem>>, vector<2x512xf32>
    %c0_15 = arith.constant 0 : index
    %c0_16 = arith.constant 0 : index
    %15 = vector.load %arg5[%c0_15, %c0_16] : memref<128x512xbf16, #tpu.memory_space<vmem>>, vector<128x512xbf16>
    %16 = arith.truncf %13 : vector<2x128xf32> to vector<2x128xbf16>
    %cst_17 = arith.constant dense<0.000000e+00> : vector<2x512xf32>
    %17 = tpu.matmul %16, %15, %cst_17 {dimension_numbers = #tpu.dot_dimension_numbers<[1], [0], [0], [1], [0, 0, 1, 1], [], []>} : vector<2x128xbf16>, vector<128x512xbf16>, vector<2x512xf32> -> vector<2x512xf32>
    %18 = arith.addf %14, %17 : vector<2x512xf32>
    %c14 = arith.constant 14 : index
    %c512 = arith.constant 512 : index
    %19 = vector.load %arg17[%c14, %c512] : memref<16x1024xf32, #tpu.memory_space<vmem>>, vector<2x512xf32>
    %c0_18 = arith.constant 0 : index
    %c0_19 = arith.constant 0 : index
    %20 = vector.load %arg6[%c0_18, %c0_19] : memref<128x512xbf16, #tpu.memory_space<vmem>>, vector<128x512xbf16>
    %21 = arith.truncf %13 : vector<2x128xf32> to vector<2x128xbf16>
    %cst_20 = arith.constant dense<0.000000e+00> : vector<2x512xf32>
    %22 = tpu.matmul %21, %20, %cst_20 {dimension_numbers = #tpu.dot_dimension_numbers<[1], [0], [0], [1], [0, 0, 1, 1], [], []>} : vector<2x128xbf16>, vector<128x512xbf16>, vector<2x512xf32> -> vector<2x512xf32>
    %23 = arith.addf %19, %22 : vector<2x512xf32>
    %24 = vector.extract_strided_slice %18 {offsets = [0, 0], sizes = [2, 128], strides = [1, 1]} : vector<2x512xf32> to vector<2x128xf32>
    %cst_21 = arith.constant 5.000000e-01 : f32
    %25 = vector.broadcast %cst_21 : f32 to vector<2x128xf32>
    %26 = arith.mulf %25, %24 : vector<2x128xf32>
    %27 = math.tanh %26 : vector<2x128xf32>
    %cst_22 = arith.constant 5.000000e-01 : f32
    %28 = vector.broadcast %cst_22 : f32 to vector<2x128xf32>
    %29 = arith.mulf %28, %27 : vector<2x128xf32>
    %cst_23 = arith.constant 5.000000e-01 : f32
    %30 = vector.broadcast %cst_23 : f32 to vector<2x128xf32>
    %31 = arith.addf %29, %30 : vector<2x128xf32>
    %32 = vector.extract_strided_slice %18 {offsets = [0, 128], sizes = [2, 128], strides = [1, 1]} : vector<2x512xf32> to vector<2x128xf32>
    %cst_24 = arith.constant 5.000000e-01 : f32
    %33 = vector.broadcast %cst_24 : f32 to vector<2x128xf32>
    %34 = arith.mulf %33, %32 : vector<2x128xf32>
    %35 = math.tanh %34 : vector<2x128xf32>
    %cst_25 = arith.constant 5.000000e-01 : f32
    %36 = vector.broadcast %cst_25 : f32 to vector<2x128xf32>
    %37 = arith.mulf %36, %35 : vector<2x128xf32>
    %cst_26 = arith.constant 5.000000e-01 : f32
    %38 = vector.broadcast %cst_26 : f32 to vector<2x128xf32>
    %39 = arith.addf %37, %38 : vector<2x128xf32>
    %40 = vector.extract_strided_slice %18 {offsets = [0, 256], sizes = [2, 128], strides = [1, 1]} : vector<2x512xf32> to vector<2x128xf32>
    %41 = math.tanh %40 : vector<2x128xf32>
    %42 = vector.extract_strided_slice %18 {offsets = [0, 384], sizes = [2, 128], strides = [1, 1]} : vector<2x512xf32> to vector<2x128xf32>
    %cst_27 = arith.constant 5.000000e-01 : f32
    %43 = vector.broadcast %cst_27 : f32 to vector<2x128xf32>
    %44 = arith.mulf %43, %42 : vector<2x128xf32>
    %45 = math.tanh %44 : vector<2x128xf32>
    %cst_28 = arith.constant 5.000000e-01 : f32
    %46 = vector.broadcast %cst_28 : f32 to vector<2x128xf32>
    %47 = arith.mulf %46, %45 : vector<2x128xf32>
    %cst_29 = arith.constant 5.000000e-01 : f32
    %48 = vector.broadcast %cst_29 : f32 to vector<2x128xf32>
    %49 = arith.addf %47, %48 : vector<2x128xf32>
    %50 = arith.mulf %39, %13 : vector<2x128xf32>
    %51 = arith.mulf %31, %41 : vector<2x128xf32>
    %52 = arith.addf %50, %51 : vector<2x128xf32>
    %53 = math.tanh %52 : vector<2x128xf32>
    %54 = arith.mulf %49, %53 : vector<2x128xf32>
    %55 = vector.extract_strided_slice %23 {offsets = [0, 0], sizes = [2, 128], strides = [1, 1]} : vector<2x512xf32> to vector<2x128xf32>
    %cst_30 = arith.constant 5.000000e-01 : f32
    %56 = vector.broadcast %cst_30 : f32 to vector<2x128xf32>
    %57 = arith.mulf %56, %55 : vector<2x128xf32>
    %58 = math.tanh %57 : vector<2x128xf32>
    %cst_31 = arith.constant 5.000000e-01 : f32
    %59 = vector.broadcast %cst_31 : f32 to vector<2x128xf32>
    %60 = arith.mulf %59, %58 : vector<2x128xf32>
    %cst_32 = arith.constant 5.000000e-01 : f32
    %61 = vector.broadcast %cst_32 : f32 to vector<2x128xf32>
    %62 = arith.addf %60, %61 : vector<2x128xf32>
    %63 = vector.extract_strided_slice %23 {offsets = [0, 128], sizes = [2, 128], strides = [1, 1]} : vector<2x512xf32> to vector<2x128xf32>
    %cst_33 = arith.constant 5.000000e-01 : f32
    %64 = vector.broadcast %cst_33 : f32 to vector<2x128xf32>
    %65 = arith.mulf %64, %63 : vector<2x128xf32>
    %66 = math.tanh %65 : vector<2x128xf32>
    %cst_34 = arith.constant 5.000000e-01 : f32
    %67 = vector.broadcast %cst_34 : f32 to vector<2x128xf32>
    %68 = arith.mulf %67, %66 : vector<2x128xf32>
    %cst_35 = arith.constant 5.000000e-01 : f32
    %69 = vector.broadcast %cst_35 : f32 to vector<2x128xf32>
    %70 = arith.addf %68, %69 : vector<2x128xf32>
    %71 = vector.extract_strided_slice %23 {offsets = [0, 256], sizes = [2, 128], strides = [1, 1]} : vector<2x512xf32> to vector<2x128xf32>
    %72 = math.tanh %71 : vector<2x128xf32>
    %73 = vector.extract_strided_slice %23 {offsets = [0, 384], sizes = [2, 128], strides = [1, 1]} : vector<2x512xf32> to vector<2x128xf32>
    %cst_36 = arith.constant 5.000000e-01 : f32
    %74 = vector.broadcast %cst_36 : f32 to vector<2x128xf32>
    %75 = arith.mulf %74, %73 : vector<2x128xf32>
    %76 = math.tanh %75 : vector<2x128xf32>
    %cst_37 = arith.constant 5.000000e-01 : f32
    %77 = vector.broadcast %cst_37 : f32 to vector<2x128xf32>
    %78 = arith.mulf %77, %76 : vector<2x128xf32>
    %cst_38 = arith.constant 5.000000e-01 : f32
    %79 = vector.broadcast %cst_38 : f32 to vector<2x128xf32>
    %80 = arith.addf %78, %79 : vector<2x128xf32>
    %81 = arith.mulf %70, %13 : vector<2x128xf32>
    %82 = arith.mulf %62, %72 : vector<2x128xf32>
    %83 = arith.addf %81, %82 : vector<2x128xf32>
    %84 = math.tanh %83 : vector<2x128xf32>
    %85 = arith.mulf %80, %84 : vector<2x128xf32>
    %c0_39 = arith.constant 0 : index
    %c0_40 = arith.constant 0 : index
    %86 = vector.load %arg18[%c0_39, %c0_40] : memref<16x256xf32, #tpu.memory_space<vmem>>, vector<2x128xf32>
    tpu.vector_store %arg18[%c0_39, %c0_40], %54 {strides = array<i32>} : memref<16x256xf32, #tpu.memory_space<vmem>>, vector<2x128xf32>,
    %c14_41 = arith.constant 14 : index
    %c128 = arith.constant 128 : index
    %87 = vector.load %arg18[%c14_41, %c128] : memref<16x256xf32, #tpu.memory_space<vmem>>, vector<2x128xf32>
    tpu.vector_store %arg18[%c14_41, %c128], %85 {strides = array<i32>} : memref<16x256xf32, #tpu.memory_space<vmem>>, vector<2x128xf32>,
    %c2 = arith.constant 2 : index
    %c0_42 = arith.constant 0 : index
    %88 = vector.load %arg17[%c2, %c0_42] : memref<16x1024xf32, #tpu.memory_space<vmem>>, vector<2x512xf32>
    %c0_43 = arith.constant 0 : index
    %c0_44 = arith.constant 0 : index
    %89 = vector.load %arg5[%c0_43, %c0_44] : memref<128x512xbf16, #tpu.memory_space<vmem>>, vector<128x512xbf16>
    %90 = arith.truncf %54 : vector<2x128xf32> to vector<2x128xbf16>
    %cst_45 = arith.constant dense<0.000000e+00> : vector<2x512xf32>
    %91 = tpu.matmul %90, %89, %cst_45 {dimension_numbers = #tpu.dot_dimension_numbers<[1], [0], [0], [1], [0, 0, 1, 1], [], []>} : vector<2x128xbf16>, vector<128x512xbf16>, vector<2x512xf32> -> vector<2x512xf32>
    %92 = arith.addf %88, %91 : vector<2x512xf32>
    %c12 = arith.constant 12 : index
    %c512_46 = arith.constant 512 : index
    %93 = vector.load %arg17[%c12, %c512_46] : memref<16x1024xf32, #tpu.memory_space<vmem>>, vector<2x512xf32>
    %c0_47 = arith.constant 0 : index
    %c0_48 = arith.constant 0 : index
    %94 = vector.load %arg6[%c0_47, %c0_48] : memref<128x512xbf16, #tpu.memory_space<vmem>>, vector<128x512xbf16>
    %95 = arith.truncf %85 : vector<2x128xf32> to vector<2x128xbf16>
    %cst_49 = arith.constant dense<0.000000e+00> : vector<2x512xf32>
    %96 = tpu.matmul %95, %94, %cst_49 {dimension_numbers = #tpu.dot_dimension_numbers<[1], [0], [0], [1], [0, 0, 1, 1], [], []>} : vector<2x128xbf16>, vector<128x512xbf16>, vector<2x512xf32> -> vector<2x512xf32>
    %97 = arith.addf %93, %96 : vector<2x512xf32>
    %98 = vector.extract_strided_slice %92 {offsets = [0, 0], sizes = [2, 128], strides = [1, 1]} : vector<2x512xf32> to vector<2x128xf32>
    %cst_50 = arith.constant 5.000000e-01 : f32
    %99 = vector.broadcast %cst_50 : f32 to vector<2x128xf32>
    %100 = arith.mulf %99, %98 : vector<2x128xf32>
    %101 = math.tanh %100 : vector<2x128xf32>
    %cst_51 = arith.constant 5.000000e-01 : f32
    %102 = vector.broadcast %cst_51 : f32 to vector<2x128xf32>
    %103 = arith.mulf %102, %101 : vector<2x128xf32>
    %cst_52 = arith.constant 5.000000e-01 : f32
    %104 = vector.broadcast %cst_52 : f32 to vector<2x128xf32>
    %105 = arith.addf %103, %104 : vector<2x128xf32>
    %106 = vector.extract_strided_slice %92 {offsets = [0, 128], sizes = [2, 128], strides = [1, 1]} : vector<2x512xf32> to vector<2x128xf32>
    %cst_53 = arith.constant 5.000000e-01 : f32
    %107 = vector.broadcast %cst_53 : f32 to vector<2x128xf32>
    %108 = arith.mulf %107, %106 : vector<2x128xf32>
    %109 = math.tanh %108 : vector<2x128xf32>
    %cst_54 = arith.constant 5.000000e-01 : f32
    %110 = vector.broadcast %cst_54 : f32 to vector<2x128xf32>
    %111 = arith.mulf %110, %109 : vector<2x128xf32>
    %cst_55 = arith.constant 5.000000e-01 : f32
    %112 = vector.broadcast %cst_55 : f32 to vector<2x128xf32>
    %113 = arith.addf %111, %112 : vector<2x128xf32>
    %114 = vector.extract_strided_slice %92 {offsets = [0, 256], sizes = [2, 128], strides = [1, 1]} : vector<2x512xf32> to vector<2x128xf32>
    %115 = math.tanh %114 : vector<2x128xf32>
    %116 = vector.extract_strided_slice %92 {offsets = [0, 384], sizes = [2, 128], strides = [1, 1]} : vector<2x512xf32> to vector<2x128xf32>
    %cst_56 = arith.constant 5.000000e-01 : f32
    %117 = vector.broadcast %cst_56 : f32 to vector<2x128xf32>
    %118 = arith.mulf %117, %116 : vector<2x128xf32>
    %119 = math.tanh %118 : vector<2x128xf32>
    %cst_57 = arith.constant 5.000000e-01 : f32
    %120 = vector.broadcast %cst_57 : f32 to vector<2x128xf32>
    %121 = arith.mulf %120, %119 : vector<2x128xf32>
    %cst_58 = arith.constant 5.000000e-01 : f32
    %122 = vector.broadcast %cst_58 : f32 to vector<2x128xf32>
    %123 = arith.addf %121, %122 : vector<2x128xf32>
    %124 = arith.mulf %113, %52 : vector<2x128xf32>
    %125 = arith.mulf %105, %115 : vector<2x128xf32>
    %126 = arith.addf %124, %125 : vector<2x128xf32>
    %127 = math.tanh %126 : vector<2x128xf32>
    %128 = arith.mulf %123, %127 : vector<2x128xf32>
    %129 = vector.extract_strided_slice %97 {offsets = [0, 0], sizes = [2, 128], strides = [1, 1]} : vector<2x512xf32> to vector<2x128xf32>
    %cst_59 = arith.constant 5.000000e-01 : f32
    %130 = vector.broadcast %cst_59 : f32 to vector<2x128xf32>
    %131 = arith.mulf %130, %129 : vector<2x128xf32>
    %132 = math.tanh %131 : vector<2x128xf32>
    %cst_60 = arith.constant 5.000000e-01 : f32
    %133 = vector.broadcast %cst_60 : f32 to vector<2x128xf32>
    %134 = arith.mulf %133, %132 : vector<2x128xf32>
    %cst_61 = arith.constant 5.000000e-01 : f32
    %135 = vector.broadcast %cst_61 : f32 to vector<2x128xf32>
    %136 = arith.addf %134, %135 : vector<2x128xf32>
    %137 = vector.extract_strided_slice %97 {offsets = [0, 128], sizes = [2, 128], strides = [1, 1]} : vector<2x512xf32> to vector<2x128xf32>
    %cst_62 = arith.constant 5.000000e-01 : f32
    %138 = vector.broadcast %cst_62 : f32 to vector<2x128xf32>
    %139 = arith.mulf %138, %137 : vector<2x128xf32>
    %140 = math.tanh %139 : vector<2x128xf32>
    %cst_63 = arith.constant 5.000000e-01 : f32
    %141 = vector.broadcast %cst_63 : f32 to vector<2x128xf32>
    %142 = arith.mulf %141, %140 : vector<2x128xf32>
    %cst_64 = arith.constant 5.000000e-01 : f32
    %143 = vector.broadcast %cst_64 : f32 to vector<2x128xf32>
    %144 = arith.addf %142, %143 : vector<2x128xf32>
    %145 = vector.extract_strided_slice %97 {offsets = [0, 256], sizes = [2, 128], strides = [1, 1]} : vector<2x512xf32> to vector<2x128xf32>
    %146 = math.tanh %145 : vector<2x128xf32>
    %147 = vector.extract_strided_slice %97 {offsets = [0, 384], sizes = [2, 128], strides = [1, 1]} : vector<2x512xf32> to vector<2x128xf32>
    %cst_65 = arith.constant 5.000000e-01 : f32
    %148 = vector.broadcast %cst_65 : f32 to vector<2x128xf32>
    %149 = arith.mulf %148, %147 : vector<2x128xf32>
    %150 = math.tanh %149 : vector<2x128xf32>
    %cst_66 = arith.constant 5.000000e-01 : f32
    %151 = vector.broadcast %cst_66 : f32 to vector<2x128xf32>
    %152 = arith.mulf %151, %150 : vector<2x128xf32>
    %cst_67 = arith.constant 5.000000e-01 : f32
    %153 = vector.broadcast %cst_67 : f32 to vector<2x128xf32>
    %154 = arith.addf %152, %153 : vector<2x128xf32>
    %155 = arith.mulf %144, %83 : vector<2x128xf32>
    %156 = arith.mulf %136, %146 : vector<2x128xf32>
    %157 = arith.addf %155, %156 : vector<2x128xf32>
    %158 = math.tanh %157 : vector<2x128xf32>
    %159 = arith.mulf %154, %158 : vector<2x128xf32>
    %c2_68 = arith.constant 2 : index
    %c0_69 = arith.constant 0 : index
    %160 = vector.load %arg18[%c2_68, %c0_69] : memref<16x256xf32, #tpu.memory_space<vmem>>, vector<2x128xf32>
    tpu.vector_store %arg18[%c2_68, %c0_69], %128 {strides = array<i32>} : memref<16x256xf32, #tpu.memory_space<vmem>>, vector<2x128xf32>,
    %c12_70 = arith.constant 12 : index
    %c128_71 = arith.constant 128 : index
    %161 = vector.load %arg18[%c12_70, %c128_71] : memref<16x256xf32, #tpu.memory_space<vmem>>, vector<2x128xf32>
    tpu.vector_store %arg18[%c12_70, %c128_71], %159 {strides = array<i32>} : memref<16x256xf32, #tpu.memory_space<vmem>>, vector<2x128xf32>,
    %c4 = arith.constant 4 : index
    %c0_72 = arith.constant 0 : index
    %162 = vector.load %arg17[%c4, %c0_72] : memref<16x1024xf32, #tpu.memory_space<vmem>>, vector<2x512xf32>
    %c0_73 = arith.constant 0 : index
    %c0_74 = arith.constant 0 : index
    %163 = vector.load %arg5[%c0_73, %c0_74] : memref<128x512xbf16, #tpu.memory_space<vmem>>, vector<128x512xbf16>
    %164 = arith.truncf %128 : vector<2x128xf32> to vector<2x128xbf16>
    %cst_75 = arith.constant dense<0.000000e+00> : vector<2x512xf32>
    %165 = tpu.matmul %164, %163, %cst_75 {dimension_numbers = #tpu.dot_dimension_numbers<[1], [0], [0], [1], [0, 0, 1, 1], [], []>} : vector<2x128xbf16>, vector<128x512xbf16>, vector<2x512xf32> -> vector<2x512xf32>
    %166 = arith.addf %162, %165 : vector<2x512xf32>
    %c10 = arith.constant 10 : index
    %c512_76 = arith.constant 512 : index
    %167 = vector.load %arg17[%c10, %c512_76] : memref<16x1024xf32, #tpu.memory_space<vmem>>, vector<2x512xf32>
    %c0_77 = arith.constant 0 : index
    %c0_78 = arith.constant 0 : index
    %168 = vector.load %arg6[%c0_77, %c0_78] : memref<128x512xbf16, #tpu.memory_space<vmem>>, vector<128x512xbf16>
    %169 = arith.truncf %159 : vector<2x128xf32> to vector<2x128xbf16>
    %cst_79 = arith.constant dense<0.000000e+00> : vector<2x512xf32>
    %170 = tpu.matmul %169, %168, %cst_79 {dimension_numbers = #tpu.dot_dimension_numbers<[1], [0], [0], [1], [0, 0, 1, 1], [], []>} : vector<2x128xbf16>, vector<128x512xbf16>, vector<2x512xf32> -> vector<2x512xf32>
    %171 = arith.addf %167, %170 : vector<2x512xf32>
    %172 = vector.extract_strided_slice %166 {offsets = [0, 0], sizes = [2, 128], strides = [1, 1]} : vector<2x512xf32> to vector<2x128xf32>
    %cst_80 = arith.constant 5.000000e-01 : f32
    %173 = vector.broadcast %cst_80 : f32 to vector<2x128xf32>
    %174 = arith.mulf %173, %172 : vector<2x128xf32>
    %175 = math.tanh %174 : vector<2x128xf32>
    %cst_81 = arith.constant 5.000000e-01 : f32
    %176 = vector.broadcast %cst_81 : f32 to vector<2x128xf32>
    %177 = arith.mulf %176, %175 : vector<2x128xf32>
    %cst_82 = arith.constant 5.000000e-01 : f32
    %178 = vector.broadcast %cst_82 : f32 to vector<2x128xf32>
    %179 = arith.addf %177, %178 : vector<2x128xf32>
    %180 = vector.extract_strided_slice %166 {offsets = [0, 128], sizes = [2, 128], strides = [1, 1]} : vector<2x512xf32> to vector<2x128xf32>
    %cst_83 = arith.constant 5.000000e-01 : f32
    %181 = vector.broadcast %cst_83 : f32 to vector<2x128xf32>
    %182 = arith.mulf %181, %180 : vector<2x128xf32>
    %183 = math.tanh %182 : vector<2x128xf32>
    %cst_84 = arith.constant 5.000000e-01 : f32
    %184 = vector.broadcast %cst_84 : f32 to vector<2x128xf32>
    %185 = arith.mulf %184, %183 : vector<2x128xf32>
    %cst_85 = arith.constant 5.000000e-01 : f32
    %186 = vector.broadcast %cst_85 : f32 to vector<2x128xf32>
    %187 = arith.addf %185, %186 : vector<2x128xf32>
    %188 = vector.extract_strided_slice %166 {offsets = [0, 256], sizes = [2, 128], strides = [1, 1]} : vector<2x512xf32> to vector<2x128xf32>
    %189 = math.tanh %188 : vector<2x128xf32>
    %190 = vector.extract_strided_slice %166 {offsets = [0, 384], sizes = [2, 128], strides = [1, 1]} : vector<2x512xf32> to vector<2x128xf32>
    %cst_86 = arith.constant 5.000000e-01 : f32
    %191 = vector.broadcast %cst_86 : f32 to vector<2x128xf32>
    %192 = arith.mulf %191, %190 : vector<2x128xf32>
    %193 = math.tanh %192 : vector<2x128xf32>
    %cst_87 = arith.constant 5.000000e-01 : f32
    %194 = vector.broadcast %cst_87 : f32 to vector<2x128xf32>
    %195 = arith.mulf %194, %193 : vector<2x128xf32>
    %cst_88 = arith.constant 5.000000e-01 : f32
    %196 = vector.broadcast %cst_88 : f32 to vector<2x128xf32>
    %197 = arith.addf %195, %196 : vector<2x128xf32>
    %198 = arith.mulf %187, %126 : vector<2x128xf32>
    %199 = arith.mulf %179, %189 : vector<2x128xf32>
    %200 = arith.addf %198, %199 : vector<2x128xf32>
    %201 = math.tanh %200 : vector<2x128xf32>
    %202 = arith.mulf %197, %201 : vector<2x128xf32>
    %203 = vector.extract_strided_slice %171 {offsets = [0, 0], sizes = [2, 128], strides = [1, 1]} : vector<2x512xf32> to vector<2x128xf32>
    %cst_89 = arith.constant 5.000000e-01 : f32
    %204 = vector.broadcast %cst_89 : f32 to vector<2x128xf32>
    %205 = arith.mulf %204, %203 : vector<2x128xf32>
    %206 = math.tanh %205 : vector<2x128xf32>
    %cst_90 = arith.constant 5.000000e-01 : f32
    %207 = vector.broadcast %cst_90 : f32 to vector<2x128xf32>
    %208 = arith.mulf %207, %206 : vector<2x128xf32>
    %cst_91 = arith.constant 5.000000e-01 : f32
    %209 = vector.broadcast %cst_91 : f32 to vector<2x128xf32>
    %210 = arith.addf %208, %209 : vector<2x128xf32>
    %211 = vector.extract_strided_slice %171 {offsets = [0, 128], sizes = [2, 128], strides = [1, 1]} : vector<2x512xf32> to vector<2x128xf32>
    %cst_92 = arith.constant 5.000000e-01 : f32
    %212 = vector.broadcast %cst_92 : f32 to vector<2x128xf32>
    %213 = arith.mulf %212, %211 : vector<2x128xf32>
    %214 = math.tanh %213 : vector<2x128xf32>
    %cst_93 = arith.constant 5.000000e-01 : f32
    %215 = vector.broadcast %cst_93 : f32 to vector<2x128xf32>
    %216 = arith.mulf %215, %214 : vector<2x128xf32>
    %cst_94 = arith.constant 5.000000e-01 : f32
    %217 = vector.broadcast %cst_94 : f32 to vector<2x128xf32>
    %218 = arith.addf %216, %217 : vector<2x128xf32>
    %219 = vector.extract_strided_slice %171 {offsets = [0, 256], sizes = [2, 128], strides = [1, 1]} : vector<2x512xf32> to vector<2x128xf32>
    %220 = math.tanh %219 : vector<2x128xf32>
    %221 = vector.extract_strided_slice %171 {offsets = [0, 384], sizes = [2, 128], strides = [1, 1]} : vector<2x512xf32> to vector<2x128xf32>
    %cst_95 = arith.constant 5.000000e-01 : f32
    %222 = vector.broadcast %cst_95 : f32 to vector<2x128xf32>
    %223 = arith.mulf %222, %221 : vector<2x128xf32>
    %224 = math.tanh %223 : vector<2x128xf32>
    %cst_96 = arith.constant 5.000000e-01 : f32
    %225 = vector.broadcast %cst_96 : f32 to vector<2x128xf32>
    %226 = arith.mulf %225, %224 : vector<2x128xf32>
    %cst_97 = arith.constant 5.000000e-01 : f32
    %227 = vector.broadcast %cst_97 : f32 to vector<2x128xf32>
    %228 = arith.addf %226, %227 : vector<2x128xf32>
    %229 = arith.mulf %218, %157 : vector<2x128xf32>
    %230 = arith.mulf %210, %220 : vector<2x128xf32>
    %231 = arith.addf %229, %230 : vector<2x128xf32>
    %232 = math.tanh %231 : vector<2x128xf32>
    %233 = arith.mulf %228, %232 : vector<2x128xf32>
    %c4_98 = arith.constant 4 : index
    %c0_99 = arith.constant 0 : index
    %234 = vector.load %arg18[%c4_98, %c0_99] : memref<16x256xf32, #tpu.memory_space<vmem>>, vector<2x128xf32>
    tpu.vector_store %arg18[%c4_98, %c0_99], %202 {strides = array<i32>} : memref<16x256xf32, #tpu.memory_space<vmem>>, vector<2x128xf32>,
    %c10_100 = arith.constant 10 : index
    %c128_101 = arith.constant 128 : index
    %235 = vector.load %arg18[%c10_100, %c128_101] : memref<16x256xf32, #tpu.memory_space<vmem>>, vector<2x128xf32>
    tpu.vector_store %arg18[%c10_100, %c128_101], %233 {strides = array<i32>} : memref<16x256xf32, #tpu.memory_space<vmem>>, vector<2x128xf32>,
    %c6 = arith.constant 6 : index
    %c0_102 = arith.constant 0 : index
    %236 = vector.load %arg17[%c6, %c0_102] : memref<16x1024xf32, #tpu.memory_space<vmem>>, vector<2x512xf32>
    %c0_103 = arith.constant 0 : index
    %c0_104 = arith.constant 0 : index
    %237 = vector.load %arg5[%c0_103, %c0_104] : memref<128x512xbf16, #tpu.memory_space<vmem>>, vector<128x512xbf16>
    %238 = arith.truncf %202 : vector<2x128xf32> to vector<2x128xbf16>
    %cst_105 = arith.constant dense<0.000000e+00> : vector<2x512xf32>
    %239 = tpu.matmul %238, %237, %cst_105 {dimension_numbers = #tpu.dot_dimension_numbers<[1], [0], [0], [1], [0, 0, 1, 1], [], []>} : vector<2x128xbf16>, vector<128x512xbf16>, vector<2x512xf32> -> vector<2x512xf32>
    %240 = arith.addf %236, %239 : vector<2x512xf32>
    %c8 = arith.constant 8 : index
    %c512_106 = arith.constant 512 : index
    %241 = vector.load %arg17[%c8, %c512_106] : memref<16x1024xf32, #tpu.memory_space<vmem>>, vector<2x512xf32>
    %c0_107 = arith.constant 0 : index
    %c0_108 = arith.constant 0 : index
    %242 = vector.load %arg6[%c0_107, %c0_108] : memref<128x512xbf16, #tpu.memory_space<vmem>>, vector<128x512xbf16>
    %243 = arith.truncf %233 : vector<2x128xf32> to vector<2x128xbf16>
    %cst_109 = arith.constant dense<0.000000e+00> : vector<2x512xf32>
    %244 = tpu.matmul %243, %242, %cst_109 {dimension_numbers = #tpu.dot_dimension_numbers<[1], [0], [0], [1], [0, 0, 1, 1], [], []>} : vector<2x128xbf16>, vector<128x512xbf16>, vector<2x512xf32> -> vector<2x512xf32>
    %245 = arith.addf %241, %244 : vector<2x512xf32>
    %246 = vector.extract_strided_slice %240 {offsets = [0, 0], sizes = [2, 128], strides = [1, 1]} : vector<2x512xf32> to vector<2x128xf32>
    %cst_110 = arith.constant 5.000000e-01 : f32
    %247 = vector.broadcast %cst_110 : f32 to vector<2x128xf32>
    %248 = arith.mulf %247, %246 : vector<2x128xf32>
    %249 = math.tanh %248 : vector<2x128xf32>
    %cst_111 = arith.constant 5.000000e-01 : f32
    %250 = vector.broadcast %cst_111 : f32 to vector<2x128xf32>
    %251 = arith.mulf %250, %249 : vector<2x128xf32>
    %cst_112 = arith.constant 5.000000e-01 : f32
    %252 = vector.broadcast %cst_112 : f32 to vector<2x128xf32>
    %253 = arith.addf %251, %252 : vector<2x128xf32>
    %254 = vector.extract_strided_slice %240 {offsets = [0, 128], sizes = [2, 128], strides = [1, 1]} : vector<2x512xf32> to vector<2x128xf32>
    %cst_113 = arith.constant 5.000000e-01 : f32
    %255 = vector.broadcast %cst_113 : f32 to vector<2x128xf32>
    %256 = arith.mulf %255, %254 : vector<2x128xf32>
    %257 = math.tanh %256 : vector<2x128xf32>
    %cst_114 = arith.constant 5.000000e-01 : f32
    %258 = vector.broadcast %cst_114 : f32 to vector<2x128xf32>
    %259 = arith.mulf %258, %257 : vector<2x128xf32>
    %cst_115 = arith.constant 5.000000e-01 : f32
    %260 = vector.broadcast %cst_115 : f32 to vector<2x128xf32>
    %261 = arith.addf %259, %260 : vector<2x128xf32>
    %262 = vector.extract_strided_slice %240 {offsets = [0, 256], sizes = [2, 128], strides = [1, 1]} : vector<2x512xf32> to vector<2x128xf32>
    %263 = math.tanh %262 : vector<2x128xf32>
    %264 = vector.extract_strided_slice %240 {offsets = [0, 384], sizes = [2, 128], strides = [1, 1]} : vector<2x512xf32> to vector<2x128xf32>
    %cst_116 = arith.constant 5.000000e-01 : f32
    %265 = vector.broadcast %cst_116 : f32 to vector<2x128xf32>
    %266 = arith.mulf %265, %264 : vector<2x128xf32>
    %267 = math.tanh %266 : vector<2x128xf32>
    %cst_117 = arith.constant 5.000000e-01 : f32
    %268 = vector.broadcast %cst_117 : f32 to vector<2x128xf32>
    %269 = arith.mulf %268, %267 : vector<2x128xf32>
    %cst_118 = arith.constant 5.000000e-01 : f32
    %270 = vector.broadcast %cst_118 : f32 to vector<2x128xf32>
    %271 = arith.addf %269, %270 : vector<2x128xf32>
    %272 = arith.mulf %261, %200 : vector<2x128xf32>
    %273 = arith.mulf %253, %263 : vector<2x128xf32>
    %274 = arith.addf %272, %273 : vector<2x128xf32>
    %275 = math.tanh %274 : vector<2x128xf32>
    %276 = arith.mulf %271, %275 : vector<2x128xf32>
    %277 = vector.extract_strided_slice %245 {offsets = [0, 0], sizes = [2, 128], strides = [1, 1]} : vector<2x512xf32> to vector<2x128xf32>
    %cst_119 = arith.constant 5.000000e-01 : f32
    %278 = vector.broadcast %cst_119 : f32 to vector<2x128xf32>
    %279 = arith.mulf %278, %277 : vector<2x128xf32>
    %280 = math.tanh %279 : vector<2x128xf32>
    %cst_120 = arith.constant 5.000000e-01 : f32
    %281 = vector.broadcast %cst_120 : f32 to vector<2x128xf32>
    %282 = arith.mulf %281, %280 : vector<2x128xf32>
    %cst_121 = arith.constant 5.000000e-01 : f32
    %283 = vector.broadcast %cst_121 : f32 to vector<2x128xf32>
    %284 = arith.addf %282, %283 : vector<2x128xf32>
    %285 = vector.extract_strided_slice %245 {offsets = [0, 128], sizes = [2, 128], strides = [1, 1]} : vector<2x512xf32> to vector<2x128xf32>
    %cst_122 = arith.constant 5.000000e-01 : f32
    %286 = vector.broadcast %cst_122 : f32 to vector<2x128xf32>
    %287 = arith.mulf %286, %285 : vector<2x128xf32>
    %288 = math.tanh %287 : vector<2x128xf32>
    %cst_123 = arith.constant 5.000000e-01 : f32
    %289 = vector.broadcast %cst_123 : f32 to vector<2x128xf32>
    %290 = arith.mulf %289, %288 : vector<2x128xf32>
    %cst_124 = arith.constant 5.000000e-01 : f32
    %291 = vector.broadcast %cst_124 : f32 to vector<2x128xf32>
    %292 = arith.addf %290, %291 : vector<2x128xf32>
    %293 = vector.extract_strided_slice %245 {offsets = [0, 256], sizes = [2, 128], strides = [1, 1]} : vector<2x512xf32> to vector<2x128xf32>
    %294 = math.tanh %293 : vector<2x128xf32>
    %295 = vector.extract_strided_slice %245 {offsets = [0, 384], sizes = [2, 128], strides = [1, 1]} : vector<2x512xf32> to vector<2x128xf32>
    %cst_125 = arith.constant 5.000000e-01 : f32
    %296 = vector.broadcast %cst_125 : f32 to vector<2x128xf32>
    %297 = arith.mulf %296, %295 : vector<2x128xf32>
    %298 = math.tanh %297 : vector<2x128xf32>
    %cst_126 = arith.constant 5.000000e-01 : f32
    %299 = vector.broadcast %cst_126 : f32 to vector<2x128xf32>
    %300 = arith.mulf %299, %298 : vector<2x128xf32>
    %cst_127 = arith.constant 5.000000e-01 : f32
    %301 = vector.broadcast %cst_127 : f32 to vector<2x128xf32>
    %302 = arith.addf %300, %301 : vector<2x128xf32>
    %303 = arith.mulf %292, %231 : vector<2x128xf32>
    %304 = arith.mulf %284, %294 : vector<2x128xf32>
    %305 = arith.addf %303, %304 : vector<2x128xf32>
    %306 = math.tanh %305 : vector<2x128xf32>
    %307 = arith.mulf %302, %306 : vector<2x128xf32>
    %c6_128 = arith.constant 6 : index
    %c0_129 = arith.constant 0 : index
    %308 = vector.load %arg18[%c6_128, %c0_129] : memref<16x256xf32, #tpu.memory_space<vmem>>, vector<2x128xf32>
    tpu.vector_store %arg18[%c6_128, %c0_129], %276 {strides = array<i32>} : memref<16x256xf32, #tpu.memory_space<vmem>>, vector<2x128xf32>,
    %c8_130 = arith.constant 8 : index
    %c128_131 = arith.constant 128 : index
    %309 = vector.load %arg18[%c8_130, %c128_131] : memref<16x256xf32, #tpu.memory_space<vmem>>, vector<2x128xf32>
    tpu.vector_store %arg18[%c8_130, %c128_131], %307 {strides = array<i32>} : memref<16x256xf32, #tpu.memory_space<vmem>>, vector<2x128xf32>,
    %c8_132 = arith.constant 8 : index
    %c0_133 = arith.constant 0 : index
    %310 = vector.load %arg17[%c8_132, %c0_133] : memref<16x1024xf32, #tpu.memory_space<vmem>>, vector<2x512xf32>
    %c0_134 = arith.constant 0 : index
    %c0_135 = arith.constant 0 : index
    %311 = vector.load %arg5[%c0_134, %c0_135] : memref<128x512xbf16, #tpu.memory_space<vmem>>, vector<128x512xbf16>
    %312 = arith.truncf %276 : vector<2x128xf32> to vector<2x128xbf16>
    %cst_136 = arith.constant dense<0.000000e+00> : vector<2x512xf32>
    %313 = tpu.matmul %312, %311, %cst_136 {dimension_numbers = #tpu.dot_dimension_numbers<[1], [0], [0], [1], [0, 0, 1, 1], [], []>} : vector<2x128xbf16>, vector<128x512xbf16>, vector<2x512xf32> -> vector<2x512xf32>
    %314 = arith.addf %310, %313 : vector<2x512xf32>
    %c6_137 = arith.constant 6 : index
    %c512_138 = arith.constant 512 : index
    %315 = vector.load %arg17[%c6_137, %c512_138] : memref<16x1024xf32, #tpu.memory_space<vmem>>, vector<2x512xf32>
    %c0_139 = arith.constant 0 : index
    %c0_140 = arith.constant 0 : index
    %316 = vector.load %arg6[%c0_139, %c0_140] : memref<128x512xbf16, #tpu.memory_space<vmem>>, vector<128x512xbf16>
    %317 = arith.truncf %307 : vector<2x128xf32> to vector<2x128xbf16>
    %cst_141 = arith.constant dense<0.000000e+00> : vector<2x512xf32>
    %318 = tpu.matmul %317, %316, %cst_141 {dimension_numbers = #tpu.dot_dimension_numbers<[1], [0], [0], [1], [0, 0, 1, 1], [], []>} : vector<2x128xbf16>, vector<128x512xbf16>, vector<2x512xf32> -> vector<2x512xf32>
    %319 = arith.addf %315, %318 : vector<2x512xf32>
    %320 = vector.extract_strided_slice %314 {offsets = [0, 0], sizes = [2, 128], strides = [1, 1]} : vector<2x512xf32> to vector<2x128xf32>
    %cst_142 = arith.constant 5.000000e-01 : f32
    %321 = vector.broadcast %cst_142 : f32 to vector<2x128xf32>
    %322 = arith.mulf %321, %320 : vector<2x128xf32>
    %323 = math.tanh %322 : vector<2x128xf32>
    %cst_143 = arith.constant 5.000000e-01 : f32
    %324 = vector.broadcast %cst_143 : f32 to vector<2x128xf32>
    %325 = arith.mulf %324, %323 : vector<2x128xf32>
    %cst_144 = arith.constant 5.000000e-01 : f32
    %326 = vector.broadcast %cst_144 : f32 to vector<2x128xf32>
    %327 = arith.addf %325, %326 : vector<2x128xf32>
    %328 = vector.extract_strided_slice %314 {offsets = [0, 128], sizes = [2, 128], strides = [1, 1]} : vector<2x512xf32> to vector<2x128xf32>
    %cst_145 = arith.constant 5.000000e-01 : f32
    %329 = vector.broadcast %cst_145 : f32 to vector<2x128xf32>
    %330 = arith.mulf %329, %328 : vector<2x128xf32>
    %331 = math.tanh %330 : vector<2x128xf32>
    %cst_146 = arith.constant 5.000000e-01 : f32
    %332 = vector.broadcast %cst_146 : f32 to vector<2x128xf32>
    %333 = arith.mulf %332, %331 : vector<2x128xf32>
    %cst_147 = arith.constant 5.000000e-01 : f32
    %334 = vector.broadcast %cst_147 : f32 to vector<2x128xf32>
    %335 = arith.addf %333, %334 : vector<2x128xf32>
    %336 = vector.extract_strided_slice %314 {offsets = [0, 256], sizes = [2, 128], strides = [1, 1]} : vector<2x512xf32> to vector<2x128xf32>
    %337 = math.tanh %336 : vector<2x128xf32>
    %338 = vector.extract_strided_slice %314 {offsets = [0, 384], sizes = [2, 128], strides = [1, 1]} : vector<2x512xf32> to vector<2x128xf32>
    %cst_148 = arith.constant 5.000000e-01 : f32
    %339 = vector.broadcast %cst_148 : f32 to vector<2x128xf32>
    %340 = arith.mulf %339, %338 : vector<2x128xf32>
    %341 = math.tanh %340 : vector<2x128xf32>
    %cst_149 = arith.constant 5.000000e-01 : f32
    %342 = vector.broadcast %cst_149 : f32 to vector<2x128xf32>
    %343 = arith.mulf %342, %341 : vector<2x128xf32>
    %cst_150 = arith.constant 5.000000e-01 : f32
    %344 = vector.broadcast %cst_150 : f32 to vector<2x128xf32>
    %345 = arith.addf %343, %344 : vector<2x128xf32>
    %346 = arith.mulf %335, %274 : vector<2x128xf32>
    %347 = arith.mulf %327, %337 : vector<2x128xf32>
    %348 = arith.addf %346, %347 : vector<2x128xf32>
    %349 = math.tanh %348 : vector<2x128xf32>
    %350 = arith.mulf %345, %349 : vector<2x128xf32>
    %351 = vector.extract_strided_slice %319 {offsets = [0, 0], sizes = [2, 128], strides = [1, 1]} : vector<2x512xf32> to vector<2x128xf32>
    %cst_151 = arith.constant 5.000000e-01 : f32
    %352 = vector.broadcast %cst_151 : f32 to vector<2x128xf32>
    %353 = arith.mulf %352, %351 : vector<2x128xf32>
    %354 = math.tanh %353 : vector<2x128xf32>
    %cst_152 = arith.constant 5.000000e-01 : f32
    %355 = vector.broadcast %cst_152 : f32 to vector<2x128xf32>
    %356 = arith.mulf %355, %354 : vector<2x128xf32>
    %cst_153 = arith.constant 5.000000e-01 : f32
    %357 = vector.broadcast %cst_153 : f32 to vector<2x128xf32>
    %358 = arith.addf %356, %357 : vector<2x128xf32>
    %359 = vector.extract_strided_slice %319 {offsets = [0, 128], sizes = [2, 128], strides = [1, 1]} : vector<2x512xf32> to vector<2x128xf32>
    %cst_154 = arith.constant 5.000000e-01 : f32
    %360 = vector.broadcast %cst_154 : f32 to vector<2x128xf32>
    %361 = arith.mulf %360, %359 : vector<2x128xf32>
    %362 = math.tanh %361 : vector<2x128xf32>
    %cst_155 = arith.constant 5.000000e-01 : f32
    %363 = vector.broadcast %cst_155 : f32 to vector<2x128xf32>
    %364 = arith.mulf %363, %362 : vector<2x128xf32>
    %cst_156 = arith.constant 5.000000e-01 : f32
    %365 = vector.broadcast %cst_156 : f32 to vector<2x128xf32>
    %366 = arith.addf %364, %365 : vector<2x128xf32>
    %367 = vector.extract_strided_slice %319 {offsets = [0, 256], sizes = [2, 128], strides = [1, 1]} : vector<2x512xf32> to vector<2x128xf32>
    %368 = math.tanh %367 : vector<2x128xf32>
    %369 = vector.extract_strided_slice %319 {offsets = [0, 384], sizes = [2, 128], strides = [1, 1]} : vector<2x512xf32> to vector<2x128xf32>
    %cst_157 = arith.constant 5.000000e-01 : f32
    %370 = vector.broadcast %cst_157 : f32 to vector<2x128xf32>
    %371 = arith.mulf %370, %369 : vector<2x128xf32>
    %372 = math.tanh %371 : vector<2x128xf32>
    %cst_158 = arith.constant 5.000000e-01 : f32
    %373 = vector.broadcast %cst_158 : f32 to vector<2x128xf32>
    %374 = arith.mulf %373, %372 : vector<2x128xf32>
    %cst_159 = arith.constant 5.000000e-01 : f32
    %375 = vector.broadcast %cst_159 : f32 to vector<2x128xf32>
    %376 = arith.addf %374, %375 : vector<2x128xf32>
    %377 = arith.mulf %366, %305 : vector<2x128xf32>
    %378 = arith.mulf %358, %368 : vector<2x128xf32>
    %379 = arith.addf %377, %378 : vector<2x128xf32>
    %380 = math.tanh %379 : vector<2x128xf32>
    %381 = arith.mulf %376, %380 : vector<2x128xf32>
    %c8_160 = arith.constant 8 : index
    %c0_161 = arith.constant 0 : index
    %382 = vector.load %arg18[%c8_160, %c0_161] : memref<16x256xf32, #tpu.memory_space<vmem>>, vector<2x128xf32>
    tpu.vector_store %arg18[%c8_160, %c0_161], %350 {strides = array<i32>} : memref<16x256xf32, #tpu.memory_space<vmem>>, vector<2x128xf32>,
    %c6_162 = arith.constant 6 : index
    %c128_163 = arith.constant 128 : index
    %383 = vector.load %arg18[%c6_162, %c128_163] : memref<16x256xf32, #tpu.memory_space<vmem>>, vector<2x128xf32>
    tpu.vector_store %arg18[%c6_162, %c128_163], %381 {strides = array<i32>} : memref<16x256xf32, #tpu.memory_space<vmem>>, vector<2x128xf32>,
    %c10_164 = arith.constant 10 : index
    %c0_165 = arith.constant 0 : index
    %384 = vector.load %arg17[%c10_164, %c0_165] : memref<16x1024xf32, #tpu.memory_space<vmem>>, vector<2x512xf32>
    %c0_166 = arith.constant 0 : index
    %c0_167 = arith.constant 0 : index
    %385 = vector.load %arg5[%c0_166, %c0_167] : memref<128x512xbf16, #tpu.memory_space<vmem>>, vector<128x512xbf16>
    %386 = arith.truncf %350 : vector<2x128xf32> to vector<2x128xbf16>
    %cst_168 = arith.constant dense<0.000000e+00> : vector<2x512xf32>
    %387 = tpu.matmul %386, %385, %cst_168 {dimension_numbers = #tpu.dot_dimension_numbers<[1], [0], [0], [1], [0, 0, 1, 1], [], []>} : vector<2x128xbf16>, vector<128x512xbf16>, vector<2x512xf32> -> vector<2x512xf32>
    %388 = arith.addf %384, %387 : vector<2x512xf32>
    %c4_169 = arith.constant 4 : index
    %c512_170 = arith.constant 512 : index
    %389 = vector.load %arg17[%c4_169, %c512_170] : memref<16x1024xf32, #tpu.memory_space<vmem>>, vector<2x512xf32>
    %c0_171 = arith.constant 0 : index
    %c0_172 = arith.constant 0 : index
    %390 = vector.load %arg6[%c0_171, %c0_172] : memref<128x512xbf16, #tpu.memory_space<vmem>>, vector<128x512xbf16>
    %391 = arith.truncf %381 : vector<2x128xf32> to vector<2x128xbf16>
    %cst_173 = arith.constant dense<0.000000e+00> : vector<2x512xf32>
    %392 = tpu.matmul %391, %390, %cst_173 {dimension_numbers = #tpu.dot_dimension_numbers<[1], [0], [0], [1], [0, 0, 1, 1], [], []>} : vector<2x128xbf16>, vector<128x512xbf16>, vector<2x512xf32> -> vector<2x512xf32>
    %393 = arith.addf %389, %392 : vector<2x512xf32>
    %394 = vector.extract_strided_slice %388 {offsets = [0, 0], sizes = [2, 128], strides = [1, 1]} : vector<2x512xf32> to vector<2x128xf32>
    %cst_174 = arith.constant 5.000000e-01 : f32
    %395 = vector.broadcast %cst_174 : f32 to vector<2x128xf32>
    %396 = arith.mulf %395, %394 : vector<2x128xf32>
    %397 = math.tanh %396 : vector<2x128xf32>
    %cst_175 = arith.constant 5.000000e-01 : f32
    %398 = vector.broadcast %cst_175 : f32 to vector<2x128xf32>
    %399 = arith.mulf %398, %397 : vector<2x128xf32>
    %cst_176 = arith.constant 5.000000e-01 : f32
    %400 = vector.broadcast %cst_176 : f32 to vector<2x128xf32>
    %401 = arith.addf %399, %400 : vector<2x128xf32>
    %402 = vector.extract_strided_slice %388 {offsets = [0, 128], sizes = [2, 128], strides = [1, 1]} : vector<2x512xf32> to vector<2x128xf32>
    %cst_177 = arith.constant 5.000000e-01 : f32
    %403 = vector.broadcast %cst_177 : f32 to vector<2x128xf32>
    %404 = arith.mulf %403, %402 : vector<2x128xf32>
    %405 = math.tanh %404 : vector<2x128xf32>
    %cst_178 = arith.constant 5.000000e-01 : f32
    %406 = vector.broadcast %cst_178 : f32 to vector<2x128xf32>
    %407 = arith.mulf %406, %405 : vector<2x128xf32>
    %cst_179 = arith.constant 5.000000e-01 : f32
    %408 = vector.broadcast %cst_179 : f32 to vector<2x128xf32>
    %409 = arith.addf %407, %408 : vector<2x128xf32>
    %410 = vector.extract_strided_slice %388 {offsets = [0, 256], sizes = [2, 128], strides = [1, 1]} : vector<2x512xf32> to vector<2x128xf32>
    %411 = math.tanh %410 : vector<2x128xf32>
    %412 = vector.extract_strided_slice %388 {offsets = [0, 384], sizes = [2, 128], strides = [1, 1]} : vector<2x512xf32> to vector<2x128xf32>
    %cst_180 = arith.constant 5.000000e-01 : f32
    %413 = vector.broadcast %cst_180 : f32 to vector<2x128xf32>
    %414 = arith.mulf %413, %412 : vector<2x128xf32>
    %415 = math.tanh %414 : vector<2x128xf32>
    %cst_181 = arith.constant 5.000000e-01 : f32
    %416 = vector.broadcast %cst_181 : f32 to vector<2x128xf32>
    %417 = arith.mulf %416, %415 : vector<2x128xf32>
    %cst_182 = arith.constant 5.000000e-01 : f32
    %418 = vector.broadcast %cst_182 : f32 to vector<2x128xf32>
    %419 = arith.addf %417, %418 : vector<2x128xf32>
    %420 = arith.mulf %409, %348 : vector<2x128xf32>
    %421 = arith.mulf %401, %411 : vector<2x128xf32>
    %422 = arith.addf %420, %421 : vector<2x128xf32>
    %423 = math.tanh %422 : vector<2x128xf32>
    %424 = arith.mulf %419, %423 : vector<2x128xf32>
    %425 = vector.extract_strided_slice %393 {offsets = [0, 0], sizes = [2, 128], strides = [1, 1]} : vector<2x512xf32> to vector<2x128xf32>
    %cst_183 = arith.constant 5.000000e-01 : f32
    %426 = vector.broadcast %cst_183 : f32 to vector<2x128xf32>
    %427 = arith.mulf %426, %425 : vector<2x128xf32>
    %428 = math.tanh %427 : vector<2x128xf32>
    %cst_184 = arith.constant 5.000000e-01 : f32
    %429 = vector.broadcast %cst_184 : f32 to vector<2x128xf32>
    %430 = arith.mulf %429, %428 : vector<2x128xf32>
    %cst_185 = arith.constant 5.000000e-01 : f32
    %431 = vector.broadcast %cst_185 : f32 to vector<2x128xf32>
    %432 = arith.addf %430, %431 : vector<2x128xf32>
    %433 = vector.extract_strided_slice %393 {offsets = [0, 128], sizes = [2, 128], strides = [1, 1]} : vector<2x512xf32> to vector<2x128xf32>
    %cst_186 = arith.constant 5.000000e-01 : f32
    %434 = vector.broadcast %cst_186 : f32 to vector<2x128xf32>
    %435 = arith.mulf %434, %433 : vector<2x128xf32>
    %436 = math.tanh %435 : vector<2x128xf32>
    %cst_187 = arith.constant 5.000000e-01 : f32
    %437 = vector.broadcast %cst_187 : f32 to vector<2x128xf32>
    %438 = arith.mulf %437, %436 : vector<2x128xf32>
    %cst_188 = arith.constant 5.000000e-01 : f32
    %439 = vector.broadcast %cst_188 : f32 to vector<2x128xf32>
    %440 = arith.addf %438, %439 : vector<2x128xf32>
    %441 = vector.extract_strided_slice %393 {offsets = [0, 256], sizes = [2, 128], strides = [1, 1]} : vector<2x512xf32> to vector<2x128xf32>
    %442 = math.tanh %441 : vector<2x128xf32>
    %443 = vector.extract_strided_slice %393 {offsets = [0, 384], sizes = [2, 128], strides = [1, 1]} : vector<2x512xf32> to vector<2x128xf32>
    %cst_189 = arith.constant 5.000000e-01 : f32
    %444 = vector.broadcast %cst_189 : f32 to vector<2x128xf32>
    %445 = arith.mulf %444, %443 : vector<2x128xf32>
    %446 = math.tanh %445 : vector<2x128xf32>
    %cst_190 = arith.constant 5.000000e-01 : f32
    %447 = vector.broadcast %cst_190 : f32 to vector<2x128xf32>
    %448 = arith.mulf %447, %446 : vector<2x128xf32>
    %cst_191 = arith.constant 5.000000e-01 : f32
    %449 = vector.broadcast %cst_191 : f32 to vector<2x128xf32>
    %450 = arith.addf %448, %449 : vector<2x128xf32>
    %451 = arith.mulf %440, %379 : vector<2x128xf32>
    %452 = arith.mulf %432, %442 : vector<2x128xf32>
    %453 = arith.addf %451, %452 : vector<2x128xf32>
    %454 = math.tanh %453 : vector<2x128xf32>
    %455 = arith.mulf %450, %454 : vector<2x128xf32>
    %c10_192 = arith.constant 10 : index
    %c0_193 = arith.constant 0 : index
    %456 = vector.load %arg18[%c10_192, %c0_193] : memref<16x256xf32, #tpu.memory_space<vmem>>, vector<2x128xf32>
    tpu.vector_store %arg18[%c10_192, %c0_193], %424 {strides = array<i32>} : memref<16x256xf32, #tpu.memory_space<vmem>>, vector<2x128xf32>,
    %c4_194 = arith.constant 4 : index
    %c128_195 = arith.constant 128 : index
    %457 = vector.load %arg18[%c4_194, %c128_195] : memref<16x256xf32, #tpu.memory_space<vmem>>, vector<2x128xf32>
    tpu.vector_store %arg18[%c4_194, %c128_195], %455 {strides = array<i32>} : memref<16x256xf32, #tpu.memory_space<vmem>>, vector<2x128xf32>,
    %c12_196 = arith.constant 12 : index
    %c0_197 = arith.constant 0 : index
    %458 = vector.load %arg17[%c12_196, %c0_197] : memref<16x1024xf32, #tpu.memory_space<vmem>>, vector<2x512xf32>
    %c0_198 = arith.constant 0 : index
    %c0_199 = arith.constant 0 : index
    %459 = vector.load %arg5[%c0_198, %c0_199] : memref<128x512xbf16, #tpu.memory_space<vmem>>, vector<128x512xbf16>
    %460 = arith.truncf %424 : vector<2x128xf32> to vector<2x128xbf16>
    %cst_200 = arith.constant dense<0.000000e+00> : vector<2x512xf32>
    %461 = tpu.matmul %460, %459, %cst_200 {dimension_numbers = #tpu.dot_dimension_numbers<[1], [0], [0], [1], [0, 0, 1, 1], [], []>} : vector<2x128xbf16>, vector<128x512xbf16>, vector<2x512xf32> -> vector<2x512xf32>
    %462 = arith.addf %458, %461 : vector<2x512xf32>
    %c2_201 = arith.constant 2 : index
    %c512_202 = arith.constant 512 : index
    %463 = vector.load %arg17[%c2_201, %c512_202] : memref<16x1024xf32, #tpu.memory_space<vmem>>, vector<2x512xf32>
    %c0_203 = arith.constant 0 : index
    %c0_204 = arith.constant 0 : index
    %464 = vector.load %arg6[%c0_203, %c0_204] : memref<128x512xbf16, #tpu.memory_space<vmem>>, vector<128x512xbf16>
    %465 = arith.truncf %455 : vector<2x128xf32> to vector<2x128xbf16>
    %cst_205 = arith.constant dense<0.000000e+00> : vector<2x512xf32>
    %466 = tpu.matmul %465, %464, %cst_205 {dimension_numbers = #tpu.dot_dimension_numbers<[1], [0], [0], [1], [0, 0, 1, 1], [], []>} : vector<2x128xbf16>, vector<128x512xbf16>, vector<2x512xf32> -> vector<2x512xf32>
    %467 = arith.addf %463, %466 : vector<2x512xf32>
    %468 = vector.extract_strided_slice %462 {offsets = [0, 0], sizes = [2, 128], strides = [1, 1]} : vector<2x512xf32> to vector<2x128xf32>
    %cst_206 = arith.constant 5.000000e-01 : f32
    %469 = vector.broadcast %cst_206 : f32 to vector<2x128xf32>
    %470 = arith.mulf %469, %468 : vector<2x128xf32>
    %471 = math.tanh %470 : vector<2x128xf32>
    %cst_207 = arith.constant 5.000000e-01 : f32
    %472 = vector.broadcast %cst_207 : f32 to vector<2x128xf32>
    %473 = arith.mulf %472, %471 : vector<2x128xf32>
    %cst_208 = arith.constant 5.000000e-01 : f32
    %474 = vector.broadcast %cst_208 : f32 to vector<2x128xf32>
    %475 = arith.addf %473, %474 : vector<2x128xf32>
    %476 = vector.extract_strided_slice %462 {offsets = [0, 128], sizes = [2, 128], strides = [1, 1]} : vector<2x512xf32> to vector<2x128xf32>
    %cst_209 = arith.constant 5.000000e-01 : f32
    %477 = vector.broadcast %cst_209 : f32 to vector<2x128xf32>
    %478 = arith.mulf %477, %476 : vector<2x128xf32>
    %479 = math.tanh %478 : vector<2x128xf32>
    %cst_210 = arith.constant 5.000000e-01 : f32
    %480 = vector.broadcast %cst_210 : f32 to vector<2x128xf32>
    %481 = arith.mulf %480, %479 : vector<2x128xf32>
    %cst_211 = arith.constant 5.000000e-01 : f32
    %482 = vector.broadcast %cst_211 : f32 to vector<2x128xf32>
    %483 = arith.addf %481, %482 : vector<2x128xf32>
    %484 = vector.extract_strided_slice %462 {offsets = [0, 256], sizes = [2, 128], strides = [1, 1]} : vector<2x512xf32> to vector<2x128xf32>
    %485 = math.tanh %484 : vector<2x128xf32>
    %486 = vector.extract_strided_slice %462 {offsets = [0, 384], sizes = [2, 128], strides = [1, 1]} : vector<2x512xf32> to vector<2x128xf32>
    %cst_212 = arith.constant 5.000000e-01 : f32
    %487 = vector.broadcast %cst_212 : f32 to vector<2x128xf32>
    %488 = arith.mulf %487, %486 : vector<2x128xf32>
    %489 = math.tanh %488 : vector<2x128xf32>
    %cst_213 = arith.constant 5.000000e-01 : f32
    %490 = vector.broadcast %cst_213 : f32 to vector<2x128xf32>
    %491 = arith.mulf %490, %489 : vector<2x128xf32>
    %cst_214 = arith.constant 5.000000e-01 : f32
    %492 = vector.broadcast %cst_214 : f32 to vector<2x128xf32>
    %493 = arith.addf %491, %492 : vector<2x128xf32>
    %494 = arith.mulf %483, %422 : vector<2x128xf32>
    %495 = arith.mulf %475, %485 : vector<2x128xf32>
    %496 = arith.addf %494, %495 : vector<2x128xf32>
    %497 = math.tanh %496 : vector<2x128xf32>
    %498 = arith.mulf %493, %497 : vector<2x128xf32>
    %499 = vector.extract_strided_slice %467 {offsets = [0, 0], sizes = [2, 128], strides = [1, 1]} : vector<2x512xf32> to vector<2x128xf32>
    %cst_215 = arith.constant 5.000000e-01 : f32
    %500 = vector.broadcast %cst_215 : f32 to vector<2x128xf32>
    %501 = arith.mulf %500, %499 : vector<2x128xf32>
    %502 = math.tanh %501 : vector<2x128xf32>
    %cst_216 = arith.constant 5.000000e-01 : f32
    %503 = vector.broadcast %cst_216 : f32 to vector<2x128xf32>
    %504 = arith.mulf %503, %502 : vector<2x128xf32>
    %cst_217 = arith.constant 5.000000e-01 : f32
    %505 = vector.broadcast %cst_217 : f32 to vector<2x128xf32>
    %506 = arith.addf %504, %505 : vector<2x128xf32>
    %507 = vector.extract_strided_slice %467 {offsets = [0, 128], sizes = [2, 128], strides = [1, 1]} : vector<2x512xf32> to vector<2x128xf32>
    %cst_218 = arith.constant 5.000000e-01 : f32
    %508 = vector.broadcast %cst_218 : f32 to vector<2x128xf32>
    %509 = arith.mulf %508, %507 : vector<2x128xf32>
    %510 = math.tanh %509 : vector<2x128xf32>
    %cst_219 = arith.constant 5.000000e-01 : f32
    %511 = vector.broadcast %cst_219 : f32 to vector<2x128xf32>
    %512 = arith.mulf %511, %510 : vector<2x128xf32>
    %cst_220 = arith.constant 5.000000e-01 : f32
    %513 = vector.broadcast %cst_220 : f32 to vector<2x128xf32>
    %514 = arith.addf %512, %513 : vector<2x128xf32>
    %515 = vector.extract_strided_slice %467 {offsets = [0, 256], sizes = [2, 128], strides = [1, 1]} : vector<2x512xf32> to vector<2x128xf32>
    %516 = math.tanh %515 : vector<2x128xf32>
    %517 = vector.extract_strided_slice %467 {offsets = [0, 384], sizes = [2, 128], strides = [1, 1]} : vector<2x512xf32> to vector<2x128xf32>
    %cst_221 = arith.constant 5.000000e-01 : f32
    %518 = vector.broadcast %cst_221 : f32 to vector<2x128xf32>
    %519 = arith.mulf %518, %517 : vector<2x128xf32>
    %520 = math.tanh %519 : vector<2x128xf32>
    %cst_222 = arith.constant 5.000000e-01 : f32
    %521 = vector.broadcast %cst_222 : f32 to vector<2x128xf32>
    %522 = arith.mulf %521, %520 : vector<2x128xf32>
    %cst_223 = arith.constant 5.000000e-01 : f32
    %523 = vector.broadcast %cst_223 : f32 to vector<2x128xf32>
    %524 = arith.addf %522, %523 : vector<2x128xf32>
    %525 = arith.mulf %514, %453 : vector<2x128xf32>
    %526 = arith.mulf %506, %516 : vector<2x128xf32>
    %527 = arith.addf %525, %526 : vector<2x128xf32>
    %528 = math.tanh %527 : vector<2x128xf32>
    %529 = arith.mulf %524, %528 : vector<2x128xf32>
    %c12_224 = arith.constant 12 : index
    %c0_225 = arith.constant 0 : index
    %530 = vector.load %arg18[%c12_224, %c0_225] : memref<16x256xf32, #tpu.memory_space<vmem>>, vector<2x128xf32>
    tpu.vector_store %arg18[%c12_224, %c0_225], %498 {strides = array<i32>} : memref<16x256xf32, #tpu.memory_space<vmem>>, vector<2x128xf32>,
    %c2_226 = arith.constant 2 : index
    %c128_227 = arith.constant 128 : index
    %531 = vector.load %arg18[%c2_226, %c128_227] : memref<16x256xf32, #tpu.memory_space<vmem>>, vector<2x128xf32>
    tpu.vector_store %arg18[%c2_226, %c128_227], %529 {strides = array<i32>} : memref<16x256xf32, #tpu.memory_space<vmem>>, vector<2x128xf32>,
    %c14_228 = arith.constant 14 : index
    %c0_229 = arith.constant 0 : index
    %532 = vector.load %arg17[%c14_228, %c0_229] : memref<16x1024xf32, #tpu.memory_space<vmem>>, vector<2x512xf32>
    %c0_230 = arith.constant 0 : index
    %c0_231 = arith.constant 0 : index
    %533 = vector.load %arg5[%c0_230, %c0_231] : memref<128x512xbf16, #tpu.memory_space<vmem>>, vector<128x512xbf16>
    %534 = arith.truncf %498 : vector<2x128xf32> to vector<2x128xbf16>
    %cst_232 = arith.constant dense<0.000000e+00> : vector<2x512xf32>
    %535 = tpu.matmul %534, %533, %cst_232 {dimension_numbers = #tpu.dot_dimension_numbers<[1], [0], [0], [1], [0, 0, 1, 1], [], []>} : vector<2x128xbf16>, vector<128x512xbf16>, vector<2x512xf32> -> vector<2x512xf32>
    %536 = arith.addf %532, %535 : vector<2x512xf32>
    %c0_233 = arith.constant 0 : index
    %c512_234 = arith.constant 512 : index
    %537 = vector.load %arg17[%c0_233, %c512_234] : memref<16x1024xf32, #tpu.memory_space<vmem>>, vector<2x512xf32>
    %c0_235 = arith.constant 0 : index
    %c0_236 = arith.constant 0 : index
    %538 = vector.load %arg6[%c0_235, %c0_236] : memref<128x512xbf16, #tpu.memory_space<vmem>>, vector<128x512xbf16>
    %539 = arith.truncf %529 : vector<2x128xf32> to vector<2x128xbf16>
    %cst_237 = arith.constant dense<0.000000e+00> : vector<2x512xf32>
    %540 = tpu.matmul %539, %538, %cst_237 {dimension_numbers = #tpu.dot_dimension_numbers<[1], [0], [0], [1], [0, 0, 1, 1], [], []>} : vector<2x128xbf16>, vector<128x512xbf16>, vector<2x512xf32> -> vector<2x512xf32>
    %541 = arith.addf %537, %540 : vector<2x512xf32>
    %542 = vector.extract_strided_slice %536 {offsets = [0, 0], sizes = [2, 128], strides = [1, 1]} : vector<2x512xf32> to vector<2x128xf32>
    %cst_238 = arith.constant 5.000000e-01 : f32
    %543 = vector.broadcast %cst_238 : f32 to vector<2x128xf32>
    %544 = arith.mulf %543, %542 : vector<2x128xf32>
    %545 = math.tanh %544 : vector<2x128xf32>
    %cst_239 = arith.constant 5.000000e-01 : f32
    %546 = vector.broadcast %cst_239 : f32 to vector<2x128xf32>
    %547 = arith.mulf %546, %545 : vector<2x128xf32>
    %cst_240 = arith.constant 5.000000e-01 : f32
    %548 = vector.broadcast %cst_240 : f32 to vector<2x128xf32>
    %549 = arith.addf %547, %548 : vector<2x128xf32>
    %550 = vector.extract_strided_slice %536 {offsets = [0, 128], sizes = [2, 128], strides = [1, 1]} : vector<2x512xf32> to vector<2x128xf32>
    %cst_241 = arith.constant 5.000000e-01 : f32
    %551 = vector.broadcast %cst_241 : f32 to vector<2x128xf32>
    %552 = arith.mulf %551, %550 : vector<2x128xf32>
    %553 = math.tanh %552 : vector<2x128xf32>
    %cst_242 = arith.constant 5.000000e-01 : f32
    %554 = vector.broadcast %cst_242 : f32 to vector<2x128xf32>
    %555 = arith.mulf %554, %553 : vector<2x128xf32>
    %cst_243 = arith.constant 5.000000e-01 : f32
    %556 = vector.broadcast %cst_243 : f32 to vector<2x128xf32>
    %557 = arith.addf %555, %556 : vector<2x128xf32>
    %558 = vector.extract_strided_slice %536 {offsets = [0, 256], sizes = [2, 128], strides = [1, 1]} : vector<2x512xf32> to vector<2x128xf32>
    %559 = math.tanh %558 : vector<2x128xf32>
    %560 = vector.extract_strided_slice %536 {offsets = [0, 384], sizes = [2, 128], strides = [1, 1]} : vector<2x512xf32> to vector<2x128xf32>
    %cst_244 = arith.constant 5.000000e-01 : f32
    %561 = vector.broadcast %cst_244 : f32 to vector<2x128xf32>
    %562 = arith.mulf %561, %560 : vector<2x128xf32>
    %563 = math.tanh %562 : vector<2x128xf32>
    %cst_245 = arith.constant 5.000000e-01 : f32
    %564 = vector.broadcast %cst_245 : f32 to vector<2x128xf32>
    %565 = arith.mulf %564, %563 : vector<2x128xf32>
    %cst_246 = arith.constant 5.000000e-01 : f32
    %566 = vector.broadcast %cst_246 : f32 to vector<2x128xf32>
    %567 = arith.addf %565, %566 : vector<2x128xf32>
    %568 = arith.mulf %557, %496 : vector<2x128xf32>
    %569 = arith.mulf %549, %559 : vector<2x128xf32>
    %570 = arith.addf %568, %569 : vector<2x128xf32>
    %571 = math.tanh %570 : vector<2x128xf32>
    %572 = arith.mulf %567, %571 : vector<2x128xf32>
    %573 = vector.extract_strided_slice %541 {offsets = [0, 0], sizes = [2, 128], strides = [1, 1]} : vector<2x512xf32> to vector<2x128xf32>
    %cst_247 = arith.constant 5.000000e-01 : f32
    %574 = vector.broadcast %cst_247 : f32 to vector<2x128xf32>
    %575 = arith.mulf %574, %573 : vector<2x128xf32>
    %576 = math.tanh %575 : vector<2x128xf32>
    %cst_248 = arith.constant 5.000000e-01 : f32
    %577 = vector.broadcast %cst_248 : f32 to vector<2x128xf32>
    %578 = arith.mulf %577, %576 : vector<2x128xf32>
    %cst_249 = arith.constant 5.000000e-01 : f32
    %579 = vector.broadcast %cst_249 : f32 to vector<2x128xf32>
    %580 = arith.addf %578, %579 : vector<2x128xf32>
    %581 = vector.extract_strided_slice %541 {offsets = [0, 128], sizes = [2, 128], strides = [1, 1]} : vector<2x512xf32> to vector<2x128xf32>
    %cst_250 = arith.constant 5.000000e-01 : f32
    %582 = vector.broadcast %cst_250 : f32 to vector<2x128xf32>
    %583 = arith.mulf %582, %581 : vector<2x128xf32>
    %584 = math.tanh %583 : vector<2x128xf32>
    %cst_251 = arith.constant 5.000000e-01 : f32
    %585 = vector.broadcast %cst_251 : f32 to vector<2x128xf32>
    %586 = arith.mulf %585, %584 : vector<2x128xf32>
    %cst_252 = arith.constant 5.000000e-01 : f32
    %587 = vector.broadcast %cst_252 : f32 to vector<2x128xf32>
    %588 = arith.addf %586, %587 : vector<2x128xf32>
    %589 = vector.extract_strided_slice %541 {offsets = [0, 256], sizes = [2, 128], strides = [1, 1]} : vector<2x512xf32> to vector<2x128xf32>
    %590 = math.tanh %589 : vector<2x128xf32>
    %591 = vector.extract_strided_slice %541 {offsets = [0, 384], sizes = [2, 128], strides = [1, 1]} : vector<2x512xf32> to vector<2x128xf32>
    %cst_253 = arith.constant 5.000000e-01 : f32
    %592 = vector.broadcast %cst_253 : f32 to vector<2x128xf32>
    %593 = arith.mulf %592, %591 : vector<2x128xf32>
    %594 = math.tanh %593 : vector<2x128xf32>
    %cst_254 = arith.constant 5.000000e-01 : f32
    %595 = vector.broadcast %cst_254 : f32 to vector<2x128xf32>
    %596 = arith.mulf %595, %594 : vector<2x128xf32>
    %cst_255 = arith.constant 5.000000e-01 : f32
    %597 = vector.broadcast %cst_255 : f32 to vector<2x128xf32>
    %598 = arith.addf %596, %597 : vector<2x128xf32>
    %599 = arith.mulf %588, %527 : vector<2x128xf32>
    %600 = arith.mulf %580, %590 : vector<2x128xf32>
    %601 = arith.addf %599, %600 : vector<2x128xf32>
    %602 = math.tanh %601 : vector<2x128xf32>
    %603 = arith.mulf %598, %602 : vector<2x128xf32>
    %c14_256 = arith.constant 14 : index
    %c0_257 = arith.constant 0 : index
    %604 = vector.load %arg18[%c14_256, %c0_257] : memref<16x256xf32, #tpu.memory_space<vmem>>, vector<2x128xf32>
    tpu.vector_store %arg18[%c14_256, %c0_257], %572 {strides = array<i32>} : memref<16x256xf32, #tpu.memory_space<vmem>>, vector<2x128xf32>,
    %c0_258 = arith.constant 0 : index
    %c128_259 = arith.constant 128 : index
    %605 = vector.load %arg18[%c0_258, %c128_259] : memref<16x256xf32, #tpu.memory_space<vmem>>, vector<2x128xf32>
    tpu.vector_store %arg18[%c0_258, %c128_259], %603 {strides = array<i32>} : memref<16x256xf32, #tpu.memory_space<vmem>>, vector<2x128xf32>,
    %c0_260 = arith.constant 0 : index
    %c0_261 = arith.constant 0 : index
    %606 = vector.load %arg18[%c0_260, %c0_261] : memref<16x256xf32, #tpu.memory_space<vmem>>, vector<16x256xf32>
    %c0_262 = arith.constant 0 : index
    %c0_263 = arith.constant 0 : index
    %607 = vector.load %arg7[%c0_262, %c0_263] : memref<256x512xbf16, #tpu.memory_space<vmem>>, vector<256x512xbf16>
    %608 = arith.truncf %606 : vector<16x256xf32> to vector<16x256xbf16>
    %cst_264 = arith.constant dense<0.000000e+00> : vector<16x512xf32>
    %609 = tpu.matmul %608, %607, %cst_264 {dimension_numbers = #tpu.dot_dimension_numbers<[1], [0], [0], [1], [0, 0, 1, 1], [], []>} : vector<16x256xbf16>, vector<256x512xbf16>, vector<16x512xf32> -> vector<16x512xf32>
    %c0_265 = arith.constant 0 : index
    %c0_266 = arith.constant 0 : index
    %610 = vector.load %arg9[%c0_265, %c0_266] : memref<1x512xf32, #tpu.memory_space<vmem>>, vector<1x512xf32>
    %611 = vector.broadcast %610 : vector<1x512xf32> to vector<16x512xf32>
    %612 = arith.addf %609, %611 : vector<16x512xf32>
    %c0_267 = arith.constant 0 : index
    %c0_268 = arith.constant 0 : index
    %613 = vector.load %arg19[%c0_267, %c0_268] : memref<16x512xf32, #tpu.memory_space<vmem>>, vector<16x512xf32>
    tpu.vector_store %arg19[%c0_267, %c0_268], %612 {strides = array<i32>} : memref<16x512xf32, #tpu.memory_space<vmem>>, vector<16x512xf32>,
    %c0_269 = arith.constant 0 : index
    %c0_270 = arith.constant 0 : index
    %614 = vector.load %arg19[%c0_269, %c0_270] : memref<16x512xf32, #tpu.memory_space<vmem>>, vector<2x512xf32>
    %c0_271 = arith.constant 0 : index
    %c0_272 = arith.constant 0 : index
    %615 = vector.load %arg8[%c0_271, %c0_272] : memref<128x512xbf16, #tpu.memory_space<vmem>>, vector<128x512xbf16>
    %616 = arith.truncf %13 : vector<2x128xf32> to vector<2x128xbf16>
    %cst_273 = arith.constant dense<0.000000e+00> : vector<2x512xf32>
    %617 = tpu.matmul %616, %615, %cst_273 {dimension_numbers = #tpu.dot_dimension_numbers<[1], [0], [0], [1], [0, 0, 1, 1], [], []>} : vector<2x128xbf16>, vector<128x512xbf16>, vector<2x512xf32> -> vector<2x512xf32>
    %618 = arith.addf %614, %617 : vector<2x512xf32>
    %619 = vector.extract_strided_slice %618 {offsets = [0, 0], sizes = [2, 128], strides = [1, 1]} : vector<2x512xf32> to vector<2x128xf32>
    %cst_274 = arith.constant 5.000000e-01 : f32
    %620 = vector.broadcast %cst_274 : f32 to vector<2x128xf32>
    %621 = arith.mulf %620, %619 : vector<2x128xf32>
    %622 = math.tanh %621 : vector<2x128xf32>
    %cst_275 = arith.constant 5.000000e-01 : f32
    %623 = vector.broadcast %cst_275 : f32 to vector<2x128xf32>
    %624 = arith.mulf %623, %622 : vector<2x128xf32>
    %cst_276 = arith.constant 5.000000e-01 : f32
    %625 = vector.broadcast %cst_276 : f32 to vector<2x128xf32>
    %626 = arith.addf %624, %625 : vector<2x128xf32>
    %627 = vector.extract_strided_slice %618 {offsets = [0, 128], sizes = [2, 128], strides = [1, 1]} : vector<2x512xf32> to vector<2x128xf32>
    %cst_277 = arith.constant 5.000000e-01 : f32
    %628 = vector.broadcast %cst_277 : f32 to vector<2x128xf32>
    %629 = arith.mulf %628, %627 : vector<2x128xf32>
    %630 = math.tanh %629 : vector<2x128xf32>
    %cst_278 = arith.constant 5.000000e-01 : f32
    %631 = vector.broadcast %cst_278 : f32 to vector<2x128xf32>
    %632 = arith.mulf %631, %630 : vector<2x128xf32>
    %cst_279 = arith.constant 5.000000e-01 : f32
    %633 = vector.broadcast %cst_279 : f32 to vector<2x128xf32>
    %634 = arith.addf %632, %633 : vector<2x128xf32>
    %635 = vector.extract_strided_slice %618 {offsets = [0, 256], sizes = [2, 128], strides = [1, 1]} : vector<2x512xf32> to vector<2x128xf32>
    %636 = math.tanh %635 : vector<2x128xf32>
    %637 = vector.extract_strided_slice %618 {offsets = [0, 384], sizes = [2, 128], strides = [1, 1]} : vector<2x512xf32> to vector<2x128xf32>
    %cst_280 = arith.constant 5.000000e-01 : f32
    %638 = vector.broadcast %cst_280 : f32 to vector<2x128xf32>
    %639 = arith.mulf %638, %637 : vector<2x128xf32>
    %640 = math.tanh %639 : vector<2x128xf32>
    %cst_281 = arith.constant 5.000000e-01 : f32
    %641 = vector.broadcast %cst_281 : f32 to vector<2x128xf32>
    %642 = arith.mulf %641, %640 : vector<2x128xf32>
    %cst_282 = arith.constant 5.000000e-01 : f32
    %643 = vector.broadcast %cst_282 : f32 to vector<2x128xf32>
    %644 = arith.addf %642, %643 : vector<2x128xf32>
    %645 = arith.mulf %634, %13 : vector<2x128xf32>
    %646 = arith.mulf %626, %636 : vector<2x128xf32>
    %647 = arith.addf %645, %646 : vector<2x128xf32>
    %648 = math.tanh %647 : vector<2x128xf32>
    %649 = arith.mulf %644, %648 : vector<2x128xf32>
    %c2_283 = arith.constant 2 : index
    %c0_284 = arith.constant 0 : index
    %650 = vector.load %arg19[%c2_283, %c0_284] : memref<16x512xf32, #tpu.memory_space<vmem>>, vector<2x512xf32>
    %c0_285 = arith.constant 0 : index
    %c0_286 = arith.constant 0 : index
    %651 = vector.load %arg8[%c0_285, %c0_286] : memref<128x512xbf16, #tpu.memory_space<vmem>>, vector<128x512xbf16>
    %652 = arith.truncf %649 : vector<2x128xf32> to vector<2x128xbf16>
    %cst_287 = arith.constant dense<0.000000e+00> : vector<2x512xf32>
    %653 = tpu.matmul %652, %651, %cst_287 {dimension_numbers = #tpu.dot_dimension_numbers<[1], [0], [0], [1], [0, 0, 1, 1], [], []>} : vector<2x128xbf16>, vector<128x512xbf16>, vector<2x512xf32> -> vector<2x512xf32>
    %654 = arith.addf %650, %653 : vector<2x512xf32>
    %655 = vector.extract_strided_slice %654 {offsets = [0, 0], sizes = [2, 128], strides = [1, 1]} : vector<2x512xf32> to vector<2x128xf32>
    %cst_288 = arith.constant 5.000000e-01 : f32
    %656 = vector.broadcast %cst_288 : f32 to vector<2x128xf32>
    %657 = arith.mulf %656, %655 : vector<2x128xf32>
    %658 = math.tanh %657 : vector<2x128xf32>
    %cst_289 = arith.constant 5.000000e-01 : f32
    %659 = vector.broadcast %cst_289 : f32 to vector<2x128xf32>
    %660 = arith.mulf %659, %658 : vector<2x128xf32>
    %cst_290 = arith.constant 5.000000e-01 : f32
    %661 = vector.broadcast %cst_290 : f32 to vector<2x128xf32>
    %662 = arith.addf %660, %661 : vector<2x128xf32>
    %663 = vector.extract_strided_slice %654 {offsets = [0, 128], sizes = [2, 128], strides = [1, 1]} : vector<2x512xf32> to vector<2x128xf32>
    %cst_291 = arith.constant 5.000000e-01 : f32
    %664 = vector.broadcast %cst_291 : f32 to vector<2x128xf32>
    %665 = arith.mulf %664, %663 : vector<2x128xf32>
    %666 = math.tanh %665 : vector<2x128xf32>
    %cst_292 = arith.constant 5.000000e-01 : f32
    %667 = vector.broadcast %cst_292 : f32 to vector<2x128xf32>
    %668 = arith.mulf %667, %666 : vector<2x128xf32>
    %cst_293 = arith.constant 5.000000e-01 : f32
    %669 = vector.broadcast %cst_293 : f32 to vector<2x128xf32>
    %670 = arith.addf %668, %669 : vector<2x128xf32>
    %671 = vector.extract_strided_slice %654 {offsets = [0, 256], sizes = [2, 128], strides = [1, 1]} : vector<2x512xf32> to vector<2x128xf32>
    %672 = math.tanh %671 : vector<2x128xf32>
    %673 = vector.extract_strided_slice %654 {offsets = [0, 384], sizes = [2, 128], strides = [1, 1]} : vector<2x512xf32> to vector<2x128xf32>
    %cst_294 = arith.constant 5.000000e-01 : f32
    %674 = vector.broadcast %cst_294 : f32 to vector<2x128xf32>
    %675 = arith.mulf %674, %673 : vector<2x128xf32>
    %676 = math.tanh %675 : vector<2x128xf32>
    %cst_295 = arith.constant 5.000000e-01 : f32
    %677 = vector.broadcast %cst_295 : f32 to vector<2x128xf32>
    %678 = arith.mulf %677, %676 : vector<2x128xf32>
    %cst_296 = arith.constant 5.000000e-01 : f32
    %679 = vector.broadcast %cst_296 : f32 to vector<2x128xf32>
    %680 = arith.addf %678, %679 : vector<2x128xf32>
    %681 = arith.mulf %670, %647 : vector<2x128xf32>
    %682 = arith.mulf %662, %672 : vector<2x128xf32>
    %683 = arith.addf %681, %682 : vector<2x128xf32>
    %684 = math.tanh %683 : vector<2x128xf32>
    %685 = arith.mulf %680, %684 : vector<2x128xf32>
    %c4_297 = arith.constant 4 : index
    %c0_298 = arith.constant 0 : index
    %686 = vector.load %arg19[%c4_297, %c0_298] : memref<16x512xf32, #tpu.memory_space<vmem>>, vector<2x512xf32>
    %c0_299 = arith.constant 0 : index
    %c0_300 = arith.constant 0 : index
    %687 = vector.load %arg8[%c0_299, %c0_300] : memref<128x512xbf16, #tpu.memory_space<vmem>>, vector<128x512xbf16>
    %688 = arith.truncf %685 : vector<2x128xf32> to vector<2x128xbf16>
    %cst_301 = arith.constant dense<0.000000e+00> : vector<2x512xf32>
    %689 = tpu.matmul %688, %687, %cst_301 {dimension_numbers = #tpu.dot_dimension_numbers<[1], [0], [0], [1], [0, 0, 1, 1], [], []>} : vector<2x128xbf16>, vector<128x512xbf16>, vector<2x512xf32> -> vector<2x512xf32>
    %690 = arith.addf %686, %689 : vector<2x512xf32>
    %691 = vector.extract_strided_slice %690 {offsets = [0, 0], sizes = [2, 128], strides = [1, 1]} : vector<2x512xf32> to vector<2x128xf32>
    %cst_302 = arith.constant 5.000000e-01 : f32
    %692 = vector.broadcast %cst_302 : f32 to vector<2x128xf32>
    %693 = arith.mulf %692, %691 : vector<2x128xf32>
    %694 = math.tanh %693 : vector<2x128xf32>
    %cst_303 = arith.constant 5.000000e-01 : f32
    %695 = vector.broadcast %cst_303 : f32 to vector<2x128xf32>
    %696 = arith.mulf %695, %694 : vector<2x128xf32>
    %cst_304 = arith.constant 5.000000e-01 : f32
    %697 = vector.broadcast %cst_304 : f32 to vector<2x128xf32>
    %698 = arith.addf %696, %697 : vector<2x128xf32>
    %699 = vector.extract_strided_slice %690 {offsets = [0, 128], sizes = [2, 128], strides = [1, 1]} : vector<2x512xf32> to vector<2x128xf32>
    %cst_305 = arith.constant 5.000000e-01 : f32
    %700 = vector.broadcast %cst_305 : f32 to vector<2x128xf32>
    %701 = arith.mulf %700, %699 : vector<2x128xf32>
    %702 = math.tanh %701 : vector<2x128xf32>
    %cst_306 = arith.constant 5.000000e-01 : f32
    %703 = vector.broadcast %cst_306 : f32 to vector<2x128xf32>
    %704 = arith.mulf %703, %702 : vector<2x128xf32>
    %cst_307 = arith.constant 5.000000e-01 : f32
    %705 = vector.broadcast %cst_307 : f32 to vector<2x128xf32>
    %706 = arith.addf %704, %705 : vector<2x128xf32>
    %707 = vector.extract_strided_slice %690 {offsets = [0, 256], sizes = [2, 128], strides = [1, 1]} : vector<2x512xf32> to vector<2x128xf32>
    %708 = math.tanh %707 : vector<2x128xf32>
    %709 = vector.extract_strided_slice %690 {offsets = [0, 384], sizes = [2, 128], strides = [1, 1]} : vector<2x512xf32> to vector<2x128xf32>
    %cst_308 = arith.constant 5.000000e-01 : f32
    %710 = vector.broadcast %cst_308 : f32 to vector<2x128xf32>
    %711 = arith.mulf %710, %709 : vector<2x128xf32>
    %712 = math.tanh %711 : vector<2x128xf32>
    %cst_309 = arith.constant 5.000000e-01 : f32
    %713 = vector.broadcast %cst_309 : f32 to vector<2x128xf32>
    %714 = arith.mulf %713, %712 : vector<2x128xf32>
    %cst_310 = arith.constant 5.000000e-01 : f32
    %715 = vector.broadcast %cst_310 : f32 to vector<2x128xf32>
    %716 = arith.addf %714, %715 : vector<2x128xf32>
    %717 = arith.mulf %706, %683 : vector<2x128xf32>
    %718 = arith.mulf %698, %708 : vector<2x128xf32>
    %719 = arith.addf %717, %718 : vector<2x128xf32>
    %720 = math.tanh %719 : vector<2x128xf32>
    %721 = arith.mulf %716, %720 : vector<2x128xf32>
    %c6_311 = arith.constant 6 : index
    %c0_312 = arith.constant 0 : index
    %722 = vector.load %arg19[%c6_311, %c0_312] : memref<16x512xf32, #tpu.memory_space<vmem>>, vector<2x512xf32>
    %c0_313 = arith.constant 0 : index
    %c0_314 = arith.constant 0 : index
    %723 = vector.load %arg8[%c0_313, %c0_314] : memref<128x512xbf16, #tpu.memory_space<vmem>>, vector<128x512xbf16>
    %724 = arith.truncf %721 : vector<2x128xf32> to vector<2x128xbf16>
    %cst_315 = arith.constant dense<0.000000e+00> : vector<2x512xf32>
    %725 = tpu.matmul %724, %723, %cst_315 {dimension_numbers = #tpu.dot_dimension_numbers<[1], [0], [0], [1], [0, 0, 1, 1], [], []>} : vector<2x128xbf16>, vector<128x512xbf16>, vector<2x512xf32> -> vector<2x512xf32>
    %726 = arith.addf %722, %725 : vector<2x512xf32>
    %727 = vector.extract_strided_slice %726 {offsets = [0, 0], sizes = [2, 128], strides = [1, 1]} : vector<2x512xf32> to vector<2x128xf32>
    %cst_316 = arith.constant 5.000000e-01 : f32
    %728 = vector.broadcast %cst_316 : f32 to vector<2x128xf32>
    %729 = arith.mulf %728, %727 : vector<2x128xf32>
    %730 = math.tanh %729 : vector<2x128xf32>
    %cst_317 = arith.constant 5.000000e-01 : f32
    %731 = vector.broadcast %cst_317 : f32 to vector<2x128xf32>
    %732 = arith.mulf %731, %730 : vector<2x128xf32>
    %cst_318 = arith.constant 5.000000e-01 : f32
    %733 = vector.broadcast %cst_318 : f32 to vector<2x128xf32>
    %734 = arith.addf %732, %733 : vector<2x128xf32>
    %735 = vector.extract_strided_slice %726 {offsets = [0, 128], sizes = [2, 128], strides = [1, 1]} : vector<2x512xf32> to vector<2x128xf32>
    %cst_319 = arith.constant 5.000000e-01 : f32
    %736 = vector.broadcast %cst_319 : f32 to vector<2x128xf32>
    %737 = arith.mulf %736, %735 : vector<2x128xf32>
    %738 = math.tanh %737 : vector<2x128xf32>
    %cst_320 = arith.constant 5.000000e-01 : f32
    %739 = vector.broadcast %cst_320 : f32 to vector<2x128xf32>
    %740 = arith.mulf %739, %738 : vector<2x128xf32>
    %cst_321 = arith.constant 5.000000e-01 : f32
    %741 = vector.broadcast %cst_321 : f32 to vector<2x128xf32>
    %742 = arith.addf %740, %741 : vector<2x128xf32>
    %743 = vector.extract_strided_slice %726 {offsets = [0, 256], sizes = [2, 128], strides = [1, 1]} : vector<2x512xf32> to vector<2x128xf32>
    %744 = math.tanh %743 : vector<2x128xf32>
    %745 = vector.extract_strided_slice %726 {offsets = [0, 384], sizes = [2, 128], strides = [1, 1]} : vector<2x512xf32> to vector<2x128xf32>
    %cst_322 = arith.constant 5.000000e-01 : f32
    %746 = vector.broadcast %cst_322 : f32 to vector<2x128xf32>
    %747 = arith.mulf %746, %745 : vector<2x128xf32>
    %748 = math.tanh %747 : vector<2x128xf32>
    %cst_323 = arith.constant 5.000000e-01 : f32
    %749 = vector.broadcast %cst_323 : f32 to vector<2x128xf32>
    %750 = arith.mulf %749, %748 : vector<2x128xf32>
    %cst_324 = arith.constant 5.000000e-01 : f32
    %751 = vector.broadcast %cst_324 : f32 to vector<2x128xf32>
    %752 = arith.addf %750, %751 : vector<2x128xf32>
    %753 = arith.mulf %742, %719 : vector<2x128xf32>
    %754 = arith.mulf %734, %744 : vector<2x128xf32>
    %755 = arith.addf %753, %754 : vector<2x128xf32>
    %756 = math.tanh %755 : vector<2x128xf32>
    %757 = arith.mulf %752, %756 : vector<2x128xf32>
    %c8_325 = arith.constant 8 : index
    %c0_326 = arith.constant 0 : index
    %758 = vector.load %arg19[%c8_325, %c0_326] : memref<16x512xf32, #tpu.memory_space<vmem>>, vector<2x512xf32>
    %c0_327 = arith.constant 0 : index
    %c0_328 = arith.constant 0 : index
    %759 = vector.load %arg8[%c0_327, %c0_328] : memref<128x512xbf16, #tpu.memory_space<vmem>>, vector<128x512xbf16>
    %760 = arith.truncf %757 : vector<2x128xf32> to vector<2x128xbf16>
    %cst_329 = arith.constant dense<0.000000e+00> : vector<2x512xf32>
    %761 = tpu.matmul %760, %759, %cst_329 {dimension_numbers = #tpu.dot_dimension_numbers<[1], [0], [0], [1], [0, 0, 1, 1], [], []>} : vector<2x128xbf16>, vector<128x512xbf16>, vector<2x512xf32> -> vector<2x512xf32>
    %762 = arith.addf %758, %761 : vector<2x512xf32>
    %763 = vector.extract_strided_slice %762 {offsets = [0, 0], sizes = [2, 128], strides = [1, 1]} : vector<2x512xf32> to vector<2x128xf32>
    %cst_330 = arith.constant 5.000000e-01 : f32
    %764 = vector.broadcast %cst_330 : f32 to vector<2x128xf32>
    %765 = arith.mulf %764, %763 : vector<2x128xf32>
    %766 = math.tanh %765 : vector<2x128xf32>
    %cst_331 = arith.constant 5.000000e-01 : f32
    %767 = vector.broadcast %cst_331 : f32 to vector<2x128xf32>
    %768 = arith.mulf %767, %766 : vector<2x128xf32>
    %cst_332 = arith.constant 5.000000e-01 : f32
    %769 = vector.broadcast %cst_332 : f32 to vector<2x128xf32>
    %770 = arith.addf %768, %769 : vector<2x128xf32>
    %771 = vector.extract_strided_slice %762 {offsets = [0, 128], sizes = [2, 128], strides = [1, 1]} : vector<2x512xf32> to vector<2x128xf32>
    %cst_333 = arith.constant 5.000000e-01 : f32
    %772 = vector.broadcast %cst_333 : f32 to vector<2x128xf32>
    %773 = arith.mulf %772, %771 : vector<2x128xf32>
    %774 = math.tanh %773 : vector<2x128xf32>
    %cst_334 = arith.constant 5.000000e-01 : f32
    %775 = vector.broadcast %cst_334 : f32 to vector<2x128xf32>
    %776 = arith.mulf %775, %774 : vector<2x128xf32>
    %cst_335 = arith.constant 5.000000e-01 : f32
    %777 = vector.broadcast %cst_335 : f32 to vector<2x128xf32>
    %778 = arith.addf %776, %777 : vector<2x128xf32>
    %779 = vector.extract_strided_slice %762 {offsets = [0, 256], sizes = [2, 128], strides = [1, 1]} : vector<2x512xf32> to vector<2x128xf32>
    %780 = math.tanh %779 : vector<2x128xf32>
    %781 = vector.extract_strided_slice %762 {offsets = [0, 384], sizes = [2, 128], strides = [1, 1]} : vector<2x512xf32> to vector<2x128xf32>
    %cst_336 = arith.constant 5.000000e-01 : f32
    %782 = vector.broadcast %cst_336 : f32 to vector<2x128xf32>
    %783 = arith.mulf %782, %781 : vector<2x128xf32>
    %784 = math.tanh %783 : vector<2x128xf32>
    %cst_337 = arith.constant 5.000000e-01 : f32
    %785 = vector.broadcast %cst_337 : f32 to vector<2x128xf32>
    %786 = arith.mulf %785, %784 : vector<2x128xf32>
    %cst_338 = arith.constant 5.000000e-01 : f32
    %787 = vector.broadcast %cst_338 : f32 to vector<2x128xf32>
    %788 = arith.addf %786, %787 : vector<2x128xf32>
    %789 = arith.mulf %778, %755 : vector<2x128xf32>
    %790 = arith.mulf %770, %780 : vector<2x128xf32>
    %791 = arith.addf %789, %790 : vector<2x128xf32>
    %792 = math.tanh %791 : vector<2x128xf32>
    %793 = arith.mulf %788, %792 : vector<2x128xf32>
    %c10_339 = arith.constant 10 : index
    %c0_340 = arith.constant 0 : index
    %794 = vector.load %arg19[%c10_339, %c0_340] : memref<16x512xf32, #tpu.memory_space<vmem>>, vector<2x512xf32>
    %c0_341 = arith.constant 0 : index
    %c0_342 = arith.constant 0 : index
    %795 = vector.load %arg8[%c0_341, %c0_342] : memref<128x512xbf16, #tpu.memory_space<vmem>>, vector<128x512xbf16>
    %796 = arith.truncf %793 : vector<2x128xf32> to vector<2x128xbf16>
    %cst_343 = arith.constant dense<0.000000e+00> : vector<2x512xf32>
    %797 = tpu.matmul %796, %795, %cst_343 {dimension_numbers = #tpu.dot_dimension_numbers<[1], [0], [0], [1], [0, 0, 1, 1], [], []>} : vector<2x128xbf16>, vector<128x512xbf16>, vector<2x512xf32> -> vector<2x512xf32>
    %798 = arith.addf %794, %797 : vector<2x512xf32>
    %799 = vector.extract_strided_slice %798 {offsets = [0, 0], sizes = [2, 128], strides = [1, 1]} : vector<2x512xf32> to vector<2x128xf32>
    %cst_344 = arith.constant 5.000000e-01 : f32
    %800 = vector.broadcast %cst_344 : f32 to vector<2x128xf32>
    %801 = arith.mulf %800, %799 : vector<2x128xf32>
    %802 = math.tanh %801 : vector<2x128xf32>
    %cst_345 = arith.constant 5.000000e-01 : f32
    %803 = vector.broadcast %cst_345 : f32 to vector<2x128xf32>
    %804 = arith.mulf %803, %802 : vector<2x128xf32>
    %cst_346 = arith.constant 5.000000e-01 : f32
    %805 = vector.broadcast %cst_346 : f32 to vector<2x128xf32>
    %806 = arith.addf %804, %805 : vector<2x128xf32>
    %807 = vector.extract_strided_slice %798 {offsets = [0, 128], sizes = [2, 128], strides = [1, 1]} : vector<2x512xf32> to vector<2x128xf32>
    %cst_347 = arith.constant 5.000000e-01 : f32
    %808 = vector.broadcast %cst_347 : f32 to vector<2x128xf32>
    %809 = arith.mulf %808, %807 : vector<2x128xf32>
    %810 = math.tanh %809 : vector<2x128xf32>
    %cst_348 = arith.constant 5.000000e-01 : f32
    %811 = vector.broadcast %cst_348 : f32 to vector<2x128xf32>
    %812 = arith.mulf %811, %810 : vector<2x128xf32>
    %cst_349 = arith.constant 5.000000e-01 : f32
    %813 = vector.broadcast %cst_349 : f32 to vector<2x128xf32>
    %814 = arith.addf %812, %813 : vector<2x128xf32>
    %815 = vector.extract_strided_slice %798 {offsets = [0, 256], sizes = [2, 128], strides = [1, 1]} : vector<2x512xf32> to vector<2x128xf32>
    %816 = math.tanh %815 : vector<2x128xf32>
    %817 = vector.extract_strided_slice %798 {offsets = [0, 384], sizes = [2, 128], strides = [1, 1]} : vector<2x512xf32> to vector<2x128xf32>
    %cst_350 = arith.constant 5.000000e-01 : f32
    %818 = vector.broadcast %cst_350 : f32 to vector<2x128xf32>
    %819 = arith.mulf %818, %817 : vector<2x128xf32>
    %820 = math.tanh %819 : vector<2x128xf32>
    %cst_351 = arith.constant 5.000000e-01 : f32
    %821 = vector.broadcast %cst_351 : f32 to vector<2x128xf32>
    %822 = arith.mulf %821, %820 : vector<2x128xf32>
    %cst_352 = arith.constant 5.000000e-01 : f32
    %823 = vector.broadcast %cst_352 : f32 to vector<2x128xf32>
    %824 = arith.addf %822, %823 : vector<2x128xf32>
    %825 = arith.mulf %814, %791 : vector<2x128xf32>
    %826 = arith.mulf %806, %816 : vector<2x128xf32>
    %827 = arith.addf %825, %826 : vector<2x128xf32>
    %828 = math.tanh %827 : vector<2x128xf32>
    %829 = arith.mulf %824, %828 : vector<2x128xf32>
    %c12_353 = arith.constant 12 : index
    %c0_354 = arith.constant 0 : index
    %830 = vector.load %arg19[%c12_353, %c0_354] : memref<16x512xf32, #tpu.memory_space<vmem>>, vector<2x512xf32>
    %c0_355 = arith.constant 0 : index
    %c0_356 = arith.constant 0 : index
    %831 = vector.load %arg8[%c0_355, %c0_356] : memref<128x512xbf16, #tpu.memory_space<vmem>>, vector<128x512xbf16>
    %832 = arith.truncf %829 : vector<2x128xf32> to vector<2x128xbf16>
    %cst_357 = arith.constant dense<0.000000e+00> : vector<2x512xf32>
    %833 = tpu.matmul %832, %831, %cst_357 {dimension_numbers = #tpu.dot_dimension_numbers<[1], [0], [0], [1], [0, 0, 1, 1], [], []>} : vector<2x128xbf16>, vector<128x512xbf16>, vector<2x512xf32> -> vector<2x512xf32>
    %834 = arith.addf %830, %833 : vector<2x512xf32>
    %835 = vector.extract_strided_slice %834 {offsets = [0, 0], sizes = [2, 128], strides = [1, 1]} : vector<2x512xf32> to vector<2x128xf32>
    %cst_358 = arith.constant 5.000000e-01 : f32
    %836 = vector.broadcast %cst_358 : f32 to vector<2x128xf32>
    %837 = arith.mulf %836, %835 : vector<2x128xf32>
    %838 = math.tanh %837 : vector<2x128xf32>
    %cst_359 = arith.constant 5.000000e-01 : f32
    %839 = vector.broadcast %cst_359 : f32 to vector<2x128xf32>
    %840 = arith.mulf %839, %838 : vector<2x128xf32>
    %cst_360 = arith.constant 5.000000e-01 : f32
    %841 = vector.broadcast %cst_360 : f32 to vector<2x128xf32>
    %842 = arith.addf %840, %841 : vector<2x128xf32>
    %843 = vector.extract_strided_slice %834 {offsets = [0, 128], sizes = [2, 128], strides = [1, 1]} : vector<2x512xf32> to vector<2x128xf32>
    %cst_361 = arith.constant 5.000000e-01 : f32
    %844 = vector.broadcast %cst_361 : f32 to vector<2x128xf32>
    %845 = arith.mulf %844, %843 : vector<2x128xf32>
    %846 = math.tanh %845 : vector<2x128xf32>
    %cst_362 = arith.constant 5.000000e-01 : f32
    %847 = vector.broadcast %cst_362 : f32 to vector<2x128xf32>
    %848 = arith.mulf %847, %846 : vector<2x128xf32>
    %cst_363 = arith.constant 5.000000e-01 : f32
    %849 = vector.broadcast %cst_363 : f32 to vector<2x128xf32>
    %850 = arith.addf %848, %849 : vector<2x128xf32>
    %851 = vector.extract_strided_slice %834 {offsets = [0, 256], sizes = [2, 128], strides = [1, 1]} : vector<2x512xf32> to vector<2x128xf32>
    %852 = math.tanh %851 : vector<2x128xf32>
    %853 = vector.extract_strided_slice %834 {offsets = [0, 384], sizes = [2, 128], strides = [1, 1]} : vector<2x512xf32> to vector<2x128xf32>
    %cst_364 = arith.constant 5.000000e-01 : f32
    %854 = vector.broadcast %cst_364 : f32 to vector<2x128xf32>
    %855 = arith.mulf %854, %853 : vector<2x128xf32>
    %856 = math.tanh %855 : vector<2x128xf32>
    %cst_365 = arith.constant 5.000000e-01 : f32
    %857 = vector.broadcast %cst_365 : f32 to vector<2x128xf32>
    %858 = arith.mulf %857, %856 : vector<2x128xf32>
    %cst_366 = arith.constant 5.000000e-01 : f32
    %859 = vector.broadcast %cst_366 : f32 to vector<2x128xf32>
    %860 = arith.addf %858, %859 : vector<2x128xf32>
    %861 = arith.mulf %850, %827 : vector<2x128xf32>
    %862 = arith.mulf %842, %852 : vector<2x128xf32>
    %863 = arith.addf %861, %862 : vector<2x128xf32>
    %864 = math.tanh %863 : vector<2x128xf32>
    %865 = arith.mulf %860, %864 : vector<2x128xf32>
    %c14_367 = arith.constant 14 : index
    %c0_368 = arith.constant 0 : index
    %866 = vector.load %arg19[%c14_367, %c0_368] : memref<16x512xf32, #tpu.memory_space<vmem>>, vector<2x512xf32>
    %c0_369 = arith.constant 0 : index
    %c0_370 = arith.constant 0 : index
    %867 = vector.load %arg8[%c0_369, %c0_370] : memref<128x512xbf16, #tpu.memory_space<vmem>>, vector<128x512xbf16>
    %868 = arith.truncf %865 : vector<2x128xf32> to vector<2x128xbf16>
    %cst_371 = arith.constant dense<0.000000e+00> : vector<2x512xf32>
    %869 = tpu.matmul %868, %867, %cst_371 {dimension_numbers = #tpu.dot_dimension_numbers<[1], [0], [0], [1], [0, 0, 1, 1], [], []>} : vector<2x128xbf16>, vector<128x512xbf16>, vector<2x512xf32> -> vector<2x512xf32>
    %870 = arith.addf %866, %869 : vector<2x512xf32>
    %871 = vector.extract_strided_slice %870 {offsets = [0, 0], sizes = [2, 128], strides = [1, 1]} : vector<2x512xf32> to vector<2x128xf32>
    %cst_372 = arith.constant 5.000000e-01 : f32
    %872 = vector.broadcast %cst_372 : f32 to vector<2x128xf32>
    %873 = arith.mulf %872, %871 : vector<2x128xf32>
    %874 = math.tanh %873 : vector<2x128xf32>
    %cst_373 = arith.constant 5.000000e-01 : f32
    %875 = vector.broadcast %cst_373 : f32 to vector<2x128xf32>
    %876 = arith.mulf %875, %874 : vector<2x128xf32>
    %cst_374 = arith.constant 5.000000e-01 : f32
    %877 = vector.broadcast %cst_374 : f32 to vector<2x128xf32>
    %878 = arith.addf %876, %877 : vector<2x128xf32>
    %879 = vector.extract_strided_slice %870 {offsets = [0, 128], sizes = [2, 128], strides = [1, 1]} : vector<2x512xf32> to vector<2x128xf32>
    %cst_375 = arith.constant 5.000000e-01 : f32
    %880 = vector.broadcast %cst_375 : f32 to vector<2x128xf32>
    %881 = arith.mulf %880, %879 : vector<2x128xf32>
    %882 = math.tanh %881 : vector<2x128xf32>
    %cst_376 = arith.constant 5.000000e-01 : f32
    %883 = vector.broadcast %cst_376 : f32 to vector<2x128xf32>
    %884 = arith.mulf %883, %882 : vector<2x128xf32>
    %cst_377 = arith.constant 5.000000e-01 : f32
    %885 = vector.broadcast %cst_377 : f32 to vector<2x128xf32>
    %886 = arith.addf %884, %885 : vector<2x128xf32>
    %887 = vector.extract_strided_slice %870 {offsets = [0, 256], sizes = [2, 128], strides = [1, 1]} : vector<2x512xf32> to vector<2x128xf32>
    %888 = math.tanh %887 : vector<2x128xf32>
    %889 = vector.extract_strided_slice %870 {offsets = [0, 384], sizes = [2, 128], strides = [1, 1]} : vector<2x512xf32> to vector<2x128xf32>
    %cst_378 = arith.constant 5.000000e-01 : f32
    %890 = vector.broadcast %cst_378 : f32 to vector<2x128xf32>
    %891 = arith.mulf %890, %889 : vector<2x128xf32>
    %892 = math.tanh %891 : vector<2x128xf32>
    %cst_379 = arith.constant 5.000000e-01 : f32
    %893 = vector.broadcast %cst_379 : f32 to vector<2x128xf32>
    %894 = arith.mulf %893, %892 : vector<2x128xf32>
    %cst_380 = arith.constant 5.000000e-01 : f32
    %895 = vector.broadcast %cst_380 : f32 to vector<2x128xf32>
    %896 = arith.addf %894, %895 : vector<2x128xf32>
    %897 = arith.mulf %886, %863 : vector<2x128xf32>
    %898 = arith.mulf %878, %888 : vector<2x128xf32>
    %899 = arith.addf %897, %898 : vector<2x128xf32>
    %900 = math.tanh %899 : vector<2x128xf32>
    %901 = arith.mulf %896, %900 : vector<2x128xf32>
    %c14_381 = arith.constant 14 : index
    %c0_382 = arith.constant 0 : index
    %902 = vector.load %arg18[%c14_381, %c0_382] : memref<16x256xf32, #tpu.memory_space<vmem>>, vector<2x256xf32>
    %c0_383 = arith.constant 0 : index
    %c0_384 = arith.constant 0 : index
    %903 = vector.load %arg10[%c0_383, %c0_384] : memref<256x512xbf16, #tpu.memory_space<vmem>>, vector<256x512xbf16>
    %904 = arith.truncf %902 : vector<2x256xf32> to vector<2x256xbf16>
    %cst_385 = arith.constant dense<0.000000e+00> : vector<2x512xf32>
    %905 = tpu.matmul %904, %903, %cst_385 {dimension_numbers = #tpu.dot_dimension_numbers<[1], [0], [0], [1], [0, 0, 1, 1], [], []>} : vector<2x256xbf16>, vector<256x512xbf16>, vector<2x512xf32> -> vector<2x512xf32>
    %c0_386 = arith.constant 0 : index
    %c0_387 = arith.constant 0 : index
    %906 = vector.load %arg11[%c0_386, %c0_387] : memref<1x512xf32, #tpu.memory_space<vmem>>, vector<1x512xf32>
    %907 = vector.broadcast %906 : vector<1x512xf32> to vector<2x512xf32>
    %908 = arith.addf %905, %907 : vector<2x512xf32>
    %909 = vector.extract_strided_slice %908 {offsets = [0, 0], sizes = [2, 128], strides = [1, 1]} : vector<2x512xf32> to vector<2x128xf32>
    %cst_388 = arith.constant 5.000000e-01 : f32
    %910 = vector.broadcast %cst_388 : f32 to vector<2x128xf32>
    %911 = arith.mulf %910, %909 : vector<2x128xf32>
    %912 = math.tanh %911 : vector<2x128xf32>
    %cst_389 = arith.constant 5.000000e-01 : f32
    %913 = vector.broadcast %cst_389 : f32 to vector<2x128xf32>
    %914 = arith.mulf %913, %912 : vector<2x128xf32>
    %cst_390 = arith.constant 5.000000e-01 : f32
    %915 = vector.broadcast %cst_390 : f32 to vector<2x128xf32>
    %916 = arith.addf %914, %915 : vector<2x128xf32>
    %917 = vector.extract_strided_slice %908 {offsets = [0, 128], sizes = [2, 128], strides = [1, 1]} : vector<2x512xf32> to vector<2x128xf32>
    %cst_391 = arith.constant 5.000000e-01 : f32
    %918 = vector.broadcast %cst_391 : f32 to vector<2x128xf32>
    %919 = arith.mulf %918, %917 : vector<2x128xf32>
    %920 = math.tanh %919 : vector<2x128xf32>
    %cst_392 = arith.constant 5.000000e-01 : f32
    %921 = vector.broadcast %cst_392 : f32 to vector<2x128xf32>
    %922 = arith.mulf %921, %920 : vector<2x128xf32>
    %cst_393 = arith.constant 5.000000e-01 : f32
    %923 = vector.broadcast %cst_393 : f32 to vector<2x128xf32>
    %924 = arith.addf %922, %923 : vector<2x128xf32>
    %925 = vector.extract_strided_slice %908 {offsets = [0, 256], sizes = [2, 128], strides = [1, 1]} : vector<2x512xf32> to vector<2x128xf32>
    %926 = math.tanh %925 : vector<2x128xf32>
    %927 = vector.extract_strided_slice %908 {offsets = [0, 384], sizes = [2, 128], strides = [1, 1]} : vector<2x512xf32> to vector<2x128xf32>
    %cst_394 = arith.constant 5.000000e-01 : f32
    %928 = vector.broadcast %cst_394 : f32 to vector<2x128xf32>
    %929 = arith.mulf %928, %927 : vector<2x128xf32>
    %930 = math.tanh %929 : vector<2x128xf32>
    %cst_395 = arith.constant 5.000000e-01 : f32
    %931 = vector.broadcast %cst_395 : f32 to vector<2x128xf32>
    %932 = arith.mulf %931, %930 : vector<2x128xf32>
    %cst_396 = arith.constant 5.000000e-01 : f32
    %933 = vector.broadcast %cst_396 : f32 to vector<2x128xf32>
    %934 = arith.addf %932, %933 : vector<2x128xf32>
    %935 = arith.mulf %924, %13 : vector<2x128xf32>
    %936 = arith.mulf %916, %926 : vector<2x128xf32>
    %937 = arith.addf %935, %936 : vector<2x128xf32>
    %938 = math.tanh %937 : vector<2x128xf32>
    %939 = arith.mulf %934, %938 : vector<2x128xf32>
    %940 = tpu.concatenate %901, %939 in 1 : vector<2x128xf32>, vector<2x128xf32> -> vector<2x256xf32>
    %c0_397 = arith.constant 0 : index
    %c0_398 = arith.constant 0 : index
    %941 = vector.load %arg12[%c0_397, %c0_398] : memref<256x128xbf16, #tpu.memory_space<vmem>>, vector<256x128xbf16>
    %942 = arith.truncf %940 : vector<2x256xf32> to vector<2x256xbf16>
    %cst_399 = arith.constant dense<0.000000e+00> : vector<2x128xf32>
    %943 = tpu.matmul %942, %941, %cst_399 {dimension_numbers = #tpu.dot_dimension_numbers<[1], [0], [0], [1], [0, 0, 1, 1], [], []>} : vector<2x256xbf16>, vector<256x128xbf16>, vector<2x128xf32> -> vector<2x128xf32>
    %c0_400 = arith.constant 0 : index
    %c0_401 = arith.constant 0 : index
    %944 = vector.load %arg13[%c0_400, %c0_401] : memref<1x128xf32, #tpu.memory_space<vmem>>, vector<1x128xf32>
    %945 = vector.broadcast %944 : vector<1x128xf32> to vector<2x128xf32>
    %946 = arith.addf %943, %945 : vector<2x128xf32>
    %cst_402 = arith.constant 0.000000e+00 : f32
    %947 = vector.broadcast %cst_402 : f32 to vector<2x128xf32>
    %948 = arith.maximumf %946, %947 : vector<2x128xf32>
    %c0_403 = arith.constant 0 : index
    %c0_404 = arith.constant 0 : index
    %949 = vector.load %arg14[%c0_403, %c0_404] : memref<128x50xf32, #tpu.memory_space<vmem>>, vector<128x50xf32>
    %cst_405 = arith.constant dense<0.000000e+00> : vector<2x50xf32>
    %950 = tpu.matmul %948, %949, %cst_405 {dimension_numbers = #tpu.dot_dimension_numbers<[1], [0], [0], [1], [0, 0, 1, 1], [], []>} : vector<2x128xf32>, vector<128x50xf32>, vector<2x50xf32> -> vector<2x50xf32>
    %c0_406 = arith.constant 0 : index
    %c0_407 = arith.constant 0 : index
    %951 = vector.load %arg15[%c0_406, %c0_407] : memref<1x50xf32, #tpu.memory_space<vmem>>, vector<1x50xf32>
    %952 = vector.broadcast %951 : vector<1x50xf32> to vector<2x50xf32>
    %953 = arith.addf %950, %952 : vector<2x50xf32>
    %c0_408 = arith.constant 0 : index
    %c0_409 = arith.constant 0 : index
    %954 = vector.load %arg16[%c0_408, %c0_409] : memref<2x50xf32, #tpu.memory_space<vmem>>, vector<2x50xf32>
    tpu.vector_store %arg16[%c0_408, %c0_409], %953 {strides = array<i32>} : memref<2x50xf32, #tpu.memory_space<vmem>>, vector<2x50xf32>,
    return
  }
}

</mosaic_0001>

<llo_original>
// kernel: vae_bilstm_forward.1
$region0: #{vae_bilstm_forward.1}
  #allocation0 [shape = 'u32[]', space=smem, size = 0x4, offset = 0x4, fixed_abs, tag = 'smem constant byte address 0x4 - core index']
  #allocation1 [shape = 'u32[144,128]{1,0:T(1,128)}', space=vmem, size = 0x12000, scoped, tag = 'internal scratch']
  #allocation2 [shape = 'f32[16,1024]{1,0:T(8,128)}', space=vmem, size = 0x10000, scoped, tag = 'scratch operand']
  #allocation3 [shape = 'f32[16,256]{1,0:T(8,128)}', space=vmem, size = 0x4000, scoped, tag = 'scratch operand']
  #allocation4 [shape = 'f32[16,512]{1,0:T(8,128)}', space=vmem, size = 0x8000, scoped, tag = 'scratch operand']
  %s0 = inlined_call_operand.vmem [shape: bf16[16,1024], index: 0, kind: input, shape index: {}]
  %s1 = inlined_call_operand.vmem [shape: bf16[1024,128], index: 1, kind: input, shape index: {}]
  %s2 = inlined_call_operand.vmem [shape: f32[1,128], index: 2, kind: input, shape index: {}]
  %s3 = inlined_call_operand.vmem [shape: bf16[128,1024], index: 3, kind: input, shape index: {}]
  %s4 = inlined_call_operand.vmem [shape: f32[1,1024], index: 4, kind: input, shape index: {}]
  %s5 = inlined_call_operand.vmem [shape: bf16[128,512], index: 5, kind: input, shape index: {}]
  %s6 = inlined_call_operand.vmem [shape: bf16[128,512], index: 6, kind: input, shape index: {}]
  %s7 = inlined_call_operand.vmem [shape: bf16[256,512], index: 7, kind: input, shape index: {}]
  %s8 = inlined_call_operand.vmem [shape: bf16[128,512], index: 8, kind: input, shape index: {}]
  %s9 = inlined_call_operand.vmem [shape: f32[1,512], index: 9, kind: input, shape index: {}]
  %s10 = inlined_call_operand.vmem [shape: bf16[256,512], index: 10, kind: input, shape index: {}]
  %s11 = inlined_call_operand.vmem [shape: f32[1,512], index: 11, kind: input, shape index: {}]
  %s12 = inlined_call_operand.vmem [shape: bf16[256,128], index: 12, kind: input, shape index: {}]
  %s13 = inlined_call_operand.vmem [shape: f32[1,128], index: 13, kind: input, shape index: {}]
  %s14 = inlined_call_operand.vmem [shape: f32[128,50], index: 14, kind: input, shape index: {}]
  %s15 = inlined_call_operand.vmem [shape: f32[1,50], index: 15, kind: input, shape index: {}]
  %s16 = inlined_call_operand.hbm [shape: f32[2,50], index: 16, kind: output, shape index: {}]
  %s17 = sld [smem:[#allocation0]]
  $region74: #{vae_bilstm_forward.1} parent=0
    _
  %s19 = ssub.s32 1, %s17
  %s20 = scalar_select 0, %s19, %s17
  $region1: #{vae_bilstm_forward.1} parent=0
    #allocation5 [shape = 'u8[1024]{0}', space=vmem, size = 0x400, scoped, tag = 'output window, operand 0, single buffered']
    #allocation6 [shape = 's32[1]{0}', space=sflag, size = 0x4, scoped, tag = 'scoped memory for vae_bilstm_forward.1']
    %21 = vsyncpa [#allocation6], 0
    // Predicated region
    $region2: #{vae_bilstm_forward.1} parent=1 // pred_check
      _
    $region3: #{vae_bilstm_forward.1} parent=1 // pred_check_branch
      %23 = sbr.rel (0) target = $region5
    $region4: #{vae_bilstm_forward.1} parent=1 // pred_region
      _
    $region5: #{vae_bilstm_forward.1} parent=1 // pred_fallthru
      _
    // Predicated region
    $region6: #{vae_bilstm_forward.1} parent=1 // pred_check
      _
    $region7: #{vae_bilstm_forward.1} parent=1 // pred_check_branch
      %25 = sbr.rel (0) target = $region9
    $region8: #{vae_bilstm_forward.1} parent=1 // pred_region
      _
    $region9: #{vae_bilstm_forward.1} parent=1 // pred_fallthru
      _
    // Predicated region
    $region10: #{vae_bilstm_forward.1} parent=1 // pred_check
      _
    $region11: #{vae_bilstm_forward.1} parent=1 // pred_check_branch
      %27 = sbr.rel (0) target = $region13
    $region12: #{vae_bilstm_forward.1} parent=1 // pred_region
      _
    $region13: #{vae_bilstm_forward.1} parent=1 // pred_fallthru
      _
    // Predicated region
    $region14: #{vae_bilstm_forward.1} parent=1 // pred_check
      _
    $region15: #{vae_bilstm_forward.1} parent=1 // pred_check_branch
      %29 = sbr.rel (0) target = $region17
    $region16: #{vae_bilstm_forward.1} parent=1 // pred_region
      _
    $region17: #{vae_bilstm_forward.1} parent=1 // pred_fallthru
      _
    // Predicated region
    $region18: #{vae_bilstm_forward.1} parent=1 // pred_check
      _
    $region19: #{vae_bilstm_forward.1} parent=1 // pred_check_branch
      %31 = sbr.rel (0) target = $region21
    $region20: #{vae_bilstm_forward.1} parent=1 // pred_region
      _
    $region21: #{vae_bilstm_forward.1} parent=1 // pred_fallthru
      _
    // Predicated region
    $region22: #{vae_bilstm_forward.1} parent=1 // pred_check
      _
    $region23: #{vae_bilstm_forward.1} parent=1 // pred_check_branch
      %33 = sbr.rel (0) target = $region25
    $region24: #{vae_bilstm_forward.1} parent=1 // pred_region
      _
    $region25: #{vae_bilstm_forward.1} parent=1 // pred_fallthru
      _
    // Predicated region
    $region26: #{vae_bilstm_forward.1} parent=1 // pred_check
      _
    $region27: #{vae_bilstm_forward.1} parent=1 // pred_check_branch
      %35 = sbr.rel (0) target = $region29
    $region28: #{vae_bilstm_forward.1} parent=1 // pred_region
      _
    $region29: #{vae_bilstm_forward.1} parent=1 // pred_fallthru
      _
    // Predicated region
    $region30: #{vae_bilstm_forward.1} parent=1 // pred_check
      _
    $region31: #{vae_bilstm_forward.1} parent=1 // pred_check_branch
      %37 = sbr.rel (0) target = $region33
    $region32: #{vae_bilstm_forward.1} parent=1 // pred_region
      _
    $region33: #{vae_bilstm_forward.1} parent=1 // pred_fallthru
      _
    // Predicated region
    $region34: #{vae_bilstm_forward.1} parent=1 // pred_check
      _
    $region35: #{vae_bilstm_forward.1} parent=1 // pred_check_branch
      %39 = sbr.rel (0) target = $region37
    $region36: #{vae_bilstm_forward.1} parent=1 // pred_region
      _
    $region37: #{vae_bilstm_forward.1} parent=1 // pred_fallthru
      _
    // Predicated region
    $region38: #{vae_bilstm_forward.1} parent=1 // pred_check
      _
    $region39: #{vae_bilstm_forward.1} parent=1 // pred_check_branch
      %41 = sbr.rel (0) target = $region41
    $region40: #{vae_bilstm_forward.1} parent=1 // pred_region
      _
    $region41: #{vae_bilstm_forward.1} parent=1 // pred_fallthru
      _
    // Predicated region
    $region42: #{vae_bilstm_forward.1} parent=1 // pred_check
      _
    $region43: #{vae_bilstm_forward.1} parent=1 // pred_check_branch
      %43 = sbr.rel (0) target = $region45
    $region44: #{vae_bilstm_forward.1} parent=1 // pred_region
      _
    $region45: #{vae_bilstm_forward.1} parent=1 // pred_fallthru
      _
    // Predicated region
    $region46: #{vae_bilstm_forward.1} parent=1 // pred_check
      _
    $region47: #{vae_bilstm_forward.1} parent=1 // pred_check_branch
      %45 = sbr.rel (0) target = $region49
    $region48: #{vae_bilstm_forward.1} parent=1 // pred_region
      _
    $region49: #{vae_bilstm_forward.1} parent=1 // pred_fallthru
      _
    // Predicated region
    $region50: #{vae_bilstm_forward.1} parent=1 // pred_check
      _
    $region51: #{vae_bilstm_forward.1} parent=1 // pred_check_branch
      %47 = sbr.rel (0) target = $region53
    $region52: #{vae_bilstm_forward.1} parent=1 // pred_region
      _
    $region53: #{vae_bilstm_forward.1} parent=1 // pred_fallthru
      _
    // Predicated region
    $region54: #{vae_bilstm_forward.1} parent=1 // pred_check
      _
    $region55: #{vae_bilstm_forward.1} parent=1 // pred_check_branch
      %49 = sbr.rel (0) target = $region57
    $region56: #{vae_bilstm_forward.1} parent=1 // pred_region
      _
    $region57: #{vae_bilstm_forward.1} parent=1 // pred_fallthru
      _
    // Predicated region
    $region58: #{vae_bilstm_forward.1} parent=1 // pred_check
      _
    $region59: #{vae_bilstm_forward.1} parent=1 // pred_check_branch
      %51 = sbr.rel (0) target = $region61
    $region60: #{vae_bilstm_forward.1} parent=1 // pred_region
      _
    $region61: #{vae_bilstm_forward.1} parent=1 // pred_fallthru
      _
    // Predicated region
    $region62: #{vae_bilstm_forward.1} parent=1 // pred_check
      _
    $region63: #{vae_bilstm_forward.1} parent=1 // pred_check_branch
      %53 = sbr.rel (0) target = $region65
    $region64: #{vae_bilstm_forward.1} parent=1 // pred_region
      _
    $region65: #{vae_bilstm_forward.1} parent=1 // pred_fallthru
      _
    %v55 = vld [vmem:[%s0] sm:$0xff]
    %v56 = vld [vmem:[%s0 + $0x8] sm:$0xff]
    %v57 = vld [vmem:[%s0 + $0x10] sm:$0xff]
    %v58 = vld [vmem:[%s0 + $0x18] sm:$0xff]
    %v59 = vld [vmem:[%s0 + $0x20] sm:$0xff]
    %v60 = vld [vmem:[%s0 + $0x28] sm:$0xff]
    %v61 = vld [vmem:[%s0 + $0x30] sm:$0xff]
    %v62 = vld [vmem:[%s0 + $0x38] sm:$0xff]
    %v63 = vld [vmem:[%s1] sm:$0xf]
    %v64 = vld [vmem:[%s1 + $0x4] sm:$0xf]
    %v65 = vld [vmem:[%s1 + $0x8] sm:$0xf]
    %v66 = vld [vmem:[%s1 + $0xc] sm:$0xf]
    %v67 = vld [vmem:[%s1 + $0x10] sm:$0xf]
    %v68 = vld [vmem:[%s1 + $0x14] sm:$0xf]
    %v69 = vld [vmem:[%s1 + $0x18] sm:$0xf]
    %v70 = vld [vmem:[%s1 + $0x1c] sm:$0xf]
    %v71 = vld [vmem:[%s1 + $0x20] sm:$0xf]
    %v72 = vld [vmem:[%s1 + $0x24] sm:$0xf]
    %v73 = vld [vmem:[%s1 + $0x28] sm:$0xf]
    %v74 = vld [vmem:[%s1 + $0x2c] sm:$0xf]
    %v75 = vld [vmem:[%s1 + $0x30] sm:$0xf]
    %v76 = vld [vmem:[%s1 + $0x34] sm:$0xf]
    %v77 = vld [vmem:[%s1 + $0x38] sm:$0xf]
    %v78 = vld [vmem:[%s1 + $0x3c] sm:$0xf]
    %v79 = vld [vmem:[%s1 + $0x40] sm:$0xf]
    %v80 = vld [vmem:[%s1 + $0x44] sm:$0xf]
    %v81 = vld [vmem:[%s1 + $0x48] sm:$0xf]
    %v82 = vld [vmem:[%s1 + $0x4c] sm:$0xf]
    %v83 = vld [vmem:[%s1 + $0x50] sm:$0xf]
    %v84 = vld [vmem:[%s1 + $0x54] sm:$0xf]
    %v85 = vld [vmem:[%s1 + $0x58] sm:$0xf]
    %v86 = vld [vmem:[%s1 + $0x5c] sm:$0xf]
    %v87 = vld [vmem:[%s1 + $0x60] sm:$0xf]
    %v88 = vld [vmem:[%s1 + $0x64] sm:$0xf]
    %v89 = vld [vmem:[%s1 + $0x68] sm:$0xf]
    %v90 = vld [vmem:[%s1 + $0x6c] sm:$0xf]
    %v91 = vld [vmem:[%s1 + $0x70] sm:$0xf]
    %v92 = vld [vmem:[%s1 + $0x74] sm:$0xf]
    %v93 = vld [vmem:[%s1 + $0x78] sm:$0xf]
    %v94 = vld [vmem:[%s1 + $0x7c] sm:$0xf]
    %v95 = vld [vmem:[%s1 + $0x80] sm:$0xf]
    %v96 = vld [vmem:[%s1 + $0x84] sm:$0xf]
    %v97 = vld [vmem:[%s1 + $0x88] sm:$0xf]
    %v98 = vld [vmem:[%s1 + $0x8c] sm:$0xf]
    %v99 = vld [vmem:[%s1 + $0x90] sm:$0xf]
    %v100 = vld [vmem:[%s1 + $0x94] sm:$0xf]
    %v101 = vld [vmem:[%s1 + $0x98] sm:$0xf]
    %v102 = vld [vmem:[%s1 + $0x9c] sm:$0xf]
    %v103 = vld [vmem:[%s1 + $0xa0] sm:$0xf]
    %v104 = vld [vmem:[%s1 + $0xa4] sm:$0xf]
    %v105 = vld [vmem:[%s1 + $0xa8] sm:$0xf]
    %v106 = vld [vmem:[%s1 + $0xac] sm:$0xf]
    %v107 = vld [vmem:[%s1 + $0xb0] sm:$0xf]
    %v108 = vld [vmem:[%s1 + $0xb4] sm:$0xf]
    %v109 = vld [vmem:[%s1 + $0xb8] sm:$0xf]
    %v110 = vld [vmem:[%s1 + $0xbc] sm:$0xf]
    %v111 = vld [vmem:[%s1 + $0xc0] sm:$0xf]
    %v112 = vld [vmem:[%s1 + $0xc4] sm:$0xf]
    %v113 = vld [vmem:[%s1 + $0xc8] sm:$0xf]
    %v114 = vld [vmem:[%s1 + $0xcc] sm:$0xf]
    %v115 = vld [vmem:[%s1 + $0xd0] sm:$0xf]
    %v116 = vld [vmem:[%s1 + $0xd4] sm:$0xf]
    %v117 = vld [vmem:[%s1 + $0xd8] sm:$0xf]
    %v118 = vld [vmem:[%s1 + $0xdc] sm:$0xf]
    %v119 = vld [vmem:[%s1 + $0xe0] sm:$0xf]
    %v120 = vld [vmem:[%s1 + $0xe4] sm:$0xf]
    %v121 = vld [vmem:[%s1 + $0xe8] sm:$0xf]
    %v122 = vld [vmem:[%s1 + $0xec] sm:$0xf]
    %v123 = vld [vmem:[%s1 + $0xf0] sm:$0xf]
    %v124 = vld [vmem:[%s1 + $0xf4] sm:$0xf]
    %v125 = vld [vmem:[%s1 + $0xf8] sm:$0xf]
    %v126 = vld [vmem:[%s1 + $0xfc] sm:$0xf]
    %v127 = vld [vmem:[%s1 + $0x100] sm:$0xf]
    %v128 = vld [vmem:[%s1 + $0x104] sm:$0xf]
    %v129 = vld [vmem:[%s1 + $0x108] sm:$0xf]
    %v130 = vld [vmem:[%s1 + $0x10c] sm:$0xf]
    %v131 = vld [vmem:[%s1 + $0x110] sm:$0xf]
    %v132 = vld [vmem:[%s1 + $0x114] sm:$0xf]
    %v133 = vld [vmem:[%s1 + $0x118] sm:$0xf]
    %v134 = vld [vmem:[%s1 + $0x11c] sm:$0xf]
    %v135 = vld [vmem:[%s1 + $0x120] sm:$0xf]
    %v136 = vld [vmem:[%s1 + $0x124] sm:$0xf]
    %v137 = vld [vmem:[%s1 + $0x128] sm:$0xf]
    %v138 = vld [vmem:[%s1 + $0x12c] sm:$0xf]
    %v139 = vld [vmem:[%s1 + $0x130] sm:$0xf]
    %v140 = vld [vmem:[%s1 + $0x134] sm:$0xf]
    %v141 = vld [vmem:[%s1 + $0x138] sm:$0xf]
    %v142 = vld [vmem:[%s1 + $0x13c] sm:$0xf]
    %v143 = vld [vmem:[%s1 + $0x140] sm:$0xf]
    %v144 = vld [vmem:[%s1 + $0x144] sm:$0xf]
    %v145 = vld [vmem:[%s1 + $0x148] sm:$0xf]
    %v146 = vld [vmem:[%s1 + $0x14c] sm:$0xf]
    %v147 = vld [vmem:[%s1 + $0x150] sm:$0xf]
    %v148 = vld [vmem:[%s1 + $0x154] sm:$0xf]
    %v149 = vld [vmem:[%s1 + $0x158] sm:$0xf]
    %v150 = vld [vmem:[%s1 + $0x15c] sm:$0xf]
    %v151 = vld [vmem:[%s1 + $0x160] sm:$0xf]
    %v152 = vld [vmem:[%s1 + $0x164] sm:$0xf]
    %v153 = vld [vmem:[%s1 + $0x168] sm:$0xf]
    %v154 = vld [vmem:[%s1 + $0x16c] sm:$0xf]
    %v155 = vld [vmem:[%s1 + $0x170] sm:$0xf]
    %v156 = vld [vmem:[%s1 + $0x174] sm:$0xf]
    %v157 = vld [vmem:[%s1 + $0x178] sm:$0xf]
    %v158 = vld [vmem:[%s1 + $0x17c] sm:$0xf]
    %v159 = vld [vmem:[%s1 + $0x180] sm:$0xf]
    %v160 = vld [vmem:[%s1 + $0x184] sm:$0xf]
    %v161 = vld [vmem:[%s1 + $0x188] sm:$0xf]
    %v162 = vld [vmem:[%s1 + $0x18c] sm:$0xf]
    %v163 = vld [vmem:[%s1 + $0x190] sm:$0xf]
    %v164 = vld [vmem:[%s1 + $0x194] sm:$0xf]
    %v165 = vld [vmem:[%s1 + $0x198] sm:$0xf]
    %v166 = vld [vmem:[%s1 + $0x19c] sm:$0xf]
    %v167 = vld [vmem:[%s1 + $0x1a0] sm:$0xf]
    %v168 = vld [vmem:[%s1 + $0x1a4] sm:$0xf]
    %v169 = vld [vmem:[%s1 + $0x1a8] sm:$0xf]
    %v170 = vld [vmem:[%s1 + $0x1ac] sm:$0xf]
    %v171 = vld [vmem:[%s1 + $0x1b0] sm:$0xf]
    %v172 = vld [vmem:[%s1 + $0x1b4] sm:$0xf]
    %v173 = vld [vmem:[%s1 + $0x1b8] sm:$0xf]
    %v174 = vld [vmem:[%s1 + $0x1bc] sm:$0xf]
    %v175 = vld [vmem:[%s1 + $0x1c0] sm:$0xf]
    %v176 = vld [vmem:[%s1 + $0x1c4] sm:$0xf]
    %v177 = vld [vmem:[%s1 + $0x1c8] sm:$0xf]
    %v178 = vld [vmem:[%s1 + $0x1cc] sm:$0xf]
    %v179 = vld [vmem:[%s1 + $0x1d0] sm:$0xf]
    %v180 = vld [vmem:[%s1 + $0x1d4] sm:$0xf]
    %v181 = vld [vmem:[%s1 + $0x1d8] sm:$0xf]
    %v182 = vld [vmem:[%s1 + $0x1dc] sm:$0xf]
    %v183 = vld [vmem:[%s1 + $0x1e0] sm:$0xf]
    %v184 = vld [vmem:[%s1 + $0x1e4] sm:$0xf]
    %v185 = vld [vmem:[%s1 + $0x1e8] sm:$0xf]
    %v186 = vld [vmem:[%s1 + $0x1ec] sm:$0xf]
    %v187 = vld [vmem:[%s1 + $0x1f0] sm:$0xf]
    %v188 = vld [vmem:[%s1 + $0x1f4] sm:$0xf]
    %v189 = vld [vmem:[%s1 + $0x1f8] sm:$0xf]
    %v190 = vld [vmem:[%s1 + $0x1fc] sm:$0xf]
    %v191 = vld [vmem:[%s2] sm:$0x1]
    %v193 = vlaneseq
    %v194 = vshrl.u32 %v193, 7
    %v195 = vsub.s32 0, %v194
    %v196 = vrot.slane %v191, %v195
    %v206 = vunpack.c.l.b16 %v55
    %v207 = vunpack.c.h.b16 %v55
    %v208 = vunpack.c.l.b16 %v56
    %v209 = vunpack.c.h.b16 %v56
    %v210 = vunpack.c.l.b16 %v57
    %v211 = vunpack.c.h.b16 %v57
    %v212 = vunpack.c.l.b16 %v58
    %v213 = vunpack.c.h.b16 %v58
    %v214 = vunpack.c.l.b16 %v59
    %v215 = vunpack.c.h.b16 %v59
    %v216 = vunpack.c.l.b16 %v60
    %v217 = vunpack.c.h.b16 %v60
    %v218 = vunpack.c.l.b16 %v61
    %v219 = vunpack.c.h.b16 %v61
    %v220 = vunpack.c.l.b16 %v62
    %v221 = vunpack.c.h.b16 %v62
    %v222 = vpack.c.b16 %v214, %v206
    %v223 = vpack.c.b16 %v215, %v207
    %v224 = vpack.c.b16 %v216, %v208
    %v225 = vpack.c.b16 %v217, %v209
    %v226 = vpack.c.b16 %v218, %v210
    %v227 = vpack.c.b16 %v219, %v211
    %v228 = vpack.c.b16 %v220, %v212
    %v229 = vpack.c.b16 %v221, %v213
    %v366 = vunpack.c.l.b16 %v63
    %v367 = vunpack.c.l.b16 %v64
    %v368 = vunpack.c.l.b16 %v65
    %v369 = vunpack.c.l.b16 %v66
    %v370 = vunpack.c.l.b16 %v67
    %v371 = vunpack.c.l.b16 %v68
    %v372 = vunpack.c.l.b16 %v69
    %v373 = vunpack.c.l.b16 %v70
    %v374 = vunpack.c.l.b16 %v71
    %v375 = vunpack.c.l.b16 %v72
    %v376 = vunpack.c.l.b16 %v73
    %v377 = vunpack.c.l.b16 %v74
    %v378 = vunpack.c.l.b16 %v75
    %v379 = vunpack.c.l.b16 %v76
    %v380 = vunpack.c.l.b16 %v77
    %v381 = vunpack.c.l.b16 %v78
    %v382 = vunpack.c.l.b16 %v79
    %v383 = vunpack.c.l.b16 %v80
    %v384 = vunpack.c.l.b16 %v81
    %v385 = vunpack.c.l.b16 %v82
    %v386 = vunpack.c.l.b16 %v83
    %v387 = vunpack.c.l.b16 %v84
    %v388 = vunpack.c.l.b16 %v85
    %v389 = vunpack.c.l.b16 %v86
    %v390 = vunpack.c.l.b16 %v87
    %v391 = vunpack.c.l.b16 %v88
    %v392 = vunpack.c.l.b16 %v89
    %v393 = vunpack.c.l.b16 %v90
    %v394 = vunpack.c.l.b16 %v91
    %v395 = vunpack.c.l.b16 %v92
    %v396 = vunpack.c.l.b16 %v93
    %v397 = vunpack.c.l.b16 %v94
    %v398 = vunpack.c.l.b16 %v95
    %v399 = vunpack.c.l.b16 %v96
    %v400 = vunpack.c.l.b16 %v97
    %v401 = vunpack.c.l.b16 %v98
    %v402 = vunpack.c.l.b16 %v99
    %v403 = vunpack.c.l.b16 %v100
    %v404 = vunpack.c.l.b16 %v101
    %v405 = vunpack.c.l.b16 %v102
    %v406 = vunpack.c.l.b16 %v103
    %v407 = vunpack.c.l.b16 %v104
    %v408 = vunpack.c.l.b16 %v105
    %v409 = vunpack.c.l.b16 %v106
    %v410 = vunpack.c.l.b16 %v107
    %v411 = vunpack.c.l.b16 %v108
    %v412 = vunpack.c.l.b16 %v109
    %v413 = vunpack.c.l.b16 %v110
    %v414 = vunpack.c.l.b16 %v111
    %v415 = vunpack.c.l.b16 %v112
    %v416 = vunpack.c.l.b16 %v113
    %v417 = vunpack.c.l.b16 %v114
    %v418 = vunpack.c.l.b16 %v115
    %v419 = vunpack.c.l.b16 %v116
    %v420 = vunpack.c.l.b16 %v117
    %v421 = vunpack.c.l.b16 %v118
    %v422 = vunpack.c.l.b16 %v119
    %v423 = vunpack.c.l.b16 %v120
    %v424 = vunpack.c.l.b16 %v121
    %v425 = vunpack.c.l.b16 %v122
    %v426 = vunpack.c.l.b16 %v123
    %v427 = vunpack.c.l.b16 %v124
    %v428 = vunpack.c.l.b16 %v125
    %v429 = vunpack.c.l.b16 %v126
    %v430 = vunpack.c.l.b16 %v127
    %v431 = vunpack.c.l.b16 %v128
    %v432 = vunpack.c.l.b16 %v129
    %v433 = vunpack.c.l.b16 %v130
    %v434 = vunpack.c.l.b16 %v131
    %v435 = vunpack.c.l.b16 %v132
    %v436 = vunpack.c.l.b16 %v133
    %v437 = vunpack.c.l.b16 %v134
    %v438 = vunpack.c.l.b16 %v135
    %v439 = vunpack.c.l.b16 %v136
    %v440 = vunpack.c.l.b16 %v137
    %v441 = vunpack.c.l.b16 %v138
    %v442 = vunpack.c.l.b16 %v139
    %v443 = vunpack.c.l.b16 %v140
    %v444 = vunpack.c.l.b16 %v141
    %v445 = vunpack.c.l.b16 %v142
    %v446 = vunpack.c.l.b16 %v143
    %v447 = vunpack.c.l.b16 %v144
    %v448 = vunpack.c.l.b16 %v145
    %v449 = vunpack.c.l.b16 %v146
    %v450 = vunpack.c.l.b16 %v147
    %v451 = vunpack.c.l.b16 %v148
    %v452 = vunpack.c.l.b16 %v149
    %v453 = vunpack.c.l.b16 %v150
    %v454 = vunpack.c.l.b16 %v151
    %v455 = vunpack.c.l.b16 %v152
    %v456 = vunpack.c.l.b16 %v153
    %v457 = vunpack.c.l.b16 %v154
    %v458 = vunpack.c.l.b16 %v155
    %v459 = vunpack.c.l.b16 %v156
    %v460 = vunpack.c.l.b16 %v157
    %v461 = vunpack.c.l.b16 %v158
    %v462 = vunpack.c.l.b16 %v159
    %v463 = vunpack.c.l.b16 %v160
    %v464 = vunpack.c.l.b16 %v161
    %v465 = vunpack.c.l.b16 %v162
    %v466 = vunpack.c.l.b16 %v163
    %v467 = vunpack.c.l.b16 %v164
    %v468 = vunpack.c.l.b16 %v165
    %v469 = vunpack.c.l.b16 %v166
    %v470 = vunpack.c.l.b16 %v167
    %v471 = vunpack.c.l.b16 %v168
    %v472 = vunpack.c.l.b16 %v169
    %v473 = vunpack.c.l.b16 %v170
    %v474 = vunpack.c.l.b16 %v171
    %v475 = vunpack.c.l.b16 %v172
    %v476 = vunpack.c.l.b16 %v173
    %v477 = vunpack.c.l.b16 %v174
    %v478 = vunpack.c.l.b16 %v175
    %v479 = vunpack.c.l.b16 %v176
    %v480 = vunpack.c.l.b16 %v177
    %v481 = vunpack.c.l.b16 %v178
    %v482 = vunpack.c.l.b16 %v179
    %v483 = vunpack.c.l.b16 %v180
    %v484 = vunpack.c.l.b16 %v181
    %v485 = vunpack.c.l.b16 %v182
    %v486 = vunpack.c.l.b16 %v183
    %v487 = vunpack.c.l.b16 %v184
    %v488 = vunpack.c.l.b16 %v185
    %v489 = vunpack.c.l.b16 %v186
    %v490 = vunpack.c.l.b16 %v187
    %v491 = vunpack.c.l.b16 %v188
    %v492 = vunpack.c.l.b16 %v189
    %v493 = vunpack.c.l.b16 %v190
    %v494 = vpack.c.b16 %v367, %v366
    %v495 = vpack.c.b16 %v369, %v368
    %v496 = vpack.c.b16 %v371, %v370
    %v497 = vpack.c.b16 %v373, %v372
    %v498 = vpack.c.b16 %v375, %v374
    %v499 = vpack.c.b16 %v377, %v376
    %v500 = vpack.c.b16 %v379, %v378
    %v501 = vpack.c.b16 %v381, %v380
    %v502 = vpack.c.b16 %v383, %v382
    %v503 = vpack.c.b16 %v385, %v384
    %v504 = vpack.c.b16 %v387, %v386
    %v505 = vpack.c.b16 %v389, %v388
    %v506 = vpack.c.b16 %v391, %v390
    %v507 = vpack.c.b16 %v393, %v392
    %v508 = vpack.c.b16 %v395, %v394
    %v509 = vpack.c.b16 %v397, %v396
    %v510 = vpack.c.b16 %v399, %v398
    %v511 = vpack.c.b16 %v401, %v400
    %v512 = vpack.c.b16 %v403, %v402
    %v513 = vpack.c.b16 %v405, %v404
    %v514 = vpack.c.b16 %v407, %v406
    %v515 = vpack.c.b16 %v409, %v408
    %v516 = vpack.c.b16 %v411, %v410
    %v517 = vpack.c.b16 %v413, %v412
    %v518 = vpack.c.b16 %v415, %v414
    %v519 = vpack.c.b16 %v417, %v416
    %v520 = vpack.c.b16 %v419, %v418
    %v521 = vpack.c.b16 %v421, %v420
    %v522 = vpack.c.b16 %v423, %v422
    %v523 = vpack.c.b16 %v425, %v424
    %v524 = vpack.c.b16 %v427, %v426
    %v525 = vpack.c.b16 %v429, %v428
    %v526 = vpack.c.b16 %v431, %v430
    %v527 = vpack.c.b16 %v433, %v432
    %v528 = vpack.c.b16 %v435, %v434
    %v529 = vpack.c.b16 %v437, %v436
    %v530 = vpack.c.b16 %v439, %v438
    %v531 = vpack.c.b16 %v441, %v440
    %v532 = vpack.c.b16 %v443, %v442
    %v533 = vpack.c.b16 %v445, %v444
    %v534 = vpack.c.b16 %v447, %v446
    %v535 = vpack.c.b16 %v449, %v448
    %v536 = vpack.c.b16 %v451, %v450
    %v537 = vpack.c.b16 %v453, %v452
    %v538 = vpack.c.b16 %v455, %v454
    %v539 = vpack.c.b16 %v457, %v456
    %v540 = vpack.c.b16 %v459, %v458
    %v541 = vpack.c.b16 %v461, %v460
    %v542 = vpack.c.b16 %v463, %v462
    %v543 = vpack.c.b16 %v465, %v464
    %v544 = vpack.c.b16 %v467, %v466
    %v545 = vpack.c.b16 %v469, %v468
    %v546 = vpack.c.b16 %v471, %v470
    %v547 = vpack.c.b16 %v473, %v472
    %v548 = vpack.c.b16 %v475, %v474
    %v549 = vpack.c.b16 %v477, %v476
    %v550 = vpack.c.b16 %v479, %v478
    %v551 = vpack.c.b16 %v481, %v480
    %v552 = vpack.c.b16 %v483, %v482
    %v553 = vpack.c.b16 %v485, %v484
    %v554 = vpack.c.b16 %v487, %v486
    %v555 = vpack.c.b16 %v489, %v488
    %v556 = vpack.c.b16 %v491, %v490
    %v557 = vpack.c.b16 %v493, %v492
    %622 = vmatprep.subr.bf16.mxu0 0
    %623 = vmatpush1.bf16.msra.mxu0 %v501
    %624 = vmatprep.subr.bf16.mxu0 0
    %625 = vmatpush1.bf16.msra.mxu0 %v500
    %626 = vmatprep.subr.bf16.mxu0 0
    %627 = vmatpush1.bf16.msra.mxu0 %v499
    %628 = vmatprep.subr.bf16.mxu0 0
    %629 = vmatpush1.bf16.msra.mxu0 %v498
    %630 = vmatprep.subr.bf16.mxu0 0
    %631 = vmatpush1.bf16.msra.mxu0 %v497
    %632 = vmatprep.subr.bf16.mxu0 0
    %633 = vmatpush1.bf16.msra.mxu0 %v496
    %634 = vmatprep.subr.bf16.mxu0 0
    %635 = vmatpush1.bf16.msra.mxu0 %v495
    %636 = vmatprep.subr.bf16.mxu0 0
    %637 = vmatpush1.bf16.msra.mxu0 %v494
    %638 = vmatprep.subr.bf16.mxu0 0
    %639 = vmatpush2.bf16.msra.mxu0 %v509
    %640 = vmatprep.subr.bf16.mxu0 0
    %641 = vmatpush2.bf16.msra.mxu0 %v508
    %642 = vmatprep.subr.bf16.mxu0 0
    %643 = vmatpush2.bf16.msra.mxu0 %v507
    %644 = vmatprep.subr.bf16.mxu0 0
    %645 = vmatpush2.bf16.msra.mxu0 %v506
    %646 = vmatprep.subr.bf16.mxu0 0
    %647 = vmatpush2.bf16.msra.mxu0 %v505
    %648 = vmatprep.subr.bf16.mxu0 0
    %649 = vmatpush2.bf16.msra.mxu0 %v504
    %650 = vmatprep.subr.bf16.mxu0 0
    %651 = vmatpush2.bf16.msra.mxu0 %v503
    %652 = vmatprep.subr.bf16.mxu0 0
    %653 = vmatpush2.bf16.msra.mxu0 %v502
    %654 = vmatprep.mubr.bf16.mxu0 %v223
    %655 = vmatmul.mubr.bf16.gmra.mxu0 %v222
    %v656 = vpop.f32.mrf.mxu0
    %v657 = vadd.f32 %v196, %v656
    %v658 = vpop.f32.mrf.mxu0
    %v659 = vpop.f32.mrf.mxu0
    %v660 = vadd.f32 %v196, %v659
    %v661 = vpop.f32.mrf.mxu0
    %662 = vdwg.mxu0
    %663 = vmatprep.subr.bf16.mxu0 0
    %664 = vmatpush1.bf16.msra.mxu0 %v517
    %665 = vmatprep.subr.bf16.mxu0 0
    %666 = vmatpush1.bf16.msra.mxu0 %v516
    %667 = vmatprep.subr.bf16.mxu0 0
    %668 = vmatpush1.bf16.msra.mxu0 %v515
    %669 = vmatprep.subr.bf16.mxu0 0
    %670 = vmatpush1.bf16.msra.mxu0 %v514
    %671 = vmatprep.subr.bf16.mxu0 0
    %672 = vmatpush1.bf16.msra.mxu0 %v513
    %673 = vmatprep.subr.bf16.mxu0 0
    %674 = vmatpush1.bf16.msra.mxu0 %v512
    %675 = vmatprep.subr.bf16.mxu0 0
    %676 = vmatpush1.bf16.msra.mxu0 %v511
    %677 = vmatprep.subr.bf16.mxu0 0
    %678 = vmatpush1.bf16.msra.mxu0 %v510
    %679 = vmatprep.subr.bf16.mxu0 0
    %680 = vmatpush2.bf16.msra.mxu0 %v525
    %681 = vmatprep.subr.bf16.mxu0 0
    %682 = vmatpush2.bf16.msra.mxu0 %v524
    %683 = vmatprep.subr.bf16.mxu0 0
    %684 = vmatpush2.bf16.msra.mxu0 %v523
    %685 = vmatprep.subr.bf16.mxu0 0
    %686 = vmatpush2.bf16.msra.mxu0 %v522
    %687 = vmatprep.subr.bf16.mxu0 0
    %688 = vmatpush2.bf16.msra.mxu0 %v521
    %689 = vmatprep.subr.bf16.mxu0 0
    %690 = vmatpush2.bf16.msra.mxu0 %v520
    %691 = vmatprep.subr.bf16.mxu0 0
    %692 = vmatpush2.bf16.msra.mxu0 %v519
    %693 = vmatprep.subr.bf16.mxu0 0
    %694 = vmatpush2.bf16.msra.mxu0 %v518
    %695 = vmatprep.mubr.bf16.mxu0 %v225
    %696 = vmatmul.mubr.bf16.gmra.mxu0 %v224
    %v697 = vpop.f32.mrf.mxu0
    %v698 = vadd.f32 %v657, %v697
    %v699 = vpop.f32.mrf.mxu0
    %v700 = vpop.f32.mrf.mxu0
    %v701 = vadd.f32 %v660, %v700
    %v702 = vpop.f32.mrf.mxu0
    %703 = vdwg.mxu0
    %704 = vmatprep.subr.bf16.mxu0 0
    %705 = vmatpush1.bf16.msra.mxu0 %v533
    %706 = vmatprep.subr.bf16.mxu0 0
    %707 = vmatpush1.bf16.msra.mxu0 %v532
    %708 = vmatprep.subr.bf16.mxu0 0
    %709 = vmatpush1.bf16.msra.mxu0 %v531
    %710 = vmatprep.subr.bf16.mxu0 0
    %711 = vmatpush1.bf16.msra.mxu0 %v530
    %712 = vmatprep.subr.bf16.mxu0 0
    %713 = vmatpush1.bf16.msra.mxu0 %v529
    %714 = vmatprep.subr.bf16.mxu0 0
    %715 = vmatpush1.bf16.msra.mxu0 %v528
    %716 = vmatprep.subr.bf16.mxu0 0
    %717 = vmatpush1.bf16.msra.mxu0 %v527
    %718 = vmatprep.subr.bf16.mxu0 0
    %719 = vmatpush1.bf16.msra.mxu0 %v526
    %720 = vmatprep.subr.bf16.mxu0 0
    %721 = vmatpush2.bf16.msra.mxu0 %v541
    %722 = vmatprep.subr.bf16.mxu0 0
    %723 = vmatpush2.bf16.msra.mxu0 %v540
    %724 = vmatprep.subr.bf16.mxu0 0
    %725 = vmatpush2.bf16.msra.mxu0 %v539
    %726 = vmatprep.subr.bf16.mxu0 0
    %727 = vmatpush2.bf16.msra.mxu0 %v538
    %728 = vmatprep.subr.bf16.mxu0 0
    %729 = vmatpush2.bf16.msra.mxu0 %v537
    %730 = vmatprep.subr.bf16.mxu0 0
    %731 = vmatpush2.bf16.msra.mxu0 %v536
    %732 = vmatprep.subr.bf16.mxu0 0
    %733 = vmatpush2.bf16.msra.mxu0 %v535
    %734 = vmatprep.subr.bf16.mxu0 0
    %735 = vmatpush2.bf16.msra.mxu0 %v534
    %736 = vmatprep.mubr.bf16.mxu0 %v227
    %737 = vmatmul.mubr.bf16.gmra.mxu0 %v226
    %v738 = vpop.f32.mrf.mxu0
    %v739 = vadd.f32 %v698, %v738
    %v740 = vpop.f32.mrf.mxu0
    %v741 = vpop.f32.mrf.mxu0
    %v742 = vadd.f32 %v701, %v741
    %v743 = vpop.f32.mrf.mxu0
    %744 = vdwg.mxu0
    %745 = vmatprep.subr.bf16.mxu0 0
    %746 = vmatpush1.bf16.msra.mxu0 %v549
    %747 = vmatprep.subr.bf16.mxu0 0
    %748 = vmatpush1.bf16.msra.mxu0 %v548
    %749 = vmatprep.subr.bf16.mxu0 0
    %750 = vmatpush1.bf16.msra.mxu0 %v547
    %751 = vmatprep.subr.bf16.mxu0 0
    %752 = vmatpush1.bf16.msra.mxu0 %v546
    %753 = vmatprep.subr.bf16.mxu0 0
    %754 = vmatpush1.bf16.msra.mxu0 %v545
    %755 = vmatprep.subr.bf16.mxu0 0
    %756 = vmatpush1.bf16.msra.mxu0 %v544
    %757 = vmatprep.subr.bf16.mxu0 0
    %758 = vmatpush1.bf16.msra.mxu0 %v543
    %759 = vmatprep.subr.bf16.mxu0 0
    %760 = vmatpush1.bf16.msra.mxu0 %v542
    %761 = vmatprep.subr.bf16.mxu0 0
    %762 = vmatpush2.bf16.msra.mxu0 %v557
    %763 = vmatprep.subr.bf16.mxu0 0
    %764 = vmatpush2.bf16.msra.mxu0 %v556
    %765 = vmatprep.subr.bf16.mxu0 0
    %766 = vmatpush2.bf16.msra.mxu0 %v555
    %767 = vmatprep.subr.bf16.mxu0 0
    %768 = vmatpush2.bf16.msra.mxu0 %v554
    %769 = vmatprep.subr.bf16.mxu0 0
    %770 = vmatpush2.bf16.msra.mxu0 %v553
    %771 = vmatprep.subr.bf16.mxu0 0
    %772 = vmatpush2.bf16.msra.mxu0 %v552
    %773 = vmatprep.subr.bf16.mxu0 0
    %774 = vmatpush2.bf16.msra.mxu0 %v551
    %775 = vmatprep.subr.bf16.mxu0 0
    %776 = vmatpush2.bf16.msra.mxu0 %v550
    %777 = vmatprep.mubr.bf16.mxu0 %v229
    %778 = vmatmul.mubr.bf16.gmra.mxu0 %v228
    %v779 = vpop.f32.mrf.mxu0
    %v780 = vadd.f32 %v739, %v779
    %v781 = vpop.f32.mrf.mxu0
    %v782 = vpop.f32.mrf.mxu0
    %v783 = vadd.f32 %v742, %v782
    %v784 = vpop.f32.mrf.mxu0
    %785 = vdwg.mxu0
    %v786 = vld [vmem:[%s3] sm:$0xff]
    %v787 = vld [vmem:[%s3 + $0x8] sm:$0xff]
    %v788 = vld [vmem:[%s3 + $0x10] sm:$0xff]
    %v789 = vld [vmem:[%s3 + $0x18] sm:$0xff]
    %v790 = vld [vmem:[%s3 + $0x20] sm:$0xff]
    %v791 = vld [vmem:[%s3 + $0x28] sm:$0xff]
    %v792 = vld [vmem:[%s3 + $0x30] sm:$0xff]
    %v793 = vld [vmem:[%s3 + $0x38] sm:$0xff]
    %v794 = vld [vmem:[%s3 + $0x40] sm:$0xff]
    %v795 = vld [vmem:[%s3 + $0x48] sm:$0xff]
    %v796 = vld [vmem:[%s3 + $0x50] sm:$0xff]
    %v797 = vld [vmem:[%s3 + $0x58] sm:$0xff]
    %v798 = vld [vmem:[%s3 + $0x60] sm:$0xff]
    %v799 = vld [vmem:[%s3 + $0x68] sm:$0xff]
    %v800 = vld [vmem:[%s3 + $0x70] sm:$0xff]
    %v801 = vld [vmem:[%s3 + $0x78] sm:$0xff]
    %v802 = vld [vmem:[%s3 + $0x80] sm:$0xff]
    %v803 = vld [vmem:[%s3 + $0x88] sm:$0xff]
    %v804 = vld [vmem:[%s3 + $0x90] sm:$0xff]
    %v805 = vld [vmem:[%s3 + $0x98] sm:$0xff]
    %v806 = vld [vmem:[%s3 + $0xa0] sm:$0xff]
    %v807 = vld [vmem:[%s3 + $0xa8] sm:$0xff]
    %v808 = vld [vmem:[%s3 + $0xb0] sm:$0xff]
    %v809 = vld [vmem:[%s3 + $0xb8] sm:$0xff]
    %v810 = vld [vmem:[%s3 + $0xc0] sm:$0xff]
    %v811 = vld [vmem:[%s3 + $0xc8] sm:$0xff]
    %v812 = vld [vmem:[%s3 + $0xd0] sm:$0xff]
    %v813 = vld [vmem:[%s3 + $0xd8] sm:$0xff]
    %v814 = vld [vmem:[%s3 + $0xe0] sm:$0xff]
    %v815 = vld [vmem:[%s3 + $0xe8] sm:$0xff]
    %v816 = vld [vmem:[%s3 + $0xf0] sm:$0xff]
    %v817 = vld [vmem:[%s3 + $0xf8] sm:$0xff]
    %v818 = vld [vmem:[%s3 + $0x100] sm:$0xff]
    %v819 = vld [vmem:[%s3 + $0x108] sm:$0xff]
    %v820 = vld [vmem:[%s3 + $0x110] sm:$0xff]
    %v821 = vld [vmem:[%s3 + $0x118] sm:$0xff]
    %v822 = vld [vmem:[%s3 + $0x120] sm:$0xff]
    %v823 = vld [vmem:[%s3 + $0x128] sm:$0xff]
    %v824 = vld [vmem:[%s3 + $0x130] sm:$0xff]
    %v825 = vld [vmem:[%s3 + $0x138] sm:$0xff]
    %v826 = vld [vmem:[%s3 + $0x140] sm:$0xff]
    %v827 = vld [vmem:[%s3 + $0x148] sm:$0xff]
    %v828 = vld [vmem:[%s3 + $0x150] sm:$0xff]
    %v829 = vld [vmem:[%s3 + $0x158] sm:$0xff]
    %v830 = vld [vmem:[%s3 + $0x160] sm:$0xff]
    %v831 = vld [vmem:[%s3 + $0x168] sm:$0xff]
    %v832 = vld [vmem:[%s3 + $0x170] sm:$0xff]
    %v833 = vld [vmem:[%s3 + $0x178] sm:$0xff]
    %v834 = vld [vmem:[%s3 + $0x180] sm:$0xff]
    %v835 = vld [vmem:[%s3 + $0x188] sm:$0xff]
    %v836 = vld [vmem:[%s3 + $0x190] sm:$0xff]
    %v837 = vld [vmem:[%s3 + $0x198] sm:$0xff]
    %v838 = vld [vmem:[%s3 + $0x1a0] sm:$0xff]
    %v839 = vld [vmem:[%s3 + $0x1a8] sm:$0xff]
    %v840 = vld [vmem:[%s3 + $0x1b0] sm:$0xff]
    %v841 = vld [vmem:[%s3 + $0x1b8] sm:$0xff]
    %v842 = vld [vmem:[%s3 + $0x1c0] sm:$0xff]
    %v843 = vld [vmem:[%s3 + $0x1c8] sm:$0xff]
    %v844 = vld [vmem:[%s3 + $0x1d0] sm:$0xff]
    %v845 = vld [vmem:[%s3 + $0x1d8] sm:$0xff]
    %v846 = vld [vmem:[%s3 + $0x1e0] sm:$0xff]
    %v847 = vld [vmem:[%s3 + $0x1e8] sm:$0xff]
    %v848 = vld [vmem:[%s3 + $0x1f0] sm:$0xff]
    %v849 = vld [vmem:[%s3 + $0x1f8] sm:$0xff]
    %v850 = vpack.c.bf16 %v783, %v780
    %v851 = vld [vmem:[%s4] sm:$0xff]
    %v853 = vlaneseq
    %v854 = vshrl.u32 %v853, 7
    %v855 = vsub.s32 0, %v854
    %v856 = vrot.slane %v851, %v855
    %v857 = vlaneseq
    %v858 = vshrl.u32 %v857, 7
    %v859 = vsub.s32 1, %v858
    %v860 = vrot.slane %v851, %v859
    %v861 = vlaneseq
    %v862 = vshrl.u32 %v861, 7
    %v863 = vsub.s32 2, %v862
    %v864 = vrot.slane %v851, %v863
    %v865 = vlaneseq
    %v866 = vshrl.u32 %v865, 7
    %v867 = vsub.s32 3, %v866
    %v868 = vrot.slane %v851, %v867
    %v869 = vlaneseq
    %v870 = vshrl.u32 %v869, 7
    %v871 = vsub.s32 4, %v870
    %v872 = vrot.slane %v851, %v871
    %v873 = vlaneseq
    %v874 = vshrl.u32 %v873, 7
    %v875 = vsub.s32 5, %v874
    %v876 = vrot.slane %v851, %v875
    %v877 = vlaneseq
    %v878 = vshrl.u32 %v877, 7
    %v879 = vsub.s32 6, %v878
    %v880 = vrot.slane %v851, %v879
    %v881 = vlaneseq
    %v882 = vshrl.u32 %v881, 7
    %v883 = vsub.s32 7, %v882
    %v884 = vrot.slane %v851, %v883
    %v957 = vunpack.c.l.b16 %v786
    %v958 = vunpack.c.h.b16 %v786
    %v959 = vunpack.c.l.b16 %v787
    %v960 = vunpack.c.h.b16 %v787
    %v961 = vunpack.c.l.b16 %v788
    %v962 = vunpack.c.h.b16 %v788
    %v963 = vunpack.c.l.b16 %v789
    %v964 = vunpack.c.h.b16 %v789
    %v965 = vunpack.c.l.b16 %v790
    %v966 = vunpack.c.h.b16 %v790
    %v967 = vunpack.c.l.b16 %v791
    %v968 = vunpack.c.h.b16 %v791
    %v969 = vunpack.c.l.b16 %v792
    %v970 = vunpack.c.h.b16 %v792
    %v971 = vunpack.c.l.b16 %v793
    %v972 = vunpack.c.h.b16 %v793
    %v973 = vunpack.c.l.b16 %v794
    %v974 = vunpack.c.h.b16 %v794
    %v975 = vunpack.c.l.b16 %v795
    %v976 = vunpack.c.h.b16 %v795
    %v977 = vunpack.c.l.b16 %v796
    %v978 = vunpack.c.h.b16 %v796
    %v979 = vunpack.c.l.b16 %v797
    %v980 = vunpack.c.h.b16 %v797
    %v981 = vunpack.c.l.b16 %v798
    %v982 = vunpack.c.h.b16 %v798
    %v983 = vunpack.c.l.b16 %v799
    %v984 = vunpack.c.h.b16 %v799
    %v985 = vunpack.c.l.b16 %v800
    %v986 = vunpack.c.h.b16 %v800
    %v987 = vunpack.c.l.b16 %v801
    %v988 = vunpack.c.h.b16 %v801
    %v989 = vunpack.c.l.b16 %v802
    %v990 = vunpack.c.h.b16 %v802
    %v991 = vunpack.c.l.b16 %v803
    %v992 = vunpack.c.h.b16 %v803
    %v993 = vunpack.c.l.b16 %v804
    %v994 = vunpack.c.h.b16 %v804
    %v995 = vunpack.c.l.b16 %v805
    %v996 = vunpack.c.h.b16 %v805
    %v997 = vunpack.c.l.b16 %v806
    %v998 = vunpack.c.h.b16 %v806
    %v999 = vunpack.c.l.b16 %v807
    %v1000 = vunpack.c.h.b16 %v807
    %v1001 = vunpack.c.l.b16 %v808
    %v1002 = vunpack.c.h.b16 %v808
    %v1003 = vunpack.c.l.b16 %v809
    %v1004 = vunpack.c.h.b16 %v809
    %v1005 = vunpack.c.l.b16 %v810
    %v1006 = vunpack.c.h.b16 %v810
    %v1007 = vunpack.c.l.b16 %v811
    %v1008 = vunpack.c.h.b16 %v811
    %v1009 = vunpack.c.l.b16 %v812
    %v1010 = vunpack.c.h.b16 %v812
    %v1011 = vunpack.c.l.b16 %v813
    %v1012 = vunpack.c.h.b16 %v813
    %v1013 = vunpack.c.l.b16 %v814
    %v1014 = vunpack.c.h.b16 %v814
    %v1015 = vunpack.c.l.b16 %v815
    %v1016 = vunpack.c.h.b16 %v815
    %v1017 = vunpack.c.l.b16 %v816
    %v1018 = vunpack.c.h.b16 %v816
    %v1019 = vunpack.c.l.b16 %v817
    %v1020 = vunpack.c.h.b16 %v817
    %v1021 = vunpack.c.l.b16 %v818
    %v1022 = vunpack.c.h.b16 %v818
    %v1023 = vunpack.c.l.b16 %v819
    %v1024 = vunpack.c.h.b16 %v819
    %v1025 = vunpack.c.l.b16 %v820
    %v1026 = vunpack.c.h.b16 %v820
    %v1027 = vunpack.c.l.b16 %v821
    %v1028 = vunpack.c.h.b16 %v821
    %v1029 = vunpack.c.l.b16 %v822
    %v1030 = vunpack.c.h.b16 %v822
    %v1031 = vunpack.c.l.b16 %v823
    %v1032 = vunpack.c.h.b16 %v823
    %v1033 = vunpack.c.l.b16 %v824
    %v1034 = vunpack.c.h.b16 %v824
    %v1035 = vunpack.c.l.b16 %v825
    %v1036 = vunpack.c.h.b16 %v825
    %v1037 = vunpack.c.l.b16 %v826
    %v1038 = vunpack.c.h.b16 %v826
    %v1039 = vunpack.c.l.b16 %v827
    %v1040 = vunpack.c.h.b16 %v827
    %v1041 = vunpack.c.l.b16 %v828
    %v1042 = vunpack.c.h.b16 %v828
    %v1043 = vunpack.c.l.b16 %v829
    %v1044 = vunpack.c.h.b16 %v829
    %v1045 = vunpack.c.l.b16 %v830
    %v1046 = vunpack.c.h.b16 %v830
    %v1047 = vunpack.c.l.b16 %v831
    %v1048 = vunpack.c.h.b16 %v831
    %v1049 = vunpack.c.l.b16 %v832
    %v1050 = vunpack.c.h.b16 %v832
    %v1051 = vunpack.c.l.b16 %v833
    %v1052 = vunpack.c.h.b16 %v833
    %v1053 = vunpack.c.l.b16 %v834
    %v1054 = vunpack.c.h.b16 %v834
    %v1055 = vunpack.c.l.b16 %v835
    %v1056 = vunpack.c.h.b16 %v835
    %v1057 = vunpack.c.l.b16 %v836
    %v1058 = vunpack.c.h.b16 %v836
    %v1059 = vunpack.c.l.b16 %v837
    %v1060 = vunpack.c.h.b16 %v837
    %v1061 = vunpack.c.l.b16 %v838
    %v1062 = vunpack.c.h.b16 %v838
    %v1063 = vunpack.c.l.b16 %v839
    %v1064 = vunpack.c.h.b16 %v839
    %v1065 = vunpack.c.l.b16 %v840
    %v1066 = vunpack.c.h.b16 %v840
    %v1067 = vunpack.c.l.b16 %v841
    %v1068 = vunpack.c.h.b16 %v841
    %v1069 = vunpack.c.l.b16 %v842
    %v1070 = vunpack.c.h.b16 %v842
    %v1071 = vunpack.c.l.b16 %v843
    %v1072 = vunpack.c.h.b16 %v843
    %v1073 = vunpack.c.l.b16 %v844
    %v1074 = vunpack.c.h.b16 %v844
    %v1075 = vunpack.c.l.b16 %v845
    %v1076 = vunpack.c.h.b16 %v845
    %v1077 = vunpack.c.l.b16 %v846
    %v1078 = vunpack.c.h.b16 %v846
    %v1079 = vunpack.c.l.b16 %v847
    %v1080 = vunpack.c.h.b16 %v847
    %v1081 = vunpack.c.l.b16 %v848
    %v1082 = vunpack.c.h.b16 %v848
    %v1083 = vunpack.c.l.b16 %v849
    %v1084 = vunpack.c.h.b16 %v849
    %v1085 = vpack.c.b16 %v965, %v957
    %v1086 = vpack.c.b16 %v966, %v958
    %v1087 = vpack.c.b16 %v967, %v959
    %v1088 = vpack.c.b16 %v968, %v960
    %v1089 = vpack.c.b16 %v969, %v961
    %v1090 = vpack.c.b16 %v970, %v962
    %v1091 = vpack.c.b16 %v971, %v963
    %v1092 = vpack.c.b16 %v972, %v964
    %v1093 = vpack.c.b16 %v981, %v973
    %v1094 = vpack.c.b16 %v982, %v974
    %v1095 = vpack.c.b16 %v983, %v975
    %v1096 = vpack.c.b16 %v984, %v976
    %v1097 = vpack.c.b16 %v985, %v977
    %v1098 = vpack.c.b16 %v986, %v978
    %v1099 = vpack.c.b16 %v987, %v979
    %v1100 = vpack.c.b16 %v988, %v980
    %v1101 = vpack.c.b16 %v997, %v989
    %v1102 = vpack.c.b16 %v998, %v990
    %v1103 = vpack.c.b16 %v999, %v991
    %v1104 = vpack.c.b16 %v1000, %v992
    %v1105 = vpack.c.b16 %v1001, %v993
    %v1106 = vpack.c.b16 %v1002, %v994
    %v1107 = vpack.c.b16 %v1003, %v995
    %v1108 = vpack.c.b16 %v1004, %v996
    %v1109 = vpack.c.b16 %v1013, %v1005
    %v1110 = vpack.c.b16 %v1014, %v1006
    %v1111 = vpack.c.b16 %v1015, %v1007
    %v1112 = vpack.c.b16 %v1016, %v1008
    %v1113 = vpack.c.b16 %v1017, %v1009
    %v1114 = vpack.c.b16 %v1018, %v1010
    %v1115 = vpack.c.b16 %v1019, %v1011
    %v1116 = vpack.c.b16 %v1020, %v1012
    %v1117 = vpack.c.b16 %v1029, %v1021
    %v1118 = vpack.c.b16 %v1030, %v1022
    %v1119 = vpack.c.b16 %v1031, %v1023
    %v1120 = vpack.c.b16 %v1032, %v1024
    %v1121 = vpack.c.b16 %v1033, %v1025
    %v1122 = vpack.c.b16 %v1034, %v1026
    %v1123 = vpack.c.b16 %v1035, %v1027
    %v1124 = vpack.c.b16 %v1036, %v1028
    %v1125 = vpack.c.b16 %v1045, %v1037
    %v1126 = vpack.c.b16 %v1046, %v1038
    %v1127 = vpack.c.b16 %v1047, %v1039
    %v1128 = vpack.c.b16 %v1048, %v1040
    %v1129 = vpack.c.b16 %v1049, %v1041
    %v1130 = vpack.c.b16 %v1050, %v1042
    %v1131 = vpack.c.b16 %v1051, %v1043
    %v1132 = vpack.c.b16 %v1052, %v1044
    %v1133 = vpack.c.b16 %v1061, %v1053
    %v1134 = vpack.c.b16 %v1062, %v1054
    %v1135 = vpack.c.b16 %v1063, %v1055
    %v1136 = vpack.c.b16 %v1064, %v1056
    %v1137 = vpack.c.b16 %v1065, %v1057
    %v1138 = vpack.c.b16 %v1066, %v1058
    %v1139 = vpack.c.b16 %v1067, %v1059
    %v1140 = vpack.c.b16 %v1068, %v1060
    %v1141 = vpack.c.b16 %v1077, %v1069
    %v1142 = vpack.c.b16 %v1078, %v1070
    %v1143 = vpack.c.b16 %v1079, %v1071
    %v1144 = vpack.c.b16 %v1080, %v1072
    %v1145 = vpack.c.b16 %v1081, %v1073
    %v1146 = vpack.c.b16 %v1082, %v1074
    %v1147 = vpack.c.b16 %v1083, %v1075
    %v1148 = vpack.c.b16 %v1084, %v1076
    %1213 = vmatprep.subr.bf16.mxu0 %v1142
    %1214 = vmatpush1.bf16.msra.mxu0 %v1141
    %1215 = vmatprep.subr.bf16.mxu0 %v1134
    %1216 = vmatpush1.bf16.msra.mxu0 %v1133
    %1217 = vmatprep.subr.bf16.mxu0 %v1126
    %1218 = vmatpush1.bf16.msra.mxu0 %v1125
    %1219 = vmatprep.subr.bf16.mxu0 %v1118
    %1220 = vmatpush1.bf16.msra.mxu0 %v1117
    %1221 = vmatprep.subr.bf16.mxu0 %v1110
    %1222 = vmatpush1.bf16.msra.mxu0 %v1109
    %1223 = vmatprep.subr.bf16.mxu0 %v1102
    %1224 = vmatpush1.bf16.msra.mxu0 %v1101
    %1225 = vmatprep.subr.bf16.mxu0 %v1094
    %1226 = vmatpush1.bf16.msra.mxu0 %v1093
    %1227 = vmatprep.subr.bf16.mxu0 %v1086
    %1228 = vmatpush1.bf16.msra.mxu0 %v1085
    %1229 = vmatprep.subr.bf16.mxu0 0
    %1230 = vmatpush2.bf16.msra.mxu0 0
    %1231 = vmatprep.subr.bf16.mxu0 0
    %1232 = vmatpush2.bf16.msra.mxu0 0
    %1233 = vmatprep.subr.bf16.mxu0 0
    %1234 = vmatpush2.bf16.msra.mxu0 0
    %1235 = vmatprep.subr.bf16.mxu0 0
    %1236 = vmatpush2.bf16.msra.mxu0 0
    %1237 = vmatprep.subr.bf16.mxu0 0
    %1238 = vmatpush2.bf16.msra.mxu0 0
    %1239 = vmatprep.subr.bf16.mxu0 0
    %1240 = vmatpush2.bf16.msra.mxu0 0
    %1241 = vmatprep.subr.bf16.mxu0 0
    %1242 = vmatpush2.bf16.msra.mxu0 0
    %1243 = vmatprep.subr.bf16.mxu0 0
    %1244 = vmatpush2.bf16.msra.mxu0 0
    %1245 = vmatprep.mubr.bf16.mxu0 0
    %1246 = vmatmul.mubr.bf16.gmra.mxu0 %v850
    %v1247 = vpop.f32.mrf.mxu0
    %v1248 = vadd.f32 %v856, %v1247
    %v1249 = vpop.f32.mrf.mxu0
    %v1250 = vadd.f32 %v860, %v1249
    %v1251 = vpop.f32.mrf.mxu0
    %v1252 = vadd.f32 %v856, %v1251
    %v1253 = vpop.f32.mrf.mxu0
    %v1254 = vadd.f32 %v860, %v1253
    %1255 = vdwg.mxu0
    %1256 = vmatprep.subr.bf16.mxu0 %v1144
    %1257 = vmatpush1.bf16.msra.mxu0 %v1143
    %1258 = vmatprep.subr.bf16.mxu0 %v1136
    %1259 = vmatpush1.bf16.msra.mxu0 %v1135
    %1260 = vmatprep.subr.bf16.mxu0 %v1128
    %1261 = vmatpush1.bf16.msra.mxu0 %v1127
    %1262 = vmatprep.subr.bf16.mxu0 %v1120
    %1263 = vmatpush1.bf16.msra.mxu0 %v1119
    %1264 = vmatprep.subr.bf16.mxu0 %v1112
    %1265 = vmatpush1.bf16.msra.mxu0 %v1111
    %1266 = vmatprep.subr.bf16.mxu0 %v1104
    %1267 = vmatpush1.bf16.msra.mxu0 %v1103
    %1268 = vmatprep.subr.bf16.mxu0 %v1096
    %1269 = vmatpush1.bf16.msra.mxu0 %v1095
    %1270 = vmatprep.subr.bf16.mxu0 %v1088
    %1271 = vmatpush1.bf16.msra.mxu0 %v1087
    %1272 = vmatprep.subr.bf16.mxu0 0
    %1273 = vmatpush2.bf16.msra.mxu0 0
    %1274 = vmatprep.subr.bf16.mxu0 0
    %1275 = vmatpush2.bf16.msra.mxu0 0
    %1276 = vmatprep.subr.bf16.mxu0 0
    %1277 = vmatpush2.bf16.msra.mxu0 0
    %1278 = vmatprep.subr.bf16.mxu0 0
    %1279 = vmatpush2.bf16.msra.mxu0 0
    %1280 = vmatprep.subr.bf16.mxu0 0
    %1281 = vmatpush2.bf16.msra.mxu0 0
    %1282 = vmatprep.subr.bf16.mxu0 0
    %1283 = vmatpush2.bf16.msra.mxu0 0
    %1284 = vmatprep.subr.bf16.mxu0 0
    %1285 = vmatpush2.bf16.msra.mxu0 0
    %1286 = vmatprep.subr.bf16.mxu0 0
    %1287 = vmatpush2.bf16.msra.mxu0 0
    %1288 = vmatprep.mubr.bf16.mxu0 0
    %1289 = vmatmul.mubr.bf16.gmra.mxu0 %v850
    %v1290 = vpop.f32.mrf.mxu0
    %v1291 = vadd.f32 %v864, %v1290
    %v1292 = vpop.f32.mrf.mxu0
    %v1293 = vadd.f32 %v868, %v1292
    %v1294 = vpop.f32.mrf.mxu0
    %v1295 = vadd.f32 %v864, %v1294
    %v1296 = vpop.f32.mrf.mxu0
    %v1297 = vadd.f32 %v868, %v1296
    %1298 = vdwg.mxu0
    %1299 = vmatprep.subr.bf16.mxu0 %v1146
    %1300 = vmatpush1.bf16.msra.mxu0 %v1145
    %1301 = vmatprep.subr.bf16.mxu0 %v1138
    %1302 = vmatpush1.bf16.msra.mxu0 %v1137
    %1303 = vmatprep.subr.bf16.mxu0 %v1130
    %1304 = vmatpush1.bf16.msra.mxu0 %v1129
    %1305 = vmatprep.subr.bf16.mxu0 %v1122
    %1306 = vmatpush1.bf16.msra.mxu0 %v1121
    %1307 = vmatprep.subr.bf16.mxu0 %v1114
    %1308 = vmatpush1.bf16.msra.mxu0 %v1113
    %1309 = vmatprep.subr.bf16.mxu0 %v1106
    %1310 = vmatpush1.bf16.msra.mxu0 %v1105
    %1311 = vmatprep.subr.bf16.mxu0 %v1098
    %1312 = vmatpush1.bf16.msra.mxu0 %v1097
    %1313 = vmatprep.subr.bf16.mxu0 %v1090
    %1314 = vmatpush1.bf16.msra.mxu0 %v1089
    %1315 = vmatprep.subr.bf16.mxu0 0
    %1316 = vmatpush2.bf16.msra.mxu0 0
    %1317 = vmatprep.subr.bf16.mxu0 0
    %1318 = vmatpush2.bf16.msra.mxu0 0
    %1319 = vmatprep.subr.bf16.mxu0 0
    %1320 = vmatpush2.bf16.msra.mxu0 0
    %1321 = vmatprep.subr.bf16.mxu0 0
    %1322 = vmatpush2.bf16.msra.mxu0 0
    %1323 = vmatprep.subr.bf16.mxu0 0
    %1324 = vmatpush2.bf16.msra.mxu0 0
    %1325 = vmatprep.subr.bf16.mxu0 0
    %1326 = vmatpush2.bf16.msra.mxu0 0
    %1327 = vmatprep.subr.bf16.mxu0 0
    %1328 = vmatpush2.bf16.msra.mxu0 0
    %1329 = vmatprep.subr.bf16.mxu0 0
    %1330 = vmatpush2.bf16.msra.mxu0 0
    %1331 = vmatprep.mubr.bf16.mxu0 0
    %1332 = vmatmul.mubr.bf16.gmra.mxu0 %v850
    %v1333 = vpop.f32.mrf.mxu0
    %v1334 = vadd.f32 %v872, %v1333
    %v1335 = vpop.f32.mrf.mxu0
    %v1336 = vadd.f32 %v876, %v1335
    %v1337 = vpop.f32.mrf.mxu0
    %v1338 = vadd.f32 %v872, %v1337
    %v1339 = vpop.f32.mrf.mxu0
    %v1340 = vadd.f32 %v876, %v1339
    %1341 = vdwg.mxu0
    %1342 = vmatprep.subr.bf16.mxu0 %v1148
    %1343 = vmatpush1.bf16.msra.mxu0 %v1147
    %1344 = vmatprep.subr.bf16.mxu0 %v1140
    %1345 = vmatpush1.bf16.msra.mxu0 %v1139
    %1346 = vmatprep.subr.bf16.mxu0 %v1132
    %1347 = vmatpush1.bf16.msra.mxu0 %v1131
    %1348 = vmatprep.subr.bf16.mxu0 %v1124
    %1349 = vmatpush1.bf16.msra.mxu0 %v1123
    %1350 = vmatprep.subr.bf16.mxu0 %v1116
    %1351 = vmatpush1.bf16.msra.mxu0 %v1115
    %1352 = vmatprep.subr.bf16.mxu0 %v1108
    %1353 = vmatpush1.bf16.msra.mxu0 %v1107
    %1354 = vmatprep.subr.bf16.mxu0 %v1100
    %1355 = vmatpush1.bf16.msra.mxu0 %v1099
    %1356 = vmatprep.subr.bf16.mxu0 %v1092
    %1357 = vmatpush1.bf16.msra.mxu0 %v1091
    %1358 = vmatprep.subr.bf16.mxu0 0
    %1359 = vmatpush2.bf16.msra.mxu0 0
    %1360 = vmatprep.subr.bf16.mxu0 0
    %1361 = vmatpush2.bf16.msra.mxu0 0
    %1362 = vmatprep.subr.bf16.mxu0 0
    %1363 = vmatpush2.bf16.msra.mxu0 0
    %1364 = vmatprep.subr.bf16.mxu0 0
    %1365 = vmatpush2.bf16.msra.mxu0 0
    %1366 = vmatprep.subr.bf16.mxu0 0
    %1367 = vmatpush2.bf16.msra.mxu0 0
    %1368 = vmatprep.subr.bf16.mxu0 0
    %1369 = vmatpush2.bf16.msra.mxu0 0
    %1370 = vmatprep.subr.bf16.mxu0 0
    %1371 = vmatpush2.bf16.msra.mxu0 0
    %1372 = vmatprep.subr.bf16.mxu0 0
    %1373 = vmatpush2.bf16.msra.mxu0 0
    %1374 = vmatprep.mubr.bf16.mxu0 0
    %1375 = vmatmul.mubr.bf16.gmra.mxu0 %v850
    %v1376 = vpop.f32.mrf.mxu0
    %v1377 = vadd.f32 %v880, %v1376
    %v1378 = vpop.f32.mrf.mxu0
    %v1379 = vadd.f32 %v884, %v1378
    %v1380 = vpop.f32.mrf.mxu0
    %v1381 = vadd.f32 %v880, %v1380
    %v1382 = vpop.f32.mrf.mxu0
    %v1383 = vadd.f32 %v884, %v1382
    %1384 = vdwg.mxu0
    %1385 = vst [vmem:[#allocation2] sm:$0xff] %v1248
    %1386 = vst [vmem:[#allocation2 + $0x8] sm:$0xff] %v1250
    %1387 = vst [vmem:[#allocation2 + $0x10] sm:$0xff] %v1291
    %1388 = vst [vmem:[#allocation2 + $0x18] sm:$0xff] %v1293
    %1389 = vst [vmem:[#allocation2 + $0x20] sm:$0xff] %v1334
    %1390 = vst [vmem:[#allocation2 + $0x28] sm:$0xff] %v1336
    %1391 = vst [vmem:[#allocation2 + $0x30] sm:$0xff] %v1377
    %1392 = vst [vmem:[#allocation2 + $0x38] sm:$0xff] %v1379
    %1393 = vst [vmem:[#allocation2 + $0x40] sm:$0xff] %v1252
    %1394 = vst [vmem:[#allocation2 + $0x48] sm:$0xff] %v1254
    %1395 = vst [vmem:[#allocation2 + $0x50] sm:$0xff] %v1295
    %1396 = vst [vmem:[#allocation2 + $0x58] sm:$0xff] %v1297
    %1397 = vst [vmem:[#allocation2 + $0x60] sm:$0xff] %v1338
    %1398 = vst [vmem:[#allocation2 + $0x68] sm:$0xff] %v1340
    %1399 = vst [vmem:[#allocation2 + $0x70] sm:$0xff] %v1381
    %1400 = vst [vmem:[#allocation2 + $0x78] sm:$0xff] %v1383
    %v1401 = vld [vmem:[#allocation2] sm:$0x3]
    %v1402 = vld [vmem:[#allocation2 + $0x8] sm:$0x3]
    %v1403 = vld [vmem:[#allocation2 + $0x10] sm:$0x3]
    %v1404 = vld [vmem:[#allocation2 + $0x18] sm:$0x3]
    %v1405 = vld [vmem:[%s5] sm:$0xff]
    %v1406 = vld [vmem:[%s5 + $0x8] sm:$0xff]
    %v1407 = vld [vmem:[%s5 + $0x10] sm:$0xff]
    %v1408 = vld [vmem:[%s5 + $0x18] sm:$0xff]
    %v1409 = vld [vmem:[%s5 + $0x20] sm:$0xff]
    %v1410 = vld [vmem:[%s5 + $0x28] sm:$0xff]
    %v1411 = vld [vmem:[%s5 + $0x30] sm:$0xff]
    %v1412 = vld [vmem:[%s5 + $0x38] sm:$0xff]
    %v1413 = vld [vmem:[%s5 + $0x40] sm:$0xff]
    %v1414 = vld [vmem:[%s5 + $0x48] sm:$0xff]
    %v1415 = vld [vmem:[%s5 + $0x50] sm:$0xff]
    %v1416 = vld [vmem:[%s5 + $0x58] sm:$0xff]
    %v1417 = vld [vmem:[%s5 + $0x60] sm:$0xff]
    %v1418 = vld [vmem:[%s5 + $0x68] sm:$0xff]
    %v1419 = vld [vmem:[%s5 + $0x70] sm:$0xff]
    %v1420 = vld [vmem:[%s5 + $0x78] sm:$0xff]
    %v1421 = vld [vmem:[%s5 + $0x80] sm:$0xff]
    %v1422 = vld [vmem:[%s5 + $0x88] sm:$0xff]
    %v1423 = vld [vmem:[%s5 + $0x90] sm:$0xff]
    %v1424 = vld [vmem:[%s5 + $0x98] sm:$0xff]
    %v1425 = vld [vmem:[%s5 + $0xa0] sm:$0xff]
    %v1426 = vld [vmem:[%s5 + $0xa8] sm:$0xff]
    %v1427 = vld [vmem:[%s5 + $0xb0] sm:$0xff]
    %v1428 = vld [vmem:[%s5 + $0xb8] sm:$0xff]
    %v1429 = vld [vmem:[%s5 + $0xc0] sm:$0xff]
    %v1430 = vld [vmem:[%s5 + $0xc8] sm:$0xff]
    %v1431 = vld [vmem:[%s5 + $0xd0] sm:$0xff]
    %v1432 = vld [vmem:[%s5 + $0xd8] sm:$0xff]
    %v1433 = vld [vmem:[%s5 + $0xe0] sm:$0xff]
    %v1434 = vld [vmem:[%s5 + $0xe8] sm:$0xff]
    %v1435 = vld [vmem:[%s5 + $0xf0] sm:$0xff]
    %v1436 = vld [vmem:[%s5 + $0xf8] sm:$0xff]
    %v1469 = vunpack.c.l.b16 %v1405
    %v1470 = vunpack.c.h.b16 %v1405
    %v1471 = vunpack.c.l.b16 %v1406
    %v1472 = vunpack.c.h.b16 %v1406
    %v1473 = vunpack.c.l.b16 %v1407
    %v1474 = vunpack.c.h.b16 %v1407
    %v1475 = vunpack.c.l.b16 %v1408
    %v1476 = vunpack.c.h.b16 %v1408
    %v1477 = vunpack.c.l.b16 %v1409
    %v1478 = vunpack.c.h.b16 %v1409
    %v1479 = vunpack.c.l.b16 %v1410
    %v1480 = vunpack.c.h.b16 %v1410
    %v1481 = vunpack.c.l.b16 %v1411
    %v1482 = vunpack.c.h.b16 %v1411
    %v1483 = vunpack.c.l.b16 %v1412
    %v1484 = vunpack.c.h.b16 %v1412
    %v1485 = vunpack.c.l.b16 %v1413
    %v1486 = vunpack.c.h.b16 %v1413
    %v1487 = vunpack.c.l.b16 %v1414
    %v1488 = vunpack.c.h.b16 %v1414
    %v1489 = vunpack.c.l.b16 %v1415
    %v1490 = vunpack.c.h.b16 %v1415
    %v1491 = vunpack.c.l.b16 %v1416
    %v1492 = vunpack.c.h.b16 %v1416
    %v1493 = vunpack.c.l.b16 %v1417
    %v1494 = vunpack.c.h.b16 %v1417
    %v1495 = vunpack.c.l.b16 %v1418
    %v1496 = vunpack.c.h.b16 %v1418
    %v1497 = vunpack.c.l.b16 %v1419
    %v1498 = vunpack.c.h.b16 %v1419
    %v1499 = vunpack.c.l.b16 %v1420
    %v1500 = vunpack.c.h.b16 %v1420
    %v1501 = vunpack.c.l.b16 %v1421
    %v1502 = vunpack.c.h.b16 %v1421
    %v1503 = vunpack.c.l.b16 %v1422
    %v1504 = vunpack.c.h.b16 %v1422
    %v1505 = vunpack.c.l.b16 %v1423
    %v1506 = vunpack.c.h.b16 %v1423
    %v1507 = vunpack.c.l.b16 %v1424
    %v1508 = vunpack.c.h.b16 %v1424
    %v1509 = vunpack.c.l.b16 %v1425
    %v1510 = vunpack.c.h.b16 %v1425
    %v1511 = vunpack.c.l.b16 %v1426
    %v1512 = vunpack.c.h.b16 %v1426
    %v1513 = vunpack.c.l.b16 %v1427
    %v1514 = vunpack.c.h.b16 %v1427
    %v1515 = vunpack.c.l.b16 %v1428
    %v1516 = vunpack.c.h.b16 %v1428
    %v1517 = vunpack.c.l.b16 %v1429
    %v1518 = vunpack.c.h.b16 %v1429
    %v1519 = vunpack.c.l.b16 %v1430
    %v1520 = vunpack.c.h.b16 %v1430
    %v1521 = vunpack.c.l.b16 %v1431
    %v1522 = vunpack.c.h.b16 %v1431
    %v1523 = vunpack.c.l.b16 %v1432
    %v1524 = vunpack.c.h.b16 %v1432
    %v1525 = vunpack.c.l.b16 %v1433
    %v1526 = vunpack.c.h.b16 %v1433
    %v1527 = vunpack.c.l.b16 %v1434
    %v1528 = vunpack.c.h.b16 %v1434
    %v1529 = vunpack.c.l.b16 %v1435
    %v1530 = vunpack.c.h.b16 %v1435
    %v1531 = vunpack.c.l.b16 %v1436
    %v1532 = vunpack.c.h.b16 %v1436
    %v1533 = vpack.c.b16 %v1473, %v1469
    %v1534 = vpack.c.b16 %v1474, %v1470
    %v1535 = vpack.c.b16 %v1475, %v1471
    %v1536 = vpack.c.b16 %v1476, %v1472
    %v1537 = vpack.c.b16 %v1481, %v1477
    %v1538 = vpack.c.b16 %v1482, %v1478
    %v1539 = vpack.c.b16 %v1483, %v1479
    %v1540 = vpack.c.b16 %v1484, %v1480
    %v1541 = vpack.c.b16 %v1489, %v1485
    %v1542 = vpack.c.b16 %v1490, %v1486
    %v1543 = vpack.c.b16 %v1491, %v1487
    %v1544 = vpack.c.b16 %v1492, %v1488
    %v1545 = vpack.c.b16 %v1497, %v1493
    %v1546 = vpack.c.b16 %v1498, %v1494
    %v1547 = vpack.c.b16 %v1499, %v1495
    %v1548 = vpack.c.b16 %v1500, %v1496
    %v1549 = vpack.c.b16 %v1505, %v1501
    %v1550 = vpack.c.b16 %v1506, %v1502
    %v1551 = vpack.c.b16 %v1507, %v1503
    %v1552 = vpack.c.b16 %v1508, %v1504
    %v1553 = vpack.c.b16 %v1513, %v1509
    %v1554 = vpack.c.b16 %v1514, %v1510
    %v1555 = vpack.c.b16 %v1515, %v1511
    %v1556 = vpack.c.b16 %v1516, %v1512
    %v1557 = vpack.c.b16 %v1521, %v1517
    %v1558 = vpack.c.b16 %v1522, %v1518
    %v1559 = vpack.c.b16 %v1523, %v1519
    %v1560 = vpack.c.b16 %v1524, %v1520
    %v1561 = vpack.c.b16 %v1529, %v1525
    %v1562 = vpack.c.b16 %v1530, %v1526
    %v1563 = vpack.c.b16 %v1531, %v1527
    %v1564 = vpack.c.b16 %v1532, %v1528
    %1597 = vmatprep.subr.bf16.mxu0 %v1562
    %1598 = vmatpush1.bf16.msra.mxu0 %v1561
    %1599 = vmatprep.subr.bf16.mxu0 %v1558
    %1600 = vmatpush1.bf16.msra.mxu0 %v1557
    %1601 = vmatprep.subr.bf16.mxu0 %v1554
    %1602 = vmatpush1.bf16.msra.mxu0 %v1553
    %1603 = vmatprep.subr.bf16.mxu0 %v1550
    %1604 = vmatpush1.bf16.msra.mxu0 %v1549
    %1605 = vmatprep.subr.bf16.mxu0 %v1546
    %1606 = vmatpush1.bf16.msra.mxu0 %v1545
    %1607 = vmatprep.subr.bf16.mxu0 %v1542
    %1608 = vmatpush1.bf16.msra.mxu0 %v1541
    %1609 = vmatprep.subr.bf16.mxu0 %v1538
    %1610 = vmatpush1.bf16.msra.mxu0 %v1537
    %1611 = vmatprep.subr.bf16.mxu0 %v1534
    %1612 = vmatpush1.bf16.msra.mxu0 %v1533
    %1613 = vmatprep.subr.bf16.mxu0 0
    %1614 = vmatpush2.bf16.msra.mxu0 0
    %1615 = vmatprep.subr.bf16.mxu0 0
    %1616 = vmatpush2.bf16.msra.mxu0 0
    %1617 = vmatprep.subr.bf16.mxu0 0
    %1618 = vmatpush2.bf16.msra.mxu0 0
    %1619 = vmatprep.subr.bf16.mxu0 0
    %1620 = vmatpush2.bf16.msra.mxu0 0
    %1621 = vmatprep.subr.bf16.mxu0 0
    %1622 = vmatpush2.bf16.msra.mxu0 0
    %1623 = vmatprep.subr.bf16.mxu0 0
    %1624 = vmatpush2.bf16.msra.mxu0 0
    %1625 = vmatprep.subr.bf16.mxu0 0
    %1626 = vmatpush2.bf16.msra.mxu0 0
    %1627 = vmatprep.subr.bf16.mxu0 0
    %1628 = vmatpush2.bf16.msra.mxu0 0
    %1629 = vmatprep.mubr.bf16.mxu0 0
    %1630 = vmatmul.mubr.bf16.gmra.mxu0 0
    %v1631 = vpop.f32.mrf.mxu0
    %v1632 = vadd.f32 0.0, %v1631
    %v1633 = vpop.f32.mrf.mxu0
    %v1634 = vadd.f32 0.0, %v1633
    %v1635 = vpop.f32.mrf.mxu0
    %v1636 = vpop.f32.mrf.mxu0
    %1637 = vdwg.mxu0
    %1638 = vmatprep.subr.bf16.mxu0 %v1564
    %1639 = vmatpush1.bf16.msra.mxu0 %v1563
    %1640 = vmatprep.subr.bf16.mxu0 %v1560
    %1641 = vmatpush1.bf16.msra.mxu0 %v1559
    %1642 = vmatprep.subr.bf16.mxu0 %v1556
    %1643 = vmatpush1.bf16.msra.mxu0 %v1555
    %1644 = vmatprep.subr.bf16.mxu0 %v1552
    %1645 = vmatpush1.bf16.msra.mxu0 %v1551
    %1646 = vmatprep.subr.bf16.mxu0 %v1548
    %1647 = vmatpush1.bf16.msra.mxu0 %v1547
    %1648 = vmatprep.subr.bf16.mxu0 %v1544
    %1649 = vmatpush1.bf16.msra.mxu0 %v1543
    %1650 = vmatprep.subr.bf16.mxu0 %v1540
    %1651 = vmatpush1.bf16.msra.mxu0 %v1539
    %1652 = vmatprep.subr.bf16.mxu0 %v1536
    %1653 = vmatpush1.bf16.msra.mxu0 %v1535
    %1654 = vmatprep.subr.bf16.mxu0 0
    %1655 = vmatpush2.bf16.msra.mxu0 0
    %1656 = vmatprep.subr.bf16.mxu0 0
    %1657 = vmatpush2.bf16.msra.mxu0 0
    %1658 = vmatprep.subr.bf16.mxu0 0
    %1659 = vmatpush2.bf16.msra.mxu0 0
    %1660 = vmatprep.subr.bf16.mxu0 0
    %1661 = vmatpush2.bf16.msra.mxu0 0
    %1662 = vmatprep.subr.bf16.mxu0 0
    %1663 = vmatpush2.bf16.msra.mxu0 0
    %1664 = vmatprep.subr.bf16.mxu0 0
    %1665 = vmatpush2.bf16.msra.mxu0 0
    %1666 = vmatprep.subr.bf16.mxu0 0
    %1667 = vmatpush2.bf16.msra.mxu0 0
    %1668 = vmatprep.subr.bf16.mxu0 0
    %1669 = vmatpush2.bf16.msra.mxu0 0
    %1670 = vmatprep.mubr.bf16.mxu0 0
    %1671 = vmatmul.mubr.bf16.gmra.mxu0 0
    %v1672 = vpop.f32.mrf.mxu0
    %v1673 = vadd.f32 0.0, %v1672
    %v1674 = vpop.f32.mrf.mxu0
    %v1675 = vadd.f32 0.0, %v1674
    %v1676 = vpop.f32.mrf.mxu0
    %v1677 = vpop.f32.mrf.mxu0
    %1678 = vdwg.mxu0
    %v1679 = vadd.f32 %v1401, %v1632
    %v1680 = vadd.f32 %v1402, %v1634
    %v1681 = vadd.f32 %v1403, %v1673
    %v1682 = vadd.f32 %v1404, %v1675
    %v1683 = vld [vmem:[#allocation2 + $0x60] sm:$0xc0]
    %v1684 = vld [vmem:[#allocation2 + $0x68] sm:$0xc0]
    %v1685 = vld [vmem:[#allocation2 + $0x70] sm:$0xc0]
    %v1686 = vld [vmem:[#allocation2 + $0x78] sm:$0xc0]
    %v1687 = vld [vmem:[%s6] sm:$0xff]
    %v1688 = vld [vmem:[%s6 + $0x8] sm:$0xff]
    %v1689 = vld [vmem:[%s6 + $0x10] sm:$0xff]
    %v1690 = vld [vmem:[%s6 + $0x18] sm:$0xff]
    %v1691 = vld [vmem:[%s6 + $0x20] sm:$0xff]
    %v1692 = vld [vmem:[%s6 + $0x28] sm:$0xff]
    %v1693 = vld [vmem:[%s6 + $0x30] sm:$0xff]
    %v1694 = vld [vmem:[%s6 + $0x38] sm:$0xff]
    %v1695 = vld [vmem:[%s6 + $0x40] sm:$0xff]
    %v1696 = vld [vmem:[%s6 + $0x48] sm:$0xff]
    %v1697 = vld [vmem:[%s6 + $0x50] sm:$0xff]
    %v1698 = vld [vmem:[%s6 + $0x58] sm:$0xff]
    %v1699 = vld [vmem:[%s6 + $0x60] sm:$0xff]
    %v1700 = vld [vmem:[%s6 + $0x68] sm:$0xff]
    %v1701 = vld [vmem:[%s6 + $0x70] sm:$0xff]
    %v1702 = vld [vmem:[%s6 + $0x78] sm:$0xff]
    %v1703 = vld [vmem:[%s6 + $0x80] sm:$0xff]
    %v1704 = vld [vmem:[%s6 + $0x88] sm:$0xff]
    %v1705 = vld [vmem:[%s6 + $0x90] sm:$0xff]
    %v1706 = vld [vmem:[%s6 + $0x98] sm:$0xff]
    %v1707 = vld [vmem:[%s6 + $0xa0] sm:$0xff]
    %v1708 = vld [vmem:[%s6 + $0xa8] sm:$0xff]
    %v1709 = vld [vmem:[%s6 + $0xb0] sm:$0xff]
    %v1710 = vld [vmem:[%s6 + $0xb8] sm:$0xff]
    %v1711 = vld [vmem:[%s6 + $0xc0] sm:$0xff]
    %v1712 = vld [vmem:[%s6 + $0xc8] sm:$0xff]
    %v1713 = vld [vmem:[%s6 + $0xd0] sm:$0xff]
    %v1714 = vld [vmem:[%s6 + $0xd8] sm:$0xff]
    %v1715 = vld [vmem:[%s6 + $0xe0] sm:$0xff]
    %v1716 = vld [vmem:[%s6 + $0xe8] sm:$0xff]
    %v1717 = vld [vmem:[%s6 + $0xf0] sm:$0xff]
    %v1718 = vld [vmem:[%s6 + $0xf8] sm:$0xff]
    %v1751 = vunpack.c.l.b16 %v1687
    %v1752 = vunpack.c.h.b16 %v1687
    %v1753 = vunpack.c.l.b16 %v1688
    %v1754 = vunpack.c.h.b16 %v1688
    %v1755 = vunpack.c.l.b16 %v1689
    %v1756 = vunpack.c.h.b16 %v1689
    %v1757 = vunpack.c.l.b16 %v1690
    %v1758 = vunpack.c.h.b16 %v1690
    %v1759 = vunpack.c.l.b16 %v1691
    %v1760 = vunpack.c.h.b16 %v1691
    %v1761 = vunpack.c.l.b16 %v1692
    %v1762 = vunpack.c.h.b16 %v1692
    %v1763 = vunpack.c.l.b16 %v1693
    %v1764 = vunpack.c.h.b16 %v1693
    %v1765 = vunpack.c.l.b16 %v1694
    %v1766 = vunpack.c.h.b16 %v1694
    %v1767 = vunpack.c.l.b16 %v1695
    %v1768 = vunpack.c.h.b16 %v1695
    %v1769 = vunpack.c.l.b16 %v1696
    %v1770 = vunpack.c.h.b16 %v1696
    %v1771 = vunpack.c.l.b16 %v1697
    %v1772 = vunpack.c.h.b16 %v1697
    %v1773 = vunpack.c.l.b16 %v1698
    %v1774 = vunpack.c.h.b16 %v1698
    %v1775 = vunpack.c.l.b16 %v1699
    %v1776 = vunpack.c.h.b16 %v1699
    %v1777 = vunpack.c.l.b16 %v1700
    %v1778 = vunpack.c.h.b16 %v1700
    %v1779 = vunpack.c.l.b16 %v1701
    %v1780 = vunpack.c.h.b16 %v1701
    %v1781 = vunpack.c.l.b16 %v1702
    %v1782 = vunpack.c.h.b16 %v1702
    %v1783 = vunpack.c.l.b16 %v1703
    %v1784 = vunpack.c.h.b16 %v1703
    %v1785 = vunpack.c.l.b16 %v1704
    %v1786 = vunpack.c.h.b16 %v1704
    %v1787 = vunpack.c.l.b16 %v1705
    %v1788 = vunpack.c.h.b16 %v1705
    %v1789 = vunpack.c.l.b16 %v1706
    %v1790 = vunpack.c.h.b16 %v1706
    %v1791 = vunpack.c.l.b16 %v1707
    %v1792 = vunpack.c.h.b16 %v1707
    %v1793 = vunpack.c.l.b16 %v1708
    %v1794 = vunpack.c.h.b16 %v1708
    %v1795 = vunpack.c.l.b16 %v1709
    %v1796 = vunpack.c.h.b16 %v1709
    %v1797 = vunpack.c.l.b16 %v1710
    %v1798 = vunpack.c.h.b16 %v1710
    %v1799 = vunpack.c.l.b16 %v1711
    %v1800 = vunpack.c.h.b16 %v1711
    %v1801 = vunpack.c.l.b16 %v1712
    %v1802 = vunpack.c.h.b16 %v1712
    %v1803 = vunpack.c.l.b16 %v1713
    %v1804 = vunpack.c.h.b16 %v1713
    %v1805 = vunpack.c.l.b16 %v1714
    %v1806 = vunpack.c.h.b16 %v1714
    %v1807 = vunpack.c.l.b16 %v1715
    %v1808 = vunpack.c.h.b16 %v1715
    %v1809 = vunpack.c.l.b16 %v1716
    %v1810 = vunpack.c.h.b16 %v1716
    %v1811 = vunpack.c.l.b16 %v1717
    %v1812 = vunpack.c.h.b16 %v1717
    %v1813 = vunpack.c.l.b16 %v1718
    %v1814 = vunpack.c.h.b16 %v1718
    %v1815 = vpack.c.b16 %v1755, %v1751
    %v1816 = vpack.c.b16 %v1756, %v1752
    %v1817 = vpack.c.b16 %v1757, %v1753
    %v1818 = vpack.c.b16 %v1758, %v1754
    %v1819 = vpack.c.b16 %v1763, %v1759
    %v1820 = vpack.c.b16 %v1764, %v1760
    %v1821 = vpack.c.b16 %v1765, %v1761
    %v1822 = vpack.c.b16 %v1766, %v1762
    %v1823 = vpack.c.b16 %v1771, %v1767
    %v1824 = vpack.c.b16 %v1772, %v1768
    %v1825 = vpack.c.b16 %v1773, %v1769
    %v1826 = vpack.c.b16 %v1774, %v1770
    %v1827 = vpack.c.b16 %v1779, %v1775
    %v1828 = vpack.c.b16 %v1780, %v1776
    %v1829 = vpack.c.b16 %v1781, %v1777
    %v1830 = vpack.c.b16 %v1782, %v1778
    %v1831 = vpack.c.b16 %v1787, %v1783
    %v1832 = vpack.c.b16 %v1788, %v1784
    %v1833 = vpack.c.b16 %v1789, %v1785
    %v1834 = vpack.c.b16 %v1790, %v1786
    %v1835 = vpack.c.b16 %v1795, %v1791
    %v1836 = vpack.c.b16 %v1796, %v1792
    %v1837 = vpack.c.b16 %v1797, %v1793
    %v1838 = vpack.c.b16 %v1798, %v1794
    %v1839 = vpack.c.b16 %v1803, %v1799
    %v1840 = vpack.c.b16 %v1804, %v1800
    %v1841 = vpack.c.b16 %v1805, %v1801
    %v1842 = vpack.c.b16 %v1806, %v1802
    %v1843 = vpack.c.b16 %v1811, %v1807
    %v1844 = vpack.c.b16 %v1812, %v1808
    %v1845 = vpack.c.b16 %v1813, %v1809
    %v1846 = vpack.c.b16 %v1814, %v1810
    %1879 = vmatprep.subr.bf16.mxu0 %v1844
    %1880 = vmatpush1.bf16.msra.mxu0 %v1843
    %1881 = vmatprep.subr.bf16.mxu0 %v1840
    %1882 = vmatpush1.bf16.msra.mxu0 %v1839
    %1883 = vmatprep.subr.bf16.mxu0 %v1836
    %1884 = vmatpush1.bf16.msra.mxu0 %v1835
    %1885 = vmatprep.subr.bf16.mxu0 %v1832
    %1886 = vmatpush1.bf16.msra.mxu0 %v1831
    %1887 = vmatprep.subr.bf16.mxu0 %v1828
    %1888 = vmatpush1.bf16.msra.mxu0 %v1827
    %1889 = vmatprep.subr.bf16.mxu0 %v1824
    %1890 = vmatpush1.bf16.msra.mxu0 %v1823
    %1891 = vmatprep.subr.bf16.mxu0 %v1820
    %1892 = vmatpush1.bf16.msra.mxu0 %v1819
    %1893 = vmatprep.subr.bf16.mxu0 %v1816
    %1894 = vmatpush1.bf16.msra.mxu0 %v1815
    %1895 = vmatprep.subr.bf16.mxu0 0
    %1896 = vmatpush2.bf16.msra.mxu0 0
    %1897 = vmatprep.subr.bf16.mxu0 0
    %1898 = vmatpush2.bf16.msra.mxu0 0
    %1899 = vmatprep.subr.bf16.mxu0 0
    %1900 = vmatpush2.bf16.msra.mxu0 0
    %1901 = vmatprep.subr.bf16.mxu0 0
    %1902 = vmatpush2.bf16.msra.mxu0 0
    %1903 = vmatprep.subr.bf16.mxu0 0
    %1904 = vmatpush2.bf16.msra.mxu0 0
    %1905 = vmatprep.subr.bf16.mxu0 0
    %1906 = vmatpush2.bf16.msra.mxu0 0
    %1907 = vmatprep.subr.bf16.mxu0 0
    %1908 = vmatpush2.bf16.msra.mxu0 0
    %1909 = vmatprep.subr.bf16.mxu0 0
    %1910 = vmatpush2.bf16.msra.mxu0 0
    %1911 = vmatprep.mubr.bf16.mxu0 0
    %1912 = vmatmul.mubr.bf16.gmra.mxu0 0
    %v1913 = vpop.f32.mrf.mxu0
    %v1914 = vadd.f32 0.0, %v1913
    %v1915 = vpop.f32.mrf.mxu0
    %v1916 = vadd.f32 0.0, %v1915
    %v1917 = vpop.f32.mrf.mxu0
    %v1918 = vpop.f32.mrf.mxu0
    %1919 = vdwg.mxu0
    %1920 = vmatprep.subr.bf16.mxu0 %v1846
    %1921 = vmatpush1.bf16.msra.mxu0 %v1845
    %1922 = vmatprep.subr.bf16.mxu0 %v1842
    %1923 = vmatpush1.bf16.msra.mxu0 %v1841
    %1924 = vmatprep.subr.bf16.mxu0 %v1838
    %1925 = vmatpush1.bf16.msra.mxu0 %v1837
    %1926 = vmatprep.subr.bf16.mxu0 %v1834
    %1927 = vmatpush1.bf16.msra.mxu0 %v1833
    %1928 = vmatprep.subr.bf16.mxu0 %v1830
    %1929 = vmatpush1.bf16.msra.mxu0 %v1829
    %1930 = vmatprep.subr.bf16.mxu0 %v1826
    %1931 = vmatpush1.bf16.msra.mxu0 %v1825
    %1932 = vmatprep.subr.bf16.mxu0 %v1822
    %1933 = vmatpush1.bf16.msra.mxu0 %v1821
    %1934 = vmatprep.subr.bf16.mxu0 %v1818
    %1935 = vmatpush1.bf16.msra.mxu0 %v1817
    %1936 = vmatprep.subr.bf16.mxu0 0
    %1937 = vmatpush2.bf16.msra.mxu0 0
    %1938 = vmatprep.subr.bf16.mxu0 0
    %1939 = vmatpush2.bf16.msra.mxu0 0
    %1940 = vmatprep.subr.bf16.mxu0 0
    %1941 = vmatpush2.bf16.msra.mxu0 0
    %1942 = vmatprep.subr.bf16.mxu0 0
    %1943 = vmatpush2.bf16.msra.mxu0 0
    %1944 = vmatprep.subr.bf16.mxu0 0
    %1945 = vmatpush2.bf16.msra.mxu0 0
    %1946 = vmatprep.subr.bf16.mxu0 0
    %1947 = vmatpush2.bf16.msra.mxu0 0
    %1948 = vmatprep.subr.bf16.mxu0 0
    %1949 = vmatpush2.bf16.msra.mxu0 0
    %1950 = vmatprep.subr.bf16.mxu0 0
    %1951 = vmatpush2.bf16.msra.mxu0 0
    %1952 = vmatprep.mubr.bf16.mxu0 0
    %1953 = vmatmul.mubr.bf16.gmra.mxu0 0
    %v1954 = vpop.f32.mrf.mxu0
    %v1955 = vadd.f32 0.0, %v1954
    %v1956 = vpop.f32.mrf.mxu0
    %v1957 = vadd.f32 0.0, %v1956
    %v1958 = vpop.f32.mrf.mxu0
    %v1959 = vpop.f32.mrf.mxu0
    %1960 = vdwg.mxu0
    %v1965 = vrot.slane %v1914, 2
    %v1966 = vrot.slane %v1916, 2
    %v1967 = vrot.slane %v1955, 2
    %v1968 = vrot.slane %v1957, 2
    %v1973 = vadd.f32 %v1683, %v1965
    %v1974 = vadd.f32 %v1684, %v1966
    %v1975 = vadd.f32 %v1685, %v1967
    %v1976 = vadd.f32 %v1686, %v1968
    %v1977 = vmul.f32 %v1679, 0.5
    %v1978 = vtanh.pop %v1977
    %v1979 = vmul.f32 %v1978, 0.5
    %v1980 = vadd.f32 %v1979, 0.5
    %v1981 = vmul.f32 %v1680, 0.5
    %v1982 = vtanh.pop %v1981
    %v1983 = vmul.f32 %v1982, 0.5
    %v1984 = vadd.f32 %v1983, 0.5
    %v1985 = vtanh.pop %v1681
    %v1986 = vmul.f32 %v1682, 0.5
    %v1987 = vtanh.pop %v1986
    %v1988 = vmul.f32 %v1987, 0.5
    %v1989 = vadd.f32 %v1988, 0.5
    %v1990 = vmul.f32 %v1984, 0.0
    %v1991 = vmul.f32 %v1980, %v1985
    %v1992 = vadd.f32 %v1990, %v1991
    %v1993 = vtanh.pop %v1992
    %v1994 = vmul.f32 %v1989, %v1993
    %v1995 = vmul.f32 %v1973, 0.5
    %v1996 = vtanh.pop %v1995
    %v1997 = vmul.f32 %v1996, 0.5
    %v1998 = vadd.f32 %v1997, 0.5
    %v1999 = vmul.f32 %v1974, 0.5
    %v2000 = vtanh.pop %v1999
    %v2001 = vmul.f32 %v2000, 0.5
    %v2002 = vadd.f32 %v2001, 0.5
    %v2003 = vtanh.pop %v1975
    %v2004 = vmul.f32 %v1976, 0.5
    %v2005 = vtanh.pop %v2004
    %v2006 = vmul.f32 %v2005, 0.5
    %v2007 = vadd.f32 %v2006, 0.5
    %v2008 = vmul.f32 %v2002, 0.0
    %v2009 = vmul.f32 %v1998, %v2003
    %v2010 = vadd.f32 %v2008, %v2009
    %v2011 = vtanh.pop %v2010
    %v2012 = vmul.f32 %v2007, %v2011
    %2013 = vst [vmem:[#allocation3] sm:$0x3] %v1994
    %2014 = vst [vmem:[#allocation3 + $0x18] sm:$0xc0] %v2012
    %v2015 = vld [vmem:[#allocation2] sm:$0xc]
    %v2016 = vld [vmem:[#allocation2 + $0x8] sm:$0xc]
    %v2017 = vld [vmem:[#allocation2 + $0x10] sm:$0xc]
    %v2018 = vld [vmem:[#allocation2 + $0x18] sm:$0xc]
    %v2019 = vld [vmem:[%s5] sm:$0xff]
    %v2020 = vld [vmem:[%s5 + $0x8] sm:$0xff]
    %v2021 = vld [vmem:[%s5 + $0x10] sm:$0xff]
    %v2022 = vld [vmem:[%s5 + $0x18] sm:$0xff]
    %v2023 = vld [vmem:[%s5 + $0x20] sm:$0xff]
    %v2024 = vld [vmem:[%s5 + $0x28] sm:$0xff]
    %v2025 = vld [vmem:[%s5 + $0x30] sm:$0xff]
    %v2026 = vld [vmem:[%s5 + $0x38] sm:$0xff]
    %v2027 = vld [vmem:[%s5 + $0x40] sm:$0xff]
    %v2028 = vld [vmem:[%s5 + $0x48] sm:$0xff]
    %v2029 = vld [vmem:[%s5 + $0x50] sm:$0xff]
    %v2030 = vld [vmem:[%s5 + $0x58] sm:$0xff]
    %v2031 = vld [vmem:[%s5 + $0x60] sm:$0xff]
    %v2032 = vld [vmem:[%s5 + $0x68] sm:$0xff]
    %v2033 = vld [vmem:[%s5 + $0x70] sm:$0xff]
    %v2034 = vld [vmem:[%s5 + $0x78] sm:$0xff]
    %v2035 = vld [vmem:[%s5 + $0x80] sm:$0xff]
    %v2036 = vld [vmem:[%s5 + $0x88] sm:$0xff]
    %v2037 = vld [vmem:[%s5 + $0x90] sm:$0xff]
    %v2038 = vld [vmem:[%s5 + $0x98] sm:$0xff]
    %v2039 = vld [vmem:[%s5 + $0xa0] sm:$0xff]
    %v2040 = vld [vmem:[%s5 + $0xa8] sm:$0xff]
    %v2041 = vld [vmem:[%s5 + $0xb0] sm:$0xff]
    %v2042 = vld [vmem:[%s5 + $0xb8] sm:$0xff]
    %v2043 = vld [vmem:[%s5 + $0xc0] sm:$0xff]
    %v2044 = vld [vmem:[%s5 + $0xc8] sm:$0xff]
    %v2045 = vld [vmem:[%s5 + $0xd0] sm:$0xff]
    %v2046 = vld [vmem:[%s5 + $0xd8] sm:$0xff]
    %v2047 = vld [vmem:[%s5 + $0xe0] sm:$0xff]
    %v2048 = vld [vmem:[%s5 + $0xe8] sm:$0xff]
    %v2049 = vld [vmem:[%s5 + $0xf0] sm:$0xff]
    %v2050 = vld [vmem:[%s5 + $0xf8] sm:$0xff]
    %v2051 = vpack.c.bf16 %v1994, %v1994
    %v2084 = vunpack.c.l.b16 %v2019
    %v2085 = vunpack.c.h.b16 %v2019
    %v2086 = vunpack.c.l.b16 %v2020
    %v2087 = vunpack.c.h.b16 %v2020
    %v2088 = vunpack.c.l.b16 %v2021
    %v2089 = vunpack.c.h.b16 %v2021
    %v2090 = vunpack.c.l.b16 %v2022
    %v2091 = vunpack.c.h.b16 %v2022
    %v2092 = vunpack.c.l.b16 %v2023
    %v2093 = vunpack.c.h.b16 %v2023
    %v2094 = vunpack.c.l.b16 %v2024
    %v2095 = vunpack.c.h.b16 %v2024
    %v2096 = vunpack.c.l.b16 %v2025
    %v2097 = vunpack.c.h.b16 %v2025
    %v2098 = vunpack.c.l.b16 %v2026
    %v2099 = vunpack.c.h.b16 %v2026
    %v2100 = vunpack.c.l.b16 %v2027
    %v2101 = vunpack.c.h.b16 %v2027
    %v2102 = vunpack.c.l.b16 %v2028
    %v2103 = vunpack.c.h.b16 %v2028
    %v2104 = vunpack.c.l.b16 %v2029
    %v2105 = vunpack.c.h.b16 %v2029
    %v2106 = vunpack.c.l.b16 %v2030
    %v2107 = vunpack.c.h.b16 %v2030
    %v2108 = vunpack.c.l.b16 %v2031
    %v2109 = vunpack.c.h.b16 %v2031
    %v2110 = vunpack.c.l.b16 %v2032
    %v2111 = vunpack.c.h.b16 %v2032
    %v2112 = vunpack.c.l.b16 %v2033
    %v2113 = vunpack.c.h.b16 %v2033
    %v2114 = vunpack.c.l.b16 %v2034
    %v2115 = vunpack.c.h.b16 %v2034
    %v2116 = vunpack.c.l.b16 %v2035
    %v2117 = vunpack.c.h.b16 %v2035
    %v2118 = vunpack.c.l.b16 %v2036
    %v2119 = vunpack.c.h.b16 %v2036
    %v2120 = vunpack.c.l.b16 %v2037
    %v2121 = vunpack.c.h.b16 %v2037
    %v2122 = vunpack.c.l.b16 %v2038
    %v2123 = vunpack.c.h.b16 %v2038
    %v2124 = vunpack.c.l.b16 %v2039
    %v2125 = vunpack.c.h.b16 %v2039
    %v2126 = vunpack.c.l.b16 %v2040
    %v2127 = vunpack.c.h.b16 %v2040
    %v2128 = vunpack.c.l.b16 %v2041
    %v2129 = vunpack.c.h.b16 %v2041
    %v2130 = vunpack.c.l.b16 %v2042
    %v2131 = vunpack.c.h.b16 %v2042
    %v2132 = vunpack.c.l.b16 %v2043
    %v2133 = vunpack.c.h.b16 %v2043
    %v2134 = vunpack.c.l.b16 %v2044
    %v2135 = vunpack.c.h.b16 %v2044
    %v2136 = vunpack.c.l.b16 %v2045
    %v2137 = vunpack.c.h.b16 %v2045
    %v2138 = vunpack.c.l.b16 %v2046
    %v2139 = vunpack.c.h.b16 %v2046
    %v2140 = vunpack.c.l.b16 %v2047
    %v2141 = vunpack.c.h.b16 %v2047
    %v2142 = vunpack.c.l.b16 %v2048
    %v2143 = vunpack.c.h.b16 %v2048
    %v2144 = vunpack.c.l.b16 %v2049
    %v2145 = vunpack.c.h.b16 %v2049
    %v2146 = vunpack.c.l.b16 %v2050
    %v2147 = vunpack.c.h.b16 %v2050
    %v2148 = vpack.c.b16 %v2088, %v2084
    %v2149 = vpack.c.b16 %v2089, %v2085
    %v2150 = vpack.c.b16 %v2090, %v2086
    %v2151 = vpack.c.b16 %v2091, %v2087
    %v2152 = vpack.c.b16 %v2096, %v2092
    %v2153 = vpack.c.b16 %v2097, %v2093
    %v2154 = vpack.c.b16 %v2098, %v2094
    %v2155 = vpack.c.b16 %v2099, %v2095
    %v2156 = vpack.c.b16 %v2104, %v2100
    %v2157 = vpack.c.b16 %v2105, %v2101
    %v2158 = vpack.c.b16 %v2106, %v2102
    %v2159 = vpack.c.b16 %v2107, %v2103
    %v2160 = vpack.c.b16 %v2112, %v2108
    %v2161 = vpack.c.b16 %v2113, %v2109
    %v2162 = vpack.c.b16 %v2114, %v2110
    %v2163 = vpack.c.b16 %v2115, %v2111
    %v2164 = vpack.c.b16 %v2120, %v2116
    %v2165 = vpack.c.b16 %v2121, %v2117
    %v2166 = vpack.c.b16 %v2122, %v2118
    %v2167 = vpack.c.b16 %v2123, %v2119
    %v2168 = vpack.c.b16 %v2128, %v2124
    %v2169 = vpack.c.b16 %v2129, %v2125
    %v2170 = vpack.c.b16 %v2130, %v2126
    %v2171 = vpack.c.b16 %v2131, %v2127
    %v2172 = vpack.c.b16 %v2136, %v2132
    %v2173 = vpack.c.b16 %v2137, %v2133
    %v2174 = vpack.c.b16 %v2138, %v2134
    %v2175 = vpack.c.b16 %v2139, %v2135
    %v2176 = vpack.c.b16 %v2144, %v2140
    %v2177 = vpack.c.b16 %v2145, %v2141
    %v2178 = vpack.c.b16 %v2146, %v2142
    %v2179 = vpack.c.b16 %v2147, %v2143
    %2212 = vmatprep.subr.bf16.mxu0 %v2177
    %2213 = vmatpush1.bf16.msra.mxu0 %v2176
    %2214 = vmatprep.subr.bf16.mxu0 %v2173
    %2215 = vmatpush1.bf16.msra.mxu0 %v2172
    %2216 = vmatprep.subr.bf16.mxu0 %v2169
    %2217 = vmatpush1.bf16.msra.mxu0 %v2168
    %2218 = vmatprep.subr.bf16.mxu0 %v2165
    %2219 = vmatpush1.bf16.msra.mxu0 %v2164
    %2220 = vmatprep.subr.bf16.mxu0 %v2161
    %2221 = vmatpush1.bf16.msra.mxu0 %v2160
    %2222 = vmatprep.subr.bf16.mxu0 %v2157
    %2223 = vmatpush1.bf16.msra.mxu0 %v2156
    %2224 = vmatprep.subr.bf16.mxu0 %v2153
    %2225 = vmatpush1.bf16.msra.mxu0 %v2152
    %2226 = vmatprep.subr.bf16.mxu0 %v2149
    %2227 = vmatpush1.bf16.msra.mxu0 %v2148
    %2228 = vmatprep.subr.bf16.mxu0 0
    %2229 = vmatpush2.bf16.msra.mxu0 0
    %2230 = vmatprep.subr.bf16.mxu0 0
    %2231 = vmatpush2.bf16.msra.mxu0 0
    %2232 = vmatprep.subr.bf16.mxu0 0
    %2233 = vmatpush2.bf16.msra.mxu0 0
    %2234 = vmatprep.subr.bf16.mxu0 0
    %2235 = vmatpush2.bf16.msra.mxu0 0
    %2236 = vmatprep.subr.bf16.mxu0 0
    %2237 = vmatpush2.bf16.msra.mxu0 0
    %2238 = vmatprep.subr.bf16.mxu0 0
    %2239 = vmatpush2.bf16.msra.mxu0 0
    %2240 = vmatprep.subr.bf16.mxu0 0
    %2241 = vmatpush2.bf16.msra.mxu0 0
    %2242 = vmatprep.subr.bf16.mxu0 0
    %2243 = vmatpush2.bf16.msra.mxu0 0
    %2244 = vmatprep.mubr.bf16.mxu0 0
    %2245 = vmatmul.mubr.bf16.gmra.mxu0 %v2051
    %v2246 = vpop.f32.mrf.mxu0
    %v2247 = vadd.f32 0.0, %v2246
    %v2248 = vpop.f32.mrf.mxu0
    %v2249 = vadd.f32 0.0, %v2248
    %v2250 = vpop.f32.mrf.mxu0
    %v2251 = vpop.f32.mrf.mxu0
    %2252 = vdwg.mxu0
    %2253 = vmatprep.subr.bf16.mxu0 %v2179
    %2254 = vmatpush1.bf16.msra.mxu0 %v2178
    %2255 = vmatprep.subr.bf16.mxu0 %v2175
    %2256 = vmatpush1.bf16.msra.mxu0 %v2174
    %2257 = vmatprep.subr.bf16.mxu0 %v2171
    %2258 = vmatpush1.bf16.msra.mxu0 %v2170
    %2259 = vmatprep.subr.bf16.mxu0 %v2167
    %2260 = vmatpush1.bf16.msra.mxu0 %v2166
    %2261 = vmatprep.subr.bf16.mxu0 %v2163
    %2262 = vmatpush1.bf16.msra.mxu0 %v2162
    %2263 = vmatprep.subr.bf16.mxu0 %v2159
    %2264 = vmatpush1.bf16.msra.mxu0 %v2158
    %2265 = vmatprep.subr.bf16.mxu0 %v2155
    %2266 = vmatpush1.bf16.msra.mxu0 %v2154
    %2267 = vmatprep.subr.bf16.mxu0 %v2151
    %2268 = vmatpush1.bf16.msra.mxu0 %v2150
    %2269 = vmatprep.subr.bf16.mxu0 0
    %2270 = vmatpush2.bf16.msra.mxu0 0
    %2271 = vmatprep.subr.bf16.mxu0 0
    %2272 = vmatpush2.bf16.msra.mxu0 0
    %2273 = vmatprep.subr.bf16.mxu0 0
    %2274 = vmatpush2.bf16.msra.mxu0 0
    %2275 = vmatprep.subr.bf16.mxu0 0
    %2276 = vmatpush2.bf16.msra.mxu0 0
    %2277 = vmatprep.subr.bf16.mxu0 0
    %2278 = vmatpush2.bf16.msra.mxu0 0
    %2279 = vmatprep.subr.bf16.mxu0 0
    %2280 = vmatpush2.bf16.msra.mxu0 0
    %2281 = vmatprep.subr.bf16.mxu0 0
    %2282 = vmatpush2.bf16.msra.mxu0 0
    %2283 = vmatprep.subr.bf16.mxu0 0
    %2284 = vmatpush2.bf16.msra.mxu0 0
    %2285 = vmatprep.mubr.bf16.mxu0 0
    %2286 = vmatmul.mubr.bf16.gmra.mxu0 %v2051
    %v2287 = vpop.f32.mrf.mxu0
    %v2288 = vadd.f32 0.0, %v2287
    %v2289 = vpop.f32.mrf.mxu0
    %v2290 = vadd.f32 0.0, %v2289
    %v2291 = vpop.f32.mrf.mxu0
    %v2292 = vpop.f32.mrf.mxu0
    %2293 = vdwg.mxu0
    %v2298 = vrot.slane %v2247, 6
    %v2299 = vrot.slane %v2249, 6
    %v2300 = vrot.slane %v2288, 6
    %v2301 = vrot.slane %v2290, 6
    %v2306 = vadd.f32 %v2015, %v2298
    %v2307 = vadd.f32 %v2016, %v2299
    %v2308 = vadd.f32 %v2017, %v2300
    %v2309 = vadd.f32 %v2018, %v2301
    %v2310 = vld [vmem:[#allocation2 + $0x60] sm:$0x30]
    %v2311 = vld [vmem:[#allocation2 + $0x68] sm:$0x30]
    %v2312 = vld [vmem:[#allocation2 + $0x70] sm:$0x30]
    %v2313 = vld [vmem:[#allocation2 + $0x78] sm:$0x30]
    %v2314 = vld [vmem:[%s6] sm:$0xff]
    %v2315 = vld [vmem:[%s6 + $0x8] sm:$0xff]
    %v2316 = vld [vmem:[%s6 + $0x10] sm:$0xff]
    %v2317 = vld [vmem:[%s6 + $0x18] sm:$0xff]
    %v2318 = vld [vmem:[%s6 + $0x20] sm:$0xff]
    %v2319 = vld [vmem:[%s6 + $0x28] sm:$0xff]
    %v2320 = vld [vmem:[%s6 + $0x30] sm:$0xff]
    %v2321 = vld [vmem:[%s6 + $0x38] sm:$0xff]
    %v2322 = vld [vmem:[%s6 + $0x40] sm:$0xff]
    %v2323 = vld [vmem:[%s6 + $0x48] sm:$0xff]
    %v2324 = vld [vmem:[%s6 + $0x50] sm:$0xff]
    %v2325 = vld [vmem:[%s6 + $0x58] sm:$0xff]
    %v2326 = vld [vmem:[%s6 + $0x60] sm:$0xff]
    %v2327 = vld [vmem:[%s6 + $0x68] sm:$0xff]
    %v2328 = vld [vmem:[%s6 + $0x70] sm:$0xff]
    %v2329 = vld [vmem:[%s6 + $0x78] sm:$0xff]
    %v2330 = vld [vmem:[%s6 + $0x80] sm:$0xff]
    %v2331 = vld [vmem:[%s6 + $0x88] sm:$0xff]
    %v2332 = vld [vmem:[%s6 + $0x90] sm:$0xff]
    %v2333 = vld [vmem:[%s6 + $0x98] sm:$0xff]
    %v2334 = vld [vmem:[%s6 + $0xa0] sm:$0xff]
    %v2335 = vld [vmem:[%s6 + $0xa8] sm:$0xff]
    %v2336 = vld [vmem:[%s6 + $0xb0] sm:$0xff]
    %v2337 = vld [vmem:[%s6 + $0xb8] sm:$0xff]
    %v2338 = vld [vmem:[%s6 + $0xc0] sm:$0xff]
    %v2339 = vld [vmem:[%s6 + $0xc8] sm:$0xff]
    %v2340 = vld [vmem:[%s6 + $0xd0] sm:$0xff]
    %v2341 = vld [vmem:[%s6 + $0xd8] sm:$0xff]
    %v2342 = vld [vmem:[%s6 + $0xe0] sm:$0xff]
    %v2343 = vld [vmem:[%s6 + $0xe8] sm:$0xff]
    %v2344 = vld [vmem:[%s6 + $0xf0] sm:$0xff]
    %v2345 = vld [vmem:[%s6 + $0xf8] sm:$0xff]
    %v2346 = vpack.c.bf16 %v2012, %v2012
    %v2348 = vrot.slane %v2346, 3
    %v2382 = vunpack.c.l.b16 %v2314
    %v2383 = vunpack.c.h.b16 %v2314
    %v2384 = vunpack.c.l.b16 %v2315
    %v2385 = vunpack.c.h.b16 %v2315
    %v2386 = vunpack.c.l.b16 %v2316
    %v2387 = vunpack.c.h.b16 %v2316
    %v2388 = vunpack.c.l.b16 %v2317
    %v2389 = vunpack.c.h.b16 %v2317
    %v2390 = vunpack.c.l.b16 %v2318
    %v2391 = vunpack.c.h.b16 %v2318
    %v2392 = vunpack.c.l.b16 %v2319
    %v2393 = vunpack.c.h.b16 %v2319
    %v2394 = vunpack.c.l.b16 %v2320
    %v2395 = vunpack.c.h.b16 %v2320
    %v2396 = vunpack.c.l.b16 %v2321
    %v2397 = vunpack.c.h.b16 %v2321
    %v2398 = vunpack.c.l.b16 %v2322
    %v2399 = vunpack.c.h.b16 %v2322
    %v2400 = vunpack.c.l.b16 %v2323
    %v2401 = vunpack.c.h.b16 %v2323
    %v2402 = vunpack.c.l.b16 %v2324
    %v2403 = vunpack.c.h.b16 %v2324
    %v2404 = vunpack.c.l.b16 %v2325
    %v2405 = vunpack.c.h.b16 %v2325
    %v2406 = vunpack.c.l.b16 %v2326
    %v2407 = vunpack.c.h.b16 %v2326
    %v2408 = vunpack.c.l.b16 %v2327
    %v2409 = vunpack.c.h.b16 %v2327
    %v2410 = vunpack.c.l.b16 %v2328
    %v2411 = vunpack.c.h.b16 %v2328
    %v2412 = vunpack.c.l.b16 %v2329
    %v2413 = vunpack.c.h.b16 %v2329
    %v2414 = vunpack.c.l.b16 %v2330
    %v2415 = vunpack.c.h.b16 %v2330
    %v2416 = vunpack.c.l.b16 %v2331
    %v2417 = vunpack.c.h.b16 %v2331
    %v2418 = vunpack.c.l.b16 %v2332
    %v2419 = vunpack.c.h.b16 %v2332
    %v2420 = vunpack.c.l.b16 %v2333
    %v2421 = vunpack.c.h.b16 %v2333
    %v2422 = vunpack.c.l.b16 %v2334
    %v2423 = vunpack.c.h.b16 %v2334
    %v2424 = vunpack.c.l.b16 %v2335
    %v2425 = vunpack.c.h.b16 %v2335
    %v2426 = vunpack.c.l.b16 %v2336
    %v2427 = vunpack.c.h.b16 %v2336
    %v2428 = vunpack.c.l.b16 %v2337
    %v2429 = vunpack.c.h.b16 %v2337
    %v2430 = vunpack.c.l.b16 %v2338
    %v2431 = vunpack.c.h.b16 %v2338
    %v2432 = vunpack.c.l.b16 %v2339
    %v2433 = vunpack.c.h.b16 %v2339
    %v2434 = vunpack.c.l.b16 %v2340
    %v2435 = vunpack.c.h.b16 %v2340
    %v2436 = vunpack.c.l.b16 %v2341
    %v2437 = vunpack.c.h.b16 %v2341
    %v2438 = vunpack.c.l.b16 %v2342
    %v2439 = vunpack.c.h.b16 %v2342
    %v2440 = vunpack.c.l.b16 %v2343
    %v2441 = vunpack.c.h.b16 %v2343
    %v2442 = vunpack.c.l.b16 %v2344
    %v2443 = vunpack.c.h.b16 %v2344
    %v2444 = vunpack.c.l.b16 %v2345
    %v2445 = vunpack.c.h.b16 %v2345
    %v2446 = vpack.c.b16 %v2386, %v2382
    %v2447 = vpack.c.b16 %v2387, %v2383
    %v2448 = vpack.c.b16 %v2388, %v2384
    %v2449 = vpack.c.b16 %v2389, %v2385
    %v2450 = vpack.c.b16 %v2394, %v2390
    %v2451 = vpack.c.b16 %v2395, %v2391
    %v2452 = vpack.c.b16 %v2396, %v2392
    %v2453 = vpack.c.b16 %v2397, %v2393
    %v2454 = vpack.c.b16 %v2402, %v2398
    %v2455 = vpack.c.b16 %v2403, %v2399
    %v2456 = vpack.c.b16 %v2404, %v2400
    %v2457 = vpack.c.b16 %v2405, %v2401
    %v2458 = vpack.c.b16 %v2410, %v2406
    %v2459 = vpack.c.b16 %v2411, %v2407
    %v2460 = vpack.c.b16 %v2412, %v2408
    %v2461 = vpack.c.b16 %v2413, %v2409
    %v2462 = vpack.c.b16 %v2418, %v2414
    %v2463 = vpack.c.b16 %v2419, %v2415
    %v2464 = vpack.c.b16 %v2420, %v2416
    %v2465 = vpack.c.b16 %v2421, %v2417
    %v2466 = vpack.c.b16 %v2426, %v2422
    %v2467 = vpack.c.b16 %v2427, %v2423
    %v2468 = vpack.c.b16 %v2428, %v2424
    %v2469 = vpack.c.b16 %v2429, %v2425
    %v2470 = vpack.c.b16 %v2434, %v2430
    %v2471 = vpack.c.b16 %v2435, %v2431
    %v2472 = vpack.c.b16 %v2436, %v2432
    %v2473 = vpack.c.b16 %v2437, %v2433
    %v2474 = vpack.c.b16 %v2442, %v2438
    %v2475 = vpack.c.b16 %v2443, %v2439
    %v2476 = vpack.c.b16 %v2444, %v2440
    %v2477 = vpack.c.b16 %v2445, %v2441
    %2510 = vmatprep.subr.bf16.mxu0 %v2475
    %2511 = vmatpush1.bf16.msra.mxu0 %v2474
    %2512 = vmatprep.subr.bf16.mxu0 %v2471
    %2513 = vmatpush1.bf16.msra.mxu0 %v2470
    %2514 = vmatprep.subr.bf16.mxu0 %v2467
    %2515 = vmatpush1.bf16.msra.mxu0 %v2466
    %2516 = vmatprep.subr.bf16.mxu0 %v2463
    %2517 = vmatpush1.bf16.msra.mxu0 %v2462
    %2518 = vmatprep.subr.bf16.mxu0 %v2459
    %2519 = vmatpush1.bf16.msra.mxu0 %v2458
    %2520 = vmatprep.subr.bf16.mxu0 %v2455
    %2521 = vmatpush1.bf16.msra.mxu0 %v2454
    %2522 = vmatprep.subr.bf16.mxu0 %v2451
    %2523 = vmatpush1.bf16.msra.mxu0 %v2450
    %2524 = vmatprep.subr.bf16.mxu0 %v2447
    %2525 = vmatpush1.bf16.msra.mxu0 %v2446
    %2526 = vmatprep.subr.bf16.mxu0 0
    %2527 = vmatpush2.bf16.msra.mxu0 0
    %2528 = vmatprep.subr.bf16.mxu0 0
    %2529 = vmatpush2.bf16.msra.mxu0 0
    %2530 = vmatprep.subr.bf16.mxu0 0
    %2531 = vmatpush2.bf16.msra.mxu0 0
    %2532 = vmatprep.subr.bf16.mxu0 0
    %2533 = vmatpush2.bf16.msra.mxu0 0
    %2534 = vmatprep.subr.bf16.mxu0 0
    %2535 = vmatpush2.bf16.msra.mxu0 0
    %2536 = vmatprep.subr.bf16.mxu0 0
    %2537 = vmatpush2.bf16.msra.mxu0 0
    %2538 = vmatprep.subr.bf16.mxu0 0
    %2539 = vmatpush2.bf16.msra.mxu0 0
    %2540 = vmatprep.subr.bf16.mxu0 0
    %2541 = vmatpush2.bf16.msra.mxu0 0
    %2542 = vmatprep.mubr.bf16.mxu0 0
    %2543 = vmatmul.mubr.bf16.gmra.mxu0 %v2348
    %v2544 = vpop.f32.mrf.mxu0
    %v2545 = vadd.f32 0.0, %v2544
    %v2546 = vpop.f32.mrf.mxu0
    %v2547 = vadd.f32 0.0, %v2546
    %v2548 = vpop.f32.mrf.mxu0
    %v2549 = vpop.f32.mrf.mxu0
    %2550 = vdwg.mxu0
    %2551 = vmatprep.subr.bf16.mxu0 %v2477
    %2552 = vmatpush1.bf16.msra.mxu0 %v2476
    %2553 = vmatprep.subr.bf16.mxu0 %v2473
    %2554 = vmatpush1.bf16.msra.mxu0 %v2472
    %2555 = vmatprep.subr.bf16.mxu0 %v2469
    %2556 = vmatpush1.bf16.msra.mxu0 %v2468
    %2557 = vmatprep.subr.bf16.mxu0 %v2465
    %2558 = vmatpush1.bf16.msra.mxu0 %v2464
    %2559 = vmatprep.subr.bf16.mxu0 %v2461
    %2560 = vmatpush1.bf16.msra.mxu0 %v2460
    %2561 = vmatprep.subr.bf16.mxu0 %v2457
    %2562 = vmatpush1.bf16.msra.mxu0 %v2456
    %2563 = vmatprep.subr.bf16.mxu0 %v2453
    %2564 = vmatpush1.bf16.msra.mxu0 %v2452
    %2565 = vmatprep.subr.bf16.mxu0 %v2449
    %2566 = vmatpush1.bf16.msra.mxu0 %v2448
    %2567 = vmatprep.subr.bf16.mxu0 0
    %2568 = vmatpush2.bf16.msra.mxu0 0
    %2569 = vmatprep.subr.bf16.mxu0 0
    %2570 = vmatpush2.bf16.msra.mxu0 0
    %2571 = vmatprep.subr.bf16.mxu0 0
    %2572 = vmatpush2.bf16.msra.mxu0 0
    %2573 = vmatprep.subr.bf16.mxu0 0
    %2574 = vmatpush2.bf16.msra.mxu0 0
    %2575 = vmatprep.subr.bf16.mxu0 0
    %2576 = vmatpush2.bf16.msra.mxu0 0
    %2577 = vmatprep.subr.bf16.mxu0 0
    %2578 = vmatpush2.bf16.msra.mxu0 0
    %2579 = vmatprep.subr.bf16.mxu0 0
    %2580 = vmatpush2.bf16.msra.mxu0 0
    %2581 = vmatprep.subr.bf16.mxu0 0
    %2582 = vmatpush2.bf16.msra.mxu0 0
    %2583 = vmatprep.mubr.bf16.mxu0 0
    %2584 = vmatmul.mubr.bf16.gmra.mxu0 %v2348
    %v2585 = vpop.f32.mrf.mxu0
    %v2586 = vadd.f32 0.0, %v2585
    %v2587 = vpop.f32.mrf.mxu0
    %v2588 = vadd.f32 0.0, %v2587
    %v2589 = vpop.f32.mrf.mxu0
    %v2590 = vpop.f32.mrf.mxu0
    %2591 = vdwg.mxu0
    %v2596 = vrot.slane %v2545, 4
    %v2597 = vrot.slane %v2547, 4
    %v2598 = vrot.slane %v2586, 4
    %v2599 = vrot.slane %v2588, 4
    %v2604 = vadd.f32 %v2310, %v2596
    %v2605 = vadd.f32 %v2311, %v2597
    %v2606 = vadd.f32 %v2312, %v2598
    %v2607 = vadd.f32 %v2313, %v2599
    %v2608 = vmul.f32 %v2306, 0.5
    %v2609 = vtanh.pop %v2608
    %v2610 = vmul.f32 %v2609, 0.5
    %v2611 = vadd.f32 %v2610, 0.5
    %v2612 = vmul.f32 %v2307, 0.5
    %v2613 = vtanh.pop %v2612
    %v2614 = vmul.f32 %v2613, 0.5
    %v2615 = vadd.f32 %v2614, 0.5
    %v2616 = vtanh.pop %v2308
    %v2617 = vmul.f32 %v2309, 0.5
    %v2618 = vtanh.pop %v2617
    %v2619 = vmul.f32 %v2618, 0.5
    %v2620 = vadd.f32 %v2619, 0.5
    %v2622 = vrot.slane %v1992, 6
    %v2624 = vmul.f32 %v2615, %v2622
    %v2625 = vmul.f32 %v2611, %v2616
    %v2626 = vadd.f32 %v2624, %v2625
    %v2627 = vtanh.pop %v2626
    %v2628 = vmul.f32 %v2620, %v2627
    %v2629 = vmul.f32 %v2604, 0.5
    %v2630 = vtanh.pop %v2629
    %v2631 = vmul.f32 %v2630, 0.5
    %v2632 = vadd.f32 %v2631, 0.5
    %v2633 = vmul.f32 %v2605, 0.5
    %v2634 = vtanh.pop %v2633
    %v2635 = vmul.f32 %v2634, 0.5
    %v2636 = vadd.f32 %v2635, 0.5
    %v2637 = vtanh.pop %v2606
    %v2638 = vmul.f32 %v2607, 0.5
    %v2639 = vtanh.pop %v2638
    %v2640 = vmul.f32 %v2639, 0.5
    %v2641 = vadd.f32 %v2640, 0.5
    %v2643 = vrot.slane %v2010, 2
    %v2645 = vmul.f32 %v2636, %v2643
    %v2646 = vmul.f32 %v2632, %v2637
    %v2647 = vadd.f32 %v2645, %v2646
    %v2648 = vtanh.pop %v2647
    %v2649 = vmul.f32 %v2641, %v2648
    %2650 = vst [vmem:[#allocation3] sm:$0xc] %v2628
    %2651 = vst [vmem:[#allocation3 + $0x18] sm:$0x30] %v2649
    %v2652 = vld [vmem:[#allocation2] sm:$0x30]
    %v2653 = vld [vmem:[#allocation2 + $0x8] sm:$0x30]
    %v2654 = vld [vmem:[#allocation2 + $0x10] sm:$0x30]
    %v2655 = vld [vmem:[#allocation2 + $0x18] sm:$0x30]
    %v2656 = vld [vmem:[%s5] sm:$0xff]
    %v2657 = vld [vmem:[%s5 + $0x8] sm:$0xff]
    %v2658 = vld [vmem:[%s5 + $0x10] sm:$0xff]
    %v2659 = vld [vmem:[%s5 + $0x18] sm:$0xff]
    %v2660 = vld [vmem:[%s5 + $0x20] sm:$0xff]
    %v2661 = vld [vmem:[%s5 + $0x28] sm:$0xff]
    %v2662 = vld [vmem:[%s5 + $0x30] sm:$0xff]
    %v2663 = vld [vmem:[%s5 + $0x38] sm:$0xff]
    %v2664 = vld [vmem:[%s5 + $0x40] sm:$0xff]
    %v2665 = vld [vmem:[%s5 + $0x48] sm:$0xff]
    %v2666 = vld [vmem:[%s5 + $0x50] sm:$0xff]
    %v2667 = vld [vmem:[%s5 + $0x58] sm:$0xff]
    %v2668 = vld [vmem:[%s5 + $0x60] sm:$0xff]
    %v2669 = vld [vmem:[%s5 + $0x68] sm:$0xff]
    %v2670 = vld [vmem:[%s5 + $0x70] sm:$0xff]
    %v2671 = vld [vmem:[%s5 + $0x78] sm:$0xff]
    %v2672 = vld [vmem:[%s5 + $0x80] sm:$0xff]
    %v2673 = vld [vmem:[%s5 + $0x88] sm:$0xff]
    %v2674 = vld [vmem:[%s5 + $0x90] sm:$0xff]
    %v2675 = vld [vmem:[%s5 + $0x98] sm:$0xff]
    %v2676 = vld [vmem:[%s5 + $0xa0] sm:$0xff]
    %v2677 = vld [vmem:[%s5 + $0xa8] sm:$0xff]
    %v2678 = vld [vmem:[%s5 + $0xb0] sm:$0xff]
    %v2679 = vld [vmem:[%s5 + $0xb8] sm:$0xff]
    %v2680 = vld [vmem:[%s5 + $0xc0] sm:$0xff]
    %v2681 = vld [vmem:[%s5 + $0xc8] sm:$0xff]
    %v2682 = vld [vmem:[%s5 + $0xd0] sm:$0xff]
    %v2683 = vld [vmem:[%s5 + $0xd8] sm:$0xff]
    %v2684 = vld [vmem:[%s5 + $0xe0] sm:$0xff]
    %v2685 = vld [vmem:[%s5 + $0xe8] sm:$0xff]
    %v2686 = vld [vmem:[%s5 + $0xf0] sm:$0xff]
    %v2687 = vld [vmem:[%s5 + $0xf8] sm:$0xff]
    %v2688 = vpack.c.bf16 %v2628, %v2628
    %v2690 = vrot.slane %v2688, 1
    %v2724 = vunpack.c.l.b16 %v2656
    %v2725 = vunpack.c.h.b16 %v2656
    %v2726 = vunpack.c.l.b16 %v2657
    %v2727 = vunpack.c.h.b16 %v2657
    %v2728 = vunpack.c.l.b16 %v2658
    %v2729 = vunpack.c.h.b16 %v2658
    %v2730 = vunpack.c.l.b16 %v2659
    %v2731 = vunpack.c.h.b16 %v2659
    %v2732 = vunpack.c.l.b16 %v2660
    %v2733 = vunpack.c.h.b16 %v2660
    %v2734 = vunpack.c.l.b16 %v2661
    %v2735 = vunpack.c.h.b16 %v2661
    %v2736 = vunpack.c.l.b16 %v2662
    %v2737 = vunpack.c.h.b16 %v2662
    %v2738 = vunpack.c.l.b16 %v2663
    %v2739 = vunpack.c.h.b16 %v2663
    %v2740 = vunpack.c.l.b16 %v2664
    %v2741 = vunpack.c.h.b16 %v2664
    %v2742 = vunpack.c.l.b16 %v2665
    %v2743 = vunpack.c.h.b16 %v2665
    %v2744 = vunpack.c.l.b16 %v2666
    %v2745 = vunpack.c.h.b16 %v2666
    %v2746 = vunpack.c.l.b16 %v2667
    %v2747 = vunpack.c.h.b16 %v2667
    %v2748 = vunpack.c.l.b16 %v2668
    %v2749 = vunpack.c.h.b16 %v2668
    %v2750 = vunpack.c.l.b16 %v2669
    %v2751 = vunpack.c.h.b16 %v2669
    %v2752 = vunpack.c.l.b16 %v2670
    %v2753 = vunpack.c.h.b16 %v2670
    %v2754 = vunpack.c.l.b16 %v2671
    %v2755 = vunpack.c.h.b16 %v2671
    %v2756 = vunpack.c.l.b16 %v2672
    %v2757 = vunpack.c.h.b16 %v2672
    %v2758 = vunpack.c.l.b16 %v2673
    %v2759 = vunpack.c.h.b16 %v2673
    %v2760 = vunpack.c.l.b16 %v2674
    %v2761 = vunpack.c.h.b16 %v2674
    %v2762 = vunpack.c.l.b16 %v2675
    %v2763 = vunpack.c.h.b16 %v2675
    %v2764 = vunpack.c.l.b16 %v2676
    %v2765 = vunpack.c.h.b16 %v2676
    %v2766 = vunpack.c.l.b16 %v2677
    %v2767 = vunpack.c.h.b16 %v2677
    %v2768 = vunpack.c.l.b16 %v2678
    %v2769 = vunpack.c.h.b16 %v2678
    %v2770 = vunpack.c.l.b16 %v2679
    %v2771 = vunpack.c.h.b16 %v2679
    %v2772 = vunpack.c.l.b16 %v2680
    %v2773 = vunpack.c.h.b16 %v2680
    %v2774 = vunpack.c.l.b16 %v2681
    %v2775 = vunpack.c.h.b16 %v2681
    %v2776 = vunpack.c.l.b16 %v2682
    %v2777 = vunpack.c.h.b16 %v2682
    %v2778 = vunpack.c.l.b16 %v2683
    %v2779 = vunpack.c.h.b16 %v2683
    %v2780 = vunpack.c.l.b16 %v2684
    %v2781 = vunpack.c.h.b16 %v2684
    %v2782 = vunpack.c.l.b16 %v2685
    %v2783 = vunpack.c.h.b16 %v2685
    %v2784 = vunpack.c.l.b16 %v2686
    %v2785 = vunpack.c.h.b16 %v2686
    %v2786 = vunpack.c.l.b16 %v2687
    %v2787 = vunpack.c.h.b16 %v2687
    %v2788 = vpack.c.b16 %v2728, %v2724
    %v2789 = vpack.c.b16 %v2729, %v2725
    %v2790 = vpack.c.b16 %v2730, %v2726
    %v2791 = vpack.c.b16 %v2731, %v2727
    %v2792 = vpack.c.b16 %v2736, %v2732
    %v2793 = vpack.c.b16 %v2737, %v2733
    %v2794 = vpack.c.b16 %v2738, %v2734
    %v2795 = vpack.c.b16 %v2739, %v2735
    %v2796 = vpack.c.b16 %v2744, %v2740
    %v2797 = vpack.c.b16 %v2745, %v2741
    %v2798 = vpack.c.b16 %v2746, %v2742
    %v2799 = vpack.c.b16 %v2747, %v2743
    %v2800 = vpack.c.b16 %v2752, %v2748
    %v2801 = vpack.c.b16 %v2753, %v2749
    %v2802 = vpack.c.b16 %v2754, %v2750
    %v2803 = vpack.c.b16 %v2755, %v2751
    %v2804 = vpack.c.b16 %v2760, %v2756
    %v2805 = vpack.c.b16 %v2761, %v2757
    %v2806 = vpack.c.b16 %v2762, %v2758
    %v2807 = vpack.c.b16 %v2763, %v2759
    %v2808 = vpack.c.b16 %v2768, %v2764
    %v2809 = vpack.c.b16 %v2769, %v2765
    %v2810 = vpack.c.b16 %v2770, %v2766
    %v2811 = vpack.c.b16 %v2771, %v2767
    %v2812 = vpack.c.b16 %v2776, %v2772
    %v2813 = vpack.c.b16 %v2777, %v2773
    %v2814 = vpack.c.b16 %v2778, %v2774
    %v2815 = vpack.c.b16 %v2779, %v2775
    %v2816 = vpack.c.b16 %v2784, %v2780
    %v2817 = vpack.c.b16 %v2785, %v2781
    %v2818 = vpack.c.b16 %v2786, %v2782
    %v2819 = vpack.c.b16 %v2787, %v2783
    %2852 = vmatprep.subr.bf16.mxu0 %v2817
    %2853 = vmatpush1.bf16.msra.mxu0 %v2816
    %2854 = vmatprep.subr.bf16.mxu0 %v2813
    %2855 = vmatpush1.bf16.msra.mxu0 %v2812
    %2856 = vmatprep.subr.bf16.mxu0 %v2809
    %2857 = vmatpush1.bf16.msra.mxu0 %v2808
    %2858 = vmatprep.subr.bf16.mxu0 %v2805
    %2859 = vmatpush1.bf16.msra.mxu0 %v2804
    %2860 = vmatprep.subr.bf16.mxu0 %v2801
    %2861 = vmatpush1.bf16.msra.mxu0 %v2800
    %2862 = vmatprep.subr.bf16.mxu0 %v2797
    %2863 = vmatpush1.bf16.msra.mxu0 %v2796
    %2864 = vmatprep.subr.bf16.mxu0 %v2793
    %2865 = vmatpush1.bf16.msra.mxu0 %v2792
    %2866 = vmatprep.subr.bf16.mxu0 %v2789
    %2867 = vmatpush1.bf16.msra.mxu0 %v2788
    %2868 = vmatprep.subr.bf16.mxu0 0
    %2869 = vmatpush2.bf16.msra.mxu0 0
    %2870 = vmatprep.subr.bf16.mxu0 0
    %2871 = vmatpush2.bf16.msra.mxu0 0
    %2872 = vmatprep.subr.bf16.mxu0 0
    %2873 = vmatpush2.bf16.msra.mxu0 0
    %2874 = vmatprep.subr.bf16.mxu0 0
    %2875 = vmatpush2.bf16.msra.mxu0 0
    %2876 = vmatprep.subr.bf16.mxu0 0
    %2877 = vmatpush2.bf16.msra.mxu0 0
    %2878 = vmatprep.subr.bf16.mxu0 0
    %2879 = vmatpush2.bf16.msra.mxu0 0
    %2880 = vmatprep.subr.bf16.mxu0 0
    %2881 = vmatpush2.bf16.msra.mxu0 0
    %2882 = vmatprep.subr.bf16.mxu0 0
    %2883 = vmatpush2.bf16.msra.mxu0 0
    %2884 = vmatprep.mubr.bf16.mxu0 0
    %2885 = vmatmul.mubr.bf16.gmra.mxu0 %v2690
    %v2886 = vpop.f32.mrf.mxu0
    %v2887 = vadd.f32 0.0, %v2886
    %v2888 = vpop.f32.mrf.mxu0
    %v2889 = vadd.f32 0.0, %v2888
    %v2890 = vpop.f32.mrf.mxu0
    %v2891 = vpop.f32.mrf.mxu0
    %2892 = vdwg.mxu0
    %2893 = vmatprep.subr.bf16.mxu0 %v2819
    %2894 = vmatpush1.bf16.msra.mxu0 %v2818
    %2895 = vmatprep.subr.bf16.mxu0 %v2815
    %2896 = vmatpush1.bf16.msra.mxu0 %v2814
    %2897 = vmatprep.subr.bf16.mxu0 %v2811
    %2898 = vmatpush1.bf16.msra.mxu0 %v2810
    %2899 = vmatprep.subr.bf16.mxu0 %v2807
    %2900 = vmatpush1.bf16.msra.mxu0 %v2806
    %2901 = vmatprep.subr.bf16.mxu0 %v2803
    %2902 = vmatpush1.bf16.msra.mxu0 %v2802
    %2903 = vmatprep.subr.bf16.mxu0 %v2799
    %2904 = vmatpush1.bf16.msra.mxu0 %v2798
    %2905 = vmatprep.subr.bf16.mxu0 %v2795
    %2906 = vmatpush1.bf16.msra.mxu0 %v2794
    %2907 = vmatprep.subr.bf16.mxu0 %v2791
    %2908 = vmatpush1.bf16.msra.mxu0 %v2790
    %2909 = vmatprep.subr.bf16.mxu0 0
    %2910 = vmatpush2.bf16.msra.mxu0 0
    %2911 = vmatprep.subr.bf16.mxu0 0
    %2912 = vmatpush2.bf16.msra.mxu0 0
    %2913 = vmatprep.subr.bf16.mxu0 0
    %2914 = vmatpush2.bf16.msra.mxu0 0
    %2915 = vmatprep.subr.bf16.mxu0 0
    %2916 = vmatpush2.bf16.msra.mxu0 0
    %2917 = vmatprep.subr.bf16.mxu0 0
    %2918 = vmatpush2.bf16.msra.mxu0 0
    %2919 = vmatprep.subr.bf16.mxu0 0
    %2920 = vmatpush2.bf16.msra.mxu0 0
    %2921 = vmatprep.subr.bf16.mxu0 0
    %2922 = vmatpush2.bf16.msra.mxu0 0
    %2923 = vmatprep.subr.bf16.mxu0 0
    %2924 = vmatpush2.bf16.msra.mxu0 0
    %2925 = vmatprep.mubr.bf16.mxu0 0
    %2926 = vmatmul.mubr.bf16.gmra.mxu0 %v2690
    %v2927 = vpop.f32.mrf.mxu0
    %v2928 = vadd.f32 0.0, %v2927
    %v2929 = vpop.f32.mrf.mxu0
    %v2930 = vadd.f32 0.0, %v2929
    %v2931 = vpop.f32.mrf.mxu0
    %v2932 = vpop.f32.mrf.mxu0
    %2933 = vdwg.mxu0
    %v2938 = vrot.slane %v2887, 4
    %v2939 = vrot.slane %v2889, 4
    %v2940 = vrot.slane %v2928, 4
    %v2941 = vrot.slane %v2930, 4
    %v2946 = vadd.f32 %v2652, %v2938
    %v2947 = vadd.f32 %v2653, %v2939
    %v2948 = vadd.f32 %v2654, %v2940
    %v2949 = vadd.f32 %v2655, %v2941
    %v2950 = vld [vmem:[#allocation2 + $0x60] sm:$0xc]
    %v2951 = vld [vmem:[#allocation2 + $0x68] sm:$0xc]
    %v2952 = vld [vmem:[#allocation2 + $0x70] sm:$0xc]
    %v2953 = vld [vmem:[#allocation2 + $0x78] sm:$0xc]
    %v2954 = vld [vmem:[%s6] sm:$0xff]
    %v2955 = vld [vmem:[%s6 + $0x8] sm:$0xff]
    %v2956 = vld [vmem:[%s6 + $0x10] sm:$0xff]
    %v2957 = vld [vmem:[%s6 + $0x18] sm:$0xff]
    %v2958 = vld [vmem:[%s6 + $0x20] sm:$0xff]
    %v2959 = vld [vmem:[%s6 + $0x28] sm:$0xff]
    %v2960 = vld [vmem:[%s6 + $0x30] sm:$0xff]
    %v2961 = vld [vmem:[%s6 + $0x38] sm:$0xff]
    %v2962 = vld [vmem:[%s6 + $0x40] sm:$0xff]
    %v2963 = vld [vmem:[%s6 + $0x48] sm:$0xff]
    %v2964 = vld [vmem:[%s6 + $0x50] sm:$0xff]
    %v2965 = vld [vmem:[%s6 + $0x58] sm:$0xff]
    %v2966 = vld [vmem:[%s6 + $0x60] sm:$0xff]
    %v2967 = vld [vmem:[%s6 + $0x68] sm:$0xff]
    %v2968 = vld [vmem:[%s6 + $0x70] sm:$0xff]
    %v2969 = vld [vmem:[%s6 + $0x78] sm:$0xff]
    %v2970 = vld [vmem:[%s6 + $0x80] sm:$0xff]
    %v2971 = vld [vmem:[%s6 + $0x88] sm:$0xff]
    %v2972 = vld [vmem:[%s6 + $0x90] sm:$0xff]
    %v2973 = vld [vmem:[%s6 + $0x98] sm:$0xff]
    %v2974 = vld [vmem:[%s6 + $0xa0] sm:$0xff]
    %v2975 = vld [vmem:[%s6 + $0xa8] sm:$0xff]
    %v2976 = vld [vmem:[%s6 + $0xb0] sm:$0xff]
    %v2977 = vld [vmem:[%s6 + $0xb8] sm:$0xff]
    %v2978 = vld [vmem:[%s6 + $0xc0] sm:$0xff]
    %v2979 = vld [vmem:[%s6 + $0xc8] sm:$0xff]
    %v2980 = vld [vmem:[%s6 + $0xd0] sm:$0xff]
    %v2981 = vld [vmem:[%s6 + $0xd8] sm:$0xff]
    %v2982 = vld [vmem:[%s6 + $0xe0] sm:$0xff]
    %v2983 = vld [vmem:[%s6 + $0xe8] sm:$0xff]
    %v2984 = vld [vmem:[%s6 + $0xf0] sm:$0xff]
    %v2985 = vld [vmem:[%s6 + $0xf8] sm:$0xff]
    %v2986 = vpack.c.bf16 %v2649, %v2649
    %v2988 = vrot.slane %v2986, 2
    %v3022 = vunpack.c.l.b16 %v2954
    %v3023 = vunpack.c.h.b16 %v2954
    %v3024 = vunpack.c.l.b16 %v2955
    %v3025 = vunpack.c.h.b16 %v2955
    %v3026 = vunpack.c.l.b16 %v2956
    %v3027 = vunpack.c.h.b16 %v2956
    %v3028 = vunpack.c.l.b16 %v2957
    %v3029 = vunpack.c.h.b16 %v2957
    %v3030 = vunpack.c.l.b16 %v2958
    %v3031 = vunpack.c.h.b16 %v2958
    %v3032 = vunpack.c.l.b16 %v2959
    %v3033 = vunpack.c.h.b16 %v2959
    %v3034 = vunpack.c.l.b16 %v2960
    %v3035 = vunpack.c.h.b16 %v2960
    %v3036 = vunpack.c.l.b16 %v2961
    %v3037 = vunpack.c.h.b16 %v2961
    %v3038 = vunpack.c.l.b16 %v2962
    %v3039 = vunpack.c.h.b16 %v2962
    %v3040 = vunpack.c.l.b16 %v2963
    %v3041 = vunpack.c.h.b16 %v2963
    %v3042 = vunpack.c.l.b16 %v2964
    %v3043 = vunpack.c.h.b16 %v2964
    %v3044 = vunpack.c.l.b16 %v2965
    %v3045 = vunpack.c.h.b16 %v2965
    %v3046 = vunpack.c.l.b16 %v2966
    %v3047 = vunpack.c.h.b16 %v2966
    %v3048 = vunpack.c.l.b16 %v2967
    %v3049 = vunpack.c.h.b16 %v2967
    %v3050 = vunpack.c.l.b16 %v2968
    %v3051 = vunpack.c.h.b16 %v2968
    %v3052 = vunpack.c.l.b16 %v2969
    %v3053 = vunpack.c.h.b16 %v2969
    %v3054 = vunpack.c.l.b16 %v2970
    %v3055 = vunpack.c.h.b16 %v2970
    %v3056 = vunpack.c.l.b16 %v2971
    %v3057 = vunpack.c.h.b16 %v2971
    %v3058 = vunpack.c.l.b16 %v2972
    %v3059 = vunpack.c.h.b16 %v2972
    %v3060 = vunpack.c.l.b16 %v2973
    %v3061 = vunpack.c.h.b16 %v2973
    %v3062 = vunpack.c.l.b16 %v2974
    %v3063 = vunpack.c.h.b16 %v2974
    %v3064 = vunpack.c.l.b16 %v2975
    %v3065 = vunpack.c.h.b16 %v2975
    %v3066 = vunpack.c.l.b16 %v2976
    %v3067 = vunpack.c.h.b16 %v2976
    %v3068 = vunpack.c.l.b16 %v2977
    %v3069 = vunpack.c.h.b16 %v2977
    %v3070 = vunpack.c.l.b16 %v2978
    %v3071 = vunpack.c.h.b16 %v2978
    %v3072 = vunpack.c.l.b16 %v2979
    %v3073 = vunpack.c.h.b16 %v2979
    %v3074 = vunpack.c.l.b16 %v2980
    %v3075 = vunpack.c.h.b16 %v2980
    %v3076 = vunpack.c.l.b16 %v2981
    %v3077 = vunpack.c.h.b16 %v2981
    %v3078 = vunpack.c.l.b16 %v2982
    %v3079 = vunpack.c.h.b16 %v2982
    %v3080 = vunpack.c.l.b16 %v2983
    %v3081 = vunpack.c.h.b16 %v2983
    %v3082 = vunpack.c.l.b16 %v2984
    %v3083 = vunpack.c.h.b16 %v2984
    %v3084 = vunpack.c.l.b16 %v2985
    %v3085 = vunpack.c.h.b16 %v2985
    %v3086 = vpack.c.b16 %v3026, %v3022
    %v3087 = vpack.c.b16 %v3027, %v3023
    %v3088 = vpack.c.b16 %v3028, %v3024
    %v3089 = vpack.c.b16 %v3029, %v3025
    %v3090 = vpack.c.b16 %v3034, %v3030
    %v3091 = vpack.c.b16 %v3035, %v3031
    %v3092 = vpack.c.b16 %v3036, %v3032
    %v3093 = vpack.c.b16 %v3037, %v3033
    %v3094 = vpack.c.b16 %v3042, %v3038
    %v3095 = vpack.c.b16 %v3043, %v3039
    %v3096 = vpack.c.b16 %v3044, %v3040
    %v3097 = vpack.c.b16 %v3045, %v3041
    %v3098 = vpack.c.b16 %v3050, %v3046
    %v3099 = vpack.c.b16 %v3051, %v3047
    %v3100 = vpack.c.b16 %v3052, %v3048
    %v3101 = vpack.c.b16 %v3053, %v3049
    %v3102 = vpack.c.b16 %v3058, %v3054
    %v3103 = vpack.c.b16 %v3059, %v3055
    %v3104 = vpack.c.b16 %v3060, %v3056
    %v3105 = vpack.c.b16 %v3061, %v3057
    %v3106 = vpack.c.b16 %v3066, %v3062
    %v3107 = vpack.c.b16 %v3067, %v3063
    %v3108 = vpack.c.b16 %v3068, %v3064
    %v3109 = vpack.c.b16 %v3069, %v3065
    %v3110 = vpack.c.b16 %v3074, %v3070
    %v3111 = vpack.c.b16 %v3075, %v3071
    %v3112 = vpack.c.b16 %v3076, %v3072
    %v3113 = vpack.c.b16 %v3077, %v3073
    %v3114 = vpack.c.b16 %v3082, %v3078
    %v3115 = vpack.c.b16 %v3083, %v3079
    %v3116 = vpack.c.b16 %v3084, %v3080
    %v3117 = vpack.c.b16 %v3085, %v3081
    %3150 = vmatprep.subr.bf16.mxu0 %v3115
    %3151 = vmatpush1.bf16.msra.mxu0 %v3114
    %3152 = vmatprep.subr.bf16.mxu0 %v3111
    %3153 = vmatpush1.bf16.msra.mxu0 %v3110
    %3154 = vmatprep.subr.bf16.mxu0 %v3107
    %3155 = vmatpush1.bf16.msra.mxu0 %v3106
    %3156 = vmatprep.subr.bf16.mxu0 %v3103
    %3157 = vmatpush1.bf16.msra.mxu0 %v3102
    %3158 = vmatprep.subr.bf16.mxu0 %v3099
    %3159 = vmatpush1.bf16.msra.mxu0 %v3098
    %3160 = vmatprep.subr.bf16.mxu0 %v3095
    %3161 = vmatpush1.bf16.msra.mxu0 %v3094
    %3162 = vmatprep.subr.bf16.mxu0 %v3091
    %3163 = vmatpush1.bf16.msra.mxu0 %v3090
    %3164 = vmatprep.subr.bf16.mxu0 %v3087
    %3165 = vmatpush1.bf16.msra.mxu0 %v3086
    %3166 = vmatprep.subr.bf16.mxu0 0
    %3167 = vmatpush2.bf16.msra.mxu0 0
    %3168 = vmatprep.subr.bf16.mxu0 0
    %3169 = vmatpush2.bf16.msra.mxu0 0
    %3170 = vmatprep.subr.bf16.mxu0 0
    %3171 = vmatpush2.bf16.msra.mxu0 0
    %3172 = vmatprep.subr.bf16.mxu0 0
    %3173 = vmatpush2.bf16.msra.mxu0 0
    %3174 = vmatprep.subr.bf16.mxu0 0
    %3175 = vmatpush2.bf16.msra.mxu0 0
    %3176 = vmatprep.subr.bf16.mxu0 0
    %3177 = vmatpush2.bf16.msra.mxu0 0
    %3178 = vmatprep.subr.bf16.mxu0 0
    %3179 = vmatpush2.bf16.msra.mxu0 0
    %3180 = vmatprep.subr.bf16.mxu0 0
    %3181 = vmatpush2.bf16.msra.mxu0 0
    %3182 = vmatprep.mubr.bf16.mxu0 0
    %3183 = vmatmul.mubr.bf16.gmra.mxu0 %v2988
    %v3184 = vpop.f32.mrf.mxu0
    %v3185 = vadd.f32 0.0, %v3184
    %v3186 = vpop.f32.mrf.mxu0
    %v3187 = vadd.f32 0.0, %v3186
    %v3188 = vpop.f32.mrf.mxu0
    %v3189 = vpop.f32.mrf.mxu0
    %3190 = vdwg.mxu0
    %3191 = vmatprep.subr.bf16.mxu0 %v3117
    %3192 = vmatpush1.bf16.msra.mxu0 %v3116
    %3193 = vmatprep.subr.bf16.mxu0 %v3113
    %3194 = vmatpush1.bf16.msra.mxu0 %v3112
    %3195 = vmatprep.subr.bf16.mxu0 %v3109
    %3196 = vmatpush1.bf16.msra.mxu0 %v3108
    %3197 = vmatprep.subr.bf16.mxu0 %v3105
    %3198 = vmatpush1.bf16.msra.mxu0 %v3104
    %3199 = vmatprep.subr.bf16.mxu0 %v3101
    %3200 = vmatpush1.bf16.msra.mxu0 %v3100
    %3201 = vmatprep.subr.bf16.mxu0 %v3097
    %3202 = vmatpush1.bf16.msra.mxu0 %v3096
    %3203 = vmatprep.subr.bf16.mxu0 %v3093
    %3204 = vmatpush1.bf16.msra.mxu0 %v3092
    %3205 = vmatprep.subr.bf16.mxu0 %v3089
    %3206 = vmatpush1.bf16.msra.mxu0 %v3088
    %3207 = vmatprep.subr.bf16.mxu0 0
    %3208 = vmatpush2.bf16.msra.mxu0 0
    %3209 = vmatprep.subr.bf16.mxu0 0
    %3210 = vmatpush2.bf16.msra.mxu0 0
    %3211 = vmatprep.subr.bf16.mxu0 0
    %3212 = vmatpush2.bf16.msra.mxu0 0
    %3213 = vmatprep.subr.bf16.mxu0 0
    %3214 = vmatpush2.bf16.msra.mxu0 0
    %3215 = vmatprep.subr.bf16.mxu0 0
    %3216 = vmatpush2.bf16.msra.mxu0 0
    %3217 = vmatprep.subr.bf16.mxu0 0
    %3218 = vmatpush2.bf16.msra.mxu0 0
    %3219 = vmatprep.subr.bf16.mxu0 0
    %3220 = vmatpush2.bf16.msra.mxu0 0
    %3221 = vmatprep.subr.bf16.mxu0 0
    %3222 = vmatpush2.bf16.msra.mxu0 0
    %3223 = vmatprep.mubr.bf16.mxu0 0
    %3224 = vmatmul.mubr.bf16.gmra.mxu0 %v2988
    %v3225 = vpop.f32.mrf.mxu0
    %v3226 = vadd.f32 0.0, %v3225
    %v3227 = vpop.f32.mrf.mxu0
    %v3228 = vadd.f32 0.0, %v3227
    %v3229 = vpop.f32.mrf.mxu0
    %v3230 = vpop.f32.mrf.mxu0
    %3231 = vdwg.mxu0
    %v3236 = vrot.slane %v3185, 6
    %v3237 = vrot.slane %v3187, 6
    %v3238 = vrot.slane %v3226, 6
    %v3239 = vrot.slane %v3228, 6
    %v3244 = vadd.f32 %v2950, %v3236
    %v3245 = vadd.f32 %v2951, %v3237
    %v3246 = vadd.f32 %v2952, %v3238
    %v3247 = vadd.f32 %v2953, %v3239
    %v3248 = vmul.f32 %v2946, 0.5
    %v3249 = vtanh.pop %v3248
    %v3250 = vmul.f32 %v3249, 0.5
    %v3251 = vadd.f32 %v3250, 0.5
    %v3252 = vmul.f32 %v2947, 0.5
    %v3253 = vtanh.pop %v3252
    %v3254 = vmul.f32 %v3253, 0.5
    %v3255 = vadd.f32 %v3254, 0.5
    %v3256 = vtanh.pop %v2948
    %v3257 = vmul.f32 %v2949, 0.5
    %v3258 = vtanh.pop %v3257
    %v3259 = vmul.f32 %v3258, 0.5
    %v3260 = vadd.f32 %v3259, 0.5
    %v3262 = vrot.slane %v2626, 6
    %v3264 = vmul.f32 %v3255, %v3262
    %v3265 = vmul.f32 %v3251, %v3256
    %v3266 = vadd.f32 %v3264, %v3265
    %v3267 = vtanh.pop %v3266
    %v3268 = vmul.f32 %v3260, %v3267
    %v3269 = vmul.f32 %v3244, 0.5
    %v3270 = vtanh.pop %v3269
    %v3271 = vmul.f32 %v3270, 0.5
    %v3272 = vadd.f32 %v3271, 0.5
    %v3273 = vmul.f32 %v3245, 0.5
    %v3274 = vtanh.pop %v3273
    %v3275 = vmul.f32 %v3274, 0.5
    %v3276 = vadd.f32 %v3275, 0.5
    %v3277 = vtanh.pop %v3246
    %v3278 = vmul.f32 %v3247, 0.5
    %v3279 = vtanh.pop %v3278
    %v3280 = vmul.f32 %v3279, 0.5
    %v3281 = vadd.f32 %v3280, 0.5
    %v3283 = vrot.slane %v2647, 2
    %v3285 = vmul.f32 %v3276, %v3283
    %v3286 = vmul.f32 %v3272, %v3277
    %v3287 = vadd.f32 %v3285, %v3286
    %v3288 = vtanh.pop %v3287
    %v3289 = vmul.f32 %v3281, %v3288
    %3290 = vst [vmem:[#allocation3] sm:$0x30] %v3268
    %3291 = vst [vmem:[#allocation3 + $0x18] sm:$0xc] %v3289
    %v3292 = vld [vmem:[#allocation2] sm:$0xc0]
    %v3293 = vld [vmem:[#allocation2 + $0x8] sm:$0xc0]
    %v3294 = vld [vmem:[#allocation2 + $0x10] sm:$0xc0]
    %v3295 = vld [vmem:[#allocation2 + $0x18] sm:$0xc0]
    %v3296 = vld [vmem:[%s5] sm:$0xff]
    %v3297 = vld [vmem:[%s5 + $0x8] sm:$0xff]
    %v3298 = vld [vmem:[%s5 + $0x10] sm:$0xff]
    %v3299 = vld [vmem:[%s5 + $0x18] sm:$0xff]
    %v3300 = vld [vmem:[%s5 + $0x20] sm:$0xff]
    %v3301 = vld [vmem:[%s5 + $0x28] sm:$0xff]
    %v3302 = vld [vmem:[%s5 + $0x30] sm:$0xff]
    %v3303 = vld [vmem:[%s5 + $0x38] sm:$0xff]
    %v3304 = vld [vmem:[%s5 + $0x40] sm:$0xff]
    %v3305 = vld [vmem:[%s5 + $0x48] sm:$0xff]
    %v3306 = vld [vmem:[%s5 + $0x50] sm:$0xff]
    %v3307 = vld [vmem:[%s5 + $0x58] sm:$0xff]
    %v3308 = vld [vmem:[%s5 + $0x60] sm:$0xff]
    %v3309 = vld [vmem:[%s5 + $0x68] sm:$0xff]
    %v3310 = vld [vmem:[%s5 + $0x70] sm:$0xff]
    %v3311 = vld [vmem:[%s5 + $0x78] sm:$0xff]
    %v3312 = vld [vmem:[%s5 + $0x80] sm:$0xff]
    %v3313 = vld [vmem:[%s5 + $0x88] sm:$0xff]
    %v3314 = vld [vmem:[%s5 + $0x90] sm:$0xff]
    %v3315 = vld [vmem:[%s5 + $0x98] sm:$0xff]
    %v3316 = vld [vmem:[%s5 + $0xa0] sm:$0xff]
    %v3317 = vld [vmem:[%s5 + $0xa8] sm:$0xff]
    %v3318 = vld [vmem:[%s5 + $0xb0] sm:$0xff]
    %v3319 = vld [vmem:[%s5 + $0xb8] sm:$0xff]
    %v3320 = vld [vmem:[%s5 + $0xc0] sm:$0xff]
    %v3321 = vld [vmem:[%s5 + $0xc8] sm:$0xff]
    %v3322 = vld [vmem:[%s5 + $0xd0] sm:$0xff]
    %v3323 = vld [vmem:[%s5 + $0xd8] sm:$0xff]
    %v3324 = vld [vmem:[%s5 + $0xe0] sm:$0xff]
    %v3325 = vld [vmem:[%s5 + $0xe8] sm:$0xff]
    %v3326 = vld [vmem:[%s5 + $0xf0] sm:$0xff]
    %v3327 = vld [vmem:[%s5 + $0xf8] sm:$0xff]
    %v3328 = vpack.c.bf16 %v3268, %v3268
    %v3330 = vrot.slane %v3328, 2
    %v3364 = vunpack.c.l.b16 %v3296
    %v3365 = vunpack.c.h.b16 %v3296
    %v3366 = vunpack.c.l.b16 %v3297
    %v3367 = vunpack.c.h.b16 %v3297
    %v3368 = vunpack.c.l.b16 %v3298
    %v3369 = vunpack.c.h.b16 %v3298
    %v3370 = vunpack.c.l.b16 %v3299
    %v3371 = vunpack.c.h.b16 %v3299
    %v3372 = vunpack.c.l.b16 %v3300
    %v3373 = vunpack.c.h.b16 %v3300
    %v3374 = vunpack.c.l.b16 %v3301
    %v3375 = vunpack.c.h.b16 %v3301
    %v3376 = vunpack.c.l.b16 %v3302
    %v3377 = vunpack.c.h.b16 %v3302
    %v3378 = vunpack.c.l.b16 %v3303
    %v3379 = vunpack.c.h.b16 %v3303
    %v3380 = vunpack.c.l.b16 %v3304
    %v3381 = vunpack.c.h.b16 %v3304
    %v3382 = vunpack.c.l.b16 %v3305
    %v3383 = vunpack.c.h.b16 %v3305
    %v3384 = vunpack.c.l.b16 %v3306
    %v3385 = vunpack.c.h.b16 %v3306
    %v3386 = vunpack.c.l.b16 %v3307
    %v3387 = vunpack.c.h.b16 %v3307
    %v3388 = vunpack.c.l.b16 %v3308
    %v3389 = vunpack.c.h.b16 %v3308
    %v3390 = vunpack.c.l.b16 %v3309
    %v3391 = vunpack.c.h.b16 %v3309
    %v3392 = vunpack.c.l.b16 %v3310
    %v3393 = vunpack.c.h.b16 %v3310
    %v3394 = vunpack.c.l.b16 %v3311
    %v3395 = vunpack.c.h.b16 %v3311
    %v3396 = vunpack.c.l.b16 %v3312
    %v3397 = vunpack.c.h.b16 %v3312
    %v3398 = vunpack.c.l.b16 %v3313
    %v3399 = vunpack.c.h.b16 %v3313
    %v3400 = vunpack.c.l.b16 %v3314
    %v3401 = vunpack.c.h.b16 %v3314
    %v3402 = vunpack.c.l.b16 %v3315
    %v3403 = vunpack.c.h.b16 %v3315
    %v3404 = vunpack.c.l.b16 %v3316
    %v3405 = vunpack.c.h.b16 %v3316
    %v3406 = vunpack.c.l.b16 %v3317
    %v3407 = vunpack.c.h.b16 %v3317
    %v3408 = vunpack.c.l.b16 %v3318
    %v3409 = vunpack.c.h.b16 %v3318
    %v3410 = vunpack.c.l.b16 %v3319
    %v3411 = vunpack.c.h.b16 %v3319
    %v3412 = vunpack.c.l.b16 %v3320
    %v3413 = vunpack.c.h.b16 %v3320
    %v3414 = vunpack.c.l.b16 %v3321
    %v3415 = vunpack.c.h.b16 %v3321
    %v3416 = vunpack.c.l.b16 %v3322
    %v3417 = vunpack.c.h.b16 %v3322
    %v3418 = vunpack.c.l.b16 %v3323
    %v3419 = vunpack.c.h.b16 %v3323
    %v3420 = vunpack.c.l.b16 %v3324
    %v3421 = vunpack.c.h.b16 %v3324
    %v3422 = vunpack.c.l.b16 %v3325
    %v3423 = vunpack.c.h.b16 %v3325
    %v3424 = vunpack.c.l.b16 %v3326
    %v3425 = vunpack.c.h.b16 %v3326
    %v3426 = vunpack.c.l.b16 %v3327
    %v3427 = vunpack.c.h.b16 %v3327
    %v3428 = vpack.c.b16 %v3368, %v3364
    %v3429 = vpack.c.b16 %v3369, %v3365
    %v3430 = vpack.c.b16 %v3370, %v3366
    %v3431 = vpack.c.b16 %v3371, %v3367
    %v3432 = vpack.c.b16 %v3376, %v3372
    %v3433 = vpack.c.b16 %v3377, %v3373
    %v3434 = vpack.c.b16 %v3378, %v3374
    %v3435 = vpack.c.b16 %v3379, %v3375
    %v3436 = vpack.c.b16 %v3384, %v3380
    %v3437 = vpack.c.b16 %v3385, %v3381
    %v3438 = vpack.c.b16 %v3386, %v3382
    %v3439 = vpack.c.b16 %v3387, %v3383
    %v3440 = vpack.c.b16 %v3392, %v3388
    %v3441 = vpack.c.b16 %v3393, %v3389
    %v3442 = vpack.c.b16 %v3394, %v3390
    %v3443 = vpack.c.b16 %v3395, %v3391
    %v3444 = vpack.c.b16 %v3400, %v3396
    %v3445 = vpack.c.b16 %v3401, %v3397
    %v3446 = vpack.c.b16 %v3402, %v3398
    %v3447 = vpack.c.b16 %v3403, %v3399
    %v3448 = vpack.c.b16 %v3408, %v3404
    %v3449 = vpack.c.b16 %v3409, %v3405
    %v3450 = vpack.c.b16 %v3410, %v3406
    %v3451 = vpack.c.b16 %v3411, %v3407
    %v3452 = vpack.c.b16 %v3416, %v3412
    %v3453 = vpack.c.b16 %v3417, %v3413
    %v3454 = vpack.c.b16 %v3418, %v3414
    %v3455 = vpack.c.b16 %v3419, %v3415
    %v3456 = vpack.c.b16 %v3424, %v3420
    %v3457 = vpack.c.b16 %v3425, %v3421
    %v3458 = vpack.c.b16 %v3426, %v3422
    %v3459 = vpack.c.b16 %v3427, %v3423
    %3492 = vmatprep.subr.bf16.mxu0 %v3457
    %3493 = vmatpush1.bf16.msra.mxu0 %v3456
    %3494 = vmatprep.subr.bf16.mxu0 %v3453
    %3495 = vmatpush1.bf16.msra.mxu0 %v3452
    %3496 = vmatprep.subr.bf16.mxu0 %v3449
    %3497 = vmatpush1.bf16.msra.mxu0 %v3448
    %3498 = vmatprep.subr.bf16.mxu0 %v3445
    %3499 = vmatpush1.bf16.msra.mxu0 %v3444
    %3500 = vmatprep.subr.bf16.mxu0 %v3441
    %3501 = vmatpush1.bf16.msra.mxu0 %v3440
    %3502 = vmatprep.subr.bf16.mxu0 %v3437
    %3503 = vmatpush1.bf16.msra.mxu0 %v3436
    %3504 = vmatprep.subr.bf16.mxu0 %v3433
    %3505 = vmatpush1.bf16.msra.mxu0 %v3432
    %3506 = vmatprep.subr.bf16.mxu0 %v3429
    %3507 = vmatpush1.bf16.msra.mxu0 %v3428
    %3508 = vmatprep.subr.bf16.mxu0 0
    %3509 = vmatpush2.bf16.msra.mxu0 0
    %3510 = vmatprep.subr.bf16.mxu0 0
    %3511 = vmatpush2.bf16.msra.mxu0 0
    %3512 = vmatprep.subr.bf16.mxu0 0
    %3513 = vmatpush2.bf16.msra.mxu0 0
    %3514 = vmatprep.subr.bf16.mxu0 0
    %3515 = vmatpush2.bf16.msra.mxu0 0
    %3516 = vmatprep.subr.bf16.mxu0 0
    %3517 = vmatpush2.bf16.msra.mxu0 0
    %3518 = vmatprep.subr.bf16.mxu0 0
    %3519 = vmatpush2.bf16.msra.mxu0 0
    %3520 = vmatprep.subr.bf16.mxu0 0
    %3521 = vmatpush2.bf16.msra.mxu0 0
    %3522 = vmatprep.subr.bf16.mxu0 0
    %3523 = vmatpush2.bf16.msra.mxu0 0
    %3524 = vmatprep.mubr.bf16.mxu0 0
    %3525 = vmatmul.mubr.bf16.gmra.mxu0 %v3330
    %v3526 = vpop.f32.mrf.mxu0
    %v3527 = vadd.f32 0.0, %v3526
    %v3528 = vpop.f32.mrf.mxu0
    %v3529 = vadd.f32 0.0, %v3528
    %v3530 = vpop.f32.mrf.mxu0
    %v3531 = vpop.f32.mrf.mxu0
    %3532 = vdwg.mxu0
    %3533 = vmatprep.subr.bf16.mxu0 %v3459
    %3534 = vmatpush1.bf16.msra.mxu0 %v3458
    %3535 = vmatprep.subr.bf16.mxu0 %v3455
    %3536 = vmatpush1.bf16.msra.mxu0 %v3454
    %3537 = vmatprep.subr.bf16.mxu0 %v3451
    %3538 = vmatpush1.bf16.msra.mxu0 %v3450
    %3539 = vmatprep.subr.bf16.mxu0 %v3447
    %3540 = vmatpush1.bf16.msra.mxu0 %v3446
    %3541 = vmatprep.subr.bf16.mxu0 %v3443
    %3542 = vmatpush1.bf16.msra.mxu0 %v3442
    %3543 = vmatprep.subr.bf16.mxu0 %v3439
    %3544 = vmatpush1.bf16.msra.mxu0 %v3438
    %3545 = vmatprep.subr.bf16.mxu0 %v3435
    %3546 = vmatpush1.bf16.msra.mxu0 %v3434
    %3547 = vmatprep.subr.bf16.mxu0 %v3431
    %3548 = vmatpush1.bf16.msra.mxu0 %v3430
    %3549 = vmatprep.subr.bf16.mxu0 0
    %3550 = vmatpush2.bf16.msra.mxu0 0
    %3551 = vmatprep.subr.bf16.mxu0 0
    %3552 = vmatpush2.bf16.msra.mxu0 0
    %3553 = vmatprep.subr.bf16.mxu0 0
    %3554 = vmatpush2.bf16.msra.mxu0 0
    %3555 = vmatprep.subr.bf16.mxu0 0
    %3556 = vmatpush2.bf16.msra.mxu0 0
    %3557 = vmatprep.subr.bf16.mxu0 0
    %3558 = vmatpush2.bf16.msra.mxu0 0
    %3559 = vmatprep.subr.bf16.mxu0 0
    %3560 = vmatpush2.bf16.msra.mxu0 0
    %3561 = vmatprep.subr.bf16.mxu0 0
    %3562 = vmatpush2.bf16.msra.mxu0 0
    %3563 = vmatprep.subr.bf16.mxu0 0
    %3564 = vmatpush2.bf16.msra.mxu0 0
    %3565 = vmatprep.mubr.bf16.mxu0 0
    %3566 = vmatmul.mubr.bf16.gmra.mxu0 %v3330
    %v3567 = vpop.f32.mrf.mxu0
    %v3568 = vadd.f32 0.0, %v3567
    %v3569 = vpop.f32.mrf.mxu0
    %v3570 = vadd.f32 0.0, %v3569
    %v3571 = vpop.f32.mrf.mxu0
    %v3572 = vpop.f32.mrf.mxu0
    %3573 = vdwg.mxu0
    %v3578 = vrot.slane %v3527, 2
    %v3579 = vrot.slane %v3529, 2
    %v3580 = vrot.slane %v3568, 2
    %v3581 = vrot.slane %v3570, 2
    %v3586 = vadd.f32 %v3292, %v3578
    %v3587 = vadd.f32 %v3293, %v3579
    %v3588 = vadd.f32 %v3294, %v3580
    %v3589 = vadd.f32 %v3295, %v3581
    %v3590 = vld [vmem:[#allocation2 + $0x60] sm:$0x3]
    %v3591 = vld [vmem:[#allocation2 + $0x68] sm:$0x3]
    %v3592 = vld [vmem:[#allocation2 + $0x70] sm:$0x3]
    %v3593 = vld [vmem:[#allocation2 + $0x78] sm:$0x3]
    %v3594 = vld [vmem:[%s6] sm:$0xff]
    %v3595 = vld [vmem:[%s6 + $0x8] sm:$0xff]
    %v3596 = vld [vmem:[%s6 + $0x10] sm:$0xff]
    %v3597 = vld [vmem:[%s6 + $0x18] sm:$0xff]
    %v3598 = vld [vmem:[%s6 + $0x20] sm:$0xff]
    %v3599 = vld [vmem:[%s6 + $0x28] sm:$0xff]
    %v3600 = vld [vmem:[%s6 + $0x30] sm:$0xff]
    %v3601 = vld [vmem:[%s6 + $0x38] sm:$0xff]
    %v3602 = vld [vmem:[%s6 + $0x40] sm:$0xff]
    %v3603 = vld [vmem:[%s6 + $0x48] sm:$0xff]
    %v3604 = vld [vmem:[%s6 + $0x50] sm:$0xff]
    %v3605 = vld [vmem:[%s6 + $0x58] sm:$0xff]
    %v3606 = vld [vmem:[%s6 + $0x60] sm:$0xff]
    %v3607 = vld [vmem:[%s6 + $0x68] sm:$0xff]
    %v3608 = vld [vmem:[%s6 + $0x70] sm:$0xff]
    %v3609 = vld [vmem:[%s6 + $0x78] sm:$0xff]
    %v3610 = vld [vmem:[%s6 + $0x80] sm:$0xff]
    %v3611 = vld [vmem:[%s6 + $0x88] sm:$0xff]
    %v3612 = vld [vmem:[%s6 + $0x90] sm:$0xff]
    %v3613 = vld [vmem:[%s6 + $0x98] sm:$0xff]
    %v3614 = vld [vmem:[%s6 + $0xa0] sm:$0xff]
    %v3615 = vld [vmem:[%s6 + $0xa8] sm:$0xff]
    %v3616 = vld [vmem:[%s6 + $0xb0] sm:$0xff]
    %v3617 = vld [vmem:[%s6 + $0xb8] sm:$0xff]
    %v3618 = vld [vmem:[%s6 + $0xc0] sm:$0xff]
    %v3619 = vld [vmem:[%s6 + $0xc8] sm:$0xff]
    %v3620 = vld [vmem:[%s6 + $0xd0] sm:$0xff]
    %v3621 = vld [vmem:[%s6 + $0xd8] sm:$0xff]
    %v3622 = vld [vmem:[%s6 + $0xe0] sm:$0xff]
    %v3623 = vld [vmem:[%s6 + $0xe8] sm:$0xff]
    %v3624 = vld [vmem:[%s6 + $0xf0] sm:$0xff]
    %v3625 = vld [vmem:[%s6 + $0xf8] sm:$0xff]
    %v3626 = vpack.c.bf16 %v3289, %v3289
    %v3628 = vrot.slane %v3626, 1
    %v3662 = vunpack.c.l.b16 %v3594
    %v3663 = vunpack.c.h.b16 %v3594
    %v3664 = vunpack.c.l.b16 %v3595
    %v3665 = vunpack.c.h.b16 %v3595
    %v3666 = vunpack.c.l.b16 %v3596
    %v3667 = vunpack.c.h.b16 %v3596
    %v3668 = vunpack.c.l.b16 %v3597
    %v3669 = vunpack.c.h.b16 %v3597
    %v3670 = vunpack.c.l.b16 %v3598
    %v3671 = vunpack.c.h.b16 %v3598
    %v3672 = vunpack.c.l.b16 %v3599
    %v3673 = vunpack.c.h.b16 %v3599
    %v3674 = vunpack.c.l.b16 %v3600
    %v3675 = vunpack.c.h.b16 %v3600
    %v3676 = vunpack.c.l.b16 %v3601
    %v3677 = vunpack.c.h.b16 %v3601
    %v3678 = vunpack.c.l.b16 %v3602
    %v3679 = vunpack.c.h.b16 %v3602
    %v3680 = vunpack.c.l.b16 %v3603
    %v3681 = vunpack.c.h.b16 %v3603
    %v3682 = vunpack.c.l.b16 %v3604
    %v3683 = vunpack.c.h.b16 %v3604
    %v3684 = vunpack.c.l.b16 %v3605
    %v3685 = vunpack.c.h.b16 %v3605
    %v3686 = vunpack.c.l.b16 %v3606
    %v3687 = vunpack.c.h.b16 %v3606
    %v3688 = vunpack.c.l.b16 %v3607
    %v3689 = vunpack.c.h.b16 %v3607
    %v3690 = vunpack.c.l.b16 %v3608
    %v3691 = vunpack.c.h.b16 %v3608
    %v3692 = vunpack.c.l.b16 %v3609
    %v3693 = vunpack.c.h.b16 %v3609
    %v3694 = vunpack.c.l.b16 %v3610
    %v3695 = vunpack.c.h.b16 %v3610
    %v3696 = vunpack.c.l.b16 %v3611
    %v3697 = vunpack.c.h.b16 %v3611
    %v3698 = vunpack.c.l.b16 %v3612
    %v3699 = vunpack.c.h.b16 %v3612
    %v3700 = vunpack.c.l.b16 %v3613
    %v3701 = vunpack.c.h.b16 %v3613
    %v3702 = vunpack.c.l.b16 %v3614
    %v3703 = vunpack.c.h.b16 %v3614
    %v3704 = vunpack.c.l.b16 %v3615
    %v3705 = vunpack.c.h.b16 %v3615
    %v3706 = vunpack.c.l.b16 %v3616
    %v3707 = vunpack.c.h.b16 %v3616
    %v3708 = vunpack.c.l.b16 %v3617
    %v3709 = vunpack.c.h.b16 %v3617
    %v3710 = vunpack.c.l.b16 %v3618
    %v3711 = vunpack.c.h.b16 %v3618
    %v3712 = vunpack.c.l.b16 %v3619
    %v3713 = vunpack.c.h.b16 %v3619
    %v3714 = vunpack.c.l.b16 %v3620
    %v3715 = vunpack.c.h.b16 %v3620
    %v3716 = vunpack.c.l.b16 %v3621
    %v3717 = vunpack.c.h.b16 %v3621
    %v3718 = vunpack.c.l.b16 %v3622
    %v3719 = vunpack.c.h.b16 %v3622
    %v3720 = vunpack.c.l.b16 %v3623
    %v3721 = vunpack.c.h.b16 %v3623
    %v3722 = vunpack.c.l.b16 %v3624
    %v3723 = vunpack.c.h.b16 %v3624
    %v3724 = vunpack.c.l.b16 %v3625
    %v3725 = vunpack.c.h.b16 %v3625
    %v3726 = vpack.c.b16 %v3666, %v3662
    %v3727 = vpack.c.b16 %v3667, %v3663
    %v3728 = vpack.c.b16 %v3668, %v3664
    %v3729 = vpack.c.b16 %v3669, %v3665
    %v3730 = vpack.c.b16 %v3674, %v3670
    %v3731 = vpack.c.b16 %v3675, %v3671
    %v3732 = vpack.c.b16 %v3676, %v3672
    %v3733 = vpack.c.b16 %v3677, %v3673
    %v3734 = vpack.c.b16 %v3682, %v3678
    %v3735 = vpack.c.b16 %v3683, %v3679
    %v3736 = vpack.c.b16 %v3684, %v3680
    %v3737 = vpack.c.b16 %v3685, %v3681
    %v3738 = vpack.c.b16 %v3690, %v3686
    %v3739 = vpack.c.b16 %v3691, %v3687
    %v3740 = vpack.c.b16 %v3692, %v3688
    %v3741 = vpack.c.b16 %v3693, %v3689
    %v3742 = vpack.c.b16 %v3698, %v3694
    %v3743 = vpack.c.b16 %v3699, %v3695
    %v3744 = vpack.c.b16 %v3700, %v3696
    %v3745 = vpack.c.b16 %v3701, %v3697
    %v3746 = vpack.c.b16 %v3706, %v3702
    %v3747 = vpack.c.b16 %v3707, %v3703
    %v3748 = vpack.c.b16 %v3708, %v3704
    %v3749 = vpack.c.b16 %v3709, %v3705
    %v3750 = vpack.c.b16 %v3714, %v3710
    %v3751 = vpack.c.b16 %v3715, %v3711
    %v3752 = vpack.c.b16 %v3716, %v3712
    %v3753 = vpack.c.b16 %v3717, %v3713
    %v3754 = vpack.c.b16 %v3722, %v3718
    %v3755 = vpack.c.b16 %v3723, %v3719
    %v3756 = vpack.c.b16 %v3724, %v3720
    %v3757 = vpack.c.b16 %v3725, %v3721
    %3790 = vmatprep.subr.bf16.mxu0 %v3755
    %3791 = vmatpush1.bf16.msra.mxu0 %v3754
    %3792 = vmatprep.subr.bf16.mxu0 %v3751
    %3793 = vmatpush1.bf16.msra.mxu0 %v3750
    %3794 = vmatprep.subr.bf16.mxu0 %v3747
    %3795 = vmatpush1.bf16.msra.mxu0 %v3746
    %3796 = vmatprep.subr.bf16.mxu0 %v3743
    %3797 = vmatpush1.bf16.msra.mxu0 %v3742
    %3798 = vmatprep.subr.bf16.mxu0 %v3739
    %3799 = vmatpush1.bf16.msra.mxu0 %v3738
    %3800 = vmatprep.subr.bf16.mxu0 %v3735
    %3801 = vmatpush1.bf16.msra.mxu0 %v3734
    %3802 = vmatprep.subr.bf16.mxu0 %v3731
    %3803 = vmatpush1.bf16.msra.mxu0 %v3730
    %3804 = vmatprep.subr.bf16.mxu0 %v3727
    %3805 = vmatpush1.bf16.msra.mxu0 %v3726
    %3806 = vmatprep.subr.bf16.mxu0 0
    %3807 = vmatpush2.bf16.msra.mxu0 0
    %3808 = vmatprep.subr.bf16.mxu0 0
    %3809 = vmatpush2.bf16.msra.mxu0 0
    %3810 = vmatprep.subr.bf16.mxu0 0
    %3811 = vmatpush2.bf16.msra.mxu0 0
    %3812 = vmatprep.subr.bf16.mxu0 0
    %3813 = vmatpush2.bf16.msra.mxu0 0
    %3814 = vmatprep.subr.bf16.mxu0 0
    %3815 = vmatpush2.bf16.msra.mxu0 0
    %3816 = vmatprep.subr.bf16.mxu0 0
    %3817 = vmatpush2.bf16.msra.mxu0 0
    %3818 = vmatprep.subr.bf16.mxu0 0
    %3819 = vmatpush2.bf16.msra.mxu0 0
    %3820 = vmatprep.subr.bf16.mxu0 0
    %3821 = vmatpush2.bf16.msra.mxu0 0
    %3822 = vmatprep.mubr.bf16.mxu0 0
    %3823 = vmatmul.mubr.bf16.gmra.mxu0 %v3628
    %v3824 = vpop.f32.mrf.mxu0
    %v3825 = vadd.f32 0.0, %v3824
    %v3826 = vpop.f32.mrf.mxu0
    %v3827 = vadd.f32 0.0, %v3826
    %v3828 = vpop.f32.mrf.mxu0
    %v3829 = vpop.f32.mrf.mxu0
    %3830 = vdwg.mxu0
    %3831 = vmatprep.subr.bf16.mxu0 %v3757
    %3832 = vmatpush1.bf16.msra.mxu0 %v3756
    %3833 = vmatprep.subr.bf16.mxu0 %v3753
    %3834 = vmatpush1.bf16.msra.mxu0 %v3752
    %3835 = vmatprep.subr.bf16.mxu0 %v3749
    %3836 = vmatpush1.bf16.msra.mxu0 %v3748
    %3837 = vmatprep.subr.bf16.mxu0 %v3745
    %3838 = vmatpush1.bf16.msra.mxu0 %v3744
    %3839 = vmatprep.subr.bf16.mxu0 %v3741
    %3840 = vmatpush1.bf16.msra.mxu0 %v3740
    %3841 = vmatprep.subr.bf16.mxu0 %v3737
    %3842 = vmatpush1.bf16.msra.mxu0 %v3736
    %3843 = vmatprep.subr.bf16.mxu0 %v3733
    %3844 = vmatpush1.bf16.msra.mxu0 %v3732
    %3845 = vmatprep.subr.bf16.mxu0 %v3729
    %3846 = vmatpush1.bf16.msra.mxu0 %v3728
    %3847 = vmatprep.subr.bf16.mxu0 0
    %3848 = vmatpush2.bf16.msra.mxu0 0
    %3849 = vmatprep.subr.bf16.mxu0 0
    %3850 = vmatpush2.bf16.msra.mxu0 0
    %3851 = vmatprep.subr.bf16.mxu0 0
    %3852 = vmatpush2.bf16.msra.mxu0 0
    %3853 = vmatprep.subr.bf16.mxu0 0
    %3854 = vmatpush2.bf16.msra.mxu0 0
    %3855 = vmatprep.subr.bf16.mxu0 0
    %3856 = vmatpush2.bf16.msra.mxu0 0
    %3857 = vmatprep.subr.bf16.mxu0 0
    %3858 = vmatpush2.bf16.msra.mxu0 0
    %3859 = vmatprep.subr.bf16.mxu0 0
    %3860 = vmatpush2.bf16.msra.mxu0 0
    %3861 = vmatprep.subr.bf16.mxu0 0
    %3862 = vmatpush2.bf16.msra.mxu0 0
    %3863 = vmatprep.mubr.bf16.mxu0 0
    %3864 = vmatmul.mubr.bf16.gmra.mxu0 %v3628
    %v3865 = vpop.f32.mrf.mxu0
    %v3866 = vadd.f32 0.0, %v3865
    %v3867 = vpop.f32.mrf.mxu0
    %v3868 = vadd.f32 0.0, %v3867
    %v3869 = vpop.f32.mrf.mxu0
    %v3870 = vpop.f32.mrf.mxu0
    %3871 = vdwg.mxu0
    %v3872 = vadd.f32 %v3590, %v3825
    %v3873 = vadd.f32 %v3591, %v3827
    %v3874 = vadd.f32 %v3592, %v3866
    %v3875 = vadd.f32 %v3593, %v3868
    %v3876 = vmul.f32 %v3586, 0.5
    %v3877 = vtanh.pop %v3876
    %v3878 = vmul.f32 %v3877, 0.5
    %v3879 = vadd.f32 %v3878, 0.5
    %v3880 = vmul.f32 %v3587, 0.5
    %v3881 = vtanh.pop %v3880
    %v3882 = vmul.f32 %v3881, 0.5
    %v3883 = vadd.f32 %v3882, 0.5
    %v3884 = vtanh.pop %v3588
    %v3885 = vmul.f32 %v3589, 0.5
    %v3886 = vtanh.pop %v3885
    %v3887 = vmul.f32 %v3886, 0.5
    %v3888 = vadd.f32 %v3887, 0.5
    %v3890 = vrot.slane %v3266, 6
    %v3892 = vmul.f32 %v3883, %v3890
    %v3893 = vmul.f32 %v3879, %v3884
    %v3894 = vadd.f32 %v3892, %v3893
    %v3895 = vtanh.pop %v3894
    %v3896 = vmul.f32 %v3888, %v3895
    %v3897 = vmul.f32 %v3872, 0.5
    %v3898 = vtanh.pop %v3897
    %v3899 = vmul.f32 %v3898, 0.5
    %v3900 = vadd.f32 %v3899, 0.5
    %v3901 = vmul.f32 %v3873, 0.5
    %v3902 = vtanh.pop %v3901
    %v3903 = vmul.f32 %v3902, 0.5
    %v3904 = vadd.f32 %v3903, 0.5
    %v3905 = vtanh.pop %v3874
    %v3906 = vmul.f32 %v3875, 0.5
    %v3907 = vtanh.pop %v3906
    %v3908 = vmul.f32 %v3907, 0.5
    %v3909 = vadd.f32 %v3908, 0.5
    %v3911 = vrot.slane %v3287, 2
    %v3913 = vmul.f32 %v3904, %v3911
    %v3914 = vmul.f32 %v3900, %v3905
    %v3915 = vadd.f32 %v3913, %v3914
    %v3916 = vtanh.pop %v3915
    %v3917 = vmul.f32 %v3909, %v3916
    %3918 = vst [vmem:[#allocation3] sm:$0xc0] %v3896
    %3919 = vst [vmem:[#allocation3 + $0x18] sm:$0x3] %v3917
    %v3920 = vld [vmem:[#allocation2 + $0x40] sm:$0x3]
    %v3921 = vld [vmem:[#allocation2 + $0x48] sm:$0x3]
    %v3922 = vld [vmem:[#allocation2 + $0x50] sm:$0x3]
    %v3923 = vld [vmem:[#allocation2 + $0x58] sm:$0x3]
    %v3924 = vld [vmem:[%s5] sm:$0xff]
    %v3925 = vld [vmem:[%s5 + $0x8] sm:$0xff]
    %v3926 = vld [vmem:[%s5 + $0x10] sm:$0xff]
    %v3927 = vld [vmem:[%s5 + $0x18] sm:$0xff]
    %v3928 = vld [vmem:[%s5 + $0x20] sm:$0xff]
    %v3929 = vld [vmem:[%s5 + $0x28] sm:$0xff]
    %v3930 = vld [vmem:[%s5 + $0x30] sm:$0xff]
    %v3931 = vld [vmem:[%s5 + $0x38] sm:$0xff]
    %v3932 = vld [vmem:[%s5 + $0x40] sm:$0xff]
    %v3933 = vld [vmem:[%s5 + $0x48] sm:$0xff]
    %v3934 = vld [vmem:[%s5 + $0x50] sm:$0xff]
    %v3935 = vld [vmem:[%s5 + $0x58] sm:$0xff]
    %v3936 = vld [vmem:[%s5 + $0x60] sm:$0xff]
    %v3937 = vld [vmem:[%s5 + $0x68] sm:$0xff]
    %v3938 = vld [vmem:[%s5 + $0x70] sm:$0xff]
    %v3939 = vld [vmem:[%s5 + $0x78] sm:$0xff]
    %v3940 = vld [vmem:[%s5 + $0x80] sm:$0xff]
    %v3941 = vld [vmem:[%s5 + $0x88] sm:$0xff]
    %v3942 = vld [vmem:[%s5 + $0x90] sm:$0xff]
    %v3943 = vld [vmem:[%s5 + $0x98] sm:$0xff]
    %v3944 = vld [vmem:[%s5 + $0xa0] sm:$0xff]
    %v3945 = vld [vmem:[%s5 + $0xa8] sm:$0xff]
    %v3946 = vld [vmem:[%s5 + $0xb0] sm:$0xff]
    %v3947 = vld [vmem:[%s5 + $0xb8] sm:$0xff]
    %v3948 = vld [vmem:[%s5 + $0xc0] sm:$0xff]
    %v3949 = vld [vmem:[%s5 + $0xc8] sm:$0xff]
    %v3950 = vld [vmem:[%s5 + $0xd0] sm:$0xff]
    %v3951 = vld [vmem:[%s5 + $0xd8] sm:$0xff]
    %v3952 = vld [vmem:[%s5 + $0xe0] sm:$0xff]
    %v3953 = vld [vmem:[%s5 + $0xe8] sm:$0xff]
    %v3954 = vld [vmem:[%s5 + $0xf0] sm:$0xff]
    %v3955 = vld [vmem:[%s5 + $0xf8] sm:$0xff]
    %v3956 = vpack.c.bf16 %v3896, %v3896
    %v3958 = vrot.slane %v3956, 3
    %v3992 = vunpack.c.l.b16 %v3924
    %v3993 = vunpack.c.h.b16 %v3924
    %v3994 = vunpack.c.l.b16 %v3925
    %v3995 = vunpack.c.h.b16 %v3925
    %v3996 = vunpack.c.l.b16 %v3926
    %v3997 = vunpack.c.h.b16 %v3926
    %v3998 = vunpack.c.l.b16 %v3927
    %v3999 = vunpack.c.h.b16 %v3927
    %v4000 = vunpack.c.l.b16 %v3928
    %v4001 = vunpack.c.h.b16 %v3928
    %v4002 = vunpack.c.l.b16 %v3929
    %v4003 = vunpack.c.h.b16 %v3929
    %v4004 = vunpack.c.l.b16 %v3930
    %v4005 = vunpack.c.h.b16 %v3930
    %v4006 = vunpack.c.l.b16 %v3931
    %v4007 = vunpack.c.h.b16 %v3931
    %v4008 = vunpack.c.l.b16 %v3932
    %v4009 = vunpack.c.h.b16 %v3932
    %v4010 = vunpack.c.l.b16 %v3933
    %v4011 = vunpack.c.h.b16 %v3933
    %v4012 = vunpack.c.l.b16 %v3934
    %v4013 = vunpack.c.h.b16 %v3934
    %v4014 = vunpack.c.l.b16 %v3935
    %v4015 = vunpack.c.h.b16 %v3935
    %v4016 = vunpack.c.l.b16 %v3936
    %v4017 = vunpack.c.h.b16 %v3936
    %v4018 = vunpack.c.l.b16 %v3937
    %v4019 = vunpack.c.h.b16 %v3937
    %v4020 = vunpack.c.l.b16 %v3938
    %v4021 = vunpack.c.h.b16 %v3938
    %v4022 = vunpack.c.l.b16 %v3939
    %v4023 = vunpack.c.h.b16 %v3939
    %v4024 = vunpack.c.l.b16 %v3940
    %v4025 = vunpack.c.h.b16 %v3940
    %v4026 = vunpack.c.l.b16 %v3941
    %v4027 = vunpack.c.h.b16 %v3941
    %v4028 = vunpack.c.l.b16 %v3942
    %v4029 = vunpack.c.h.b16 %v3942
    %v4030 = vunpack.c.l.b16 %v3943
    %v4031 = vunpack.c.h.b16 %v3943
    %v4032 = vunpack.c.l.b16 %v3944
    %v4033 = vunpack.c.h.b16 %v3944
    %v4034 = vunpack.c.l.b16 %v3945
    %v4035 = vunpack.c.h.b16 %v3945
    %v4036 = vunpack.c.l.b16 %v3946
    %v4037 = vunpack.c.h.b16 %v3946
    %v4038 = vunpack.c.l.b16 %v3947
    %v4039 = vunpack.c.h.b16 %v3947
    %v4040 = vunpack.c.l.b16 %v3948
    %v4041 = vunpack.c.h.b16 %v3948
    %v4042 = vunpack.c.l.b16 %v3949
    %v4043 = vunpack.c.h.b16 %v3949
    %v4044 = vunpack.c.l.b16 %v3950
    %v4045 = vunpack.c.h.b16 %v3950
    %v4046 = vunpack.c.l.b16 %v3951
    %v4047 = vunpack.c.h.b16 %v3951
    %v4048 = vunpack.c.l.b16 %v3952
    %v4049 = vunpack.c.h.b16 %v3952
    %v4050 = vunpack.c.l.b16 %v3953
    %v4051 = vunpack.c.h.b16 %v3953
    %v4052 = vunpack.c.l.b16 %v3954
    %v4053 = vunpack.c.h.b16 %v3954
    %v4054 = vunpack.c.l.b16 %v3955
    %v4055 = vunpack.c.h.b16 %v3955
    %v4056 = vpack.c.b16 %v3996, %v3992
    %v4057 = vpack.c.b16 %v3997, %v3993
    %v4058 = vpack.c.b16 %v3998, %v3994
    %v4059 = vpack.c.b16 %v3999, %v3995
    %v4060 = vpack.c.b16 %v4004, %v4000
    %v4061 = vpack.c.b16 %v4005, %v4001
    %v4062 = vpack.c.b16 %v4006, %v4002
    %v4063 = vpack.c.b16 %v4007, %v4003
    %v4064 = vpack.c.b16 %v4012, %v4008
    %v4065 = vpack.c.b16 %v4013, %v4009
    %v4066 = vpack.c.b16 %v4014, %v4010
    %v4067 = vpack.c.b16 %v4015, %v4011
    %v4068 = vpack.c.b16 %v4020, %v4016
    %v4069 = vpack.c.b16 %v4021, %v4017
    %v4070 = vpack.c.b16 %v4022, %v4018
    %v4071 = vpack.c.b16 %v4023, %v4019
    %v4072 = vpack.c.b16 %v4028, %v4024
    %v4073 = vpack.c.b16 %v4029, %v4025
    %v4074 = vpack.c.b16 %v4030, %v4026
    %v4075 = vpack.c.b16 %v4031, %v4027
    %v4076 = vpack.c.b16 %v4036, %v4032
    %v4077 = vpack.c.b16 %v4037, %v4033
    %v4078 = vpack.c.b16 %v4038, %v4034
    %v4079 = vpack.c.b16 %v4039, %v4035
    %v4080 = vpack.c.b16 %v4044, %v4040
    %v4081 = vpack.c.b16 %v4045, %v4041
    %v4082 = vpack.c.b16 %v4046, %v4042
    %v4083 = vpack.c.b16 %v4047, %v4043
    %v4084 = vpack.c.b16 %v4052, %v4048
    %v4085 = vpack.c.b16 %v4053, %v4049
    %v4086 = vpack.c.b16 %v4054, %v4050
    %v4087 = vpack.c.b16 %v4055, %v4051
    %4120 = vmatprep.subr.bf16.mxu0 %v4085
    %4121 = vmatpush1.bf16.msra.mxu0 %v4084
    %4122 = vmatprep.subr.bf16.mxu0 %v4081
    %4123 = vmatpush1.bf16.msra.mxu0 %v4080
    %4124 = vmatprep.subr.bf16.mxu0 %v4077
    %4125 = vmatpush1.bf16.msra.mxu0 %v4076
    %4126 = vmatprep.subr.bf16.mxu0 %v4073
    %4127 = vmatpush1.bf16.msra.mxu0 %v4072
    %4128 = vmatprep.subr.bf16.mxu0 %v4069
    %4129 = vmatpush1.bf16.msra.mxu0 %v4068
    %4130 = vmatprep.subr.bf16.mxu0 %v4065
    %4131 = vmatpush1.bf16.msra.mxu0 %v4064
    %4132 = vmatprep.subr.bf16.mxu0 %v4061
    %4133 = vmatpush1.bf16.msra.mxu0 %v4060
    %4134 = vmatprep.subr.bf16.mxu0 %v4057
    %4135 = vmatpush1.bf16.msra.mxu0 %v4056
    %4136 = vmatprep.subr.bf16.mxu0 0
    %4137 = vmatpush2.bf16.msra.mxu0 0
    %4138 = vmatprep.subr.bf16.mxu0 0
    %4139 = vmatpush2.bf16.msra.mxu0 0
    %4140 = vmatprep.subr.bf16.mxu0 0
    %4141 = vmatpush2.bf16.msra.mxu0 0
    %4142 = vmatprep.subr.bf16.mxu0 0
    %4143 = vmatpush2.bf16.msra.mxu0 0
    %4144 = vmatprep.subr.bf16.mxu0 0
    %4145 = vmatpush2.bf16.msra.mxu0 0
    %4146 = vmatprep.subr.bf16.mxu0 0
    %4147 = vmatpush2.bf16.msra.mxu0 0
    %4148 = vmatprep.subr.bf16.mxu0 0
    %4149 = vmatpush2.bf16.msra.mxu0 0
    %4150 = vmatprep.subr.bf16.mxu0 0
    %4151 = vmatpush2.bf16.msra.mxu0 0
    %4152 = vmatprep.mubr.bf16.mxu0 0
    %4153 = vmatmul.mubr.bf16.gmra.mxu0 %v3958
    %v4154 = vpop.f32.mrf.mxu0
    %v4155 = vadd.f32 0.0, %v4154
    %v4156 = vpop.f32.mrf.mxu0
    %v4157 = vadd.f32 0.0, %v4156
    %v4158 = vpop.f32.mrf.mxu0
    %v4159 = vpop.f32.mrf.mxu0
    %4160 = vdwg.mxu0
    %4161 = vmatprep.subr.bf16.mxu0 %v4087
    %4162 = vmatpush1.bf16.msra.mxu0 %v4086
    %4163 = vmatprep.subr.bf16.mxu0 %v4083
    %4164 = vmatpush1.bf16.msra.mxu0 %v4082
    %4165 = vmatprep.subr.bf16.mxu0 %v4079
    %4166 = vmatpush1.bf16.msra.mxu0 %v4078
    %4167 = vmatprep.subr.bf16.mxu0 %v4075
    %4168 = vmatpush1.bf16.msra.mxu0 %v4074
    %4169 = vmatprep.subr.bf16.mxu0 %v4071
    %4170 = vmatpush1.bf16.msra.mxu0 %v4070
    %4171 = vmatprep.subr.bf16.mxu0 %v4067
    %4172 = vmatpush1.bf16.msra.mxu0 %v4066
    %4173 = vmatprep.subr.bf16.mxu0 %v4063
    %4174 = vmatpush1.bf16.msra.mxu0 %v4062
    %4175 = vmatprep.subr.bf16.mxu0 %v4059
    %4176 = vmatpush1.bf16.msra.mxu0 %v4058
    %4177 = vmatprep.subr.bf16.mxu0 0
    %4178 = vmatpush2.bf16.msra.mxu0 0
    %4179 = vmatprep.subr.bf16.mxu0 0
    %4180 = vmatpush2.bf16.msra.mxu0 0
    %4181 = vmatprep.subr.bf16.mxu0 0
    %4182 = vmatpush2.bf16.msra.mxu0 0
    %4183 = vmatprep.subr.bf16.mxu0 0
    %4184 = vmatpush2.bf16.msra.mxu0 0
    %4185 = vmatprep.subr.bf16.mxu0 0
    %4186 = vmatpush2.bf16.msra.mxu0 0
    %4187 = vmatprep.subr.bf16.mxu0 0
    %4188 = vmatpush2.bf16.msra.mxu0 0
    %4189 = vmatprep.subr.bf16.mxu0 0
    %4190 = vmatpush2.bf16.msra.mxu0 0
    %4191 = vmatprep.subr.bf16.mxu0 0
    %4192 = vmatpush2.bf16.msra.mxu0 0
    %4193 = vmatprep.mubr.bf16.mxu0 0
    %4194 = vmatmul.mubr.bf16.gmra.mxu0 %v3958
    %v4195 = vpop.f32.mrf.mxu0
    %v4196 = vadd.f32 0.0, %v4195
    %v4197 = vpop.f32.mrf.mxu0
    %v4198 = vadd.f32 0.0, %v4197
    %v4199 = vpop.f32.mrf.mxu0
    %v4200 = vpop.f32.mrf.mxu0
    %4201 = vdwg.mxu0
    %v4202 = vadd.f32 %v3920, %v4155
    %v4203 = vadd.f32 %v3921, %v4157
    %v4204 = vadd.f32 %v3922, %v4196
    %v4205 = vadd.f32 %v3923, %v4198
    %v4206 = vld [vmem:[#allocation2 + $0x20] sm:$0xc0]
    %v4207 = vld [vmem:[#allocation2 + $0x28] sm:$0xc0]
    %v4208 = vld [vmem:[#allocation2 + $0x30] sm:$0xc0]
    %v4209 = vld [vmem:[#allocation2 + $0x38] sm:$0xc0]
    %v4210 = vld [vmem:[%s6] sm:$0xff]
    %v4211 = vld [vmem:[%s6 + $0x8] sm:$0xff]
    %v4212 = vld [vmem:[%s6 + $0x10] sm:$0xff]
    %v4213 = vld [vmem:[%s6 + $0x18] sm:$0xff]
    %v4214 = vld [vmem:[%s6 + $0x20] sm:$0xff]
    %v4215 = vld [vmem:[%s6 + $0x28] sm:$0xff]
    %v4216 = vld [vmem:[%s6 + $0x30] sm:$0xff]
    %v4217 = vld [vmem:[%s6 + $0x38] sm:$0xff]
    %v4218 = vld [vmem:[%s6 + $0x40] sm:$0xff]
    %v4219 = vld [vmem:[%s6 + $0x48] sm:$0xff]
    %v4220 = vld [vmem:[%s6 + $0x50] sm:$0xff]
    %v4221 = vld [vmem:[%s6 + $0x58] sm:$0xff]
    %v4222 = vld [vmem:[%s6 + $0x60] sm:$0xff]
    %v4223 = vld [vmem:[%s6 + $0x68] sm:$0xff]
    %v4224 = vld [vmem:[%s6 + $0x70] sm:$0xff]
    %v4225 = vld [vmem:[%s6 + $0x78] sm:$0xff]
    %v4226 = vld [vmem:[%s6 + $0x80] sm:$0xff]
    %v4227 = vld [vmem:[%s6 + $0x88] sm:$0xff]
    %v4228 = vld [vmem:[%s6 + $0x90] sm:$0xff]
    %v4229 = vld [vmem:[%s6 + $0x98] sm:$0xff]
    %v4230 = vld [vmem:[%s6 + $0xa0] sm:$0xff]
    %v4231 = vld [vmem:[%s6 + $0xa8] sm:$0xff]
    %v4232 = vld [vmem:[%s6 + $0xb0] sm:$0xff]
    %v4233 = vld [vmem:[%s6 + $0xb8] sm:$0xff]
    %v4234 = vld [vmem:[%s6 + $0xc0] sm:$0xff]
    %v4235 = vld [vmem:[%s6 + $0xc8] sm:$0xff]
    %v4236 = vld [vmem:[%s6 + $0xd0] sm:$0xff]
    %v4237 = vld [vmem:[%s6 + $0xd8] sm:$0xff]
    %v4238 = vld [vmem:[%s6 + $0xe0] sm:$0xff]
    %v4239 = vld [vmem:[%s6 + $0xe8] sm:$0xff]
    %v4240 = vld [vmem:[%s6 + $0xf0] sm:$0xff]
    %v4241 = vld [vmem:[%s6 + $0xf8] sm:$0xff]
    %v4242 = vpack.c.bf16 %v3917, %v3917
    %v4275 = vunpack.c.l.b16 %v4210
    %v4276 = vunpack.c.h.b16 %v4210
    %v4277 = vunpack.c.l.b16 %v4211
    %v4278 = vunpack.c.h.b16 %v4211
    %v4279 = vunpack.c.l.b16 %v4212
    %v4280 = vunpack.c.h.b16 %v4212
    %v4281 = vunpack.c.l.b16 %v4213
    %v4282 = vunpack.c.h.b16 %v4213
    %v4283 = vunpack.c.l.b16 %v4214
    %v4284 = vunpack.c.h.b16 %v4214
    %v4285 = vunpack.c.l.b16 %v4215
    %v4286 = vunpack.c.h.b16 %v4215
    %v4287 = vunpack.c.l.b16 %v4216
    %v4288 = vunpack.c.h.b16 %v4216
    %v4289 = vunpack.c.l.b16 %v4217
    %v4290 = vunpack.c.h.b16 %v4217
    %v4291 = vunpack.c.l.b16 %v4218
    %v4292 = vunpack.c.h.b16 %v4218
    %v4293 = vunpack.c.l.b16 %v4219
    %v4294 = vunpack.c.h.b16 %v4219
    %v4295 = vunpack.c.l.b16 %v4220
    %v4296 = vunpack.c.h.b16 %v4220
    %v4297 = vunpack.c.l.b16 %v4221
    %v4298 = vunpack.c.h.b16 %v4221
    %v4299 = vunpack.c.l.b16 %v4222
    %v4300 = vunpack.c.h.b16 %v4222
    %v4301 = vunpack.c.l.b16 %v4223
    %v4302 = vunpack.c.h.b16 %v4223
    %v4303 = vunpack.c.l.b16 %v4224
    %v4304 = vunpack.c.h.b16 %v4224
    %v4305 = vunpack.c.l.b16 %v4225
    %v4306 = vunpack.c.h.b16 %v4225
    %v4307 = vunpack.c.l.b16 %v4226
    %v4308 = vunpack.c.h.b16 %v4226
    %v4309 = vunpack.c.l.b16 %v4227
    %v4310 = vunpack.c.h.b16 %v4227
    %v4311 = vunpack.c.l.b16 %v4228
    %v4312 = vunpack.c.h.b16 %v4228
    %v4313 = vunpack.c.l.b16 %v4229
    %v4314 = vunpack.c.h.b16 %v4229
    %v4315 = vunpack.c.l.b16 %v4230
    %v4316 = vunpack.c.h.b16 %v4230
    %v4317 = vunpack.c.l.b16 %v4231
    %v4318 = vunpack.c.h.b16 %v4231
    %v4319 = vunpack.c.l.b16 %v4232
    %v4320 = vunpack.c.h.b16 %v4232
    %v4321 = vunpack.c.l.b16 %v4233
    %v4322 = vunpack.c.h.b16 %v4233
    %v4323 = vunpack.c.l.b16 %v4234
    %v4324 = vunpack.c.h.b16 %v4234
    %v4325 = vunpack.c.l.b16 %v4235
    %v4326 = vunpack.c.h.b16 %v4235
    %v4327 = vunpack.c.l.b16 %v4236
    %v4328 = vunpack.c.h.b16 %v4236
    %v4329 = vunpack.c.l.b16 %v4237
    %v4330 = vunpack.c.h.b16 %v4237
    %v4331 = vunpack.c.l.b16 %v4238
    %v4332 = vunpack.c.h.b16 %v4238
    %v4333 = vunpack.c.l.b16 %v4239
    %v4334 = vunpack.c.h.b16 %v4239
    %v4335 = vunpack.c.l.b16 %v4240
    %v4336 = vunpack.c.h.b16 %v4240
    %v4337 = vunpack.c.l.b16 %v4241
    %v4338 = vunpack.c.h.b16 %v4241
    %v4339 = vpack.c.b16 %v4279, %v4275
    %v4340 = vpack.c.b16 %v4280, %v4276
    %v4341 = vpack.c.b16 %v4281, %v4277
    %v4342 = vpack.c.b16 %v4282, %v4278
    %v4343 = vpack.c.b16 %v4287, %v4283
    %v4344 = vpack.c.b16 %v4288, %v4284
    %v4345 = vpack.c.b16 %v4289, %v4285
    %v4346 = vpack.c.b16 %v4290, %v4286
    %v4347 = vpack.c.b16 %v4295, %v4291
    %v4348 = vpack.c.b16 %v4296, %v4292
    %v4349 = vpack.c.b16 %v4297, %v4293
    %v4350 = vpack.c.b16 %v4298, %v4294
    %v4351 = vpack.c.b16 %v4303, %v4299
    %v4352 = vpack.c.b16 %v4304, %v4300
    %v4353 = vpack.c.b16 %v4305, %v4301
    %v4354 = vpack.c.b16 %v4306, %v4302
    %v4355 = vpack.c.b16 %v4311, %v4307
    %v4356 = vpack.c.b16 %v4312, %v4308
    %v4357 = vpack.c.b16 %v4313, %v4309
    %v4358 = vpack.c.b16 %v4314, %v4310
    %v4359 = vpack.c.b16 %v4319, %v4315
    %v4360 = vpack.c.b16 %v4320, %v4316
    %v4361 = vpack.c.b16 %v4321, %v4317
    %v4362 = vpack.c.b16 %v4322, %v4318
    %v4363 = vpack.c.b16 %v4327, %v4323
    %v4364 = vpack.c.b16 %v4328, %v4324
    %v4365 = vpack.c.b16 %v4329, %v4325
    %v4366 = vpack.c.b16 %v4330, %v4326
    %v4367 = vpack.c.b16 %v4335, %v4331
    %v4368 = vpack.c.b16 %v4336, %v4332
    %v4369 = vpack.c.b16 %v4337, %v4333
    %v4370 = vpack.c.b16 %v4338, %v4334
    %4403 = vmatprep.subr.bf16.mxu0 %v4368
    %4404 = vmatpush1.bf16.msra.mxu0 %v4367
    %4405 = vmatprep.subr.bf16.mxu0 %v4364
    %4406 = vmatpush1.bf16.msra.mxu0 %v4363
    %4407 = vmatprep.subr.bf16.mxu0 %v4360
    %4408 = vmatpush1.bf16.msra.mxu0 %v4359
    %4409 = vmatprep.subr.bf16.mxu0 %v4356
    %4410 = vmatpush1.bf16.msra.mxu0 %v4355
    %4411 = vmatprep.subr.bf16.mxu0 %v4352
    %4412 = vmatpush1.bf16.msra.mxu0 %v4351
    %4413 = vmatprep.subr.bf16.mxu0 %v4348
    %4414 = vmatpush1.bf16.msra.mxu0 %v4347
    %4415 = vmatprep.subr.bf16.mxu0 %v4344
    %4416 = vmatpush1.bf16.msra.mxu0 %v4343
    %4417 = vmatprep.subr.bf16.mxu0 %v4340
    %4418 = vmatpush1.bf16.msra.mxu0 %v4339
    %4419 = vmatprep.subr.bf16.mxu0 0
    %4420 = vmatpush2.bf16.msra.mxu0 0
    %4421 = vmatprep.subr.bf16.mxu0 0
    %4422 = vmatpush2.bf16.msra.mxu0 0
    %4423 = vmatprep.subr.bf16.mxu0 0
    %4424 = vmatpush2.bf16.msra.mxu0 0
    %4425 = vmatprep.subr.bf16.mxu0 0
    %4426 = vmatpush2.bf16.msra.mxu0 0
    %4427 = vmatprep.subr.bf16.mxu0 0
    %4428 = vmatpush2.bf16.msra.mxu0 0
    %4429 = vmatprep.subr.bf16.mxu0 0
    %4430 = vmatpush2.bf16.msra.mxu0 0
    %4431 = vmatprep.subr.bf16.mxu0 0
    %4432 = vmatpush2.bf16.msra.mxu0 0
    %4433 = vmatprep.subr.bf16.mxu0 0
    %4434 = vmatpush2.bf16.msra.mxu0 0
    %4435 = vmatprep.mubr.bf16.mxu0 0
    %4436 = vmatmul.mubr.bf16.gmra.mxu0 %v4242
    %v4437 = vpop.f32.mrf.mxu0
    %v4438 = vadd.f32 0.0, %v4437
    %v4439 = vpop.f32.mrf.mxu0
    %v4440 = vadd.f32 0.0, %v4439
    %v4441 = vpop.f32.mrf.mxu0
    %v4442 = vpop.f32.mrf.mxu0
    %4443 = vdwg.mxu0
    %4444 = vmatprep.subr.bf16.mxu0 %v4370
    %4445 = vmatpush1.bf16.msra.mxu0 %v4369
    %4446 = vmatprep.subr.bf16.mxu0 %v4366
    %4447 = vmatpush1.bf16.msra.mxu0 %v4365
    %4448 = vmatprep.subr.bf16.mxu0 %v4362
    %4449 = vmatpush1.bf16.msra.mxu0 %v4361
    %4450 = vmatprep.subr.bf16.mxu0 %v4358
    %4451 = vmatpush1.bf16.msra.mxu0 %v4357
    %4452 = vmatprep.subr.bf16.mxu0 %v4354
    %4453 = vmatpush1.bf16.msra.mxu0 %v4353
    %4454 = vmatprep.subr.bf16.mxu0 %v4350
    %4455 = vmatpush1.bf16.msra.mxu0 %v4349
    %4456 = vmatprep.subr.bf16.mxu0 %v4346
    %4457 = vmatpush1.bf16.msra.mxu0 %v4345
    %4458 = vmatprep.subr.bf16.mxu0 %v4342
    %4459 = vmatpush1.bf16.msra.mxu0 %v4341
    %4460 = vmatprep.subr.bf16.mxu0 0
    %4461 = vmatpush2.bf16.msra.mxu0 0
    %4462 = vmatprep.subr.bf16.mxu0 0
    %4463 = vmatpush2.bf16.msra.mxu0 0
    %4464 = vmatprep.subr.bf16.mxu0 0
    %4465 = vmatpush2.bf16.msra.mxu0 0
    %4466 = vmatprep.subr.bf16.mxu0 0
    %4467 = vmatpush2.bf16.msra.mxu0 0
    %4468 = vmatprep.subr.bf16.mxu0 0
    %4469 = vmatpush2.bf16.msra.mxu0 0
    %4470 = vmatprep.subr.bf16.mxu0 0
    %4471 = vmatpush2.bf16.msra.mxu0 0
    %4472 = vmatprep.subr.bf16.mxu0 0
    %4473 = vmatpush2.bf16.msra.mxu0 0
    %4474 = vmatprep.subr.bf16.mxu0 0
    %4475 = vmatpush2.bf16.msra.mxu0 0
    %4476 = vmatprep.mubr.bf16.mxu0 0
    %4477 = vmatmul.mubr.bf16.gmra.mxu0 %v4242
    %v4478 = vpop.f32.mrf.mxu0
    %v4479 = vadd.f32 0.0, %v4478
    %v4480 = vpop.f32.mrf.mxu0
    %v4481 = vadd.f32 0.0, %v4480
    %v4482 = vpop.f32.mrf.mxu0
    %v4483 = vpop.f32.mrf.mxu0
    %4484 = vdwg.mxu0
    %v4489 = vrot.slane %v4438, 2
    %v4490 = vrot.slane %v4440, 2
    %v4491 = vrot.slane %v4479, 2
    %v4492 = vrot.slane %v4481, 2
    %v4497 = vadd.f32 %v4206, %v4489
    %v4498 = vadd.f32 %v4207, %v4490
    %v4499 = vadd.f32 %v4208, %v4491
    %v4500 = vadd.f32 %v4209, %v4492
    %v4501 = vmul.f32 %v4202, 0.5
    %v4502 = vtanh.pop %v4501
    %v4503 = vmul.f32 %v4502, 0.5
    %v4504 = vadd.f32 %v4503, 0.5
    %v4505 = vmul.f32 %v4203, 0.5
    %v4506 = vtanh.pop %v4505
    %v4507 = vmul.f32 %v4506, 0.5
    %v4508 = vadd.f32 %v4507, 0.5
    %v4509 = vtanh.pop %v4204
    %v4510 = vmul.f32 %v4205, 0.5
    %v4511 = vtanh.pop %v4510
    %v4512 = vmul.f32 %v4511, 0.5
    %v4513 = vadd.f32 %v4512, 0.5
    %v4515 = vrot.slane %v3894, 6
    %v4517 = vmul.f32 %v4508, %v4515
    %v4518 = vmul.f32 %v4504, %v4509
    %v4519 = vadd.f32 %v4517, %v4518
    %v4520 = vtanh.pop %v4519
    %v4521 = vmul.f32 %v4513, %v4520
    %v4522 = vmul.f32 %v4497, 0.5
    %v4523 = vtanh.pop %v4522
    %v4524 = vmul.f32 %v4523, 0.5
    %v4525 = vadd.f32 %v4524, 0.5
    %v4526 = vmul.f32 %v4498, 0.5
    %v4527 = vtanh.pop %v4526
    %v4528 = vmul.f32 %v4527, 0.5
    %v4529 = vadd.f32 %v4528, 0.5
    %v4530 = vtanh.pop %v4499
    %v4531 = vmul.f32 %v4500, 0.5
    %v4532 = vtanh.pop %v4531
    %v4533 = vmul.f32 %v4532, 0.5
    %v4534 = vadd.f32 %v4533, 0.5
    %v4536 = vrot.slane %v3915, 2
    %v4538 = vmul.f32 %v4529, %v4536
    %v4539 = vmul.f32 %v4525, %v4530
    %v4540 = vadd.f32 %v4538, %v4539
    %v4541 = vtanh.pop %v4540
    %v4542 = vmul.f32 %v4534, %v4541
    %4543 = vst [vmem:[#allocation3 + $0x10] sm:$0x3] %v4521
    %4544 = vst [vmem:[#allocation3 + $0x8] sm:$0xc0] %v4542
    %v4545 = vld [vmem:[#allocation2 + $0x40] sm:$0xc]
    %v4546 = vld [vmem:[#allocation2 + $0x48] sm:$0xc]
    %v4547 = vld [vmem:[#allocation2 + $0x50] sm:$0xc]
    %v4548 = vld [vmem:[#allocation2 + $0x58] sm:$0xc]
    %v4549 = vld [vmem:[%s5] sm:$0xff]
    %v4550 = vld [vmem:[%s5 + $0x8] sm:$0xff]
    %v4551 = vld [vmem:[%s5 + $0x10] sm:$0xff]
    %v4552 = vld [vmem:[%s5 + $0x18] sm:$0xff]
    %v4553 = vld [vmem:[%s5 + $0x20] sm:$0xff]
    %v4554 = vld [vmem:[%s5 + $0x28] sm:$0xff]
    %v4555 = vld [vmem:[%s5 + $0x30] sm:$0xff]
    %v4556 = vld [vmem:[%s5 + $0x38] sm:$0xff]
    %v4557 = vld [vmem:[%s5 + $0x40] sm:$0xff]
    %v4558 = vld [vmem:[%s5 + $0x48] sm:$0xff]
    %v4559 = vld [vmem:[%s5 + $0x50] sm:$0xff]
    %v4560 = vld [vmem:[%s5 + $0x58] sm:$0xff]
    %v4561 = vld [vmem:[%s5 + $0x60] sm:$0xff]
    %v4562 = vld [vmem:[%s5 + $0x68] sm:$0xff]
    %v4563 = vld [vmem:[%s5 + $0x70] sm:$0xff]
    %v4564 = vld [vmem:[%s5 + $0x78] sm:$0xff]
    %v4565 = vld [vmem:[%s5 + $0x80] sm:$0xff]
    %v4566 = vld [vmem:[%s5 + $0x88] sm:$0xff]
    %v4567 = vld [vmem:[%s5 + $0x90] sm:$0xff]
    %v4568 = vld [vmem:[%s5 + $0x98] sm:$0xff]
    %v4569 = vld [vmem:[%s5 + $0xa0] sm:$0xff]
    %v4570 = vld [vmem:[%s5 + $0xa8] sm:$0xff]
    %v4571 = vld [vmem:[%s5 + $0xb0] sm:$0xff]
    %v4572 = vld [vmem:[%s5 + $0xb8] sm:$0xff]
    %v4573 = vld [vmem:[%s5 + $0xc0] sm:$0xff]
    %v4574 = vld [vmem:[%s5 + $0xc8] sm:$0xff]
    %v4575 = vld [vmem:[%s5 + $0xd0] sm:$0xff]
    %v4576 = vld [vmem:[%s5 + $0xd8] sm:$0xff]
    %v4577 = vld [vmem:[%s5 + $0xe0] sm:$0xff]
    %v4578 = vld [vmem:[%s5 + $0xe8] sm:$0xff]
    %v4579 = vld [vmem:[%s5 + $0xf0] sm:$0xff]
    %v4580 = vld [vmem:[%s5 + $0xf8] sm:$0xff]
    %v4581 = vpack.c.bf16 %v4521, %v4521
    %v4614 = vunpack.c.l.b16 %v4549
    %v4615 = vunpack.c.h.b16 %v4549
    %v4616 = vunpack.c.l.b16 %v4550
    %v4617 = vunpack.c.h.b16 %v4550
    %v4618 = vunpack.c.l.b16 %v4551
    %v4619 = vunpack.c.h.b16 %v4551
    %v4620 = vunpack.c.l.b16 %v4552
    %v4621 = vunpack.c.h.b16 %v4552
    %v4622 = vunpack.c.l.b16 %v4553
    %v4623 = vunpack.c.h.b16 %v4553
    %v4624 = vunpack.c.l.b16 %v4554
    %v4625 = vunpack.c.h.b16 %v4554
    %v4626 = vunpack.c.l.b16 %v4555
    %v4627 = vunpack.c.h.b16 %v4555
    %v4628 = vunpack.c.l.b16 %v4556
    %v4629 = vunpack.c.h.b16 %v4556
    %v4630 = vunpack.c.l.b16 %v4557
    %v4631 = vunpack.c.h.b16 %v4557
    %v4632 = vunpack.c.l.b16 %v4558
    %v4633 = vunpack.c.h.b16 %v4558
    %v4634 = vunpack.c.l.b16 %v4559
    %v4635 = vunpack.c.h.b16 %v4559
    %v4636 = vunpack.c.l.b16 %v4560
    %v4637 = vunpack.c.h.b16 %v4560
    %v4638 = vunpack.c.l.b16 %v4561
    %v4639 = vunpack.c.h.b16 %v4561
    %v4640 = vunpack.c.l.b16 %v4562
    %v4641 = vunpack.c.h.b16 %v4562
    %v4642 = vunpack.c.l.b16 %v4563
    %v4643 = vunpack.c.h.b16 %v4563
    %v4644 = vunpack.c.l.b16 %v4564
    %v4645 = vunpack.c.h.b16 %v4564
    %v4646 = vunpack.c.l.b16 %v4565
    %v4647 = vunpack.c.h.b16 %v4565
    %v4648 = vunpack.c.l.b16 %v4566
    %v4649 = vunpack.c.h.b16 %v4566
    %v4650 = vunpack.c.l.b16 %v4567
    %v4651 = vunpack.c.h.b16 %v4567
    %v4652 = vunpack.c.l.b16 %v4568
    %v4653 = vunpack.c.h.b16 %v4568
    %v4654 = vunpack.c.l.b16 %v4569
    %v4655 = vunpack.c.h.b16 %v4569
    %v4656 = vunpack.c.l.b16 %v4570
    %v4657 = vunpack.c.h.b16 %v4570
    %v4658 = vunpack.c.l.b16 %v4571
    %v4659 = vunpack.c.h.b16 %v4571
    %v4660 = vunpack.c.l.b16 %v4572
    %v4661 = vunpack.c.h.b16 %v4572
    %v4662 = vunpack.c.l.b16 %v4573
    %v4663 = vunpack.c.h.b16 %v4573
    %v4664 = vunpack.c.l.b16 %v4574
    %v4665 = vunpack.c.h.b16 %v4574
    %v4666 = vunpack.c.l.b16 %v4575
    %v4667 = vunpack.c.h.b16 %v4575
    %v4668 = vunpack.c.l.b16 %v4576
    %v4669 = vunpack.c.h.b16 %v4576
    %v4670 = vunpack.c.l.b16 %v4577
    %v4671 = vunpack.c.h.b16 %v4577
    %v4672 = vunpack.c.l.b16 %v4578
    %v4673 = vunpack.c.h.b16 %v4578
    %v4674 = vunpack.c.l.b16 %v4579
    %v4675 = vunpack.c.h.b16 %v4579
    %v4676 = vunpack.c.l.b16 %v4580
    %v4677 = vunpack.c.h.b16 %v4580
    %v4678 = vpack.c.b16 %v4618, %v4614
    %v4679 = vpack.c.b16 %v4619, %v4615
    %v4680 = vpack.c.b16 %v4620, %v4616
    %v4681 = vpack.c.b16 %v4621, %v4617
    %v4682 = vpack.c.b16 %v4626, %v4622
    %v4683 = vpack.c.b16 %v4627, %v4623
    %v4684 = vpack.c.b16 %v4628, %v4624
    %v4685 = vpack.c.b16 %v4629, %v4625
    %v4686 = vpack.c.b16 %v4634, %v4630
    %v4687 = vpack.c.b16 %v4635, %v4631
    %v4688 = vpack.c.b16 %v4636, %v4632
    %v4689 = vpack.c.b16 %v4637, %v4633
    %v4690 = vpack.c.b16 %v4642, %v4638
    %v4691 = vpack.c.b16 %v4643, %v4639
    %v4692 = vpack.c.b16 %v4644, %v4640
    %v4693 = vpack.c.b16 %v4645, %v4641
    %v4694 = vpack.c.b16 %v4650, %v4646
    %v4695 = vpack.c.b16 %v4651, %v4647
    %v4696 = vpack.c.b16 %v4652, %v4648
    %v4697 = vpack.c.b16 %v4653, %v4649
    %v4698 = vpack.c.b16 %v4658, %v4654
    %v4699 = vpack.c.b16 %v4659, %v4655
    %v4700 = vpack.c.b16 %v4660, %v4656
    %v4701 = vpack.c.b16 %v4661, %v4657
    %v4702 = vpack.c.b16 %v4666, %v4662
    %v4703 = vpack.c.b16 %v4667, %v4663
    %v4704 = vpack.c.b16 %v4668, %v4664
    %v4705 = vpack.c.b16 %v4669, %v4665
    %v4706 = vpack.c.b16 %v4674, %v4670
    %v4707 = vpack.c.b16 %v4675, %v4671
    %v4708 = vpack.c.b16 %v4676, %v4672
    %v4709 = vpack.c.b16 %v4677, %v4673
    %4742 = vmatprep.subr.bf16.mxu0 %v4707
    %4743 = vmatpush1.bf16.msra.mxu0 %v4706
    %4744 = vmatprep.subr.bf16.mxu0 %v4703
    %4745 = vmatpush1.bf16.msra.mxu0 %v4702
    %4746 = vmatprep.subr.bf16.mxu0 %v4699
    %4747 = vmatpush1.bf16.msra.mxu0 %v4698
    %4748 = vmatprep.subr.bf16.mxu0 %v4695
    %4749 = vmatpush1.bf16.msra.mxu0 %v4694
    %4750 = vmatprep.subr.bf16.mxu0 %v4691
    %4751 = vmatpush1.bf16.msra.mxu0 %v4690
    %4752 = vmatprep.subr.bf16.mxu0 %v4687
    %4753 = vmatpush1.bf16.msra.mxu0 %v4686
    %4754 = vmatprep.subr.bf16.mxu0 %v4683
    %4755 = vmatpush1.bf16.msra.mxu0 %v4682
    %4756 = vmatprep.subr.bf16.mxu0 %v4679
    %4757 = vmatpush1.bf16.msra.mxu0 %v4678
    %4758 = vmatprep.subr.bf16.mxu0 0
    %4759 = vmatpush2.bf16.msra.mxu0 0
    %4760 = vmatprep.subr.bf16.mxu0 0
    %4761 = vmatpush2.bf16.msra.mxu0 0
    %4762 = vmatprep.subr.bf16.mxu0 0
    %4763 = vmatpush2.bf16.msra.mxu0 0
    %4764 = vmatprep.subr.bf16.mxu0 0
    %4765 = vmatpush2.bf16.msra.mxu0 0
    %4766 = vmatprep.subr.bf16.mxu0 0
    %4767 = vmatpush2.bf16.msra.mxu0 0
    %4768 = vmatprep.subr.bf16.mxu0 0
    %4769 = vmatpush2.bf16.msra.mxu0 0
    %4770 = vmatprep.subr.bf16.mxu0 0
    %4771 = vmatpush2.bf16.msra.mxu0 0
    %4772 = vmatprep.subr.bf16.mxu0 0
    %4773 = vmatpush2.bf16.msra.mxu0 0
    %4774 = vmatprep.mubr.bf16.mxu0 0
    %4775 = vmatmul.mubr.bf16.gmra.mxu0 %v4581
    %v4776 = vpop.f32.mrf.mxu0
    %v4777 = vadd.f32 0.0, %v4776
    %v4778 = vpop.f32.mrf.mxu0
    %v4779 = vadd.f32 0.0, %v4778
    %v4780 = vpop.f32.mrf.mxu0
    %v4781 = vpop.f32.mrf.mxu0
    %4782 = vdwg.mxu0
    %4783 = vmatprep.subr.bf16.mxu0 %v4709
    %4784 = vmatpush1.bf16.msra.mxu0 %v4708
    %4785 = vmatprep.subr.bf16.mxu0 %v4705
    %4786 = vmatpush1.bf16.msra.mxu0 %v4704
    %4787 = vmatprep.subr.bf16.mxu0 %v4701
    %4788 = vmatpush1.bf16.msra.mxu0 %v4700
    %4789 = vmatprep.subr.bf16.mxu0 %v4697
    %4790 = vmatpush1.bf16.msra.mxu0 %v4696
    %4791 = vmatprep.subr.bf16.mxu0 %v4693
    %4792 = vmatpush1.bf16.msra.mxu0 %v4692
    %4793 = vmatprep.subr.bf16.mxu0 %v4689
    %4794 = vmatpush1.bf16.msra.mxu0 %v4688
    %4795 = vmatprep.subr.bf16.mxu0 %v4685
    %4796 = vmatpush1.bf16.msra.mxu0 %v4684
    %4797 = vmatprep.subr.bf16.mxu0 %v4681
    %4798 = vmatpush1.bf16.msra.mxu0 %v4680
    %4799 = vmatprep.subr.bf16.mxu0 0
    %4800 = vmatpush2.bf16.msra.mxu0 0
    %4801 = vmatprep.subr.bf16.mxu0 0
    %4802 = vmatpush2.bf16.msra.mxu0 0
    %4803 = vmatprep.subr.bf16.mxu0 0
    %4804 = vmatpush2.bf16.msra.mxu0 0
    %4805 = vmatprep.subr.bf16.mxu0 0
    %4806 = vmatpush2.bf16.msra.mxu0 0
    %4807 = vmatprep.subr.bf16.mxu0 0
    %4808 = vmatpush2.bf16.msra.mxu0 0
    %4809 = vmatprep.subr.bf16.mxu0 0
    %4810 = vmatpush2.bf16.msra.mxu0 0
    %4811 = vmatprep.subr.bf16.mxu0 0
    %4812 = vmatpush2.bf16.msra.mxu0 0
    %4813 = vmatprep.subr.bf16.mxu0 0
    %4814 = vmatpush2.bf16.msra.mxu0 0
    %4815 = vmatprep.mubr.bf16.mxu0 0
    %4816 = vmatmul.mubr.bf16.gmra.mxu0 %v4581
    %v4817 = vpop.f32.mrf.mxu0
    %v4818 = vadd.f32 0.0, %v4817
    %v4819 = vpop.f32.mrf.mxu0
    %v4820 = vadd.f32 0.0, %v4819
    %v4821 = vpop.f32.mrf.mxu0
    %v4822 = vpop.f32.mrf.mxu0
    %4823 = vdwg.mxu0
    %v4828 = vrot.slane %v4777, 6
    %v4829 = vrot.slane %v4779, 6
    %v4830 = vrot.slane %v4818, 6
    %v4831 = vrot.slane %v4820, 6
    %v4836 = vadd.f32 %v4545, %v4828
    %v4837 = vadd.f32 %v4546, %v4829
    %v4838 = vadd.f32 %v4547, %v4830
    %v4839 = vadd.f32 %v4548, %v4831
    %v4840 = vld [vmem:[#allocation2 + $0x20] sm:$0x30]
    %v4841 = vld [vmem:[#allocation2 + $0x28] sm:$0x30]
    %v4842 = vld [vmem:[#allocation2 + $0x30] sm:$0x30]
    %v4843 = vld [vmem:[#allocation2 + $0x38] sm:$0x30]
    %v4844 = vld [vmem:[%s6] sm:$0xff]
    %v4845 = vld [vmem:[%s6 + $0x8] sm:$0xff]
    %v4846 = vld [vmem:[%s6 + $0x10] sm:$0xff]
    %v4847 = vld [vmem:[%s6 + $0x18] sm:$0xff]
    %v4848 = vld [vmem:[%s6 + $0x20] sm:$0xff]
    %v4849 = vld [vmem:[%s6 + $0x28] sm:$0xff]
    %v4850 = vld [vmem:[%s6 + $0x30] sm:$0xff]
    %v4851 = vld [vmem:[%s6 + $0x38] sm:$0xff]
    %v4852 = vld [vmem:[%s6 + $0x40] sm:$0xff]
    %v4853 = vld [vmem:[%s6 + $0x48] sm:$0xff]
    %v4854 = vld [vmem:[%s6 + $0x50] sm:$0xff]
    %v4855 = vld [vmem:[%s6 + $0x58] sm:$0xff]
    %v4856 = vld [vmem:[%s6 + $0x60] sm:$0xff]
    %v4857 = vld [vmem:[%s6 + $0x68] sm:$0xff]
    %v4858 = vld [vmem:[%s6 + $0x70] sm:$0xff]
    %v4859 = vld [vmem:[%s6 + $0x78] sm:$0xff]
    %v4860 = vld [vmem:[%s6 + $0x80] sm:$0xff]
    %v4861 = vld [vmem:[%s6 + $0x88] sm:$0xff]
    %v4862 = vld [vmem:[%s6 + $0x90] sm:$0xff]
    %v4863 = vld [vmem:[%s6 + $0x98] sm:$0xff]
    %v4864 = vld [vmem:[%s6 + $0xa0] sm:$0xff]
    %v4865 = vld [vmem:[%s6 + $0xa8] sm:$0xff]
    %v4866 = vld [vmem:[%s6 + $0xb0] sm:$0xff]
    %v4867 = vld [vmem:[%s6 + $0xb8] sm:$0xff]
    %v4868 = vld [vmem:[%s6 + $0xc0] sm:$0xff]
    %v4869 = vld [vmem:[%s6 + $0xc8] sm:$0xff]
    %v4870 = vld [vmem:[%s6 + $0xd0] sm:$0xff]
    %v4871 = vld [vmem:[%s6 + $0xd8] sm:$0xff]
    %v4872 = vld [vmem:[%s6 + $0xe0] sm:$0xff]
    %v4873 = vld [vmem:[%s6 + $0xe8] sm:$0xff]
    %v4874 = vld [vmem:[%s6 + $0xf0] sm:$0xff]
    %v4875 = vld [vmem:[%s6 + $0xf8] sm:$0xff]
    %v4876 = vpack.c.bf16 %v4542, %v4542
    %v4878 = vrot.slane %v4876, 3
    %v4912 = vunpack.c.l.b16 %v4844
    %v4913 = vunpack.c.h.b16 %v4844
    %v4914 = vunpack.c.l.b16 %v4845
    %v4915 = vunpack.c.h.b16 %v4845
    %v4916 = vunpack.c.l.b16 %v4846
    %v4917 = vunpack.c.h.b16 %v4846
    %v4918 = vunpack.c.l.b16 %v4847
    %v4919 = vunpack.c.h.b16 %v4847
    %v4920 = vunpack.c.l.b16 %v4848
    %v4921 = vunpack.c.h.b16 %v4848
    %v4922 = vunpack.c.l.b16 %v4849
    %v4923 = vunpack.c.h.b16 %v4849
    %v4924 = vunpack.c.l.b16 %v4850
    %v4925 = vunpack.c.h.b16 %v4850
    %v4926 = vunpack.c.l.b16 %v4851
    %v4927 = vunpack.c.h.b16 %v4851
    %v4928 = vunpack.c.l.b16 %v4852
    %v4929 = vunpack.c.h.b16 %v4852
    %v4930 = vunpack.c.l.b16 %v4853
    %v4931 = vunpack.c.h.b16 %v4853
    %v4932 = vunpack.c.l.b16 %v4854
    %v4933 = vunpack.c.h.b16 %v4854
    %v4934 = vunpack.c.l.b16 %v4855
    %v4935 = vunpack.c.h.b16 %v4855
    %v4936 = vunpack.c.l.b16 %v4856
    %v4937 = vunpack.c.h.b16 %v4856
    %v4938 = vunpack.c.l.b16 %v4857
    %v4939 = vunpack.c.h.b16 %v4857
    %v4940 = vunpack.c.l.b16 %v4858
    %v4941 = vunpack.c.h.b16 %v4858
    %v4942 = vunpack.c.l.b16 %v4859
    %v4943 = vunpack.c.h.b16 %v4859
    %v4944 = vunpack.c.l.b16 %v4860
    %v4945 = vunpack.c.h.b16 %v4860
    %v4946 = vunpack.c.l.b16 %v4861
    %v4947 = vunpack.c.h.b16 %v4861
    %v4948 = vunpack.c.l.b16 %v4862
    %v4949 = vunpack.c.h.b16 %v4862
    %v4950 = vunpack.c.l.b16 %v4863
    %v4951 = vunpack.c.h.b16 %v4863
    %v4952 = vunpack.c.l.b16 %v4864
    %v4953 = vunpack.c.h.b16 %v4864
    %v4954 = vunpack.c.l.b16 %v4865
    %v4955 = vunpack.c.h.b16 %v4865
    %v4956 = vunpack.c.l.b16 %v4866
    %v4957 = vunpack.c.h.b16 %v4866
    %v4958 = vunpack.c.l.b16 %v4867
    %v4959 = vunpack.c.h.b16 %v4867
    %v4960 = vunpack.c.l.b16 %v4868
    %v4961 = vunpack.c.h.b16 %v4868
    %v4962 = vunpack.c.l.b16 %v4869
    %v4963 = vunpack.c.h.b16 %v4869
    %v4964 = vunpack.c.l.b16 %v4870
    %v4965 = vunpack.c.h.b16 %v4870
    %v4966 = vunpack.c.l.b16 %v4871
    %v4967 = vunpack.c.h.b16 %v4871
    %v4968 = vunpack.c.l.b16 %v4872
    %v4969 = vunpack.c.h.b16 %v4872
    %v4970 = vunpack.c.l.b16 %v4873
    %v4971 = vunpack.c.h.b16 %v4873
    %v4972 = vunpack.c.l.b16 %v4874
    %v4973 = vunpack.c.h.b16 %v4874
    %v4974 = vunpack.c.l.b16 %v4875
    %v4975 = vunpack.c.h.b16 %v4875
    %v4976 = vpack.c.b16 %v4916, %v4912
    %v4977 = vpack.c.b16 %v4917, %v4913
    %v4978 = vpack.c.b16 %v4918, %v4914
    %v4979 = vpack.c.b16 %v4919, %v4915
    %v4980 = vpack.c.b16 %v4924, %v4920
    %v4981 = vpack.c.b16 %v4925, %v4921
    %v4982 = vpack.c.b16 %v4926, %v4922
    %v4983 = vpack.c.b16 %v4927, %v4923
    %v4984 = vpack.c.b16 %v4932, %v4928
    %v4985 = vpack.c.b16 %v4933, %v4929
    %v4986 = vpack.c.b16 %v4934, %v4930
    %v4987 = vpack.c.b16 %v4935, %v4931
    %v4988 = vpack.c.b16 %v4940, %v4936
    %v4989 = vpack.c.b16 %v4941, %v4937
    %v4990 = vpack.c.b16 %v4942, %v4938
    %v4991 = vpack.c.b16 %v4943, %v4939
    %v4992 = vpack.c.b16 %v4948, %v4944
    %v4993 = vpack.c.b16 %v4949, %v4945
    %v4994 = vpack.c.b16 %v4950, %v4946
    %v4995 = vpack.c.b16 %v4951, %v4947
    %v4996 = vpack.c.b16 %v4956, %v4952
    %v4997 = vpack.c.b16 %v4957, %v4953
    %v4998 = vpack.c.b16 %v4958, %v4954
    %v4999 = vpack.c.b16 %v4959, %v4955
    %v5000 = vpack.c.b16 %v4964, %v4960
    %v5001 = vpack.c.b16 %v4965, %v4961
    %v5002 = vpack.c.b16 %v4966, %v4962
    %v5003 = vpack.c.b16 %v4967, %v4963
    %v5004 = vpack.c.b16 %v4972, %v4968
    %v5005 = vpack.c.b16 %v4973, %v4969
    %v5006 = vpack.c.b16 %v4974, %v4970
    %v5007 = vpack.c.b16 %v4975, %v4971
    %5040 = vmatprep.subr.bf16.mxu0 %v5005
    %5041 = vmatpush1.bf16.msra.mxu0 %v5004
    %5042 = vmatprep.subr.bf16.mxu0 %v5001
    %5043 = vmatpush1.bf16.msra.mxu0 %v5000
    %5044 = vmatprep.subr.bf16.mxu0 %v4997
    %5045 = vmatpush1.bf16.msra.mxu0 %v4996
    %5046 = vmatprep.subr.bf16.mxu0 %v4993
    %5047 = vmatpush1.bf16.msra.mxu0 %v4992
    %5048 = vmatprep.subr.bf16.mxu0 %v4989
    %5049 = vmatpush1.bf16.msra.mxu0 %v4988
    %5050 = vmatprep.subr.bf16.mxu0 %v4985
    %5051 = vmatpush1.bf16.msra.mxu0 %v4984
    %5052 = vmatprep.subr.bf16.mxu0 %v4981
    %5053 = vmatpush1.bf16.msra.mxu0 %v4980
    %5054 = vmatprep.subr.bf16.mxu0 %v4977
    %5055 = vmatpush1.bf16.msra.mxu0 %v4976
    %5056 = vmatprep.subr.bf16.mxu0 0
    %5057 = vmatpush2.bf16.msra.mxu0 0
    %5058 = vmatprep.subr.bf16.mxu0 0
    %5059 = vmatpush2.bf16.msra.mxu0 0
    %5060 = vmatprep.subr.bf16.mxu0 0
    %5061 = vmatpush2.bf16.msra.mxu0 0
    %5062 = vmatprep.subr.bf16.mxu0 0
    %5063 = vmatpush2.bf16.msra.mxu0 0
    %5064 = vmatprep.subr.bf16.mxu0 0
    %5065 = vmatpush2.bf16.msra.mxu0 0
    %5066 = vmatprep.subr.bf16.mxu0 0
    %5067 = vmatpush2.bf16.msra.mxu0 0
    %5068 = vmatprep.subr.bf16.mxu0 0
    %5069 = vmatpush2.bf16.msra.mxu0 0
    %5070 = vmatprep.subr.bf16.mxu0 0
    %5071 = vmatpush2.bf16.msra.mxu0 0
    %5072 = vmatprep.mubr.bf16.mxu0 0
    %5073 = vmatmul.mubr.bf16.gmra.mxu0 %v4878
    %v5074 = vpop.f32.mrf.mxu0
    %v5075 = vadd.f32 0.0, %v5074
    %v5076 = vpop.f32.mrf.mxu0
    %v5077 = vadd.f32 0.0, %v5076
    %v5078 = vpop.f32.mrf.mxu0
    %v5079 = vpop.f32.mrf.mxu0
    %5080 = vdwg.mxu0
    %5081 = vmatprep.subr.bf16.mxu0 %v5007
    %5082 = vmatpush1.bf16.msra.mxu0 %v5006
    %5083 = vmatprep.subr.bf16.mxu0 %v5003
    %5084 = vmatpush1.bf16.msra.mxu0 %v5002
    %5085 = vmatprep.subr.bf16.mxu0 %v4999
    %5086 = vmatpush1.bf16.msra.mxu0 %v4998
    %5087 = vmatprep.subr.bf16.mxu0 %v4995
    %5088 = vmatpush1.bf16.msra.mxu0 %v4994
    %5089 = vmatprep.subr.bf16.mxu0 %v4991
    %5090 = vmatpush1.bf16.msra.mxu0 %v4990
    %5091 = vmatprep.subr.bf16.mxu0 %v4987
    %5092 = vmatpush1.bf16.msra.mxu0 %v4986
    %5093 = vmatprep.subr.bf16.mxu0 %v4983
    %5094 = vmatpush1.bf16.msra.mxu0 %v4982
    %5095 = vmatprep.subr.bf16.mxu0 %v4979
    %5096 = vmatpush1.bf16.msra.mxu0 %v4978
    %5097 = vmatprep.subr.bf16.mxu0 0
    %5098 = vmatpush2.bf16.msra.mxu0 0
    %5099 = vmatprep.subr.bf16.mxu0 0
    %5100 = vmatpush2.bf16.msra.mxu0 0
    %5101 = vmatprep.subr.bf16.mxu0 0
    %5102 = vmatpush2.bf16.msra.mxu0 0
    %5103 = vmatprep.subr.bf16.mxu0 0
    %5104 = vmatpush2.bf16.msra.mxu0 0
    %5105 = vmatprep.subr.bf16.mxu0 0
    %5106 = vmatpush2.bf16.msra.mxu0 0
    %5107 = vmatprep.subr.bf16.mxu0 0
    %5108 = vmatpush2.bf16.msra.mxu0 0
    %5109 = vmatprep.subr.bf16.mxu0 0
    %5110 = vmatpush2.bf16.msra.mxu0 0
    %5111 = vmatprep.subr.bf16.mxu0 0
    %5112 = vmatpush2.bf16.msra.mxu0 0
    %5113 = vmatprep.mubr.bf16.mxu0 0
    %5114 = vmatmul.mubr.bf16.gmra.mxu0 %v4878
    %v5115 = vpop.f32.mrf.mxu0
    %v5116 = vadd.f32 0.0, %v5115
    %v5117 = vpop.f32.mrf.mxu0
    %v5118 = vadd.f32 0.0, %v5117
    %v5119 = vpop.f32.mrf.mxu0
    %v5120 = vpop.f32.mrf.mxu0
    %5121 = vdwg.mxu0
    %v5126 = vrot.slane %v5075, 4
    %v5127 = vrot.slane %v5077, 4
    %v5128 = vrot.slane %v5116, 4
    %v5129 = vrot.slane %v5118, 4
    %v5134 = vadd.f32 %v4840, %v5126
    %v5135 = vadd.f32 %v4841, %v5127
    %v5136 = vadd.f32 %v4842, %v5128
    %v5137 = vadd.f32 %v4843, %v5129
    %v5138 = vmul.f32 %v4836, 0.5
    %v5139 = vtanh.pop %v5138
    %v5140 = vmul.f32 %v5139, 0.5
    %v5141 = vadd.f32 %v5140, 0.5
    %v5142 = vmul.f32 %v4837, 0.5
    %v5143 = vtanh.pop %v5142
    %v5144 = vmul.f32 %v5143, 0.5
    %v5145 = vadd.f32 %v5144, 0.5
    %v5146 = vtanh.pop %v4838
    %v5147 = vmul.f32 %v4839, 0.5
    %v5148 = vtanh.pop %v5147
    %v5149 = vmul.f32 %v5148, 0.5
    %v5150 = vadd.f32 %v5149, 0.5
    %v5152 = vrot.slane %v4519, 6
    %v5154 = vmul.f32 %v5145, %v5152
    %v5155 = vmul.f32 %v5141, %v5146
    %v5156 = vadd.f32 %v5154, %v5155
    %v5157 = vtanh.pop %v5156
    %v5158 = vmul.f32 %v5150, %v5157
    %v5159 = vmul.f32 %v5134, 0.5
    %v5160 = vtanh.pop %v5159
    %v5161 = vmul.f32 %v5160, 0.5
    %v5162 = vadd.f32 %v5161, 0.5
    %v5163 = vmul.f32 %v5135, 0.5
    %v5164 = vtanh.pop %v5163
    %v5165 = vmul.f32 %v5164, 0.5
    %v5166 = vadd.f32 %v5165, 0.5
    %v5167 = vtanh.pop %v5136
    %v5168 = vmul.f32 %v5137, 0.5
    %v5169 = vtanh.pop %v5168
    %v5170 = vmul.f32 %v5169, 0.5
    %v5171 = vadd.f32 %v5170, 0.5
    %v5173 = vrot.slane %v4540, 2
    %v5175 = vmul.f32 %v5166, %v5173
    %v5176 = vmul.f32 %v5162, %v5167
    %v5177 = vadd.f32 %v5175, %v5176
    %v5178 = vtanh.pop %v5177
    %v5179 = vmul.f32 %v5171, %v5178
    %5180 = vst [vmem:[#allocation3 + $0x10] sm:$0xc] %v5158
    %5181 = vst [vmem:[#allocation3 + $0x8] sm:$0x30] %v5179
    %v5182 = vld [vmem:[#allocation2 + $0x40] sm:$0x30]
    %v5183 = vld [vmem:[#allocation2 + $0x48] sm:$0x30]
    %v5184 = vld [vmem:[#allocation2 + $0x50] sm:$0x30]
    %v5185 = vld [vmem:[#allocation2 + $0x58] sm:$0x30]
    %v5186 = vld [vmem:[%s5] sm:$0xff]
    %v5187 = vld [vmem:[%s5 + $0x8] sm:$0xff]
    %v5188 = vld [vmem:[%s5 + $0x10] sm:$0xff]
    %v5189 = vld [vmem:[%s5 + $0x18] sm:$0xff]
    %v5190 = vld [vmem:[%s5 + $0x20] sm:$0xff]
    %v5191 = vld [vmem:[%s5 + $0x28] sm:$0xff]
    %v5192 = vld [vmem:[%s5 + $0x30] sm:$0xff]
    %v5193 = vld [vmem:[%s5 + $0x38] sm:$0xff]
    %v5194 = vld [vmem:[%s5 + $0x40] sm:$0xff]
    %v5195 = vld [vmem:[%s5 + $0x48] sm:$0xff]
    %v5196 = vld [vmem:[%s5 + $0x50] sm:$0xff]
    %v5197 = vld [vmem:[%s5 + $0x58] sm:$0xff]
    %v5198 = vld [vmem:[%s5 + $0x60] sm:$0xff]
    %v5199 = vld [vmem:[%s5 + $0x68] sm:$0xff]
    %v5200 = vld [vmem:[%s5 + $0x70] sm:$0xff]
    %v5201 = vld [vmem:[%s5 + $0x78] sm:$0xff]
    %v5202 = vld [vmem:[%s5 + $0x80] sm:$0xff]
    %v5203 = vld [vmem:[%s5 + $0x88] sm:$0xff]
    %v5204 = vld [vmem:[%s5 + $0x90] sm:$0xff]
    %v5205 = vld [vmem:[%s5 + $0x98] sm:$0xff]
    %v5206 = vld [vmem:[%s5 + $0xa0] sm:$0xff]
    %v5207 = vld [vmem:[%s5 + $0xa8] sm:$0xff]
    %v5208 = vld [vmem:[%s5 + $0xb0] sm:$0xff]
    %v5209 = vld [vmem:[%s5 + $0xb8] sm:$0xff]
    %v5210 = vld [vmem:[%s5 + $0xc0] sm:$0xff]
    %v5211 = vld [vmem:[%s5 + $0xc8] sm:$0xff]
    %v5212 = vld [vmem:[%s5 + $0xd0] sm:$0xff]
    %v5213 = vld [vmem:[%s5 + $0xd8] sm:$0xff]
    %v5214 = vld [vmem:[%s5 + $0xe0] sm:$0xff]
    %v5215 = vld [vmem:[%s5 + $0xe8] sm:$0xff]
    %v5216 = vld [vmem:[%s5 + $0xf0] sm:$0xff]
    %v5217 = vld [vmem:[%s5 + $0xf8] sm:$0xff]
    %v5218 = vpack.c.bf16 %v5158, %v5158
    %v5220 = vrot.slane %v5218, 1
    %v5254 = vunpack.c.l.b16 %v5186
    %v5255 = vunpack.c.h.b16 %v5186
    %v5256 = vunpack.c.l.b16 %v5187
    %v5257 = vunpack.c.h.b16 %v5187
    %v5258 = vunpack.c.l.b16 %v5188
    %v5259 = vunpack.c.h.b16 %v5188
    %v5260 = vunpack.c.l.b16 %v5189
    %v5261 = vunpack.c.h.b16 %v5189
    %v5262 = vunpack.c.l.b16 %v5190
    %v5263 = vunpack.c.h.b16 %v5190
    %v5264 = vunpack.c.l.b16 %v5191
    %v5265 = vunpack.c.h.b16 %v5191
    %v5266 = vunpack.c.l.b16 %v5192
    %v5267 = vunpack.c.h.b16 %v5192
    %v5268 = vunpack.c.l.b16 %v5193
    %v5269 = vunpack.c.h.b16 %v5193
    %v5270 = vunpack.c.l.b16 %v5194
    %v5271 = vunpack.c.h.b16 %v5194
    %v5272 = vunpack.c.l.b16 %v5195
    %v5273 = vunpack.c.h.b16 %v5195
    %v5274 = vunpack.c.l.b16 %v5196
    %v5275 = vunpack.c.h.b16 %v5196
    %v5276 = vunpack.c.l.b16 %v5197
    %v5277 = vunpack.c.h.b16 %v5197
    %v5278 = vunpack.c.l.b16 %v5198
    %v5279 = vunpack.c.h.b16 %v5198
    %v5280 = vunpack.c.l.b16 %v5199
    %v5281 = vunpack.c.h.b16 %v5199
    %v5282 = vunpack.c.l.b16 %v5200
    %v5283 = vunpack.c.h.b16 %v5200
    %v5284 = vunpack.c.l.b16 %v5201
    %v5285 = vunpack.c.h.b16 %v5201
    %v5286 = vunpack.c.l.b16 %v5202
    %v5287 = vunpack.c.h.b16 %v5202
    %v5288 = vunpack.c.l.b16 %v5203
    %v5289 = vunpack.c.h.b16 %v5203
    %v5290 = vunpack.c.l.b16 %v5204
    %v5291 = vunpack.c.h.b16 %v5204
    %v5292 = vunpack.c.l.b16 %v5205
    %v5293 = vunpack.c.h.b16 %v5205
    %v5294 = vunpack.c.l.b16 %v5206
    %v5295 = vunpack.c.h.b16 %v5206
    %v5296 = vunpack.c.l.b16 %v5207
    %v5297 = vunpack.c.h.b16 %v5207
    %v5298 = vunpack.c.l.b16 %v5208
    %v5299 = vunpack.c.h.b16 %v5208
    %v5300 = vunpack.c.l.b16 %v5209
    %v5301 = vunpack.c.h.b16 %v5209
    %v5302 = vunpack.c.l.b16 %v5210
    %v5303 = vunpack.c.h.b16 %v5210
    %v5304 = vunpack.c.l.b16 %v5211
    %v5305 = vunpack.c.h.b16 %v5211
    %v5306 = vunpack.c.l.b16 %v5212
    %v5307 = vunpack.c.h.b16 %v5212
    %v5308 = vunpack.c.l.b16 %v5213
    %v5309 = vunpack.c.h.b16 %v5213
    %v5310 = vunpack.c.l.b16 %v5214
    %v5311 = vunpack.c.h.b16 %v5214
    %v5312 = vunpack.c.l.b16 %v5215
    %v5313 = vunpack.c.h.b16 %v5215
    %v5314 = vunpack.c.l.b16 %v5216
    %v5315 = vunpack.c.h.b16 %v5216
    %v5316 = vunpack.c.l.b16 %v5217
    %v5317 = vunpack.c.h.b16 %v5217
    %v5318 = vpack.c.b16 %v5258, %v5254
    %v5319 = vpack.c.b16 %v5259, %v5255
    %v5320 = vpack.c.b16 %v5260, %v5256
    %v5321 = vpack.c.b16 %v5261, %v5257
    %v5322 = vpack.c.b16 %v5266, %v5262
    %v5323 = vpack.c.b16 %v5267, %v5263
    %v5324 = vpack.c.b16 %v5268, %v5264
    %v5325 = vpack.c.b16 %v5269, %v5265
    %v5326 = vpack.c.b16 %v5274, %v5270
    %v5327 = vpack.c.b16 %v5275, %v5271
    %v5328 = vpack.c.b16 %v5276, %v5272
    %v5329 = vpack.c.b16 %v5277, %v5273
    %v5330 = vpack.c.b16 %v5282, %v5278
    %v5331 = vpack.c.b16 %v5283, %v5279
    %v5332 = vpack.c.b16 %v5284, %v5280
    %v5333 = vpack.c.b16 %v5285, %v5281
    %v5334 = vpack.c.b16 %v5290, %v5286
    %v5335 = vpack.c.b16 %v5291, %v5287
    %v5336 = vpack.c.b16 %v5292, %v5288
    %v5337 = vpack.c.b16 %v5293, %v5289
    %v5338 = vpack.c.b16 %v5298, %v5294
    %v5339 = vpack.c.b16 %v5299, %v5295
    %v5340 = vpack.c.b16 %v5300, %v5296
    %v5341 = vpack.c.b16 %v5301, %v5297
    %v5342 = vpack.c.b16 %v5306, %v5302
    %v5343 = vpack.c.b16 %v5307, %v5303
    %v5344 = vpack.c.b16 %v5308, %v5304
    %v5345 = vpack.c.b16 %v5309, %v5305
    %v5346 = vpack.c.b16 %v5314, %v5310
    %v5347 = vpack.c.b16 %v5315, %v5311
    %v5348 = vpack.c.b16 %v5316, %v5312
    %v5349 = vpack.c.b16 %v5317, %v5313
    %5382 = vmatprep.subr.bf16.mxu0 %v5347
    %5383 = vmatpush1.bf16.msra.mxu0 %v5346
    %5384 = vmatprep.subr.bf16.mxu0 %v5343
    %5385 = vmatpush1.bf16.msra.mxu0 %v5342
    %5386 = vmatprep.subr.bf16.mxu0 %v5339
    %5387 = vmatpush1.bf16.msra.mxu0 %v5338
    %5388 = vmatprep.subr.bf16.mxu0 %v5335
    %5389 = vmatpush1.bf16.msra.mxu0 %v5334
    %5390 = vmatprep.subr.bf16.mxu0 %v5331
    %5391 = vmatpush1.bf16.msra.mxu0 %v5330
    %5392 = vmatprep.subr.bf16.mxu0 %v5327
    %5393 = vmatpush1.bf16.msra.mxu0 %v5326
    %5394 = vmatprep.subr.bf16.mxu0 %v5323
    %5395 = vmatpush1.bf16.msra.mxu0 %v5322
    %5396 = vmatprep.subr.bf16.mxu0 %v5319
    %5397 = vmatpush1.bf16.msra.mxu0 %v5318
    %5398 = vmatprep.subr.bf16.mxu0 0
    %5399 = vmatpush2.bf16.msra.mxu0 0
    %5400 = vmatprep.subr.bf16.mxu0 0
    %5401 = vmatpush2.bf16.msra.mxu0 0
    %5402 = vmatprep.subr.bf16.mxu0 0
    %5403 = vmatpush2.bf16.msra.mxu0 0
    %5404 = vmatprep.subr.bf16.mxu0 0
    %5405 = vmatpush2.bf16.msra.mxu0 0
    %5406 = vmatprep.subr.bf16.mxu0 0
    %5407 = vmatpush2.bf16.msra.mxu0 0
    %5408 = vmatprep.subr.bf16.mxu0 0
    %5409 = vmatpush2.bf16.msra.mxu0 0
    %5410 = vmatprep.subr.bf16.mxu0 0
    %5411 = vmatpush2.bf16.msra.mxu0 0
    %5412 = vmatprep.subr.bf16.mxu0 0
    %5413 = vmatpush2.bf16.msra.mxu0 0
    %5414 = vmatprep.mubr.bf16.mxu0 0
    %5415 = vmatmul.mubr.bf16.gmra.mxu0 %v5220
    %v5416 = vpop.f32.mrf.mxu0
    %v5417 = vadd.f32 0.0, %v5416
    %v5418 = vpop.f32.mrf.mxu0
    %v5419 = vadd.f32 0.0, %v5418
    %v5420 = vpop.f32.mrf.mxu0
    %v5421 = vpop.f32.mrf.mxu0
    %5422 = vdwg.mxu0
    %5423 = vmatprep.subr.bf16.mxu0 %v5349
    %5424 = vmatpush1.bf16.msra.mxu0 %v5348
    %5425 = vmatprep.subr.bf16.mxu0 %v5345
    %5426 = vmatpush1.bf16.msra.mxu0 %v5344
    %5427 = vmatprep.subr.bf16.mxu0 %v5341
    %5428 = vmatpush1.bf16.msra.mxu0 %v5340
    %5429 = vmatprep.subr.bf16.mxu0 %v5337
    %5430 = vmatpush1.bf16.msra.mxu0 %v5336
    %5431 = vmatprep.subr.bf16.mxu0 %v5333
    %5432 = vmatpush1.bf16.msra.mxu0 %v5332
    %5433 = vmatprep.subr.bf16.mxu0 %v5329
    %5434 = vmatpush1.bf16.msra.mxu0 %v5328
    %5435 = vmatprep.subr.bf16.mxu0 %v5325
    %5436 = vmatpush1.bf16.msra.mxu0 %v5324
    %5437 = vmatprep.subr.bf16.mxu0 %v5321
    %5438 = vmatpush1.bf16.msra.mxu0 %v5320
    %5439 = vmatprep.subr.bf16.mxu0 0
    %5440 = vmatpush2.bf16.msra.mxu0 0
    %5441 = vmatprep.subr.bf16.mxu0 0
    %5442 = vmatpush2.bf16.msra.mxu0 0
    %5443 = vmatprep.subr.bf16.mxu0 0
    %5444 = vmatpush2.bf16.msra.mxu0 0
    %5445 = vmatprep.subr.bf16.mxu0 0
    %5446 = vmatpush2.bf16.msra.mxu0 0
    %5447 = vmatprep.subr.bf16.mxu0 0
    %5448 = vmatpush2.bf16.msra.mxu0 0
    %5449 = vmatprep.subr.bf16.mxu0 0
    %5450 = vmatpush2.bf16.msra.mxu0 0
    %5451 = vmatprep.subr.bf16.mxu0 0
    %5452 = vmatpush2.bf16.msra.mxu0 0
    %5453 = vmatprep.subr.bf16.mxu0 0
    %5454 = vmatpush2.bf16.msra.mxu0 0
    %5455 = vmatprep.mubr.bf16.mxu0 0
    %5456 = vmatmul.mubr.bf16.gmra.mxu0 %v5220
    %v5457 = vpop.f32.mrf.mxu0
    %v5458 = vadd.f32 0.0, %v5457
    %v5459 = vpop.f32.mrf.mxu0
    %v5460 = vadd.f32 0.0, %v5459
    %v5461 = vpop.f32.mrf.mxu0
    %v5462 = vpop.f32.mrf.mxu0
    %5463 = vdwg.mxu0
    %v5468 = vrot.slane %v5417, 4
    %v5469 = vrot.slane %v5419, 4
    %v5470 = vrot.slane %v5458, 4
    %v5471 = vrot.slane %v5460, 4
    %v5476 = vadd.f32 %v5182, %v5468
    %v5477 = vadd.f32 %v5183, %v5469
    %v5478 = vadd.f32 %v5184, %v5470
    %v5479 = vadd.f32 %v5185, %v5471
    %v5480 = vld [vmem:[#allocation2 + $0x20] sm:$0xc]
    %v5481 = vld [vmem:[#allocation2 + $0x28] sm:$0xc]
    %v5482 = vld [vmem:[#allocation2 + $0x30] sm:$0xc]
    %v5483 = vld [vmem:[#allocation2 + $0x38] sm:$0xc]
    %v5484 = vld [vmem:[%s6] sm:$0xff]
    %v5485 = vld [vmem:[%s6 + $0x8] sm:$0xff]
    %v5486 = vld [vmem:[%s6 + $0x10] sm:$0xff]
    %v5487 = vld [vmem:[%s6 + $0x18] sm:$0xff]
    %v5488 = vld [vmem:[%s6 + $0x20] sm:$0xff]
    %v5489 = vld [vmem:[%s6 + $0x28] sm:$0xff]
    %v5490 = vld [vmem:[%s6 + $0x30] sm:$0xff]
    %v5491 = vld [vmem:[%s6 + $0x38] sm:$0xff]
    %v5492 = vld [vmem:[%s6 + $0x40] sm:$0xff]
    %v5493 = vld [vmem:[%s6 + $0x48] sm:$0xff]
    %v5494 = vld [vmem:[%s6 + $0x50] sm:$0xff]
    %v5495 = vld [vmem:[%s6 + $0x58] sm:$0xff]
    %v5496 = vld [vmem:[%s6 + $0x60] sm:$0xff]
    %v5497 = vld [vmem:[%s6 + $0x68] sm:$0xff]
    %v5498 = vld [vmem:[%s6 + $0x70] sm:$0xff]
    %v5499 = vld [vmem:[%s6 + $0x78] sm:$0xff]
    %v5500 = vld [vmem:[%s6 + $0x80] sm:$0xff]
    %v5501 = vld [vmem:[%s6 + $0x88] sm:$0xff]
    %v5502 = vld [vmem:[%s6 + $0x90] sm:$0xff]
    %v5503 = vld [vmem:[%s6 + $0x98] sm:$0xff]
    %v5504 = vld [vmem:[%s6 + $0xa0] sm:$0xff]
    %v5505 = vld [vmem:[%s6 + $0xa8] sm:$0xff]
    %v5506 = vld [vmem:[%s6 + $0xb0] sm:$0xff]
    %v5507 = vld [vmem:[%s6 + $0xb8] sm:$0xff]
    %v5508 = vld [vmem:[%s6 + $0xc0] sm:$0xff]
    %v5509 = vld [vmem:[%s6 + $0xc8] sm:$0xff]
    %v5510 = vld [vmem:[%s6 + $0xd0] sm:$0xff]
    %v5511 = vld [vmem:[%s6 + $0xd8] sm:$0xff]
    %v5512 = vld [vmem:[%s6 + $0xe0] sm:$0xff]
    %v5513 = vld [vmem:[%s6 + $0xe8] sm:$0xff]
    %v5514 = vld [vmem:[%s6 + $0xf0] sm:$0xff]
    %v5515 = vld [vmem:[%s6 + $0xf8] sm:$0xff]
    %v5516 = vpack.c.bf16 %v5179, %v5179
    %v5518 = vrot.slane %v5516, 2
    %v5552 = vunpack.c.l.b16 %v5484
    %v5553 = vunpack.c.h.b16 %v5484
    %v5554 = vunpack.c.l.b16 %v5485
    %v5555 = vunpack.c.h.b16 %v5485
    %v5556 = vunpack.c.l.b16 %v5486
    %v5557 = vunpack.c.h.b16 %v5486
    %v5558 = vunpack.c.l.b16 %v5487
    %v5559 = vunpack.c.h.b16 %v5487
    %v5560 = vunpack.c.l.b16 %v5488
    %v5561 = vunpack.c.h.b16 %v5488
    %v5562 = vunpack.c.l.b16 %v5489
    %v5563 = vunpack.c.h.b16 %v5489
    %v5564 = vunpack.c.l.b16 %v5490
    %v5565 = vunpack.c.h.b16 %v5490
    %v5566 = vunpack.c.l.b16 %v5491
    %v5567 = vunpack.c.h.b16 %v5491
    %v5568 = vunpack.c.l.b16 %v5492
    %v5569 = vunpack.c.h.b16 %v5492
    %v5570 = vunpack.c.l.b16 %v5493
    %v5571 = vunpack.c.h.b16 %v5493
    %v5572 = vunpack.c.l.b16 %v5494
    %v5573 = vunpack.c.h.b16 %v5494
    %v5574 = vunpack.c.l.b16 %v5495
    %v5575 = vunpack.c.h.b16 %v5495
    %v5576 = vunpack.c.l.b16 %v5496
    %v5577 = vunpack.c.h.b16 %v5496
    %v5578 = vunpack.c.l.b16 %v5497
    %v5579 = vunpack.c.h.b16 %v5497
    %v5580 = vunpack.c.l.b16 %v5498
    %v5581 = vunpack.c.h.b16 %v5498
    %v5582 = vunpack.c.l.b16 %v5499
    %v5583 = vunpack.c.h.b16 %v5499
    %v5584 = vunpack.c.l.b16 %v5500
    %v5585 = vunpack.c.h.b16 %v5500
    %v5586 = vunpack.c.l.b16 %v5501
    %v5587 = vunpack.c.h.b16 %v5501
    %v5588 = vunpack.c.l.b16 %v5502
    %v5589 = vunpack.c.h.b16 %v5502
    %v5590 = vunpack.c.l.b16 %v5503
    %v5591 = vunpack.c.h.b16 %v5503
    %v5592 = vunpack.c.l.b16 %v5504
    %v5593 = vunpack.c.h.b16 %v5504
    %v5594 = vunpack.c.l.b16 %v5505
    %v5595 = vunpack.c.h.b16 %v5505
    %v5596 = vunpack.c.l.b16 %v5506
    %v5597 = vunpack.c.h.b16 %v5506
    %v5598 = vunpack.c.l.b16 %v5507
    %v5599 = vunpack.c.h.b16 %v5507
    %v5600 = vunpack.c.l.b16 %v5508
    %v5601 = vunpack.c.h.b16 %v5508
    %v5602 = vunpack.c.l.b16 %v5509
    %v5603 = vunpack.c.h.b16 %v5509
    %v5604 = vunpack.c.l.b16 %v5510
    %v5605 = vunpack.c.h.b16 %v5510
    %v5606 = vunpack.c.l.b16 %v5511
    %v5607 = vunpack.c.h.b16 %v5511
    %v5608 = vunpack.c.l.b16 %v5512
    %v5609 = vunpack.c.h.b16 %v5512
    %v5610 = vunpack.c.l.b16 %v5513
    %v5611 = vunpack.c.h.b16 %v5513
    %v5612 = vunpack.c.l.b16 %v5514
    %v5613 = vunpack.c.h.b16 %v5514
    %v5614 = vunpack.c.l.b16 %v5515
    %v5615 = vunpack.c.h.b16 %v5515
    %v5616 = vpack.c.b16 %v5556, %v5552
    %v5617 = vpack.c.b16 %v5557, %v5553
    %v5618 = vpack.c.b16 %v5558, %v5554
    %v5619 = vpack.c.b16 %v5559, %v5555
    %v5620 = vpack.c.b16 %v5564, %v5560
    %v5621 = vpack.c.b16 %v5565, %v5561
    %v5622 = vpack.c.b16 %v5566, %v5562
    %v5623 = vpack.c.b16 %v5567, %v5563
    %v5624 = vpack.c.b16 %v5572, %v5568
    %v5625 = vpack.c.b16 %v5573, %v5569
    %v5626 = vpack.c.b16 %v5574, %v5570
    %v5627 = vpack.c.b16 %v5575, %v5571
    %v5628 = vpack.c.b16 %v5580, %v5576
    %v5629 = vpack.c.b16 %v5581, %v5577
    %v5630 = vpack.c.b16 %v5582, %v5578
    %v5631 = vpack.c.b16 %v5583, %v5579
    %v5632 = vpack.c.b16 %v5588, %v5584
    %v5633 = vpack.c.b16 %v5589, %v5585
    %v5634 = vpack.c.b16 %v5590, %v5586
    %v5635 = vpack.c.b16 %v5591, %v5587
    %v5636 = vpack.c.b16 %v5596, %v5592
    %v5637 = vpack.c.b16 %v5597, %v5593
    %v5638 = vpack.c.b16 %v5598, %v5594
    %v5639 = vpack.c.b16 %v5599, %v5595
    %v5640 = vpack.c.b16 %v5604, %v5600
    %v5641 = vpack.c.b16 %v5605, %v5601
    %v5642 = vpack.c.b16 %v5606, %v5602
    %v5643 = vpack.c.b16 %v5607, %v5603
    %v5644 = vpack.c.b16 %v5612, %v5608
    %v5645 = vpack.c.b16 %v5613, %v5609
    %v5646 = vpack.c.b16 %v5614, %v5610
    %v5647 = vpack.c.b16 %v5615, %v5611
    %5680 = vmatprep.subr.bf16.mxu0 %v5645
    %5681 = vmatpush1.bf16.msra.mxu0 %v5644
    %5682 = vmatprep.subr.bf16.mxu0 %v5641
    %5683 = vmatpush1.bf16.msra.mxu0 %v5640
    %5684 = vmatprep.subr.bf16.mxu0 %v5637
    %5685 = vmatpush1.bf16.msra.mxu0 %v5636
    %5686 = vmatprep.subr.bf16.mxu0 %v5633
    %5687 = vmatpush1.bf16.msra.mxu0 %v5632
    %5688 = vmatprep.subr.bf16.mxu0 %v5629
    %5689 = vmatpush1.bf16.msra.mxu0 %v5628
    %5690 = vmatprep.subr.bf16.mxu0 %v5625
    %5691 = vmatpush1.bf16.msra.mxu0 %v5624
    %5692 = vmatprep.subr.bf16.mxu0 %v5621
    %5693 = vmatpush1.bf16.msra.mxu0 %v5620
    %5694 = vmatprep.subr.bf16.mxu0 %v5617
    %5695 = vmatpush1.bf16.msra.mxu0 %v5616
    %5696 = vmatprep.subr.bf16.mxu0 0
    %5697 = vmatpush2.bf16.msra.mxu0 0
    %5698 = vmatprep.subr.bf16.mxu0 0
    %5699 = vmatpush2.bf16.msra.mxu0 0
    %5700 = vmatprep.subr.bf16.mxu0 0
    %5701 = vmatpush2.bf16.msra.mxu0 0
    %5702 = vmatprep.subr.bf16.mxu0 0
    %5703 = vmatpush2.bf16.msra.mxu0 0
    %5704 = vmatprep.subr.bf16.mxu0 0
    %5705 = vmatpush2.bf16.msra.mxu0 0
    %5706 = vmatprep.subr.bf16.mxu0 0
    %5707 = vmatpush2.bf16.msra.mxu0 0
    %5708 = vmatprep.subr.bf16.mxu0 0
    %5709 = vmatpush2.bf16.msra.mxu0 0
    %5710 = vmatprep.subr.bf16.mxu0 0
    %5711 = vmatpush2.bf16.msra.mxu0 0
    %5712 = vmatprep.mubr.bf16.mxu0 0
    %5713 = vmatmul.mubr.bf16.gmra.mxu0 %v5518
    %v5714 = vpop.f32.mrf.mxu0
    %v5715 = vadd.f32 0.0, %v5714
    %v5716 = vpop.f32.mrf.mxu0
    %v5717 = vadd.f32 0.0, %v5716
    %v5718 = vpop.f32.mrf.mxu0
    %v5719 = vpop.f32.mrf.mxu0
    %5720 = vdwg.mxu0
    %5721 = vmatprep.subr.bf16.mxu0 %v5647
    %5722 = vmatpush1.bf16.msra.mxu0 %v5646
    %5723 = vmatprep.subr.bf16.mxu0 %v5643
    %5724 = vmatpush1.bf16.msra.mxu0 %v5642
    %5725 = vmatprep.subr.bf16.mxu0 %v5639
    %5726 = vmatpush1.bf16.msra.mxu0 %v5638
    %5727 = vmatprep.subr.bf16.mxu0 %v5635
    %5728 = vmatpush1.bf16.msra.mxu0 %v5634
    %5729 = vmatprep.subr.bf16.mxu0 %v5631
    %5730 = vmatpush1.bf16.msra.mxu0 %v5630
    %5731 = vmatprep.subr.bf16.mxu0 %v5627
    %5732 = vmatpush1.bf16.msra.mxu0 %v5626
    %5733 = vmatprep.subr.bf16.mxu0 %v5623
    %5734 = vmatpush1.bf16.msra.mxu0 %v5622
    %5735 = vmatprep.subr.bf16.mxu0 %v5619
    %5736 = vmatpush1.bf16.msra.mxu0 %v5618
    %5737 = vmatprep.subr.bf16.mxu0 0
    %5738 = vmatpush2.bf16.msra.mxu0 0
    %5739 = vmatprep.subr.bf16.mxu0 0
    %5740 = vmatpush2.bf16.msra.mxu0 0
    %5741 = vmatprep.subr.bf16.mxu0 0
    %5742 = vmatpush2.bf16.msra.mxu0 0
    %5743 = vmatprep.subr.bf16.mxu0 0
    %5744 = vmatpush2.bf16.msra.mxu0 0
    %5745 = vmatprep.subr.bf16.mxu0 0
    %5746 = vmatpush2.bf16.msra.mxu0 0
    %5747 = vmatprep.subr.bf16.mxu0 0
    %5748 = vmatpush2.bf16.msra.mxu0 0
    %5749 = vmatprep.subr.bf16.mxu0 0
    %5750 = vmatpush2.bf16.msra.mxu0 0
    %5751 = vmatprep.subr.bf16.mxu0 0
    %5752 = vmatpush2.bf16.msra.mxu0 0
    %5753 = vmatprep.mubr.bf16.mxu0 0
    %5754 = vmatmul.mubr.bf16.gmra.mxu0 %v5518
    %v5755 = vpop.f32.mrf.mxu0
    %v5756 = vadd.f32 0.0, %v5755
    %v5757 = vpop.f32.mrf.mxu0
    %v5758 = vadd.f32 0.0, %v5757
    %v5759 = vpop.f32.mrf.mxu0
    %v5760 = vpop.f32.mrf.mxu0
    %5761 = vdwg.mxu0
    %v5766 = vrot.slane %v5715, 6
    %v5767 = vrot.slane %v5717, 6
    %v5768 = vrot.slane %v5756, 6
    %v5769 = vrot.slane %v5758, 6
    %v5774 = vadd.f32 %v5480, %v5766
    %v5775 = vadd.f32 %v5481, %v5767
    %v5776 = vadd.f32 %v5482, %v5768
    %v5777 = vadd.f32 %v5483, %v5769
    %v5778 = vmul.f32 %v5476, 0.5
    %v5779 = vtanh.pop %v5778
    %v5780 = vmul.f32 %v5779, 0.5
    %v5781 = vadd.f32 %v5780, 0.5
    %v5782 = vmul.f32 %v5477, 0.5
    %v5783 = vtanh.pop %v5782
    %v5784 = vmul.f32 %v5783, 0.5
    %v5785 = vadd.f32 %v5784, 0.5
    %v5786 = vtanh.pop %v5478
    %v5787 = vmul.f32 %v5479, 0.5
    %v5788 = vtanh.pop %v5787
    %v5789 = vmul.f32 %v5788, 0.5
    %v5790 = vadd.f32 %v5789, 0.5
    %v5792 = vrot.slane %v5156, 6
    %v5794 = vmul.f32 %v5785, %v5792
    %v5795 = vmul.f32 %v5781, %v5786
    %v5796 = vadd.f32 %v5794, %v5795
    %v5797 = vtanh.pop %v5796
    %v5798 = vmul.f32 %v5790, %v5797
    %v5799 = vmul.f32 %v5774, 0.5
    %v5800 = vtanh.pop %v5799
    %v5801 = vmul.f32 %v5800, 0.5
    %v5802 = vadd.f32 %v5801, 0.5
    %v5803 = vmul.f32 %v5775, 0.5
    %v5804 = vtanh.pop %v5803
    %v5805 = vmul.f32 %v5804, 0.5
    %v5806 = vadd.f32 %v5805, 0.5
    %v5807 = vtanh.pop %v5776
    %v5808 = vmul.f32 %v5777, 0.5
    %v5809 = vtanh.pop %v5808
    %v5810 = vmul.f32 %v5809, 0.5
    %v5811 = vadd.f32 %v5810, 0.5
    %v5813 = vrot.slane %v5177, 2
    %v5815 = vmul.f32 %v5806, %v5813
    %v5816 = vmul.f32 %v5802, %v5807
    %v5817 = vadd.f32 %v5815, %v5816
    %v5818 = vtanh.pop %v5817
    %v5819 = vmul.f32 %v5811, %v5818
    %5820 = vst [vmem:[#allocation3 + $0x10] sm:$0x30] %v5798
    %5821 = vst [vmem:[#allocation3 + $0x8] sm:$0xc] %v5819
    %v5822 = vld [vmem:[#allocation2 + $0x40] sm:$0xc0]
    %v5823 = vld [vmem:[#allocation2 + $0x48] sm:$0xc0]
    %v5824 = vld [vmem:[#allocation2 + $0x50] sm:$0xc0]
    %v5825 = vld [vmem:[#allocation2 + $0x58] sm:$0xc0]
    %v5826 = vld [vmem:[%s5] sm:$0xff]
    %v5827 = vld [vmem:[%s5 + $0x8] sm:$0xff]
    %v5828 = vld [vmem:[%s5 + $0x10] sm:$0xff]
    %v5829 = vld [vmem:[%s5 + $0x18] sm:$0xff]
    %v5830 = vld [vmem:[%s5 + $0x20] sm:$0xff]
    %v5831 = vld [vmem:[%s5 + $0x28] sm:$0xff]
    %v5832 = vld [vmem:[%s5 + $0x30] sm:$0xff]
    %v5833 = vld [vmem:[%s5 + $0x38] sm:$0xff]
    %v5834 = vld [vmem:[%s5 + $0x40] sm:$0xff]
    %v5835 = vld [vmem:[%s5 + $0x48] sm:$0xff]
    %v5836 = vld [vmem:[%s5 + $0x50] sm:$0xff]
    %v5837 = vld [vmem:[%s5 + $0x58] sm:$0xff]
    %v5838 = vld [vmem:[%s5 + $0x60] sm:$0xff]
    %v5839 = vld [vmem:[%s5 + $0x68] sm:$0xff]
    %v5840 = vld [vmem:[%s5 + $0x70] sm:$0xff]
    %v5841 = vld [vmem:[%s5 + $0x78] sm:$0xff]
    %v5842 = vld [vmem:[%s5 + $0x80] sm:$0xff]
    %v5843 = vld [vmem:[%s5 + $0x88] sm:$0xff]
    %v5844 = vld [vmem:[%s5 + $0x90] sm:$0xff]
    %v5845 = vld [vmem:[%s5 + $0x98] sm:$0xff]
    %v5846 = vld [vmem:[%s5 + $0xa0] sm:$0xff]
    %v5847 = vld [vmem:[%s5 + $0xa8] sm:$0xff]
    %v5848 = vld [vmem:[%s5 + $0xb0] sm:$0xff]
    %v5849 = vld [vmem:[%s5 + $0xb8] sm:$0xff]
    %v5850 = vld [vmem:[%s5 + $0xc0] sm:$0xff]
    %v5851 = vld [vmem:[%s5 + $0xc8] sm:$0xff]
    %v5852 = vld [vmem:[%s5 + $0xd0] sm:$0xff]
    %v5853 = vld [vmem:[%s5 + $0xd8] sm:$0xff]
    %v5854 = vld [vmem:[%s5 + $0xe0] sm:$0xff]
    %v5855 = vld [vmem:[%s5 + $0xe8] sm:$0xff]
    %v5856 = vld [vmem:[%s5 + $0xf0] sm:$0xff]
    %v5857 = vld [vmem:[%s5 + $0xf8] sm:$0xff]
    %v5858 = vpack.c.bf16 %v5798, %v5798
    %v5860 = vrot.slane %v5858, 2
    %v5894 = vunpack.c.l.b16 %v5826
    %v5895 = vunpack.c.h.b16 %v5826
    %v5896 = vunpack.c.l.b16 %v5827
    %v5897 = vunpack.c.h.b16 %v5827
    %v5898 = vunpack.c.l.b16 %v5828
    %v5899 = vunpack.c.h.b16 %v5828
    %v5900 = vunpack.c.l.b16 %v5829
    %v5901 = vunpack.c.h.b16 %v5829
    %v5902 = vunpack.c.l.b16 %v5830
    %v5903 = vunpack.c.h.b16 %v5830
    %v5904 = vunpack.c.l.b16 %v5831
    %v5905 = vunpack.c.h.b16 %v5831
    %v5906 = vunpack.c.l.b16 %v5832
    %v5907 = vunpack.c.h.b16 %v5832
    %v5908 = vunpack.c.l.b16 %v5833
    %v5909 = vunpack.c.h.b16 %v5833
    %v5910 = vunpack.c.l.b16 %v5834
    %v5911 = vunpack.c.h.b16 %v5834
    %v5912 = vunpack.c.l.b16 %v5835
    %v5913 = vunpack.c.h.b16 %v5835
    %v5914 = vunpack.c.l.b16 %v5836
    %v5915 = vunpack.c.h.b16 %v5836
    %v5916 = vunpack.c.l.b16 %v5837
    %v5917 = vunpack.c.h.b16 %v5837
    %v5918 = vunpack.c.l.b16 %v5838
    %v5919 = vunpack.c.h.b16 %v5838
    %v5920 = vunpack.c.l.b16 %v5839
    %v5921 = vunpack.c.h.b16 %v5839
    %v5922 = vunpack.c.l.b16 %v5840
    %v5923 = vunpack.c.h.b16 %v5840
    %v5924 = vunpack.c.l.b16 %v5841
    %v5925 = vunpack.c.h.b16 %v5841
    %v5926 = vunpack.c.l.b16 %v5842
    %v5927 = vunpack.c.h.b16 %v5842
    %v5928 = vunpack.c.l.b16 %v5843
    %v5929 = vunpack.c.h.b16 %v5843
    %v5930 = vunpack.c.l.b16 %v5844
    %v5931 = vunpack.c.h.b16 %v5844
    %v5932 = vunpack.c.l.b16 %v5845
    %v5933 = vunpack.c.h.b16 %v5845
    %v5934 = vunpack.c.l.b16 %v5846
    %v5935 = vunpack.c.h.b16 %v5846
    %v5936 = vunpack.c.l.b16 %v5847
    %v5937 = vunpack.c.h.b16 %v5847
    %v5938 = vunpack.c.l.b16 %v5848
    %v5939 = vunpack.c.h.b16 %v5848
    %v5940 = vunpack.c.l.b16 %v5849
    %v5941 = vunpack.c.h.b16 %v5849
    %v5942 = vunpack.c.l.b16 %v5850
    %v5943 = vunpack.c.h.b16 %v5850
    %v5944 = vunpack.c.l.b16 %v5851
    %v5945 = vunpack.c.h.b16 %v5851
    %v5946 = vunpack.c.l.b16 %v5852
    %v5947 = vunpack.c.h.b16 %v5852
    %v5948 = vunpack.c.l.b16 %v5853
    %v5949 = vunpack.c.h.b16 %v5853
    %v5950 = vunpack.c.l.b16 %v5854
    %v5951 = vunpack.c.h.b16 %v5854
    %v5952 = vunpack.c.l.b16 %v5855
    %v5953 = vunpack.c.h.b16 %v5855
    %v5954 = vunpack.c.l.b16 %v5856
    %v5955 = vunpack.c.h.b16 %v5856
    %v5956 = vunpack.c.l.b16 %v5857
    %v5957 = vunpack.c.h.b16 %v5857
    %v5958 = vpack.c.b16 %v5898, %v5894
    %v5959 = vpack.c.b16 %v5899, %v5895
    %v5960 = vpack.c.b16 %v5900, %v5896
    %v5961 = vpack.c.b16 %v5901, %v5897
    %v5962 = vpack.c.b16 %v5906, %v5902
    %v5963 = vpack.c.b16 %v5907, %v5903
    %v5964 = vpack.c.b16 %v5908, %v5904
    %v5965 = vpack.c.b16 %v5909, %v5905
    %v5966 = vpack.c.b16 %v5914, %v5910
    %v5967 = vpack.c.b16 %v5915, %v5911
    %v5968 = vpack.c.b16 %v5916, %v5912
    %v5969 = vpack.c.b16 %v5917, %v5913
    %v5970 = vpack.c.b16 %v5922, %v5918
    %v5971 = vpack.c.b16 %v5923, %v5919
    %v5972 = vpack.c.b16 %v5924, %v5920
    %v5973 = vpack.c.b16 %v5925, %v5921
    %v5974 = vpack.c.b16 %v5930, %v5926
    %v5975 = vpack.c.b16 %v5931, %v5927
    %v5976 = vpack.c.b16 %v5932, %v5928
    %v5977 = vpack.c.b16 %v5933, %v5929
    %v5978 = vpack.c.b16 %v5938, %v5934
    %v5979 = vpack.c.b16 %v5939, %v5935
    %v5980 = vpack.c.b16 %v5940, %v5936
    %v5981 = vpack.c.b16 %v5941, %v5937
    %v5982 = vpack.c.b16 %v5946, %v5942
    %v5983 = vpack.c.b16 %v5947, %v5943
    %v5984 = vpack.c.b16 %v5948, %v5944
    %v5985 = vpack.c.b16 %v5949, %v5945
    %v5986 = vpack.c.b16 %v5954, %v5950
    %v5987 = vpack.c.b16 %v5955, %v5951
    %v5988 = vpack.c.b16 %v5956, %v5952
    %v5989 = vpack.c.b16 %v5957, %v5953
    %6022 = vmatprep.subr.bf16.mxu0 %v5987
    %6023 = vmatpush1.bf16.msra.mxu0 %v5986
    %6024 = vmatprep.subr.bf16.mxu0 %v5983
    %6025 = vmatpush1.bf16.msra.mxu0 %v5982
    %6026 = vmatprep.subr.bf16.mxu0 %v5979
    %6027 = vmatpush1.bf16.msra.mxu0 %v5978
    %6028 = vmatprep.subr.bf16.mxu0 %v5975
    %6029 = vmatpush1.bf16.msra.mxu0 %v5974
    %6030 = vmatprep.subr.bf16.mxu0 %v5971
    %6031 = vmatpush1.bf16.msra.mxu0 %v5970
    %6032 = vmatprep.subr.bf16.mxu0 %v5967
    %6033 = vmatpush1.bf16.msra.mxu0 %v5966
    %6034 = vmatprep.subr.bf16.mxu0 %v5963
    %6035 = vmatpush1.bf16.msra.mxu0 %v5962
    %6036 = vmatprep.subr.bf16.mxu0 %v5959
    %6037 = vmatpush1.bf16.msra.mxu0 %v5958
    %6038 = vmatprep.subr.bf16.mxu0 0
    %6039 = vmatpush2.bf16.msra.mxu0 0
    %6040 = vmatprep.subr.bf16.mxu0 0
    %6041 = vmatpush2.bf16.msra.mxu0 0
    %6042 = vmatprep.subr.bf16.mxu0 0
    %6043 = vmatpush2.bf16.msra.mxu0 0
    %6044 = vmatprep.subr.bf16.mxu0 0
    %6045 = vmatpush2.bf16.msra.mxu0 0
    %6046 = vmatprep.subr.bf16.mxu0 0
    %6047 = vmatpush2.bf16.msra.mxu0 0
    %6048 = vmatprep.subr.bf16.mxu0 0
    %6049 = vmatpush2.bf16.msra.mxu0 0
    %6050 = vmatprep.subr.bf16.mxu0 0
    %6051 = vmatpush2.bf16.msra.mxu0 0
    %6052 = vmatprep.subr.bf16.mxu0 0
    %6053 = vmatpush2.bf16.msra.mxu0 0
    %6054 = vmatprep.mubr.bf16.mxu0 0
    %6055 = vmatmul.mubr.bf16.gmra.mxu0 %v5860
    %v6056 = vpop.f32.mrf.mxu0
    %v6057 = vadd.f32 0.0, %v6056
    %v6058 = vpop.f32.mrf.mxu0
    %v6059 = vadd.f32 0.0, %v6058
    %v6060 = vpop.f32.mrf.mxu0
    %v6061 = vpop.f32.mrf.mxu0
    %6062 = vdwg.mxu0
    %6063 = vmatprep.subr.bf16.mxu0 %v5989
    %6064 = vmatpush1.bf16.msra.mxu0 %v5988
    %6065 = vmatprep.subr.bf16.mxu0 %v5985
    %6066 = vmatpush1.bf16.msra.mxu0 %v5984
    %6067 = vmatprep.subr.bf16.mxu0 %v5981
    %6068 = vmatpush1.bf16.msra.mxu0 %v5980
    %6069 = vmatprep.subr.bf16.mxu0 %v5977
    %6070 = vmatpush1.bf16.msra.mxu0 %v5976
    %6071 = vmatprep.subr.bf16.mxu0 %v5973
    %6072 = vmatpush1.bf16.msra.mxu0 %v5972
    %6073 = vmatprep.subr.bf16.mxu0 %v5969
    %6074 = vmatpush1.bf16.msra.mxu0 %v5968
    %6075 = vmatprep.subr.bf16.mxu0 %v5965
    %6076 = vmatpush1.bf16.msra.mxu0 %v5964
    %6077 = vmatprep.subr.bf16.mxu0 %v5961
    %6078 = vmatpush1.bf16.msra.mxu0 %v5960
    %6079 = vmatprep.subr.bf16.mxu0 0
    %6080 = vmatpush2.bf16.msra.mxu0 0
    %6081 = vmatprep.subr.bf16.mxu0 0
    %6082 = vmatpush2.bf16.msra.mxu0 0
    %6083 = vmatprep.subr.bf16.mxu0 0
    %6084 = vmatpush2.bf16.msra.mxu0 0
    %6085 = vmatprep.subr.bf16.mxu0 0
    %6086 = vmatpush2.bf16.msra.mxu0 0
    %6087 = vmatprep.subr.bf16.mxu0 0
    %6088 = vmatpush2.bf16.msra.mxu0 0
    %6089 = vmatprep.subr.bf16.mxu0 0
    %6090 = vmatpush2.bf16.msra.mxu0 0
    %6091 = vmatprep.subr.bf16.mxu0 0
    %6092 = vmatpush2.bf16.msra.mxu0 0
    %6093 = vmatprep.subr.bf16.mxu0 0
    %6094 = vmatpush2.bf16.msra.mxu0 0
    %6095 = vmatprep.mubr.bf16.mxu0 0
    %6096 = vmatmul.mubr.bf16.gmra.mxu0 %v5860
    %v6097 = vpop.f32.mrf.mxu0
    %v6098 = vadd.f32 0.0, %v6097
    %v6099 = vpop.f32.mrf.mxu0
    %v6100 = vadd.f32 0.0, %v6099
    %v6101 = vpop.f32.mrf.mxu0
    %v6102 = vpop.f32.mrf.mxu0
    %6103 = vdwg.mxu0
    %v6108 = vrot.slane %v6057, 2
    %v6109 = vrot.slane %v6059, 2
    %v6110 = vrot.slane %v6098, 2
    %v6111 = vrot.slane %v6100, 2
    %v6116 = vadd.f32 %v5822, %v6108
    %v6117 = vadd.f32 %v5823, %v6109
    %v6118 = vadd.f32 %v5824, %v6110
    %v6119 = vadd.f32 %v5825, %v6111
    %v6120 = vld [vmem:[#allocation2 + $0x20] sm:$0x3]
    %v6121 = vld [vmem:[#allocation2 + $0x28] sm:$0x3]
    %v6122 = vld [vmem:[#allocation2 + $0x30] sm:$0x3]
    %v6123 = vld [vmem:[#allocation2 + $0x38] sm:$0x3]
    %v6124 = vld [vmem:[%s6] sm:$0xff]
    %v6125 = vld [vmem:[%s6 + $0x8] sm:$0xff]
    %v6126 = vld [vmem:[%s6 + $0x10] sm:$0xff]
    %v6127 = vld [vmem:[%s6 + $0x18] sm:$0xff]
    %v6128 = vld [vmem:[%s6 + $0x20] sm:$0xff]
    %v6129 = vld [vmem:[%s6 + $0x28] sm:$0xff]
    %v6130 = vld [vmem:[%s6 + $0x30] sm:$0xff]
    %v6131 = vld [vmem:[%s6 + $0x38] sm:$0xff]
    %v6132 = vld [vmem:[%s6 + $0x40] sm:$0xff]
    %v6133 = vld [vmem:[%s6 + $0x48] sm:$0xff]
    %v6134 = vld [vmem:[%s6 + $0x50] sm:$0xff]
    %v6135 = vld [vmem:[%s6 + $0x58] sm:$0xff]
    %v6136 = vld [vmem:[%s6 + $0x60] sm:$0xff]
    %v6137 = vld [vmem:[%s6 + $0x68] sm:$0xff]
    %v6138 = vld [vmem:[%s6 + $0x70] sm:$0xff]
    %v6139 = vld [vmem:[%s6 + $0x78] sm:$0xff]
    %v6140 = vld [vmem:[%s6 + $0x80] sm:$0xff]
    %v6141 = vld [vmem:[%s6 + $0x88] sm:$0xff]
    %v6142 = vld [vmem:[%s6 + $0x90] sm:$0xff]
    %v6143 = vld [vmem:[%s6 + $0x98] sm:$0xff]
    %v6144 = vld [vmem:[%s6 + $0xa0] sm:$0xff]
    %v6145 = vld [vmem:[%s6 + $0xa8] sm:$0xff]
    %v6146 = vld [vmem:[%s6 + $0xb0] sm:$0xff]
    %v6147 = vld [vmem:[%s6 + $0xb8] sm:$0xff]
    %v6148 = vld [vmem:[%s6 + $0xc0] sm:$0xff]
    %v6149 = vld [vmem:[%s6 + $0xc8] sm:$0xff]
    %v6150 = vld [vmem:[%s6 + $0xd0] sm:$0xff]
    %v6151 = vld [vmem:[%s6 + $0xd8] sm:$0xff]
    %v6152 = vld [vmem:[%s6 + $0xe0] sm:$0xff]
    %v6153 = vld [vmem:[%s6 + $0xe8] sm:$0xff]
    %v6154 = vld [vmem:[%s6 + $0xf0] sm:$0xff]
    %v6155 = vld [vmem:[%s6 + $0xf8] sm:$0xff]
    %v6156 = vpack.c.bf16 %v5819, %v5819
    %v6158 = vrot.slane %v6156, 1
    %v6192 = vunpack.c.l.b16 %v6124
    %v6193 = vunpack.c.h.b16 %v6124
    %v6194 = vunpack.c.l.b16 %v6125
    %v6195 = vunpack.c.h.b16 %v6125
    %v6196 = vunpack.c.l.b16 %v6126
    %v6197 = vunpack.c.h.b16 %v6126
    %v6198 = vunpack.c.l.b16 %v6127
    %v6199 = vunpack.c.h.b16 %v6127
    %v6200 = vunpack.c.l.b16 %v6128
    %v6201 = vunpack.c.h.b16 %v6128
    %v6202 = vunpack.c.l.b16 %v6129
    %v6203 = vunpack.c.h.b16 %v6129
    %v6204 = vunpack.c.l.b16 %v6130
    %v6205 = vunpack.c.h.b16 %v6130
    %v6206 = vunpack.c.l.b16 %v6131
    %v6207 = vunpack.c.h.b16 %v6131
    %v6208 = vunpack.c.l.b16 %v6132
    %v6209 = vunpack.c.h.b16 %v6132
    %v6210 = vunpack.c.l.b16 %v6133
    %v6211 = vunpack.c.h.b16 %v6133
    %v6212 = vunpack.c.l.b16 %v6134
    %v6213 = vunpack.c.h.b16 %v6134
    %v6214 = vunpack.c.l.b16 %v6135
    %v6215 = vunpack.c.h.b16 %v6135
    %v6216 = vunpack.c.l.b16 %v6136
    %v6217 = vunpack.c.h.b16 %v6136
    %v6218 = vunpack.c.l.b16 %v6137
    %v6219 = vunpack.c.h.b16 %v6137
    %v6220 = vunpack.c.l.b16 %v6138
    %v6221 = vunpack.c.h.b16 %v6138
    %v6222 = vunpack.c.l.b16 %v6139
    %v6223 = vunpack.c.h.b16 %v6139
    %v6224 = vunpack.c.l.b16 %v6140
    %v6225 = vunpack.c.h.b16 %v6140
    %v6226 = vunpack.c.l.b16 %v6141
    %v6227 = vunpack.c.h.b16 %v6141
    %v6228 = vunpack.c.l.b16 %v6142
    %v6229 = vunpack.c.h.b16 %v6142
    %v6230 = vunpack.c.l.b16 %v6143
    %v6231 = vunpack.c.h.b16 %v6143
    %v6232 = vunpack.c.l.b16 %v6144
    %v6233 = vunpack.c.h.b16 %v6144
    %v6234 = vunpack.c.l.b16 %v6145
    %v6235 = vunpack.c.h.b16 %v6145
    %v6236 = vunpack.c.l.b16 %v6146
    %v6237 = vunpack.c.h.b16 %v6146
    %v6238 = vunpack.c.l.b16 %v6147
    %v6239 = vunpack.c.h.b16 %v6147
    %v6240 = vunpack.c.l.b16 %v6148
    %v6241 = vunpack.c.h.b16 %v6148
    %v6242 = vunpack.c.l.b16 %v6149
    %v6243 = vunpack.c.h.b16 %v6149
    %v6244 = vunpack.c.l.b16 %v6150
    %v6245 = vunpack.c.h.b16 %v6150
    %v6246 = vunpack.c.l.b16 %v6151
    %v6247 = vunpack.c.h.b16 %v6151
    %v6248 = vunpack.c.l.b16 %v6152
    %v6249 = vunpack.c.h.b16 %v6152
    %v6250 = vunpack.c.l.b16 %v6153
    %v6251 = vunpack.c.h.b16 %v6153
    %v6252 = vunpack.c.l.b16 %v6154
    %v6253 = vunpack.c.h.b16 %v6154
    %v6254 = vunpack.c.l.b16 %v6155
    %v6255 = vunpack.c.h.b16 %v6155
    %v6256 = vpack.c.b16 %v6196, %v6192
    %v6257 = vpack.c.b16 %v6197, %v6193
    %v6258 = vpack.c.b16 %v6198, %v6194
    %v6259 = vpack.c.b16 %v6199, %v6195
    %v6260 = vpack.c.b16 %v6204, %v6200
    %v6261 = vpack.c.b16 %v6205, %v6201
    %v6262 = vpack.c.b16 %v6206, %v6202
    %v6263 = vpack.c.b16 %v6207, %v6203
    %v6264 = vpack.c.b16 %v6212, %v6208
    %v6265 = vpack.c.b16 %v6213, %v6209
    %v6266 = vpack.c.b16 %v6214, %v6210
    %v6267 = vpack.c.b16 %v6215, %v6211
    %v6268 = vpack.c.b16 %v6220, %v6216
    %v6269 = vpack.c.b16 %v6221, %v6217
    %v6270 = vpack.c.b16 %v6222, %v6218
    %v6271 = vpack.c.b16 %v6223, %v6219
    %v6272 = vpack.c.b16 %v6228, %v6224
    %v6273 = vpack.c.b16 %v6229, %v6225
    %v6274 = vpack.c.b16 %v6230, %v6226
    %v6275 = vpack.c.b16 %v6231, %v6227
    %v6276 = vpack.c.b16 %v6236, %v6232
    %v6277 = vpack.c.b16 %v6237, %v6233
    %v6278 = vpack.c.b16 %v6238, %v6234
    %v6279 = vpack.c.b16 %v6239, %v6235
    %v6280 = vpack.c.b16 %v6244, %v6240
    %v6281 = vpack.c.b16 %v6245, %v6241
    %v6282 = vpack.c.b16 %v6246, %v6242
    %v6283 = vpack.c.b16 %v6247, %v6243
    %v6284 = vpack.c.b16 %v6252, %v6248
    %v6285 = vpack.c.b16 %v6253, %v6249
    %v6286 = vpack.c.b16 %v6254, %v6250
    %v6287 = vpack.c.b16 %v6255, %v6251
    %6320 = vmatprep.subr.bf16.mxu0 %v6285
    %6321 = vmatpush1.bf16.msra.mxu0 %v6284
    %6322 = vmatprep.subr.bf16.mxu0 %v6281
    %6323 = vmatpush1.bf16.msra.mxu0 %v6280
    %6324 = vmatprep.subr.bf16.mxu0 %v6277
    %6325 = vmatpush1.bf16.msra.mxu0 %v6276
    %6326 = vmatprep.subr.bf16.mxu0 %v6273
    %6327 = vmatpush1.bf16.msra.mxu0 %v6272
    %6328 = vmatprep.subr.bf16.mxu0 %v6269
    %6329 = vmatpush1.bf16.msra.mxu0 %v6268
    %6330 = vmatprep.subr.bf16.mxu0 %v6265
    %6331 = vmatpush1.bf16.msra.mxu0 %v6264
    %6332 = vmatprep.subr.bf16.mxu0 %v6261
    %6333 = vmatpush1.bf16.msra.mxu0 %v6260
    %6334 = vmatprep.subr.bf16.mxu0 %v6257
    %6335 = vmatpush1.bf16.msra.mxu0 %v6256
    %6336 = vmatprep.subr.bf16.mxu0 0
    %6337 = vmatpush2.bf16.msra.mxu0 0
    %6338 = vmatprep.subr.bf16.mxu0 0
    %6339 = vmatpush2.bf16.msra.mxu0 0
    %6340 = vmatprep.subr.bf16.mxu0 0
    %6341 = vmatpush2.bf16.msra.mxu0 0
    %6342 = vmatprep.subr.bf16.mxu0 0
    %6343 = vmatpush2.bf16.msra.mxu0 0
    %6344 = vmatprep.subr.bf16.mxu0 0
    %6345 = vmatpush2.bf16.msra.mxu0 0
    %6346 = vmatprep.subr.bf16.mxu0 0
    %6347 = vmatpush2.bf16.msra.mxu0 0
    %6348 = vmatprep.subr.bf16.mxu0 0
    %6349 = vmatpush2.bf16.msra.mxu0 0
    %6350 = vmatprep.subr.bf16.mxu0 0
    %6351 = vmatpush2.bf16.msra.mxu0 0
    %6352 = vmatprep.mubr.bf16.mxu0 0
    %6353 = vmatmul.mubr.bf16.gmra.mxu0 %v6158
    %v6354 = vpop.f32.mrf.mxu0
    %v6355 = vadd.f32 0.0, %v6354
    %v6356 = vpop.f32.mrf.mxu0
    %v6357 = vadd.f32 0.0, %v6356
    %v6358 = vpop.f32.mrf.mxu0
    %v6359 = vpop.f32.mrf.mxu0
    %6360 = vdwg.mxu0
    %6361 = vmatprep.subr.bf16.mxu0 %v6287
    %6362 = vmatpush1.bf16.msra.mxu0 %v6286
    %6363 = vmatprep.subr.bf16.mxu0 %v6283
    %6364 = vmatpush1.bf16.msra.mxu0 %v6282
    %6365 = vmatprep.subr.bf16.mxu0 %v6279
    %6366 = vmatpush1.bf16.msra.mxu0 %v6278
    %6367 = vmatprep.subr.bf16.mxu0 %v6275
    %6368 = vmatpush1.bf16.msra.mxu0 %v6274
    %6369 = vmatprep.subr.bf16.mxu0 %v6271
    %6370 = vmatpush1.bf16.msra.mxu0 %v6270
    %6371 = vmatprep.subr.bf16.mxu0 %v6267
    %6372 = vmatpush1.bf16.msra.mxu0 %v6266
    %6373 = vmatprep.subr.bf16.mxu0 %v6263
    %6374 = vmatpush1.bf16.msra.mxu0 %v6262
    %6375 = vmatprep.subr.bf16.mxu0 %v6259
    %6376 = vmatpush1.bf16.msra.mxu0 %v6258
    %6377 = vmatprep.subr.bf16.mxu0 0
    %6378 = vmatpush2.bf16.msra.mxu0 0
    %6379 = vmatprep.subr.bf16.mxu0 0
    %6380 = vmatpush2.bf16.msra.mxu0 0
    %6381 = vmatprep.subr.bf16.mxu0 0
    %6382 = vmatpush2.bf16.msra.mxu0 0
    %6383 = vmatprep.subr.bf16.mxu0 0
    %6384 = vmatpush2.bf16.msra.mxu0 0
    %6385 = vmatprep.subr.bf16.mxu0 0
    %6386 = vmatpush2.bf16.msra.mxu0 0
    %6387 = vmatprep.subr.bf16.mxu0 0
    %6388 = vmatpush2.bf16.msra.mxu0 0
    %6389 = vmatprep.subr.bf16.mxu0 0
    %6390 = vmatpush2.bf16.msra.mxu0 0
    %6391 = vmatprep.subr.bf16.mxu0 0
    %6392 = vmatpush2.bf16.msra.mxu0 0
    %6393 = vmatprep.mubr.bf16.mxu0 0
    %6394 = vmatmul.mubr.bf16.gmra.mxu0 %v6158
    %v6395 = vpop.f32.mrf.mxu0
    %v6396 = vadd.f32 0.0, %v6395
    %v6397 = vpop.f32.mrf.mxu0
    %v6398 = vadd.f32 0.0, %v6397
    %v6399 = vpop.f32.mrf.mxu0
    %v6400 = vpop.f32.mrf.mxu0
    %6401 = vdwg.mxu0
    %v6402 = vadd.f32 %v6120, %v6355
    %v6403 = vadd.f32 %v6121, %v6357
    %v6404 = vadd.f32 %v6122, %v6396
    %v6405 = vadd.f32 %v6123, %v6398
    %v6406 = vmul.f32 %v6116, 0.5
    %v6407 = vtanh.pop %v6406
    %v6408 = vmul.f32 %v6407, 0.5
    %v6409 = vadd.f32 %v6408, 0.5
    %v6410 = vmul.f32 %v6117, 0.5
    %v6411 = vtanh.pop %v6410
    %v6412 = vmul.f32 %v6411, 0.5
    %v6413 = vadd.f32 %v6412, 0.5
    %v6414 = vtanh.pop %v6118
    %v6415 = vmul.f32 %v6119, 0.5
    %v6416 = vtanh.pop %v6415
    %v6417 = vmul.f32 %v6416, 0.5
    %v6418 = vadd.f32 %v6417, 0.5
    %v6420 = vrot.slane %v5796, 6
    %v6422 = vmul.f32 %v6413, %v6420
    %v6423 = vmul.f32 %v6409, %v6414
    %v6424 = vadd.f32 %v6422, %v6423
    %v6425 = vtanh.pop %v6424
    %v6426 = vmul.f32 %v6418, %v6425
    %v6427 = vmul.f32 %v6402, 0.5
    %v6428 = vtanh.pop %v6427
    %v6429 = vmul.f32 %v6428, 0.5
    %v6430 = vadd.f32 %v6429, 0.5
    %v6431 = vmul.f32 %v6403, 0.5
    %v6432 = vtanh.pop %v6431
    %v6433 = vmul.f32 %v6432, 0.5
    %v6434 = vadd.f32 %v6433, 0.5
    %v6435 = vtanh.pop %v6404
    %v6436 = vmul.f32 %v6405, 0.5
    %v6437 = vtanh.pop %v6436
    %v6438 = vmul.f32 %v6437, 0.5
    %v6439 = vadd.f32 %v6438, 0.5
    %v6441 = vrot.slane %v5817, 2
    %v6443 = vmul.f32 %v6434, %v6441
    %v6444 = vmul.f32 %v6430, %v6435
    %v6445 = vadd.f32 %v6443, %v6444
    %v6446 = vtanh.pop %v6445
    %v6447 = vmul.f32 %v6439, %v6446
    %6448 = vst [vmem:[#allocation3 + $0x10] sm:$0xc0] %v6426
    %6449 = vst [vmem:[#allocation3 + $0x8] sm:$0x3] %v6447
    %v6450 = vld [vmem:[#allocation3] sm:$0xff]
    %v6451 = vld [vmem:[#allocation3 + $0x8] sm:$0xff]
    %v6452 = vld [vmem:[#allocation3 + $0x10] sm:$0xff]
    %v6453 = vld [vmem:[#allocation3 + $0x18] sm:$0xff]
    %v6454 = vld [vmem:[%s7] sm:$0xff]
    %v6455 = vld [vmem:[%s7 + $0x8] sm:$0xff]
    %v6456 = vld [vmem:[%s7 + $0x10] sm:$0xff]
    %v6457 = vld [vmem:[%s7 + $0x18] sm:$0xff]
    %v6458 = vld [vmem:[%s7 + $0x20] sm:$0xff]
    %v6459 = vld [vmem:[%s7 + $0x28] sm:$0xff]
    %v6460 = vld [vmem:[%s7 + $0x30] sm:$0xff]
    %v6461 = vld [vmem:[%s7 + $0x38] sm:$0xff]
    %v6462 = vld [vmem:[%s7 + $0x40] sm:$0xff]
    %v6463 = vld [vmem:[%s7 + $0x48] sm:$0xff]
    %v6464 = vld [vmem:[%s7 + $0x50] sm:$0xff]
    %v6465 = vld [vmem:[%s7 + $0x58] sm:$0xff]
    %v6466 = vld [vmem:[%s7 + $0x60] sm:$0xff]
    %v6467 = vld [vmem:[%s7 + $0x68] sm:$0xff]
    %v6468 = vld [vmem:[%s7 + $0x70] sm:$0xff]
    %v6469 = vld [vmem:[%s7 + $0x78] sm:$0xff]
    %v6470 = vld [vmem:[%s7 + $0x80] sm:$0xff]
    %v6471 = vld [vmem:[%s7 + $0x88] sm:$0xff]
    %v6472 = vld [vmem:[%s7 + $0x90] sm:$0xff]
    %v6473 = vld [vmem:[%s7 + $0x98] sm:$0xff]
    %v6474 = vld [vmem:[%s7 + $0xa0] sm:$0xff]
    %v6475 = vld [vmem:[%s7 + $0xa8] sm:$0xff]
    %v6476 = vld [vmem:[%s7 + $0xb0] sm:$0xff]
    %v6477 = vld [vmem:[%s7 + $0xb8] sm:$0xff]
    %v6478 = vld [vmem:[%s7 + $0xc0] sm:$0xff]
    %v6479 = vld [vmem:[%s7 + $0xc8] sm:$0xff]
    %v6480 = vld [vmem:[%s7 + $0xd0] sm:$0xff]
    %v6481 = vld [vmem:[%s7 + $0xd8] sm:$0xff]
    %v6482 = vld [vmem:[%s7 + $0xe0] sm:$0xff]
    %v6483 = vld [vmem:[%s7 + $0xe8] sm:$0xff]
    %v6484 = vld [vmem:[%s7 + $0xf0] sm:$0xff]
    %v6485 = vld [vmem:[%s7 + $0xf8] sm:$0xff]
    %v6486 = vld [vmem:[%s7 + $0x100] sm:$0xff]
    %v6487 = vld [vmem:[%s7 + $0x108] sm:$0xff]
    %v6488 = vld [vmem:[%s7 + $0x110] sm:$0xff]
    %v6489 = vld [vmem:[%s7 + $0x118] sm:$0xff]
    %v6490 = vld [vmem:[%s7 + $0x120] sm:$0xff]
    %v6491 = vld [vmem:[%s7 + $0x128] sm:$0xff]
    %v6492 = vld [vmem:[%s7 + $0x130] sm:$0xff]
    %v6493 = vld [vmem:[%s7 + $0x138] sm:$0xff]
    %v6494 = vld [vmem:[%s7 + $0x140] sm:$0xff]
    %v6495 = vld [vmem:[%s7 + $0x148] sm:$0xff]
    %v6496 = vld [vmem:[%s7 + $0x150] sm:$0xff]
    %v6497 = vld [vmem:[%s7 + $0x158] sm:$0xff]
    %v6498 = vld [vmem:[%s7 + $0x160] sm:$0xff]
    %v6499 = vld [vmem:[%s7 + $0x168] sm:$0xff]
    %v6500 = vld [vmem:[%s7 + $0x170] sm:$0xff]
    %v6501 = vld [vmem:[%s7 + $0x178] sm:$0xff]
    %v6502 = vld [vmem:[%s7 + $0x180] sm:$0xff]
    %v6503 = vld [vmem:[%s7 + $0x188] sm:$0xff]
    %v6504 = vld [vmem:[%s7 + $0x190] sm:$0xff]
    %v6505 = vld [vmem:[%s7 + $0x198] sm:$0xff]
    %v6506 = vld [vmem:[%s7 + $0x1a0] sm:$0xff]
    %v6507 = vld [vmem:[%s7 + $0x1a8] sm:$0xff]
    %v6508 = vld [vmem:[%s7 + $0x1b0] sm:$0xff]
    %v6509 = vld [vmem:[%s7 + $0x1b8] sm:$0xff]
    %v6510 = vld [vmem:[%s7 + $0x1c0] sm:$0xff]
    %v6511 = vld [vmem:[%s7 + $0x1c8] sm:$0xff]
    %v6512 = vld [vmem:[%s7 + $0x1d0] sm:$0xff]
    %v6513 = vld [vmem:[%s7 + $0x1d8] sm:$0xff]
    %v6514 = vld [vmem:[%s7 + $0x1e0] sm:$0xff]
    %v6515 = vld [vmem:[%s7 + $0x1e8] sm:$0xff]
    %v6516 = vld [vmem:[%s7 + $0x1f0] sm:$0xff]
    %v6517 = vld [vmem:[%s7 + $0x1f8] sm:$0xff]
    %v6518 = vpack.c.bf16 %v6452, %v6450
    %v6519 = vpack.c.bf16 %v6453, %v6451
    %v6520 = vld [vmem:[%s9] sm:$0xf]
    %v6522 = vlaneseq
    %v6523 = vshrl.u32 %v6522, 7
    %v6524 = vsub.s32 0, %v6523
    %v6525 = vrot.slane %v6520, %v6524
    %v6526 = vlaneseq
    %v6527 = vshrl.u32 %v6526, 7
    %v6528 = vsub.s32 1, %v6527
    %v6529 = vrot.slane %v6520, %v6528
    %v6530 = vlaneseq
    %v6531 = vshrl.u32 %v6530, 7
    %v6532 = vsub.s32 2, %v6531
    %v6533 = vrot.slane %v6520, %v6532
    %v6534 = vlaneseq
    %v6535 = vshrl.u32 %v6534, 7
    %v6536 = vsub.s32 3, %v6535
    %v6537 = vrot.slane %v6520, %v6536
    %v6606 = vunpack.c.l.b16 %v6454
    %v6607 = vunpack.c.h.b16 %v6454
    %v6608 = vunpack.c.l.b16 %v6455
    %v6609 = vunpack.c.h.b16 %v6455
    %v6610 = vunpack.c.l.b16 %v6456
    %v6611 = vunpack.c.h.b16 %v6456
    %v6612 = vunpack.c.l.b16 %v6457
    %v6613 = vunpack.c.h.b16 %v6457
    %v6614 = vunpack.c.l.b16 %v6458
    %v6615 = vunpack.c.h.b16 %v6458
    %v6616 = vunpack.c.l.b16 %v6459
    %v6617 = vunpack.c.h.b16 %v6459
    %v6618 = vunpack.c.l.b16 %v6460
    %v6619 = vunpack.c.h.b16 %v6460
    %v6620 = vunpack.c.l.b16 %v6461
    %v6621 = vunpack.c.h.b16 %v6461
    %v6622 = vunpack.c.l.b16 %v6462
    %v6623 = vunpack.c.h.b16 %v6462
    %v6624 = vunpack.c.l.b16 %v6463
    %v6625 = vunpack.c.h.b16 %v6463
    %v6626 = vunpack.c.l.b16 %v6464
    %v6627 = vunpack.c.h.b16 %v6464
    %v6628 = vunpack.c.l.b16 %v6465
    %v6629 = vunpack.c.h.b16 %v6465
    %v6630 = vunpack.c.l.b16 %v6466
    %v6631 = vunpack.c.h.b16 %v6466
    %v6632 = vunpack.c.l.b16 %v6467
    %v6633 = vunpack.c.h.b16 %v6467
    %v6634 = vunpack.c.l.b16 %v6468
    %v6635 = vunpack.c.h.b16 %v6468
    %v6636 = vunpack.c.l.b16 %v6469
    %v6637 = vunpack.c.h.b16 %v6469
    %v6638 = vunpack.c.l.b16 %v6470
    %v6639 = vunpack.c.h.b16 %v6470
    %v6640 = vunpack.c.l.b16 %v6471
    %v6641 = vunpack.c.h.b16 %v6471
    %v6642 = vunpack.c.l.b16 %v6472
    %v6643 = vunpack.c.h.b16 %v6472
    %v6644 = vunpack.c.l.b16 %v6473
    %v6645 = vunpack.c.h.b16 %v6473
    %v6646 = vunpack.c.l.b16 %v6474
    %v6647 = vunpack.c.h.b16 %v6474
    %v6648 = vunpack.c.l.b16 %v6475
    %v6649 = vunpack.c.h.b16 %v6475
    %v6650 = vunpack.c.l.b16 %v6476
    %v6651 = vunpack.c.h.b16 %v6476
    %v6652 = vunpack.c.l.b16 %v6477
    %v6653 = vunpack.c.h.b16 %v6477
    %v6654 = vunpack.c.l.b16 %v6478
    %v6655 = vunpack.c.h.b16 %v6478
    %v6656 = vunpack.c.l.b16 %v6479
    %v6657 = vunpack.c.h.b16 %v6479
    %v6658 = vunpack.c.l.b16 %v6480
    %v6659 = vunpack.c.h.b16 %v6480
    %v6660 = vunpack.c.l.b16 %v6481
    %v6661 = vunpack.c.h.b16 %v6481
    %v6662 = vunpack.c.l.b16 %v6482
    %v6663 = vunpack.c.h.b16 %v6482
    %v6664 = vunpack.c.l.b16 %v6483
    %v6665 = vunpack.c.h.b16 %v6483
    %v6666 = vunpack.c.l.b16 %v6484
    %v6667 = vunpack.c.h.b16 %v6484
    %v6668 = vunpack.c.l.b16 %v6485
    %v6669 = vunpack.c.h.b16 %v6485
    %v6670 = vunpack.c.l.b16 %v6486
    %v6671 = vunpack.c.h.b16 %v6486
    %v6672 = vunpack.c.l.b16 %v6487
    %v6673 = vunpack.c.h.b16 %v6487
    %v6674 = vunpack.c.l.b16 %v6488
    %v6675 = vunpack.c.h.b16 %v6488
    %v6676 = vunpack.c.l.b16 %v6489
    %v6677 = vunpack.c.h.b16 %v6489
    %v6678 = vunpack.c.l.b16 %v6490
    %v6679 = vunpack.c.h.b16 %v6490
    %v6680 = vunpack.c.l.b16 %v6491
    %v6681 = vunpack.c.h.b16 %v6491
    %v6682 = vunpack.c.l.b16 %v6492
    %v6683 = vunpack.c.h.b16 %v6492
    %v6684 = vunpack.c.l.b16 %v6493
    %v6685 = vunpack.c.h.b16 %v6493
    %v6686 = vunpack.c.l.b16 %v6494
    %v6687 = vunpack.c.h.b16 %v6494
    %v6688 = vunpack.c.l.b16 %v6495
    %v6689 = vunpack.c.h.b16 %v6495
    %v6690 = vunpack.c.l.b16 %v6496
    %v6691 = vunpack.c.h.b16 %v6496
    %v6692 = vunpack.c.l.b16 %v6497
    %v6693 = vunpack.c.h.b16 %v6497
    %v6694 = vunpack.c.l.b16 %v6498
    %v6695 = vunpack.c.h.b16 %v6498
    %v6696 = vunpack.c.l.b16 %v6499
    %v6697 = vunpack.c.h.b16 %v6499
    %v6698 = vunpack.c.l.b16 %v6500
    %v6699 = vunpack.c.h.b16 %v6500
    %v6700 = vunpack.c.l.b16 %v6501
    %v6701 = vunpack.c.h.b16 %v6501
    %v6702 = vunpack.c.l.b16 %v6502
    %v6703 = vunpack.c.h.b16 %v6502
    %v6704 = vunpack.c.l.b16 %v6503
    %v6705 = vunpack.c.h.b16 %v6503
    %v6706 = vunpack.c.l.b16 %v6504
    %v6707 = vunpack.c.h.b16 %v6504
    %v6708 = vunpack.c.l.b16 %v6505
    %v6709 = vunpack.c.h.b16 %v6505
    %v6710 = vunpack.c.l.b16 %v6506
    %v6711 = vunpack.c.h.b16 %v6506
    %v6712 = vunpack.c.l.b16 %v6507
    %v6713 = vunpack.c.h.b16 %v6507
    %v6714 = vunpack.c.l.b16 %v6508
    %v6715 = vunpack.c.h.b16 %v6508
    %v6716 = vunpack.c.l.b16 %v6509
    %v6717 = vunpack.c.h.b16 %v6509
    %v6718 = vunpack.c.l.b16 %v6510
    %v6719 = vunpack.c.h.b16 %v6510
    %v6720 = vunpack.c.l.b16 %v6511
    %v6721 = vunpack.c.h.b16 %v6511
    %v6722 = vunpack.c.l.b16 %v6512
    %v6723 = vunpack.c.h.b16 %v6512
    %v6724 = vunpack.c.l.b16 %v6513
    %v6725 = vunpack.c.h.b16 %v6513
    %v6726 = vunpack.c.l.b16 %v6514
    %v6727 = vunpack.c.h.b16 %v6514
    %v6728 = vunpack.c.l.b16 %v6515
    %v6729 = vunpack.c.h.b16 %v6515
    %v6730 = vunpack.c.l.b16 %v6516
    %v6731 = vunpack.c.h.b16 %v6516
    %v6732 = vunpack.c.l.b16 %v6517
    %v6733 = vunpack.c.h.b16 %v6517
    %v6734 = vpack.c.b16 %v6610, %v6606
    %v6735 = vpack.c.b16 %v6611, %v6607
    %v6736 = vpack.c.b16 %v6612, %v6608
    %v6737 = vpack.c.b16 %v6613, %v6609
    %v6738 = vpack.c.b16 %v6618, %v6614
    %v6739 = vpack.c.b16 %v6619, %v6615
    %v6740 = vpack.c.b16 %v6620, %v6616
    %v6741 = vpack.c.b16 %v6621, %v6617
    %v6742 = vpack.c.b16 %v6626, %v6622
    %v6743 = vpack.c.b16 %v6627, %v6623
    %v6744 = vpack.c.b16 %v6628, %v6624
    %v6745 = vpack.c.b16 %v6629, %v6625
    %v6746 = vpack.c.b16 %v6634, %v6630
    %v6747 = vpack.c.b16 %v6635, %v6631
    %v6748 = vpack.c.b16 %v6636, %v6632
    %v6749 = vpack.c.b16 %v6637, %v6633
    %v6750 = vpack.c.b16 %v6642, %v6638
    %v6751 = vpack.c.b16 %v6643, %v6639
    %v6752 = vpack.c.b16 %v6644, %v6640
    %v6753 = vpack.c.b16 %v6645, %v6641
    %v6754 = vpack.c.b16 %v6650, %v6646
    %v6755 = vpack.c.b16 %v6651, %v6647
    %v6756 = vpack.c.b16 %v6652, %v6648
    %v6757 = vpack.c.b16 %v6653, %v6649
    %v6758 = vpack.c.b16 %v6658, %v6654
    %v6759 = vpack.c.b16 %v6659, %v6655
    %v6760 = vpack.c.b16 %v6660, %v6656
    %v6761 = vpack.c.b16 %v6661, %v6657
    %v6762 = vpack.c.b16 %v6666, %v6662
    %v6763 = vpack.c.b16 %v6667, %v6663
    %v6764 = vpack.c.b16 %v6668, %v6664
    %v6765 = vpack.c.b16 %v6669, %v6665
    %v6766 = vpack.c.b16 %v6674, %v6670
    %v6767 = vpack.c.b16 %v6675, %v6671
    %v6768 = vpack.c.b16 %v6676, %v6672
    %v6769 = vpack.c.b16 %v6677, %v6673
    %v6770 = vpack.c.b16 %v6682, %v6678
    %v6771 = vpack.c.b16 %v6683, %v6679
    %v6772 = vpack.c.b16 %v6684, %v6680
    %v6773 = vpack.c.b16 %v6685, %v6681
    %v6774 = vpack.c.b16 %v6690, %v6686
    %v6775 = vpack.c.b16 %v6691, %v6687
    %v6776 = vpack.c.b16 %v6692, %v6688
    %v6777 = vpack.c.b16 %v6693, %v6689
    %v6778 = vpack.c.b16 %v6698, %v6694
    %v6779 = vpack.c.b16 %v6699, %v6695
    %v6780 = vpack.c.b16 %v6700, %v6696
    %v6781 = vpack.c.b16 %v6701, %v6697
    %v6782 = vpack.c.b16 %v6706, %v6702
    %v6783 = vpack.c.b16 %v6707, %v6703
    %v6784 = vpack.c.b16 %v6708, %v6704
    %v6785 = vpack.c.b16 %v6709, %v6705
    %v6786 = vpack.c.b16 %v6714, %v6710
    %v6787 = vpack.c.b16 %v6715, %v6711
    %v6788 = vpack.c.b16 %v6716, %v6712
    %v6789 = vpack.c.b16 %v6717, %v6713
    %v6790 = vpack.c.b16 %v6722, %v6718
    %v6791 = vpack.c.b16 %v6723, %v6719
    %v6792 = vpack.c.b16 %v6724, %v6720
    %v6793 = vpack.c.b16 %v6725, %v6721
    %v6794 = vpack.c.b16 %v6730, %v6726
    %v6795 = vpack.c.b16 %v6731, %v6727
    %v6796 = vpack.c.b16 %v6732, %v6728
    %v6797 = vpack.c.b16 %v6733, %v6729
    %6862 = vmatprep.subr.bf16.mxu0 %v6763
    %6863 = vmatpush1.bf16.msra.mxu0 %v6762
    %6864 = vmatprep.subr.bf16.mxu0 %v6759
    %6865 = vmatpush1.bf16.msra.mxu0 %v6758
    %6866 = vmatprep.subr.bf16.mxu0 %v6755
    %6867 = vmatpush1.bf16.msra.mxu0 %v6754
    %6868 = vmatprep.subr.bf16.mxu0 %v6751
    %6869 = vmatpush1.bf16.msra.mxu0 %v6750
    %6870 = vmatprep.subr.bf16.mxu0 %v6747
    %6871 = vmatpush1.bf16.msra.mxu0 %v6746
    %6872 = vmatprep.subr.bf16.mxu0 %v6743
    %6873 = vmatpush1.bf16.msra.mxu0 %v6742
    %6874 = vmatprep.subr.bf16.mxu0 %v6739
    %6875 = vmatpush1.bf16.msra.mxu0 %v6738
    %6876 = vmatprep.subr.bf16.mxu0 %v6735
    %6877 = vmatpush1.bf16.msra.mxu0 %v6734
    %6878 = vmatprep.subr.bf16.mxu0 %v6795
    %6879 = vmatpush2.bf16.msra.mxu0 %v6794
    %6880 = vmatprep.subr.bf16.mxu0 %v6791
    %6881 = vmatpush2.bf16.msra.mxu0 %v6790
    %6882 = vmatprep.subr.bf16.mxu0 %v6787
    %6883 = vmatpush2.bf16.msra.mxu0 %v6786
    %6884 = vmatprep.subr.bf16.mxu0 %v6783
    %6885 = vmatpush2.bf16.msra.mxu0 %v6782
    %6886 = vmatprep.subr.bf16.mxu0 %v6779
    %6887 = vmatpush2.bf16.msra.mxu0 %v6778
    %6888 = vmatprep.subr.bf16.mxu0 %v6775
    %6889 = vmatpush2.bf16.msra.mxu0 %v6774
    %6890 = vmatprep.subr.bf16.mxu0 %v6771
    %6891 = vmatpush2.bf16.msra.mxu0 %v6770
    %6892 = vmatprep.subr.bf16.mxu0 %v6767
    %6893 = vmatpush2.bf16.msra.mxu0 %v6766
    %6894 = vmatprep.mubr.bf16.mxu0 %v6519
    %6895 = vmatmul.mubr.bf16.gmra.mxu0 %v6518
    %v6896 = vpop.f32.mrf.mxu0
    %v6897 = vadd.f32 %v6525, %v6896
    %v6898 = vpop.f32.mrf.mxu0
    %v6899 = vadd.f32 %v6529, %v6898
    %v6900 = vpop.f32.mrf.mxu0
    %v6901 = vadd.f32 %v6525, %v6900
    %v6902 = vpop.f32.mrf.mxu0
    %v6903 = vadd.f32 %v6529, %v6902
    %6904 = vdwg.mxu0
    %6905 = vmatprep.subr.bf16.mxu0 %v6765
    %6906 = vmatpush1.bf16.msra.mxu0 %v6764
    %6907 = vmatprep.subr.bf16.mxu0 %v6761
    %6908 = vmatpush1.bf16.msra.mxu0 %v6760
    %6909 = vmatprep.subr.bf16.mxu0 %v6757
    %6910 = vmatpush1.bf16.msra.mxu0 %v6756
    %6911 = vmatprep.subr.bf16.mxu0 %v6753
    %6912 = vmatpush1.bf16.msra.mxu0 %v6752
    %6913 = vmatprep.subr.bf16.mxu0 %v6749
    %6914 = vmatpush1.bf16.msra.mxu0 %v6748
    %6915 = vmatprep.subr.bf16.mxu0 %v6745
    %6916 = vmatpush1.bf16.msra.mxu0 %v6744
    %6917 = vmatprep.subr.bf16.mxu0 %v6741
    %6918 = vmatpush1.bf16.msra.mxu0 %v6740
    %6919 = vmatprep.subr.bf16.mxu0 %v6737
    %6920 = vmatpush1.bf16.msra.mxu0 %v6736
    %6921 = vmatprep.subr.bf16.mxu0 %v6797
    %6922 = vmatpush2.bf16.msra.mxu0 %v6796
    %6923 = vmatprep.subr.bf16.mxu0 %v6793
    %6924 = vmatpush2.bf16.msra.mxu0 %v6792
    %6925 = vmatprep.subr.bf16.mxu0 %v6789
    %6926 = vmatpush2.bf16.msra.mxu0 %v6788
    %6927 = vmatprep.subr.bf16.mxu0 %v6785
    %6928 = vmatpush2.bf16.msra.mxu0 %v6784
    %6929 = vmatprep.subr.bf16.mxu0 %v6781
    %6930 = vmatpush2.bf16.msra.mxu0 %v6780
    %6931 = vmatprep.subr.bf16.mxu0 %v6777
    %6932 = vmatpush2.bf16.msra.mxu0 %v6776
    %6933 = vmatprep.subr.bf16.mxu0 %v6773
    %6934 = vmatpush2.bf16.msra.mxu0 %v6772
    %6935 = vmatprep.subr.bf16.mxu0 %v6769
    %6936 = vmatpush2.bf16.msra.mxu0 %v6768
    %6937 = vmatprep.mubr.bf16.mxu0 %v6519
    %6938 = vmatmul.mubr.bf16.gmra.mxu0 %v6518
    %v6939 = vpop.f32.mrf.mxu0
    %v6940 = vadd.f32 %v6533, %v6939
    %v6941 = vpop.f32.mrf.mxu0
    %v6942 = vadd.f32 %v6537, %v6941
    %v6943 = vpop.f32.mrf.mxu0
    %v6944 = vadd.f32 %v6533, %v6943
    %v6945 = vpop.f32.mrf.mxu0
    %v6946 = vadd.f32 %v6537, %v6945
    %6947 = vdwg.mxu0
    %6948 = vst [vmem:[#allocation4] sm:$0xff] %v6897
    %6949 = vst [vmem:[#allocation4 + $0x8] sm:$0xff] %v6899
    %6950 = vst [vmem:[#allocation4 + $0x10] sm:$0xff] %v6940
    %6951 = vst [vmem:[#allocation4 + $0x18] sm:$0xff] %v6942
    %6952 = vst [vmem:[#allocation4 + $0x20] sm:$0xff] %v6901
    %6953 = vst [vmem:[#allocation4 + $0x28] sm:$0xff] %v6903
    %6954 = vst [vmem:[#allocation4 + $0x30] sm:$0xff] %v6944
    %6955 = vst [vmem:[#allocation4 + $0x38] sm:$0xff] %v6946
    %v6956 = vld [vmem:[#allocation4] sm:$0x3]
    %v6957 = vld [vmem:[#allocation4 + $0x8] sm:$0x3]
    %v6958 = vld [vmem:[#allocation4 + $0x10] sm:$0x3]
    %v6959 = vld [vmem:[#allocation4 + $0x18] sm:$0x3]
    %v6960 = vld [vmem:[%s8] sm:$0xff]
    %v6961 = vld [vmem:[%s8 + $0x8] sm:$0xff]
    %v6962 = vld [vmem:[%s8 + $0x10] sm:$0xff]
    %v6963 = vld [vmem:[%s8 + $0x18] sm:$0xff]
    %v6964 = vld [vmem:[%s8 + $0x20] sm:$0xff]
    %v6965 = vld [vmem:[%s8 + $0x28] sm:$0xff]
    %v6966 = vld [vmem:[%s8 + $0x30] sm:$0xff]
    %v6967 = vld [vmem:[%s8 + $0x38] sm:$0xff]
    %v6968 = vld [vmem:[%s8 + $0x40] sm:$0xff]
    %v6969 = vld [vmem:[%s8 + $0x48] sm:$0xff]
    %v6970 = vld [vmem:[%s8 + $0x50] sm:$0xff]
    %v6971 = vld [vmem:[%s8 + $0x58] sm:$0xff]
    %v6972 = vld [vmem:[%s8 + $0x60] sm:$0xff]
    %v6973 = vld [vmem:[%s8 + $0x68] sm:$0xff]
    %v6974 = vld [vmem:[%s8 + $0x70] sm:$0xff]
    %v6975 = vld [vmem:[%s8 + $0x78] sm:$0xff]
    %v6976 = vld [vmem:[%s8 + $0x80] sm:$0xff]
    %v6977 = vld [vmem:[%s8 + $0x88] sm:$0xff]
    %v6978 = vld [vmem:[%s8 + $0x90] sm:$0xff]
    %v6979 = vld [vmem:[%s8 + $0x98] sm:$0xff]
    %v6980 = vld [vmem:[%s8 + $0xa0] sm:$0xff]
    %v6981 = vld [vmem:[%s8 + $0xa8] sm:$0xff]
    %v6982 = vld [vmem:[%s8 + $0xb0] sm:$0xff]
    %v6983 = vld [vmem:[%s8 + $0xb8] sm:$0xff]
    %v6984 = vld [vmem:[%s8 + $0xc0] sm:$0xff]
    %v6985 = vld [vmem:[%s8 + $0xc8] sm:$0xff]
    %v6986 = vld [vmem:[%s8 + $0xd0] sm:$0xff]
    %v6987 = vld [vmem:[%s8 + $0xd8] sm:$0xff]
    %v6988 = vld [vmem:[%s8 + $0xe0] sm:$0xff]
    %v6989 = vld [vmem:[%s8 + $0xe8] sm:$0xff]
    %v6990 = vld [vmem:[%s8 + $0xf0] sm:$0xff]
    %v6991 = vld [vmem:[%s8 + $0xf8] sm:$0xff]
    %v7024 = vunpack.c.l.b16 %v6960
    %v7025 = vunpack.c.h.b16 %v6960
    %v7026 = vunpack.c.l.b16 %v6961
    %v7027 = vunpack.c.h.b16 %v6961
    %v7028 = vunpack.c.l.b16 %v6962
    %v7029 = vunpack.c.h.b16 %v6962
    %v7030 = vunpack.c.l.b16 %v6963
    %v7031 = vunpack.c.h.b16 %v6963
    %v7032 = vunpack.c.l.b16 %v6964
    %v7033 = vunpack.c.h.b16 %v6964
    %v7034 = vunpack.c.l.b16 %v6965
    %v7035 = vunpack.c.h.b16 %v6965
    %v7036 = vunpack.c.l.b16 %v6966
    %v7037 = vunpack.c.h.b16 %v6966
    %v7038 = vunpack.c.l.b16 %v6967
    %v7039 = vunpack.c.h.b16 %v6967
    %v7040 = vunpack.c.l.b16 %v6968
    %v7041 = vunpack.c.h.b16 %v6968
    %v7042 = vunpack.c.l.b16 %v6969
    %v7043 = vunpack.c.h.b16 %v6969
    %v7044 = vunpack.c.l.b16 %v6970
    %v7045 = vunpack.c.h.b16 %v6970
    %v7046 = vunpack.c.l.b16 %v6971
    %v7047 = vunpack.c.h.b16 %v6971
    %v7048 = vunpack.c.l.b16 %v6972
    %v7049 = vunpack.c.h.b16 %v6972
    %v7050 = vunpack.c.l.b16 %v6973
    %v7051 = vunpack.c.h.b16 %v6973
    %v7052 = vunpack.c.l.b16 %v6974
    %v7053 = vunpack.c.h.b16 %v6974
    %v7054 = vunpack.c.l.b16 %v6975
    %v7055 = vunpack.c.h.b16 %v6975
    %v7056 = vunpack.c.l.b16 %v6976
    %v7057 = vunpack.c.h.b16 %v6976
    %v7058 = vunpack.c.l.b16 %v6977
    %v7059 = vunpack.c.h.b16 %v6977
    %v7060 = vunpack.c.l.b16 %v6978
    %v7061 = vunpack.c.h.b16 %v6978
    %v7062 = vunpack.c.l.b16 %v6979
    %v7063 = vunpack.c.h.b16 %v6979
    %v7064 = vunpack.c.l.b16 %v6980
    %v7065 = vunpack.c.h.b16 %v6980
    %v7066 = vunpack.c.l.b16 %v6981
    %v7067 = vunpack.c.h.b16 %v6981
    %v7068 = vunpack.c.l.b16 %v6982
    %v7069 = vunpack.c.h.b16 %v6982
    %v7070 = vunpack.c.l.b16 %v6983
    %v7071 = vunpack.c.h.b16 %v6983
    %v7072 = vunpack.c.l.b16 %v6984
    %v7073 = vunpack.c.h.b16 %v6984
    %v7074 = vunpack.c.l.b16 %v6985
    %v7075 = vunpack.c.h.b16 %v6985
    %v7076 = vunpack.c.l.b16 %v6986
    %v7077 = vunpack.c.h.b16 %v6986
    %v7078 = vunpack.c.l.b16 %v6987
    %v7079 = vunpack.c.h.b16 %v6987
    %v7080 = vunpack.c.l.b16 %v6988
    %v7081 = vunpack.c.h.b16 %v6988
    %v7082 = vunpack.c.l.b16 %v6989
    %v7083 = vunpack.c.h.b16 %v6989
    %v7084 = vunpack.c.l.b16 %v6990
    %v7085 = vunpack.c.h.b16 %v6990
    %v7086 = vunpack.c.l.b16 %v6991
    %v7087 = vunpack.c.h.b16 %v6991
    %v7088 = vpack.c.b16 %v7028, %v7024
    %v7089 = vpack.c.b16 %v7029, %v7025
    %v7090 = vpack.c.b16 %v7030, %v7026
    %v7091 = vpack.c.b16 %v7031, %v7027
    %v7092 = vpack.c.b16 %v7036, %v7032
    %v7093 = vpack.c.b16 %v7037, %v7033
    %v7094 = vpack.c.b16 %v7038, %v7034
    %v7095 = vpack.c.b16 %v7039, %v7035
    %v7096 = vpack.c.b16 %v7044, %v7040
    %v7097 = vpack.c.b16 %v7045, %v7041
    %v7098 = vpack.c.b16 %v7046, %v7042
    %v7099 = vpack.c.b16 %v7047, %v7043
    %v7100 = vpack.c.b16 %v7052, %v7048
    %v7101 = vpack.c.b16 %v7053, %v7049
    %v7102 = vpack.c.b16 %v7054, %v7050
    %v7103 = vpack.c.b16 %v7055, %v7051
    %v7104 = vpack.c.b16 %v7060, %v7056
    %v7105 = vpack.c.b16 %v7061, %v7057
    %v7106 = vpack.c.b16 %v7062, %v7058
    %v7107 = vpack.c.b16 %v7063, %v7059
    %v7108 = vpack.c.b16 %v7068, %v7064
    %v7109 = vpack.c.b16 %v7069, %v7065
    %v7110 = vpack.c.b16 %v7070, %v7066
    %v7111 = vpack.c.b16 %v7071, %v7067
    %v7112 = vpack.c.b16 %v7076, %v7072
    %v7113 = vpack.c.b16 %v7077, %v7073
    %v7114 = vpack.c.b16 %v7078, %v7074
    %v7115 = vpack.c.b16 %v7079, %v7075
    %v7116 = vpack.c.b16 %v7084, %v7080
    %v7117 = vpack.c.b16 %v7085, %v7081
    %v7118 = vpack.c.b16 %v7086, %v7082
    %v7119 = vpack.c.b16 %v7087, %v7083
    %7152 = vmatprep.subr.bf16.mxu0 %v7117
    %7153 = vmatpush1.bf16.msra.mxu0 %v7116
    %7154 = vmatprep.subr.bf16.mxu0 %v7113
    %7155 = vmatpush1.bf16.msra.mxu0 %v7112
    %7156 = vmatprep.subr.bf16.mxu0 %v7109
    %7157 = vmatpush1.bf16.msra.mxu0 %v7108
    %7158 = vmatprep.subr.bf16.mxu0 %v7105
    %7159 = vmatpush1.bf16.msra.mxu0 %v7104
    %7160 = vmatprep.subr.bf16.mxu0 %v7101
    %7161 = vmatpush1.bf16.msra.mxu0 %v7100
    %7162 = vmatprep.subr.bf16.mxu0 %v7097
    %7163 = vmatpush1.bf16.msra.mxu0 %v7096
    %7164 = vmatprep.subr.bf16.mxu0 %v7093
    %7165 = vmatpush1.bf16.msra.mxu0 %v7092
    %7166 = vmatprep.subr.bf16.mxu0 %v7089
    %7167 = vmatpush1.bf16.msra.mxu0 %v7088
    %7168 = vmatprep.subr.bf16.mxu0 0
    %7169 = vmatpush2.bf16.msra.mxu0 0
    %7170 = vmatprep.subr.bf16.mxu0 0
    %7171 = vmatpush2.bf16.msra.mxu0 0
    %7172 = vmatprep.subr.bf16.mxu0 0
    %7173 = vmatpush2.bf16.msra.mxu0 0
    %7174 = vmatprep.subr.bf16.mxu0 0
    %7175 = vmatpush2.bf16.msra.mxu0 0
    %7176 = vmatprep.subr.bf16.mxu0 0
    %7177 = vmatpush2.bf16.msra.mxu0 0
    %7178 = vmatprep.subr.bf16.mxu0 0
    %7179 = vmatpush2.bf16.msra.mxu0 0
    %7180 = vmatprep.subr.bf16.mxu0 0
    %7181 = vmatpush2.bf16.msra.mxu0 0
    %7182 = vmatprep.subr.bf16.mxu0 0
    %7183 = vmatpush2.bf16.msra.mxu0 0
    %7184 = vmatprep.mubr.bf16.mxu0 0
    %7185 = vmatmul.mubr.bf16.gmra.mxu0 0
    %v7186 = vpop.f32.mrf.mxu0
    %v7187 = vadd.f32 0.0, %v7186
    %v7188 = vpop.f32.mrf.mxu0
    %v7189 = vadd.f32 0.0, %v7188
    %v7190 = vpop.f32.mrf.mxu0
    %v7191 = vpop.f32.mrf.mxu0
    %7192 = vdwg.mxu0
    %7193 = vmatprep.subr.bf16.mxu0 %v7119
    %7194 = vmatpush1.bf16.msra.mxu0 %v7118
    %7195 = vmatprep.subr.bf16.mxu0 %v7115
    %7196 = vmatpush1.bf16.msra.mxu0 %v7114
    %7197 = vmatprep.subr.bf16.mxu0 %v7111
    %7198 = vmatpush1.bf16.msra.mxu0 %v7110
    %7199 = vmatprep.subr.bf16.mxu0 %v7107
    %7200 = vmatpush1.bf16.msra.mxu0 %v7106
    %7201 = vmatprep.subr.bf16.mxu0 %v7103
    %7202 = vmatpush1.bf16.msra.mxu0 %v7102
    %7203 = vmatprep.subr.bf16.mxu0 %v7099
    %7204 = vmatpush1.bf16.msra.mxu0 %v7098
    %7205 = vmatprep.subr.bf16.mxu0 %v7095
    %7206 = vmatpush1.bf16.msra.mxu0 %v7094
    %7207 = vmatprep.subr.bf16.mxu0 %v7091
    %7208 = vmatpush1.bf16.msra.mxu0 %v7090
    %7209 = vmatprep.subr.bf16.mxu0 0
    %7210 = vmatpush2.bf16.msra.mxu0 0
    %7211 = vmatprep.subr.bf16.mxu0 0
    %7212 = vmatpush2.bf16.msra.mxu0 0
    %7213 = vmatprep.subr.bf16.mxu0 0
    %7214 = vmatpush2.bf16.msra.mxu0 0
    %7215 = vmatprep.subr.bf16.mxu0 0
    %7216 = vmatpush2.bf16.msra.mxu0 0
    %7217 = vmatprep.subr.bf16.mxu0 0
    %7218 = vmatpush2.bf16.msra.mxu0 0
    %7219 = vmatprep.subr.bf16.mxu0 0
    %7220 = vmatpush2.bf16.msra.mxu0 0
    %7221 = vmatprep.subr.bf16.mxu0 0
    %7222 = vmatpush2.bf16.msra.mxu0 0
    %7223 = vmatprep.subr.bf16.mxu0 0
    %7224 = vmatpush2.bf16.msra.mxu0 0
    %7225 = vmatprep.mubr.bf16.mxu0 0
    %7226 = vmatmul.mubr.bf16.gmra.mxu0 0
    %v7227 = vpop.f32.mrf.mxu0
    %v7228 = vadd.f32 0.0, %v7227
    %v7229 = vpop.f32.mrf.mxu0
    %v7230 = vadd.f32 0.0, %v7229
    %v7231 = vpop.f32.mrf.mxu0
    %v7232 = vpop.f32.mrf.mxu0
    %7233 = vdwg.mxu0
    %v7234 = vadd.f32 %v6956, %v7187
    %v7235 = vadd.f32 %v6957, %v7189
    %v7236 = vadd.f32 %v6958, %v7228
    %v7237 = vadd.f32 %v6959, %v7230
    %v7238 = vmul.f32 %v7234, 0.5
    %v7239 = vtanh.pop %v7238
    %v7240 = vmul.f32 %v7239, 0.5
    %v7241 = vadd.f32 %v7240, 0.5
    %v7242 = vmul.f32 %v7235, 0.5
    %v7243 = vtanh.pop %v7242
    %v7244 = vmul.f32 %v7243, 0.5
    %v7245 = vadd.f32 %v7244, 0.5
    %v7246 = vtanh.pop %v7236
    %v7247 = vmul.f32 %v7237, 0.5
    %v7248 = vtanh.pop %v7247
    %v7249 = vmul.f32 %v7248, 0.5
    %v7250 = vadd.f32 %v7249, 0.5
    %v7251 = vmul.f32 %v7245, 0.0
    %v7252 = vmul.f32 %v7241, %v7246
    %v7253 = vadd.f32 %v7251, %v7252
    %v7254 = vtanh.pop %v7253
    %v7255 = vmul.f32 %v7250, %v7254
    %v7256 = vld [vmem:[#allocation4] sm:$0xc]
    %v7257 = vld [vmem:[#allocation4 + $0x8] sm:$0xc]
    %v7258 = vld [vmem:[#allocation4 + $0x10] sm:$0xc]
    %v7259 = vld [vmem:[#allocation4 + $0x18] sm:$0xc]
    %v7260 = vpack.c.bf16 %v7255, %v7255
    %7261 = vmatprep.subr.bf16.mxu0 %v7117
    %7262 = vmatpush1.bf16.msra.mxu0 %v7116
    %7263 = vmatprep.subr.bf16.mxu0 %v7113
    %7264 = vmatpush1.bf16.msra.mxu0 %v7112
    %7265 = vmatprep.subr.bf16.mxu0 %v7109
    %7266 = vmatpush1.bf16.msra.mxu0 %v7108
    %7267 = vmatprep.subr.bf16.mxu0 %v7105
    %7268 = vmatpush1.bf16.msra.mxu0 %v7104
    %7269 = vmatprep.subr.bf16.mxu0 %v7101
    %7270 = vmatpush1.bf16.msra.mxu0 %v7100
    %7271 = vmatprep.subr.bf16.mxu0 %v7097
    %7272 = vmatpush1.bf16.msra.mxu0 %v7096
    %7273 = vmatprep.subr.bf16.mxu0 %v7093
    %7274 = vmatpush1.bf16.msra.mxu0 %v7092
    %7275 = vmatprep.subr.bf16.mxu0 %v7089
    %7276 = vmatpush1.bf16.msra.mxu0 %v7088
    %7277 = vmatprep.subr.bf16.mxu0 0
    %7278 = vmatpush2.bf16.msra.mxu0 0
    %7279 = vmatprep.subr.bf16.mxu0 0
    %7280 = vmatpush2.bf16.msra.mxu0 0
    %7281 = vmatprep.subr.bf16.mxu0 0
    %7282 = vmatpush2.bf16.msra.mxu0 0
    %7283 = vmatprep.subr.bf16.mxu0 0
    %7284 = vmatpush2.bf16.msra.mxu0 0
    %7285 = vmatprep.subr.bf16.mxu0 0
    %7286 = vmatpush2.bf16.msra.mxu0 0
    %7287 = vmatprep.subr.bf16.mxu0 0
    %7288 = vmatpush2.bf16.msra.mxu0 0
    %7289 = vmatprep.subr.bf16.mxu0 0
    %7290 = vmatpush2.bf16.msra.mxu0 0
    %7291 = vmatprep.subr.bf16.mxu0 0
    %7292 = vmatpush2.bf16.msra.mxu0 0
    %7293 = vmatprep.mubr.bf16.mxu0 0
    %7294 = vmatmul.mubr.bf16.gmra.mxu0 %v7260
    %v7295 = vpop.f32.mrf.mxu0
    %v7296 = vadd.f32 0.0, %v7295
    %v7297 = vpop.f32.mrf.mxu0
    %v7298 = vadd.f32 0.0, %v7297
    %v7299 = vpop.f32.mrf.mxu0
    %v7300 = vpop.f32.mrf.mxu0
    %7301 = vdwg.mxu0
    %7302 = vmatprep.subr.bf16.mxu0 %v7119
    %7303 = vmatpush1.bf16.msra.mxu0 %v7118
    %7304 = vmatprep.subr.bf16.mxu0 %v7115
    %7305 = vmatpush1.bf16.msra.mxu0 %v7114
    %7306 = vmatprep.subr.bf16.mxu0 %v7111
    %7307 = vmatpush1.bf16.msra.mxu0 %v7110
    %7308 = vmatprep.subr.bf16.mxu0 %v7107
    %7309 = vmatpush1.bf16.msra.mxu0 %v7106
    %7310 = vmatprep.subr.bf16.mxu0 %v7103
    %7311 = vmatpush1.bf16.msra.mxu0 %v7102
    %7312 = vmatprep.subr.bf16.mxu0 %v7099
    %7313 = vmatpush1.bf16.msra.mxu0 %v7098
    %7314 = vmatprep.subr.bf16.mxu0 %v7095
    %7315 = vmatpush1.bf16.msra.mxu0 %v7094
    %7316 = vmatprep.subr.bf16.mxu0 %v7091
    %7317 = vmatpush1.bf16.msra.mxu0 %v7090
    %7318 = vmatprep.subr.bf16.mxu0 0
    %7319 = vmatpush2.bf16.msra.mxu0 0
    %7320 = vmatprep.subr.bf16.mxu0 0
    %7321 = vmatpush2.bf16.msra.mxu0 0
    %7322 = vmatprep.subr.bf16.mxu0 0
    %7323 = vmatpush2.bf16.msra.mxu0 0
    %7324 = vmatprep.subr.bf16.mxu0 0
    %7325 = vmatpush2.bf16.msra.mxu0 0
    %7326 = vmatprep.subr.bf16.mxu0 0
    %7327 = vmatpush2.bf16.msra.mxu0 0
    %7328 = vmatprep.subr.bf16.mxu0 0
    %7329 = vmatpush2.bf16.msra.mxu0 0
    %7330 = vmatprep.subr.bf16.mxu0 0
    %7331 = vmatpush2.bf16.msra.mxu0 0
    %7332 = vmatprep.subr.bf16.mxu0 0
    %7333 = vmatpush2.bf16.msra.mxu0 0
    %7334 = vmatprep.mubr.bf16.mxu0 0
    %7335 = vmatmul.mubr.bf16.gmra.mxu0 %v7260
    %v7336 = vpop.f32.mrf.mxu0
    %v7337 = vadd.f32 0.0, %v7336
    %v7338 = vpop.f32.mrf.mxu0
    %v7339 = vadd.f32 0.0, %v7338
    %v7340 = vpop.f32.mrf.mxu0
    %v7341 = vpop.f32.mrf.mxu0
    %7342 = vdwg.mxu0
    %v7347 = vrot.slane %v7296, 6
    %v7348 = vrot.slane %v7298, 6
    %v7349 = vrot.slane %v7337, 6
    %v7350 = vrot.slane %v7339, 6
    %v7355 = vadd.f32 %v7256, %v7347
    %v7356 = vadd.f32 %v7257, %v7348
    %v7357 = vadd.f32 %v7258, %v7349
    %v7358 = vadd.f32 %v7259, %v7350
    %v7359 = vmul.f32 %v7355, 0.5
    %v7360 = vtanh.pop %v7359
    %v7361 = vmul.f32 %v7360, 0.5
    %v7362 = vadd.f32 %v7361, 0.5
    %v7363 = vmul.f32 %v7356, 0.5
    %v7364 = vtanh.pop %v7363
    %v7365 = vmul.f32 %v7364, 0.5
    %v7366 = vadd.f32 %v7365, 0.5
    %v7367 = vtanh.pop %v7357
    %v7368 = vmul.f32 %v7358, 0.5
    %v7369 = vtanh.pop %v7368
    %v7370 = vmul.f32 %v7369, 0.5
    %v7371 = vadd.f32 %v7370, 0.5
    %v7373 = vrot.slane %v7253, 6
    %v7375 = vmul.f32 %v7366, %v7373
    %v7376 = vmul.f32 %v7362, %v7367
    %v7377 = vadd.f32 %v7375, %v7376
    %v7378 = vtanh.pop %v7377
    %v7379 = vmul.f32 %v7371, %v7378
    %v7380 = vld [vmem:[#allocation4] sm:$0x30]
    %v7381 = vld [vmem:[#allocation4 + $0x8] sm:$0x30]
    %v7382 = vld [vmem:[#allocation4 + $0x10] sm:$0x30]
    %v7383 = vld [vmem:[#allocation4 + $0x18] sm:$0x30]
    %v7384 = vpack.c.bf16 %v7379, %v7379
    %v7386 = vrot.slane %v7384, 1
    %7388 = vmatprep.subr.bf16.mxu0 %v7117
    %7389 = vmatpush1.bf16.msra.mxu0 %v7116
    %7390 = vmatprep.subr.bf16.mxu0 %v7113
    %7391 = vmatpush1.bf16.msra.mxu0 %v7112
    %7392 = vmatprep.subr.bf16.mxu0 %v7109
    %7393 = vmatpush1.bf16.msra.mxu0 %v7108
    %7394 = vmatprep.subr.bf16.mxu0 %v7105
    %7395 = vmatpush1.bf16.msra.mxu0 %v7104
    %7396 = vmatprep.subr.bf16.mxu0 %v7101
    %7397 = vmatpush1.bf16.msra.mxu0 %v7100
    %7398 = vmatprep.subr.bf16.mxu0 %v7097
    %7399 = vmatpush1.bf16.msra.mxu0 %v7096
    %7400 = vmatprep.subr.bf16.mxu0 %v7093
    %7401 = vmatpush1.bf16.msra.mxu0 %v7092
    %7402 = vmatprep.subr.bf16.mxu0 %v7089
    %7403 = vmatpush1.bf16.msra.mxu0 %v7088
    %7404 = vmatprep.subr.bf16.mxu0 0
    %7405 = vmatpush2.bf16.msra.mxu0 0
    %7406 = vmatprep.subr.bf16.mxu0 0
    %7407 = vmatpush2.bf16.msra.mxu0 0
    %7408 = vmatprep.subr.bf16.mxu0 0
    %7409 = vmatpush2.bf16.msra.mxu0 0
    %7410 = vmatprep.subr.bf16.mxu0 0
    %7411 = vmatpush2.bf16.msra.mxu0 0
    %7412 = vmatprep.subr.bf16.mxu0 0
    %7413 = vmatpush2.bf16.msra.mxu0 0
    %7414 = vmatprep.subr.bf16.mxu0 0
    %7415 = vmatpush2.bf16.msra.mxu0 0
    %7416 = vmatprep.subr.bf16.mxu0 0
    %7417 = vmatpush2.bf16.msra.mxu0 0
    %7418 = vmatprep.subr.bf16.mxu0 0
    %7419 = vmatpush2.bf16.msra.mxu0 0
    %7420 = vmatprep.mubr.bf16.mxu0 0
    %7421 = vmatmul.mubr.bf16.gmra.mxu0 %v7386
    %v7422 = vpop.f32.mrf.mxu0
    %v7423 = vadd.f32 0.0, %v7422
    %v7424 = vpop.f32.mrf.mxu0
    %v7425 = vadd.f32 0.0, %v7424
    %v7426 = vpop.f32.mrf.mxu0
    %v7427 = vpop.f32.mrf.mxu0
    %7428 = vdwg.mxu0
    %7429 = vmatprep.subr.bf16.mxu0 %v7119
    %7430 = vmatpush1.bf16.msra.mxu0 %v7118
    %7431 = vmatprep.subr.bf16.mxu0 %v7115
    %7432 = vmatpush1.bf16.msra.mxu0 %v7114
    %7433 = vmatprep.subr.bf16.mxu0 %v7111
    %7434 = vmatpush1.bf16.msra.mxu0 %v7110
    %7435 = vmatprep.subr.bf16.mxu0 %v7107
    %7436 = vmatpush1.bf16.msra.mxu0 %v7106
    %7437 = vmatprep.subr.bf16.mxu0 %v7103
    %7438 = vmatpush1.bf16.msra.mxu0 %v7102
    %7439 = vmatprep.subr.bf16.mxu0 %v7099
    %7440 = vmatpush1.bf16.msra.mxu0 %v7098
    %7441 = vmatprep.subr.bf16.mxu0 %v7095
    %7442 = vmatpush1.bf16.msra.mxu0 %v7094
    %7443 = vmatprep.subr.bf16.mxu0 %v7091
    %7444 = vmatpush1.bf16.msra.mxu0 %v7090
    %7445 = vmatprep.subr.bf16.mxu0 0
    %7446 = vmatpush2.bf16.msra.mxu0 0
    %7447 = vmatprep.subr.bf16.mxu0 0
    %7448 = vmatpush2.bf16.msra.mxu0 0
    %7449 = vmatprep.subr.bf16.mxu0 0
    %7450 = vmatpush2.bf16.msra.mxu0 0
    %7451 = vmatprep.subr.bf16.mxu0 0
    %7452 = vmatpush2.bf16.msra.mxu0 0
    %7453 = vmatprep.subr.bf16.mxu0 0
    %7454 = vmatpush2.bf16.msra.mxu0 0
    %7455 = vmatprep.subr.bf16.mxu0 0
    %7456 = vmatpush2.bf16.msra.mxu0 0
    %7457 = vmatprep.subr.bf16.mxu0 0
    %7458 = vmatpush2.bf16.msra.mxu0 0
    %7459 = vmatprep.subr.bf16.mxu0 0
    %7460 = vmatpush2.bf16.msra.mxu0 0
    %7461 = vmatprep.mubr.bf16.mxu0 0
    %7462 = vmatmul.mubr.bf16.gmra.mxu0 %v7386
    %v7463 = vpop.f32.mrf.mxu0
    %v7464 = vadd.f32 0.0, %v7463
    %v7465 = vpop.f32.mrf.mxu0
    %v7466 = vadd.f32 0.0, %v7465
    %v7467 = vpop.f32.mrf.mxu0
    %v7468 = vpop.f32.mrf.mxu0
    %7469 = vdwg.mxu0
    %v7474 = vrot.slane %v7423, 4
    %v7475 = vrot.slane %v7425, 4
    %v7476 = vrot.slane %v7464, 4
    %v7477 = vrot.slane %v7466, 4
    %v7482 = vadd.f32 %v7380, %v7474
    %v7483 = vadd.f32 %v7381, %v7475
    %v7484 = vadd.f32 %v7382, %v7476
    %v7485 = vadd.f32 %v7383, %v7477
    %v7486 = vmul.f32 %v7482, 0.5
    %v7487 = vtanh.pop %v7486
    %v7488 = vmul.f32 %v7487, 0.5
    %v7489 = vadd.f32 %v7488, 0.5
    %v7490 = vmul.f32 %v7483, 0.5
    %v7491 = vtanh.pop %v7490
    %v7492 = vmul.f32 %v7491, 0.5
    %v7493 = vadd.f32 %v7492, 0.5
    %v7494 = vtanh.pop %v7484
    %v7495 = vmul.f32 %v7485, 0.5
    %v7496 = vtanh.pop %v7495
    %v7497 = vmul.f32 %v7496, 0.5
    %v7498 = vadd.f32 %v7497, 0.5
    %v7500 = vrot.slane %v7377, 6
    %v7502 = vmul.f32 %v7493, %v7500
    %v7503 = vmul.f32 %v7489, %v7494
    %v7504 = vadd.f32 %v7502, %v7503
    %v7505 = vtanh.pop %v7504
    %v7506 = vmul.f32 %v7498, %v7505
    %v7507 = vld [vmem:[#allocation4] sm:$0xc0]
    %v7508 = vld [vmem:[#allocation4 + $0x8] sm:$0xc0]
    %v7509 = vld [vmem:[#allocation4 + $0x10] sm:$0xc0]
    %v7510 = vld [vmem:[#allocation4 + $0x18] sm:$0xc0]
    %v7511 = vpack.c.bf16 %v7506, %v7506
    %v7513 = vrot.slane %v7511, 2
    %7515 = vmatprep.subr.bf16.mxu0 %v7117
    %7516 = vmatpush1.bf16.msra.mxu0 %v7116
    %7517 = vmatprep.subr.bf16.mxu0 %v7113
    %7518 = vmatpush1.bf16.msra.mxu0 %v7112
    %7519 = vmatprep.subr.bf16.mxu0 %v7109
    %7520 = vmatpush1.bf16.msra.mxu0 %v7108
    %7521 = vmatprep.subr.bf16.mxu0 %v7105
    %7522 = vmatpush1.bf16.msra.mxu0 %v7104
    %7523 = vmatprep.subr.bf16.mxu0 %v7101
    %7524 = vmatpush1.bf16.msra.mxu0 %v7100
    %7525 = vmatprep.subr.bf16.mxu0 %v7097
    %7526 = vmatpush1.bf16.msra.mxu0 %v7096
    %7527 = vmatprep.subr.bf16.mxu0 %v7093
    %7528 = vmatpush1.bf16.msra.mxu0 %v7092
    %7529 = vmatprep.subr.bf16.mxu0 %v7089
    %7530 = vmatpush1.bf16.msra.mxu0 %v7088
    %7531 = vmatprep.subr.bf16.mxu0 0
    %7532 = vmatpush2.bf16.msra.mxu0 0
    %7533 = vmatprep.subr.bf16.mxu0 0
    %7534 = vmatpush2.bf16.msra.mxu0 0
    %7535 = vmatprep.subr.bf16.mxu0 0
    %7536 = vmatpush2.bf16.msra.mxu0 0
    %7537 = vmatprep.subr.bf16.mxu0 0
    %7538 = vmatpush2.bf16.msra.mxu0 0
    %7539 = vmatprep.subr.bf16.mxu0 0
    %7540 = vmatpush2.bf16.msra.mxu0 0
    %7541 = vmatprep.subr.bf16.mxu0 0
    %7542 = vmatpush2.bf16.msra.mxu0 0
    %7543 = vmatprep.subr.bf16.mxu0 0
    %7544 = vmatpush2.bf16.msra.mxu0 0
    %7545 = vmatprep.subr.bf16.mxu0 0
    %7546 = vmatpush2.bf16.msra.mxu0 0
    %7547 = vmatprep.mubr.bf16.mxu0 0
    %7548 = vmatmul.mubr.bf16.gmra.mxu0 %v7513
    %v7549 = vpop.f32.mrf.mxu0
    %v7550 = vadd.f32 0.0, %v7549
    %v7551 = vpop.f32.mrf.mxu0
    %v7552 = vadd.f32 0.0, %v7551
    %v7553 = vpop.f32.mrf.mxu0
    %v7554 = vpop.f32.mrf.mxu0
    %7555 = vdwg.mxu0
    %7556 = vmatprep.subr.bf16.mxu0 %v7119
    %7557 = vmatpush1.bf16.msra.mxu0 %v7118
    %7558 = vmatprep.subr.bf16.mxu0 %v7115
    %7559 = vmatpush1.bf16.msra.mxu0 %v7114
    %7560 = vmatprep.subr.bf16.mxu0 %v7111
    %7561 = vmatpush1.bf16.msra.mxu0 %v7110
    %7562 = vmatprep.subr.bf16.mxu0 %v7107
    %7563 = vmatpush1.bf16.msra.mxu0 %v7106
    %7564 = vmatprep.subr.bf16.mxu0 %v7103
    %7565 = vmatpush1.bf16.msra.mxu0 %v7102
    %7566 = vmatprep.subr.bf16.mxu0 %v7099
    %7567 = vmatpush1.bf16.msra.mxu0 %v7098
    %7568 = vmatprep.subr.bf16.mxu0 %v7095
    %7569 = vmatpush1.bf16.msra.mxu0 %v7094
    %7570 = vmatprep.subr.bf16.mxu0 %v7091
    %7571 = vmatpush1.bf16.msra.mxu0 %v7090
    %7572 = vmatprep.subr.bf16.mxu0 0
    %7573 = vmatpush2.bf16.msra.mxu0 0
    %7574 = vmatprep.subr.bf16.mxu0 0
    %7575 = vmatpush2.bf16.msra.mxu0 0
    %7576 = vmatprep.subr.bf16.mxu0 0
    %7577 = vmatpush2.bf16.msra.mxu0 0
    %7578 = vmatprep.subr.bf16.mxu0 0
    %7579 = vmatpush2.bf16.msra.mxu0 0
    %7580 = vmatprep.subr.bf16.mxu0 0
    %7581 = vmatpush2.bf16.msra.mxu0 0
    %7582 = vmatprep.subr.bf16.mxu0 0
    %7583 = vmatpush2.bf16.msra.mxu0 0
    %7584 = vmatprep.subr.bf16.mxu0 0
    %7585 = vmatpush2.bf16.msra.mxu0 0
    %7586 = vmatprep.subr.bf16.mxu0 0
    %7587 = vmatpush2.bf16.msra.mxu0 0
    %7588 = vmatprep.mubr.bf16.mxu0 0
    %7589 = vmatmul.mubr.bf16.gmra.mxu0 %v7513
    %v7590 = vpop.f32.mrf.mxu0
    %v7591 = vadd.f32 0.0, %v7590
    %v7592 = vpop.f32.mrf.mxu0
    %v7593 = vadd.f32 0.0, %v7592
    %v7594 = vpop.f32.mrf.mxu0
    %v7595 = vpop.f32.mrf.mxu0
    %7596 = vdwg.mxu0
    %v7601 = vrot.slane %v7550, 2
    %v7602 = vrot.slane %v7552, 2
    %v7603 = vrot.slane %v7591, 2
    %v7604 = vrot.slane %v7593, 2
    %v7609 = vadd.f32 %v7507, %v7601
    %v7610 = vadd.f32 %v7508, %v7602
    %v7611 = vadd.f32 %v7509, %v7603
    %v7612 = vadd.f32 %v7510, %v7604
    %v7613 = vmul.f32 %v7609, 0.5
    %v7614 = vtanh.pop %v7613
    %v7615 = vmul.f32 %v7614, 0.5
    %v7616 = vadd.f32 %v7615, 0.5
    %v7617 = vmul.f32 %v7610, 0.5
    %v7618 = vtanh.pop %v7617
    %v7619 = vmul.f32 %v7618, 0.5
    %v7620 = vadd.f32 %v7619, 0.5
    %v7621 = vtanh.pop %v7611
    %v7622 = vmul.f32 %v7612, 0.5
    %v7623 = vtanh.pop %v7622
    %v7624 = vmul.f32 %v7623, 0.5
    %v7625 = vadd.f32 %v7624, 0.5
    %v7627 = vrot.slane %v7504, 6
    %v7629 = vmul.f32 %v7620, %v7627
    %v7630 = vmul.f32 %v7616, %v7621
    %v7631 = vadd.f32 %v7629, %v7630
    %v7632 = vtanh.pop %v7631
    %v7633 = vmul.f32 %v7625, %v7632
    %v7634 = vld [vmem:[#allocation4 + $0x20] sm:$0x3]
    %v7635 = vld [vmem:[#allocation4 + $0x28] sm:$0x3]
    %v7636 = vld [vmem:[#allocation4 + $0x30] sm:$0x3]
    %v7637 = vld [vmem:[#allocation4 + $0x38] sm:$0x3]
    %v7638 = vpack.c.bf16 %v7633, %v7633
    %v7640 = vrot.slane %v7638, 3
    %7642 = vmatprep.subr.bf16.mxu0 %v7117
    %7643 = vmatpush1.bf16.msra.mxu0 %v7116
    %7644 = vmatprep.subr.bf16.mxu0 %v7113
    %7645 = vmatpush1.bf16.msra.mxu0 %v7112
    %7646 = vmatprep.subr.bf16.mxu0 %v7109
    %7647 = vmatpush1.bf16.msra.mxu0 %v7108
    %7648 = vmatprep.subr.bf16.mxu0 %v7105
    %7649 = vmatpush1.bf16.msra.mxu0 %v7104
    %7650 = vmatprep.subr.bf16.mxu0 %v7101
    %7651 = vmatpush1.bf16.msra.mxu0 %v7100
    %7652 = vmatprep.subr.bf16.mxu0 %v7097
    %7653 = vmatpush1.bf16.msra.mxu0 %v7096
    %7654 = vmatprep.subr.bf16.mxu0 %v7093
    %7655 = vmatpush1.bf16.msra.mxu0 %v7092
    %7656 = vmatprep.subr.bf16.mxu0 %v7089
    %7657 = vmatpush1.bf16.msra.mxu0 %v7088
    %7658 = vmatprep.subr.bf16.mxu0 0
    %7659 = vmatpush2.bf16.msra.mxu0 0
    %7660 = vmatprep.subr.bf16.mxu0 0
    %7661 = vmatpush2.bf16.msra.mxu0 0
    %7662 = vmatprep.subr.bf16.mxu0 0
    %7663 = vmatpush2.bf16.msra.mxu0 0
    %7664 = vmatprep.subr.bf16.mxu0 0
    %7665 = vmatpush2.bf16.msra.mxu0 0
    %7666 = vmatprep.subr.bf16.mxu0 0
    %7667 = vmatpush2.bf16.msra.mxu0 0
    %7668 = vmatprep.subr.bf16.mxu0 0
    %7669 = vmatpush2.bf16.msra.mxu0 0
    %7670 = vmatprep.subr.bf16.mxu0 0
    %7671 = vmatpush2.bf16.msra.mxu0 0
    %7672 = vmatprep.subr.bf16.mxu0 0
    %7673 = vmatpush2.bf16.msra.mxu0 0
    %7674 = vmatprep.mubr.bf16.mxu0 0
    %7675 = vmatmul.mubr.bf16.gmra.mxu0 %v7640
    %v7676 = vpop.f32.mrf.mxu0
    %v7677 = vadd.f32 0.0, %v7676
    %v7678 = vpop.f32.mrf.mxu0
    %v7679 = vadd.f32 0.0, %v7678
    %v7680 = vpop.f32.mrf.mxu0
    %v7681 = vpop.f32.mrf.mxu0
    %7682 = vdwg.mxu0
    %7683 = vmatprep.subr.bf16.mxu0 %v7119
    %7684 = vmatpush1.bf16.msra.mxu0 %v7118
    %7685 = vmatprep.subr.bf16.mxu0 %v7115
    %7686 = vmatpush1.bf16.msra.mxu0 %v7114
    %7687 = vmatprep.subr.bf16.mxu0 %v7111
    %7688 = vmatpush1.bf16.msra.mxu0 %v7110
    %7689 = vmatprep.subr.bf16.mxu0 %v7107
    %7690 = vmatpush1.bf16.msra.mxu0 %v7106
    %7691 = vmatprep.subr.bf16.mxu0 %v7103
    %7692 = vmatpush1.bf16.msra.mxu0 %v7102
    %7693 = vmatprep.subr.bf16.mxu0 %v7099
    %7694 = vmatpush1.bf16.msra.mxu0 %v7098
    %7695 = vmatprep.subr.bf16.mxu0 %v7095
    %7696 = vmatpush1.bf16.msra.mxu0 %v7094
    %7697 = vmatprep.subr.bf16.mxu0 %v7091
    %7698 = vmatpush1.bf16.msra.mxu0 %v7090
    %7699 = vmatprep.subr.bf16.mxu0 0
    %7700 = vmatpush2.bf16.msra.mxu0 0
    %7701 = vmatprep.subr.bf16.mxu0 0
    %7702 = vmatpush2.bf16.msra.mxu0 0
    %7703 = vmatprep.subr.bf16.mxu0 0
    %7704 = vmatpush2.bf16.msra.mxu0 0
    %7705 = vmatprep.subr.bf16.mxu0 0
    %7706 = vmatpush2.bf16.msra.mxu0 0
    %7707 = vmatprep.subr.bf16.mxu0 0
    %7708 = vmatpush2.bf16.msra.mxu0 0
    %7709 = vmatprep.subr.bf16.mxu0 0
    %7710 = vmatpush2.bf16.msra.mxu0 0
    %7711 = vmatprep.subr.bf16.mxu0 0
    %7712 = vmatpush2.bf16.msra.mxu0 0
    %7713 = vmatprep.subr.bf16.mxu0 0
    %7714 = vmatpush2.bf16.msra.mxu0 0
    %7715 = vmatprep.mubr.bf16.mxu0 0
    %7716 = vmatmul.mubr.bf16.gmra.mxu0 %v7640
    %v7717 = vpop.f32.mrf.mxu0
    %v7718 = vadd.f32 0.0, %v7717
    %v7719 = vpop.f32.mrf.mxu0
    %v7720 = vadd.f32 0.0, %v7719
    %v7721 = vpop.f32.mrf.mxu0
    %v7722 = vpop.f32.mrf.mxu0
    %7723 = vdwg.mxu0
    %v7724 = vadd.f32 %v7634, %v7677
    %v7725 = vadd.f32 %v7635, %v7679
    %v7726 = vadd.f32 %v7636, %v7718
    %v7727 = vadd.f32 %v7637, %v7720
    %v7728 = vmul.f32 %v7724, 0.5
    %v7729 = vtanh.pop %v7728
    %v7730 = vmul.f32 %v7729, 0.5
    %v7731 = vadd.f32 %v7730, 0.5
    %v7732 = vmul.f32 %v7725, 0.5
    %v7733 = vtanh.pop %v7732
    %v7734 = vmul.f32 %v7733, 0.5
    %v7735 = vadd.f32 %v7734, 0.5
    %v7736 = vtanh.pop %v7726
    %v7737 = vmul.f32 %v7727, 0.5
    %v7738 = vtanh.pop %v7737
    %v7739 = vmul.f32 %v7738, 0.5
    %v7740 = vadd.f32 %v7739, 0.5
    %v7742 = vrot.slane %v7631, 6
    %v7744 = vmul.f32 %v7735, %v7742
    %v7745 = vmul.f32 %v7731, %v7736
    %v7746 = vadd.f32 %v7744, %v7745
    %v7747 = vtanh.pop %v7746
    %v7748 = vmul.f32 %v7740, %v7747
    %v7749 = vld [vmem:[#allocation4 + $0x20] sm:$0xc]
    %v7750 = vld [vmem:[#allocation4 + $0x28] sm:$0xc]
    %v7751 = vld [vmem:[#allocation4 + $0x30] sm:$0xc]
    %v7752 = vld [vmem:[#allocation4 + $0x38] sm:$0xc]
    %v7753 = vpack.c.bf16 %v7748, %v7748
    %7754 = vmatprep.subr.bf16.mxu0 %v7117
    %7755 = vmatpush1.bf16.msra.mxu0 %v7116
    %7756 = vmatprep.subr.bf16.mxu0 %v7113
    %7757 = vmatpush1.bf16.msra.mxu0 %v7112
    %7758 = vmatprep.subr.bf16.mxu0 %v7109
    %7759 = vmatpush1.bf16.msra.mxu0 %v7108
    %7760 = vmatprep.subr.bf16.mxu0 %v7105
    %7761 = vmatpush1.bf16.msra.mxu0 %v7104
    %7762 = vmatprep.subr.bf16.mxu0 %v7101
    %7763 = vmatpush1.bf16.msra.mxu0 %v7100
    %7764 = vmatprep.subr.bf16.mxu0 %v7097
    %7765 = vmatpush1.bf16.msra.mxu0 %v7096
    %7766 = vmatprep.subr.bf16.mxu0 %v7093
    %7767 = vmatpush1.bf16.msra.mxu0 %v7092
    %7768 = vmatprep.subr.bf16.mxu0 %v7089
    %7769 = vmatpush1.bf16.msra.mxu0 %v7088
    %7770 = vmatprep.subr.bf16.mxu0 0
    %7771 = vmatpush2.bf16.msra.mxu0 0
    %7772 = vmatprep.subr.bf16.mxu0 0
    %7773 = vmatpush2.bf16.msra.mxu0 0
    %7774 = vmatprep.subr.bf16.mxu0 0
    %7775 = vmatpush2.bf16.msra.mxu0 0
    %7776 = vmatprep.subr.bf16.mxu0 0
    %7777 = vmatpush2.bf16.msra.mxu0 0
    %7778 = vmatprep.subr.bf16.mxu0 0
    %7779 = vmatpush2.bf16.msra.mxu0 0
    %7780 = vmatprep.subr.bf16.mxu0 0
    %7781 = vmatpush2.bf16.msra.mxu0 0
    %7782 = vmatprep.subr.bf16.mxu0 0
    %7783 = vmatpush2.bf16.msra.mxu0 0
    %7784 = vmatprep.subr.bf16.mxu0 0
    %7785 = vmatpush2.bf16.msra.mxu0 0
    %7786 = vmatprep.mubr.bf16.mxu0 0
    %7787 = vmatmul.mubr.bf16.gmra.mxu0 %v7753
    %v7788 = vpop.f32.mrf.mxu0
    %v7789 = vadd.f32 0.0, %v7788
    %v7790 = vpop.f32.mrf.mxu0
    %v7791 = vadd.f32 0.0, %v7790
    %v7792 = vpop.f32.mrf.mxu0
    %v7793 = vpop.f32.mrf.mxu0
    %7794 = vdwg.mxu0
    %7795 = vmatprep.subr.bf16.mxu0 %v7119
    %7796 = vmatpush1.bf16.msra.mxu0 %v7118
    %7797 = vmatprep.subr.bf16.mxu0 %v7115
    %7798 = vmatpush1.bf16.msra.mxu0 %v7114
    %7799 = vmatprep.subr.bf16.mxu0 %v7111
    %7800 = vmatpush1.bf16.msra.mxu0 %v7110
    %7801 = vmatprep.subr.bf16.mxu0 %v7107
    %7802 = vmatpush1.bf16.msra.mxu0 %v7106
    %7803 = vmatprep.subr.bf16.mxu0 %v7103
    %7804 = vmatpush1.bf16.msra.mxu0 %v7102
    %7805 = vmatprep.subr.bf16.mxu0 %v7099
    %7806 = vmatpush1.bf16.msra.mxu0 %v7098
    %7807 = vmatprep.subr.bf16.mxu0 %v7095
    %7808 = vmatpush1.bf16.msra.mxu0 %v7094
    %7809 = vmatprep.subr.bf16.mxu0 %v7091
    %7810 = vmatpush1.bf16.msra.mxu0 %v7090
    %7811 = vmatprep.subr.bf16.mxu0 0
    %7812 = vmatpush2.bf16.msra.mxu0 0
    %7813 = vmatprep.subr.bf16.mxu0 0
    %7814 = vmatpush2.bf16.msra.mxu0 0
    %7815 = vmatprep.subr.bf16.mxu0 0
    %7816 = vmatpush2.bf16.msra.mxu0 0
    %7817 = vmatprep.subr.bf16.mxu0 0
    %7818 = vmatpush2.bf16.msra.mxu0 0
    %7819 = vmatprep.subr.bf16.mxu0 0
    %7820 = vmatpush2.bf16.msra.mxu0 0
    %7821 = vmatprep.subr.bf16.mxu0 0
    %7822 = vmatpush2.bf16.msra.mxu0 0
    %7823 = vmatprep.subr.bf16.mxu0 0
    %7824 = vmatpush2.bf16.msra.mxu0 0
    %7825 = vmatprep.subr.bf16.mxu0 0
    %7826 = vmatpush2.bf16.msra.mxu0 0
    %7827 = vmatprep.mubr.bf16.mxu0 0
    %7828 = vmatmul.mubr.bf16.gmra.mxu0 %v7753
    %v7829 = vpop.f32.mrf.mxu0
    %v7830 = vadd.f32 0.0, %v7829
    %v7831 = vpop.f32.mrf.mxu0
    %v7832 = vadd.f32 0.0, %v7831
    %v7833 = vpop.f32.mrf.mxu0
    %v7834 = vpop.f32.mrf.mxu0
    %7835 = vdwg.mxu0
    %v7840 = vrot.slane %v7789, 6
    %v7841 = vrot.slane %v7791, 6
    %v7842 = vrot.slane %v7830, 6
    %v7843 = vrot.slane %v7832, 6
    %v7848 = vadd.f32 %v7749, %v7840
    %v7849 = vadd.f32 %v7750, %v7841
    %v7850 = vadd.f32 %v7751, %v7842
    %v7851 = vadd.f32 %v7752, %v7843
    %v7852 = vmul.f32 %v7848, 0.5
    %v7853 = vtanh.pop %v7852
    %v7854 = vmul.f32 %v7853, 0.5
    %v7855 = vadd.f32 %v7854, 0.5
    %v7856 = vmul.f32 %v7849, 0.5
    %v7857 = vtanh.pop %v7856
    %v7858 = vmul.f32 %v7857, 0.5
    %v7859 = vadd.f32 %v7858, 0.5
    %v7860 = vtanh.pop %v7850
    %v7861 = vmul.f32 %v7851, 0.5
    %v7862 = vtanh.pop %v7861
    %v7863 = vmul.f32 %v7862, 0.5
    %v7864 = vadd.f32 %v7863, 0.5
    %v7866 = vrot.slane %v7746, 6
    %v7868 = vmul.f32 %v7859, %v7866
    %v7869 = vmul.f32 %v7855, %v7860
    %v7870 = vadd.f32 %v7868, %v7869
    %v7871 = vtanh.pop %v7870
    %v7872 = vmul.f32 %v7864, %v7871
    %v7873 = vld [vmem:[#allocation4 + $0x20] sm:$0x30]
    %v7874 = vld [vmem:[#allocation4 + $0x28] sm:$0x30]
    %v7875 = vld [vmem:[#allocation4 + $0x30] sm:$0x30]
    %v7876 = vld [vmem:[#allocation4 + $0x38] sm:$0x30]
    %v7877 = vpack.c.bf16 %v7872, %v7872
    %v7879 = vrot.slane %v7877, 1
    %7881 = vmatprep.subr.bf16.mxu0 %v7117
    %7882 = vmatpush1.bf16.msra.mxu0 %v7116
    %7883 = vmatprep.subr.bf16.mxu0 %v7113
    %7884 = vmatpush1.bf16.msra.mxu0 %v7112
    %7885 = vmatprep.subr.bf16.mxu0 %v7109
    %7886 = vmatpush1.bf16.msra.mxu0 %v7108
    %7887 = vmatprep.subr.bf16.mxu0 %v7105
    %7888 = vmatpush1.bf16.msra.mxu0 %v7104
    %7889 = vmatprep.subr.bf16.mxu0 %v7101
    %7890 = vmatpush1.bf16.msra.mxu0 %v7100
    %7891 = vmatprep.subr.bf16.mxu0 %v7097
    %7892 = vmatpush1.bf16.msra.mxu0 %v7096
    %7893 = vmatprep.subr.bf16.mxu0 %v7093
    %7894 = vmatpush1.bf16.msra.mxu0 %v7092
    %7895 = vmatprep.subr.bf16.mxu0 %v7089
    %7896 = vmatpush1.bf16.msra.mxu0 %v7088
    %7897 = vmatprep.subr.bf16.mxu0 0
    %7898 = vmatpush2.bf16.msra.mxu0 0
    %7899 = vmatprep.subr.bf16.mxu0 0
    %7900 = vmatpush2.bf16.msra.mxu0 0
    %7901 = vmatprep.subr.bf16.mxu0 0
    %7902 = vmatpush2.bf16.msra.mxu0 0
    %7903 = vmatprep.subr.bf16.mxu0 0
    %7904 = vmatpush2.bf16.msra.mxu0 0
    %7905 = vmatprep.subr.bf16.mxu0 0
    %7906 = vmatpush2.bf16.msra.mxu0 0
    %7907 = vmatprep.subr.bf16.mxu0 0
    %7908 = vmatpush2.bf16.msra.mxu0 0
    %7909 = vmatprep.subr.bf16.mxu0 0
    %7910 = vmatpush2.bf16.msra.mxu0 0
    %7911 = vmatprep.subr.bf16.mxu0 0
    %7912 = vmatpush2.bf16.msra.mxu0 0
    %7913 = vmatprep.mubr.bf16.mxu0 0
    %7914 = vmatmul.mubr.bf16.gmra.mxu0 %v7879
    %v7915 = vpop.f32.mrf.mxu0
    %v7916 = vadd.f32 0.0, %v7915
    %v7917 = vpop.f32.mrf.mxu0
    %v7918 = vadd.f32 0.0, %v7917
    %v7919 = vpop.f32.mrf.mxu0
    %v7920 = vpop.f32.mrf.mxu0
    %7921 = vdwg.mxu0
    %7922 = vmatprep.subr.bf16.mxu0 %v7119
    %7923 = vmatpush1.bf16.msra.mxu0 %v7118
    %7924 = vmatprep.subr.bf16.mxu0 %v7115
    %7925 = vmatpush1.bf16.msra.mxu0 %v7114
    %7926 = vmatprep.subr.bf16.mxu0 %v7111
    %7927 = vmatpush1.bf16.msra.mxu0 %v7110
    %7928 = vmatprep.subr.bf16.mxu0 %v7107
    %7929 = vmatpush1.bf16.msra.mxu0 %v7106
    %7930 = vmatprep.subr.bf16.mxu0 %v7103
    %7931 = vmatpush1.bf16.msra.mxu0 %v7102
    %7932 = vmatprep.subr.bf16.mxu0 %v7099
    %7933 = vmatpush1.bf16.msra.mxu0 %v7098
    %7934 = vmatprep.subr.bf16.mxu0 %v7095
    %7935 = vmatpush1.bf16.msra.mxu0 %v7094
    %7936 = vmatprep.subr.bf16.mxu0 %v7091
    %7937 = vmatpush1.bf16.msra.mxu0 %v7090
    %7938 = vmatprep.subr.bf16.mxu0 0
    %7939 = vmatpush2.bf16.msra.mxu0 0
    %7940 = vmatprep.subr.bf16.mxu0 0
    %7941 = vmatpush2.bf16.msra.mxu0 0
    %7942 = vmatprep.subr.bf16.mxu0 0
    %7943 = vmatpush2.bf16.msra.mxu0 0
    %7944 = vmatprep.subr.bf16.mxu0 0
    %7945 = vmatpush2.bf16.msra.mxu0 0
    %7946 = vmatprep.subr.bf16.mxu0 0
    %7947 = vmatpush2.bf16.msra.mxu0 0
    %7948 = vmatprep.subr.bf16.mxu0 0
    %7949 = vmatpush2.bf16.msra.mxu0 0
    %7950 = vmatprep.subr.bf16.mxu0 0
    %7951 = vmatpush2.bf16.msra.mxu0 0
    %7952 = vmatprep.subr.bf16.mxu0 0
    %7953 = vmatpush2.bf16.msra.mxu0 0
    %7954 = vmatprep.mubr.bf16.mxu0 0
    %7955 = vmatmul.mubr.bf16.gmra.mxu0 %v7879
    %v7956 = vpop.f32.mrf.mxu0
    %v7957 = vadd.f32 0.0, %v7956
    %v7958 = vpop.f32.mrf.mxu0
    %v7959 = vadd.f32 0.0, %v7958
    %v7960 = vpop.f32.mrf.mxu0
    %v7961 = vpop.f32.mrf.mxu0
    %7962 = vdwg.mxu0
    %v7967 = vrot.slane %v7916, 4
    %v7968 = vrot.slane %v7918, 4
    %v7969 = vrot.slane %v7957, 4
    %v7970 = vrot.slane %v7959, 4
    %v7975 = vadd.f32 %v7873, %v7967
    %v7976 = vadd.f32 %v7874, %v7968
    %v7977 = vadd.f32 %v7875, %v7969
    %v7978 = vadd.f32 %v7876, %v7970
    %v7979 = vmul.f32 %v7975, 0.5
    %v7980 = vtanh.pop %v7979
    %v7981 = vmul.f32 %v7980, 0.5
    %v7982 = vadd.f32 %v7981, 0.5
    %v7983 = vmul.f32 %v7976, 0.5
    %v7984 = vtanh.pop %v7983
    %v7985 = vmul.f32 %v7984, 0.5
    %v7986 = vadd.f32 %v7985, 0.5
    %v7987 = vtanh.pop %v7977
    %v7988 = vmul.f32 %v7978, 0.5
    %v7989 = vtanh.pop %v7988
    %v7990 = vmul.f32 %v7989, 0.5
    %v7991 = vadd.f32 %v7990, 0.5
    %v7993 = vrot.slane %v7870, 6
    %v7995 = vmul.f32 %v7986, %v7993
    %v7996 = vmul.f32 %v7982, %v7987
    %v7997 = vadd.f32 %v7995, %v7996
    %v7998 = vtanh.pop %v7997
    %v7999 = vmul.f32 %v7991, %v7998
    %v8000 = vld [vmem:[#allocation4 + $0x20] sm:$0xc0]
    %v8001 = vld [vmem:[#allocation4 + $0x28] sm:$0xc0]
    %v8002 = vld [vmem:[#allocation4 + $0x30] sm:$0xc0]
    %v8003 = vld [vmem:[#allocation4 + $0x38] sm:$0xc0]
    %v8004 = vpack.c.bf16 %v7999, %v7999
    %v8006 = vrot.slane %v8004, 2
    %8008 = vmatprep.subr.bf16.mxu0 %v7117
    %8009 = vmatpush1.bf16.msra.mxu0 %v7116
    %8010 = vmatprep.subr.bf16.mxu0 %v7113
    %8011 = vmatpush1.bf16.msra.mxu0 %v7112
    %8012 = vmatprep.subr.bf16.mxu0 %v7109
    %8013 = vmatpush1.bf16.msra.mxu0 %v7108
    %8014 = vmatprep.subr.bf16.mxu0 %v7105
    %8015 = vmatpush1.bf16.msra.mxu0 %v7104
    %8016 = vmatprep.subr.bf16.mxu0 %v7101
    %8017 = vmatpush1.bf16.msra.mxu0 %v7100
    %8018 = vmatprep.subr.bf16.mxu0 %v7097
    %8019 = vmatpush1.bf16.msra.mxu0 %v7096
    %8020 = vmatprep.subr.bf16.mxu0 %v7093
    %8021 = vmatpush1.bf16.msra.mxu0 %v7092
    %8022 = vmatprep.subr.bf16.mxu0 %v7089
    %8023 = vmatpush1.bf16.msra.mxu0 %v7088
    %8024 = vmatprep.subr.bf16.mxu0 0
    %8025 = vmatpush2.bf16.msra.mxu0 0
    %8026 = vmatprep.subr.bf16.mxu0 0
    %8027 = vmatpush2.bf16.msra.mxu0 0
    %8028 = vmatprep.subr.bf16.mxu0 0
    %8029 = vmatpush2.bf16.msra.mxu0 0
    %8030 = vmatprep.subr.bf16.mxu0 0
    %8031 = vmatpush2.bf16.msra.mxu0 0
    %8032 = vmatprep.subr.bf16.mxu0 0
    %8033 = vmatpush2.bf16.msra.mxu0 0
    %8034 = vmatprep.subr.bf16.mxu0 0
    %8035 = vmatpush2.bf16.msra.mxu0 0
    %8036 = vmatprep.subr.bf16.mxu0 0
    %8037 = vmatpush2.bf16.msra.mxu0 0
    %8038 = vmatprep.subr.bf16.mxu0 0
    %8039 = vmatpush2.bf16.msra.mxu0 0
    %8040 = vmatprep.mubr.bf16.mxu0 0
    %8041 = vmatmul.mubr.bf16.gmra.mxu0 %v8006
    %v8042 = vpop.f32.mrf.mxu0
    %v8043 = vadd.f32 0.0, %v8042
    %v8044 = vpop.f32.mrf.mxu0
    %v8045 = vadd.f32 0.0, %v8044
    %v8046 = vpop.f32.mrf.mxu0
    %v8047 = vpop.f32.mrf.mxu0
    %8048 = vdwg.mxu0
    %8049 = vmatprep.subr.bf16.mxu0 %v7119
    %8050 = vmatpush1.bf16.msra.mxu0 %v7118
    %8051 = vmatprep.subr.bf16.mxu0 %v7115
    %8052 = vmatpush1.bf16.msra.mxu0 %v7114
    %8053 = vmatprep.subr.bf16.mxu0 %v7111
    %8054 = vmatpush1.bf16.msra.mxu0 %v7110
    %8055 = vmatprep.subr.bf16.mxu0 %v7107
    %8056 = vmatpush1.bf16.msra.mxu0 %v7106
    %8057 = vmatprep.subr.bf16.mxu0 %v7103
    %8058 = vmatpush1.bf16.msra.mxu0 %v7102
    %8059 = vmatprep.subr.bf16.mxu0 %v7099
    %8060 = vmatpush1.bf16.msra.mxu0 %v7098
    %8061 = vmatprep.subr.bf16.mxu0 %v7095
    %8062 = vmatpush1.bf16.msra.mxu0 %v7094
    %8063 = vmatprep.subr.bf16.mxu0 %v7091
    %8064 = vmatpush1.bf16.msra.mxu0 %v7090
    %8065 = vmatprep.subr.bf16.mxu0 0
    %8066 = vmatpush2.bf16.msra.mxu0 0
    %8067 = vmatprep.subr.bf16.mxu0 0
    %8068 = vmatpush2.bf16.msra.mxu0 0
    %8069 = vmatprep.subr.bf16.mxu0 0
    %8070 = vmatpush2.bf16.msra.mxu0 0
    %8071 = vmatprep.subr.bf16.mxu0 0
    %8072 = vmatpush2.bf16.msra.mxu0 0
    %8073 = vmatprep.subr.bf16.mxu0 0
    %8074 = vmatpush2.bf16.msra.mxu0 0
    %8075 = vmatprep.subr.bf16.mxu0 0
    %8076 = vmatpush2.bf16.msra.mxu0 0
    %8077 = vmatprep.subr.bf16.mxu0 0
    %8078 = vmatpush2.bf16.msra.mxu0 0
    %8079 = vmatprep.subr.bf16.mxu0 0
    %8080 = vmatpush2.bf16.msra.mxu0 0
    %8081 = vmatprep.mubr.bf16.mxu0 0
    %8082 = vmatmul.mubr.bf16.gmra.mxu0 %v8006
    %v8083 = vpop.f32.mrf.mxu0
    %v8084 = vadd.f32 0.0, %v8083
    %v8085 = vpop.f32.mrf.mxu0
    %v8086 = vadd.f32 0.0, %v8085
    %v8087 = vpop.f32.mrf.mxu0
    %v8088 = vpop.f32.mrf.mxu0
    %8089 = vdwg.mxu0
    %v8094 = vrot.slane %v8043, 2
    %v8095 = vrot.slane %v8045, 2
    %v8096 = vrot.slane %v8084, 2
    %v8097 = vrot.slane %v8086, 2
    %v8102 = vadd.f32 %v8000, %v8094
    %v8103 = vadd.f32 %v8001, %v8095
    %v8104 = vadd.f32 %v8002, %v8096
    %v8105 = vadd.f32 %v8003, %v8097
    %v8106 = vmul.f32 %v8102, 0.5
    %v8107 = vtanh.pop %v8106
    %v8108 = vmul.f32 %v8107, 0.5
    %v8109 = vadd.f32 %v8108, 0.5
    %v8110 = vmul.f32 %v8103, 0.5
    %v8111 = vtanh.pop %v8110
    %v8112 = vmul.f32 %v8111, 0.5
    %v8113 = vadd.f32 %v8112, 0.5
    %v8114 = vtanh.pop %v8104
    %v8115 = vmul.f32 %v8105, 0.5
    %v8116 = vtanh.pop %v8115
    %v8117 = vmul.f32 %v8116, 0.5
    %v8118 = vadd.f32 %v8117, 0.5
    %v8120 = vrot.slane %v7997, 6
    %v8122 = vmul.f32 %v8113, %v8120
    %v8123 = vmul.f32 %v8109, %v8114
    %v8124 = vadd.f32 %v8122, %v8123
    %v8125 = vtanh.pop %v8124
    %v8126 = vmul.f32 %v8118, %v8125
    %v8127 = vld [vmem:[#allocation3 + $0x10] sm:$0xc0]
    %v8128 = vld [vmem:[#allocation3 + $0x18] sm:$0xc0]
    %v8129 = vld [vmem:[%s10] sm:$0xff]
    %v8130 = vld [vmem:[%s10 + $0x8] sm:$0xff]
    %v8131 = vld [vmem:[%s10 + $0x10] sm:$0xff]
    %v8132 = vld [vmem:[%s10 + $0x18] sm:$0xff]
    %v8133 = vld [vmem:[%s10 + $0x20] sm:$0xff]
    %v8134 = vld [vmem:[%s10 + $0x28] sm:$0xff]
    %v8135 = vld [vmem:[%s10 + $0x30] sm:$0xff]
    %v8136 = vld [vmem:[%s10 + $0x38] sm:$0xff]
    %v8137 = vld [vmem:[%s10 + $0x40] sm:$0xff]
    %v8138 = vld [vmem:[%s10 + $0x48] sm:$0xff]
    %v8139 = vld [vmem:[%s10 + $0x50] sm:$0xff]
    %v8140 = vld [vmem:[%s10 + $0x58] sm:$0xff]
    %v8141 = vld [vmem:[%s10 + $0x60] sm:$0xff]
    %v8142 = vld [vmem:[%s10 + $0x68] sm:$0xff]
    %v8143 = vld [vmem:[%s10 + $0x70] sm:$0xff]
    %v8144 = vld [vmem:[%s10 + $0x78] sm:$0xff]
    %v8145 = vld [vmem:[%s10 + $0x80] sm:$0xff]
    %v8146 = vld [vmem:[%s10 + $0x88] sm:$0xff]
    %v8147 = vld [vmem:[%s10 + $0x90] sm:$0xff]
    %v8148 = vld [vmem:[%s10 + $0x98] sm:$0xff]
    %v8149 = vld [vmem:[%s10 + $0xa0] sm:$0xff]
    %v8150 = vld [vmem:[%s10 + $0xa8] sm:$0xff]
    %v8151 = vld [vmem:[%s10 + $0xb0] sm:$0xff]
    %v8152 = vld [vmem:[%s10 + $0xb8] sm:$0xff]
    %v8153 = vld [vmem:[%s10 + $0xc0] sm:$0xff]
    %v8154 = vld [vmem:[%s10 + $0xc8] sm:$0xff]
    %v8155 = vld [vmem:[%s10 + $0xd0] sm:$0xff]
    %v8156 = vld [vmem:[%s10 + $0xd8] sm:$0xff]
    %v8157 = vld [vmem:[%s10 + $0xe0] sm:$0xff]
    %v8158 = vld [vmem:[%s10 + $0xe8] sm:$0xff]
    %v8159 = vld [vmem:[%s10 + $0xf0] sm:$0xff]
    %v8160 = vld [vmem:[%s10 + $0xf8] sm:$0xff]
    %v8161 = vld [vmem:[%s10 + $0x100] sm:$0xff]
    %v8162 = vld [vmem:[%s10 + $0x108] sm:$0xff]
    %v8163 = vld [vmem:[%s10 + $0x110] sm:$0xff]
    %v8164 = vld [vmem:[%s10 + $0x118] sm:$0xff]
    %v8165 = vld [vmem:[%s10 + $0x120] sm:$0xff]
    %v8166 = vld [vmem:[%s10 + $0x128] sm:$0xff]
    %v8167 = vld [vmem:[%s10 + $0x130] sm:$0xff]
    %v8168 = vld [vmem:[%s10 + $0x138] sm:$0xff]
    %v8169 = vld [vmem:[%s10 + $0x140] sm:$0xff]
    %v8170 = vld [vmem:[%s10 + $0x148] sm:$0xff]
    %v8171 = vld [vmem:[%s10 + $0x150] sm:$0xff]
    %v8172 = vld [vmem:[%s10 + $0x158] sm:$0xff]
    %v8173 = vld [vmem:[%s10 + $0x160] sm:$0xff]
    %v8174 = vld [vmem:[%s10 + $0x168] sm:$0xff]
    %v8175 = vld [vmem:[%s10 + $0x170] sm:$0xff]
    %v8176 = vld [vmem:[%s10 + $0x178] sm:$0xff]
    %v8177 = vld [vmem:[%s10 + $0x180] sm:$0xff]
    %v8178 = vld [vmem:[%s10 + $0x188] sm:$0xff]
    %v8179 = vld [vmem:[%s10 + $0x190] sm:$0xff]
    %v8180 = vld [vmem:[%s10 + $0x198] sm:$0xff]
    %v8181 = vld [vmem:[%s10 + $0x1a0] sm:$0xff]
    %v8182 = vld [vmem:[%s10 + $0x1a8] sm:$0xff]
    %v8183 = vld [vmem:[%s10 + $0x1b0] sm:$0xff]
    %v8184 = vld [vmem:[%s10 + $0x1b8] sm:$0xff]
    %v8185 = vld [vmem:[%s10 + $0x1c0] sm:$0xff]
    %v8186 = vld [vmem:[%s10 + $0x1c8] sm:$0xff]
    %v8187 = vld [vmem:[%s10 + $0x1d0] sm:$0xff]
    %v8188 = vld [vmem:[%s10 + $0x1d8] sm:$0xff]
    %v8189 = vld [vmem:[%s10 + $0x1e0] sm:$0xff]
    %v8190 = vld [vmem:[%s10 + $0x1e8] sm:$0xff]
    %v8191 = vld [vmem:[%s10 + $0x1f0] sm:$0xff]
    %v8192 = vld [vmem:[%s10 + $0x1f8] sm:$0xff]
    %v8193 = vpack.c.bf16 %v8127, %v8127
    %v8194 = vpack.c.bf16 %v8128, %v8128
    %v8195 = vld [vmem:[%s11] sm:$0xf]
    %v8197 = vlaneseq
    %v8198 = vshrl.u32 %v8197, 7
    %v8199 = vsub.s32 0, %v8198
    %v8200 = vrot.slane %v8195, %v8199
    %v8201 = vlaneseq
    %v8202 = vshrl.u32 %v8201, 7
    %v8203 = vsub.s32 1, %v8202
    %v8204 = vrot.slane %v8195, %v8203
    %v8205 = vlaneseq
    %v8206 = vshrl.u32 %v8205, 7
    %v8207 = vsub.s32 2, %v8206
    %v8208 = vrot.slane %v8195, %v8207
    %v8209 = vlaneseq
    %v8210 = vshrl.u32 %v8209, 7
    %v8211 = vsub.s32 3, %v8210
    %v8212 = vrot.slane %v8195, %v8211
    %v8219 = vrot.slane %v8193, 3
    %v8220 = vrot.slane %v8194, 3
    %v8287 = vunpack.c.l.b16 %v8129
    %v8288 = vunpack.c.h.b16 %v8129
    %v8289 = vunpack.c.l.b16 %v8130
    %v8290 = vunpack.c.h.b16 %v8130
    %v8291 = vunpack.c.l.b16 %v8131
    %v8292 = vunpack.c.h.b16 %v8131
    %v8293 = vunpack.c.l.b16 %v8132
    %v8294 = vunpack.c.h.b16 %v8132
    %v8295 = vunpack.c.l.b16 %v8133
    %v8296 = vunpack.c.h.b16 %v8133
    %v8297 = vunpack.c.l.b16 %v8134
    %v8298 = vunpack.c.h.b16 %v8134
    %v8299 = vunpack.c.l.b16 %v8135
    %v8300 = vunpack.c.h.b16 %v8135
    %v8301 = vunpack.c.l.b16 %v8136
    %v8302 = vunpack.c.h.b16 %v8136
    %v8303 = vunpack.c.l.b16 %v8137
    %v8304 = vunpack.c.h.b16 %v8137
    %v8305 = vunpack.c.l.b16 %v8138
    %v8306 = vunpack.c.h.b16 %v8138
    %v8307 = vunpack.c.l.b16 %v8139
    %v8308 = vunpack.c.h.b16 %v8139
    %v8309 = vunpack.c.l.b16 %v8140
    %v8310 = vunpack.c.h.b16 %v8140
    %v8311 = vunpack.c.l.b16 %v8141
    %v8312 = vunpack.c.h.b16 %v8141
    %v8313 = vunpack.c.l.b16 %v8142
    %v8314 = vunpack.c.h.b16 %v8142
    %v8315 = vunpack.c.l.b16 %v8143
    %v8316 = vunpack.c.h.b16 %v8143
    %v8317 = vunpack.c.l.b16 %v8144
    %v8318 = vunpack.c.h.b16 %v8144
    %v8319 = vunpack.c.l.b16 %v8145
    %v8320 = vunpack.c.h.b16 %v8145
    %v8321 = vunpack.c.l.b16 %v8146
    %v8322 = vunpack.c.h.b16 %v8146
    %v8323 = vunpack.c.l.b16 %v8147
    %v8324 = vunpack.c.h.b16 %v8147
    %v8325 = vunpack.c.l.b16 %v8148
    %v8326 = vunpack.c.h.b16 %v8148
    %v8327 = vunpack.c.l.b16 %v8149
    %v8328 = vunpack.c.h.b16 %v8149
    %v8329 = vunpack.c.l.b16 %v8150
    %v8330 = vunpack.c.h.b16 %v8150
    %v8331 = vunpack.c.l.b16 %v8151
    %v8332 = vunpack.c.h.b16 %v8151
    %v8333 = vunpack.c.l.b16 %v8152
    %v8334 = vunpack.c.h.b16 %v8152
    %v8335 = vunpack.c.l.b16 %v8153
    %v8336 = vunpack.c.h.b16 %v8153
    %v8337 = vunpack.c.l.b16 %v8154
    %v8338 = vunpack.c.h.b16 %v8154
    %v8339 = vunpack.c.l.b16 %v8155
    %v8340 = vunpack.c.h.b16 %v8155
    %v8341 = vunpack.c.l.b16 %v8156
    %v8342 = vunpack.c.h.b16 %v8156
    %v8343 = vunpack.c.l.b16 %v8157
    %v8344 = vunpack.c.h.b16 %v8157
    %v8345 = vunpack.c.l.b16 %v8158
    %v8346 = vunpack.c.h.b16 %v8158
    %v8347 = vunpack.c.l.b16 %v8159
    %v8348 = vunpack.c.h.b16 %v8159
    %v8349 = vunpack.c.l.b16 %v8160
    %v8350 = vunpack.c.h.b16 %v8160
    %v8351 = vunpack.c.l.b16 %v8161
    %v8352 = vunpack.c.h.b16 %v8161
    %v8353 = vunpack.c.l.b16 %v8162
    %v8354 = vunpack.c.h.b16 %v8162
    %v8355 = vunpack.c.l.b16 %v8163
    %v8356 = vunpack.c.h.b16 %v8163
    %v8357 = vunpack.c.l.b16 %v8164
    %v8358 = vunpack.c.h.b16 %v8164
    %v8359 = vunpack.c.l.b16 %v8165
    %v8360 = vunpack.c.h.b16 %v8165
    %v8361 = vunpack.c.l.b16 %v8166
    %v8362 = vunpack.c.h.b16 %v8166
    %v8363 = vunpack.c.l.b16 %v8167
    %v8364 = vunpack.c.h.b16 %v8167
    %v8365 = vunpack.c.l.b16 %v8168
    %v8366 = vunpack.c.h.b16 %v8168
    %v8367 = vunpack.c.l.b16 %v8169
    %v8368 = vunpack.c.h.b16 %v8169
    %v8369 = vunpack.c.l.b16 %v8170
    %v8370 = vunpack.c.h.b16 %v8170
    %v8371 = vunpack.c.l.b16 %v8171
    %v8372 = vunpack.c.h.b16 %v8171
    %v8373 = vunpack.c.l.b16 %v8172
    %v8374 = vunpack.c.h.b16 %v8172
    %v8375 = vunpack.c.l.b16 %v8173
    %v8376 = vunpack.c.h.b16 %v8173
    %v8377 = vunpack.c.l.b16 %v8174
    %v8378 = vunpack.c.h.b16 %v8174
    %v8379 = vunpack.c.l.b16 %v8175
    %v8380 = vunpack.c.h.b16 %v8175
    %v8381 = vunpack.c.l.b16 %v8176
    %v8382 = vunpack.c.h.b16 %v8176
    %v8383 = vunpack.c.l.b16 %v8177
    %v8384 = vunpack.c.h.b16 %v8177
    %v8385 = vunpack.c.l.b16 %v8178
    %v8386 = vunpack.c.h.b16 %v8178
    %v8387 = vunpack.c.l.b16 %v8179
    %v8388 = vunpack.c.h.b16 %v8179
    %v8389 = vunpack.c.l.b16 %v8180
    %v8390 = vunpack.c.h.b16 %v8180
    %v8391 = vunpack.c.l.b16 %v8181
    %v8392 = vunpack.c.h.b16 %v8181
    %v8393 = vunpack.c.l.b16 %v8182
    %v8394 = vunpack.c.h.b16 %v8182
    %v8395 = vunpack.c.l.b16 %v8183
    %v8396 = vunpack.c.h.b16 %v8183
    %v8397 = vunpack.c.l.b16 %v8184
    %v8398 = vunpack.c.h.b16 %v8184
    %v8399 = vunpack.c.l.b16 %v8185
    %v8400 = vunpack.c.h.b16 %v8185
    %v8401 = vunpack.c.l.b16 %v8186
    %v8402 = vunpack.c.h.b16 %v8186
    %v8403 = vunpack.c.l.b16 %v8187
    %v8404 = vunpack.c.h.b16 %v8187
    %v8405 = vunpack.c.l.b16 %v8188
    %v8406 = vunpack.c.h.b16 %v8188
    %v8407 = vunpack.c.l.b16 %v8189
    %v8408 = vunpack.c.h.b16 %v8189
    %v8409 = vunpack.c.l.b16 %v8190
    %v8410 = vunpack.c.h.b16 %v8190
    %v8411 = vunpack.c.l.b16 %v8191
    %v8412 = vunpack.c.h.b16 %v8191
    %v8413 = vunpack.c.l.b16 %v8192
    %v8414 = vunpack.c.h.b16 %v8192
    %v8415 = vpack.c.b16 %v8291, %v8287
    %v8416 = vpack.c.b16 %v8292, %v8288
    %v8417 = vpack.c.b16 %v8293, %v8289
    %v8418 = vpack.c.b16 %v8294, %v8290
    %v8419 = vpack.c.b16 %v8299, %v8295
    %v8420 = vpack.c.b16 %v8300, %v8296
    %v8421 = vpack.c.b16 %v8301, %v8297
    %v8422 = vpack.c.b16 %v8302, %v8298
    %v8423 = vpack.c.b16 %v8307, %v8303
    %v8424 = vpack.c.b16 %v8308, %v8304
    %v8425 = vpack.c.b16 %v8309, %v8305
    %v8426 = vpack.c.b16 %v8310, %v8306
    %v8427 = vpack.c.b16 %v8315, %v8311
    %v8428 = vpack.c.b16 %v8316, %v8312
    %v8429 = vpack.c.b16 %v8317, %v8313
    %v8430 = vpack.c.b16 %v8318, %v8314
    %v8431 = vpack.c.b16 %v8323, %v8319
    %v8432 = vpack.c.b16 %v8324, %v8320
    %v8433 = vpack.c.b16 %v8325, %v8321
    %v8434 = vpack.c.b16 %v8326, %v8322
    %v8435 = vpack.c.b16 %v8331, %v8327
    %v8436 = vpack.c.b16 %v8332, %v8328
    %v8437 = vpack.c.b16 %v8333, %v8329
    %v8438 = vpack.c.b16 %v8334, %v8330
    %v8439 = vpack.c.b16 %v8339, %v8335
    %v8440 = vpack.c.b16 %v8340, %v8336
    %v8441 = vpack.c.b16 %v8341, %v8337
    %v8442 = vpack.c.b16 %v8342, %v8338
    %v8443 = vpack.c.b16 %v8347, %v8343
    %v8444 = vpack.c.b16 %v8348, %v8344
    %v8445 = vpack.c.b16 %v8349, %v8345
    %v8446 = vpack.c.b16 %v8350, %v8346
    %v8447 = vpack.c.b16 %v8355, %v8351
    %v8448 = vpack.c.b16 %v8356, %v8352
    %v8449 = vpack.c.b16 %v8357, %v8353
    %v8450 = vpack.c.b16 %v8358, %v8354
    %v8451 = vpack.c.b16 %v8363, %v8359
    %v8452 = vpack.c.b16 %v8364, %v8360
    %v8453 = vpack.c.b16 %v8365, %v8361
    %v8454 = vpack.c.b16 %v8366, %v8362
    %v8455 = vpack.c.b16 %v8371, %v8367
    %v8456 = vpack.c.b16 %v8372, %v8368
    %v8457 = vpack.c.b16 %v8373, %v8369
    %v8458 = vpack.c.b16 %v8374, %v8370
    %v8459 = vpack.c.b16 %v8379, %v8375
    %v8460 = vpack.c.b16 %v8380, %v8376
    %v8461 = vpack.c.b16 %v8381, %v8377
    %v8462 = vpack.c.b16 %v8382, %v8378
    %v8463 = vpack.c.b16 %v8387, %v8383
    %v8464 = vpack.c.b16 %v8388, %v8384
    %v8465 = vpack.c.b16 %v8389, %v8385
    %v8466 = vpack.c.b16 %v8390, %v8386
    %v8467 = vpack.c.b16 %v8395, %v8391
    %v8468 = vpack.c.b16 %v8396, %v8392
    %v8469 = vpack.c.b16 %v8397, %v8393
    %v8470 = vpack.c.b16 %v8398, %v8394
    %v8471 = vpack.c.b16 %v8403, %v8399
    %v8472 = vpack.c.b16 %v8404, %v8400
    %v8473 = vpack.c.b16 %v8405, %v8401
    %v8474 = vpack.c.b16 %v8406, %v8402
    %v8475 = vpack.c.b16 %v8411, %v8407
    %v8476 = vpack.c.b16 %v8412, %v8408
    %v8477 = vpack.c.b16 %v8413, %v8409
    %v8478 = vpack.c.b16 %v8414, %v8410
    %8543 = vmatprep.subr.bf16.mxu0 %v8444
    %8544 = vmatpush1.bf16.msra.mxu0 %v8443
    %8545 = vmatprep.subr.bf16.mxu0 %v8440
    %8546 = vmatpush1.bf16.msra.mxu0 %v8439
    %8547 = vmatprep.subr.bf16.mxu0 %v8436
    %8548 = vmatpush1.bf16.msra.mxu0 %v8435
    %8549 = vmatprep.subr.bf16.mxu0 %v8432
    %8550 = vmatpush1.bf16.msra.mxu0 %v8431
    %8551 = vmatprep.subr.bf16.mxu0 %v8428
    %8552 = vmatpush1.bf16.msra.mxu0 %v8427
    %8553 = vmatprep.subr.bf16.mxu0 %v8424
    %8554 = vmatpush1.bf16.msra.mxu0 %v8423
    %8555 = vmatprep.subr.bf16.mxu0 %v8420
    %8556 = vmatpush1.bf16.msra.mxu0 %v8419
    %8557 = vmatprep.subr.bf16.mxu0 %v8416
    %8558 = vmatpush1.bf16.msra.mxu0 %v8415
    %8559 = vmatprep.subr.bf16.mxu0 %v8476
    %8560 = vmatpush2.bf16.msra.mxu0 %v8475
    %8561 = vmatprep.subr.bf16.mxu0 %v8472
    %8562 = vmatpush2.bf16.msra.mxu0 %v8471
    %8563 = vmatprep.subr.bf16.mxu0 %v8468
    %8564 = vmatpush2.bf16.msra.mxu0 %v8467
    %8565 = vmatprep.subr.bf16.mxu0 %v8464
    %8566 = vmatpush2.bf16.msra.mxu0 %v8463
    %8567 = vmatprep.subr.bf16.mxu0 %v8460
    %8568 = vmatpush2.bf16.msra.mxu0 %v8459
    %8569 = vmatprep.subr.bf16.mxu0 %v8456
    %8570 = vmatpush2.bf16.msra.mxu0 %v8455
    %8571 = vmatprep.subr.bf16.mxu0 %v8452
    %8572 = vmatpush2.bf16.msra.mxu0 %v8451
    %8573 = vmatprep.subr.bf16.mxu0 %v8448
    %8574 = vmatpush2.bf16.msra.mxu0 %v8447
    %8575 = vmatprep.mubr.bf16.mxu0 %v8220
    %8576 = vmatmul.mubr.bf16.gmra.mxu0 %v8219
    %v8577 = vpop.f32.mrf.mxu0
    %v8578 = vadd.f32 %v8200, %v8577
    %v8579 = vpop.f32.mrf.mxu0
    %v8580 = vadd.f32 %v8204, %v8579
    %v8581 = vpop.f32.mrf.mxu0
    %v8582 = vpop.f32.mrf.mxu0
    %8583 = vdwg.mxu0
    %8584 = vmatprep.subr.bf16.mxu0 %v8446
    %8585 = vmatpush1.bf16.msra.mxu0 %v8445
    %8586 = vmatprep.subr.bf16.mxu0 %v8442
    %8587 = vmatpush1.bf16.msra.mxu0 %v8441
    %8588 = vmatprep.subr.bf16.mxu0 %v8438
    %8589 = vmatpush1.bf16.msra.mxu0 %v8437
    %8590 = vmatprep.subr.bf16.mxu0 %v8434
    %8591 = vmatpush1.bf16.msra.mxu0 %v8433
    %8592 = vmatprep.subr.bf16.mxu0 %v8430
    %8593 = vmatpush1.bf16.msra.mxu0 %v8429
    %8594 = vmatprep.subr.bf16.mxu0 %v8426
    %8595 = vmatpush1.bf16.msra.mxu0 %v8425
    %8596 = vmatprep.subr.bf16.mxu0 %v8422
    %8597 = vmatpush1.bf16.msra.mxu0 %v8421
    %8598 = vmatprep.subr.bf16.mxu0 %v8418
    %8599 = vmatpush1.bf16.msra.mxu0 %v8417
    %8600 = vmatprep.subr.bf16.mxu0 %v8478
    %8601 = vmatpush2.bf16.msra.mxu0 %v8477
    %8602 = vmatprep.subr.bf16.mxu0 %v8474
    %8603 = vmatpush2.bf16.msra.mxu0 %v8473
    %8604 = vmatprep.subr.bf16.mxu0 %v8470
    %8605 = vmatpush2.bf16.msra.mxu0 %v8469
    %8606 = vmatprep.subr.bf16.mxu0 %v8466
    %8607 = vmatpush2.bf16.msra.mxu0 %v8465
    %8608 = vmatprep.subr.bf16.mxu0 %v8462
    %8609 = vmatpush2.bf16.msra.mxu0 %v8461
    %8610 = vmatprep.subr.bf16.mxu0 %v8458
    %8611 = vmatpush2.bf16.msra.mxu0 %v8457
    %8612 = vmatprep.subr.bf16.mxu0 %v8454
    %8613 = vmatpush2.bf16.msra.mxu0 %v8453
    %8614 = vmatprep.subr.bf16.mxu0 %v8450
    %8615 = vmatpush2.bf16.msra.mxu0 %v8449
    %8616 = vmatprep.mubr.bf16.mxu0 %v8220
    %8617 = vmatmul.mubr.bf16.gmra.mxu0 %v8219
    %v8618 = vpop.f32.mrf.mxu0
    %v8619 = vadd.f32 %v8208, %v8618
    %v8620 = vpop.f32.mrf.mxu0
    %v8621 = vadd.f32 %v8212, %v8620
    %v8622 = vpop.f32.mrf.mxu0
    %v8623 = vpop.f32.mrf.mxu0
    %8624 = vdwg.mxu0
    %v8625 = vmul.f32 %v8578, 0.5
    %v8626 = vtanh.pop %v8625
    %v8627 = vmul.f32 %v8626, 0.5
    %v8628 = vadd.f32 %v8627, 0.5
    %v8629 = vmul.f32 %v8580, 0.5
    %v8630 = vtanh.pop %v8629
    %v8631 = vmul.f32 %v8630, 0.5
    %v8632 = vadd.f32 %v8631, 0.5
    %v8633 = vtanh.pop %v8619
    %v8634 = vmul.f32 %v8621, 0.5
    %v8635 = vtanh.pop %v8634
    %v8636 = vmul.f32 %v8635, 0.5
    %v8637 = vadd.f32 %v8636, 0.5
    %v8638 = vmul.f32 %v8632, 0.0
    %v8639 = vmul.f32 %v8628, %v8633
    %v8640 = vadd.f32 %v8638, %v8639
    %v8641 = vtanh.pop %v8640
    %v8642 = vmul.f32 %v8637, %v8641
    %v8644 = vrot.slane %v8642, 2
    %v8646 = vld [vmem:[%s12] sm:$0xf]
    %v8647 = vld [vmem:[%s12 + $0x4] sm:$0xf]
    %v8648 = vld [vmem:[%s12 + $0x8] sm:$0xf]
    %v8649 = vld [vmem:[%s12 + $0xc] sm:$0xf]
    %v8650 = vld [vmem:[%s12 + $0x10] sm:$0xf]
    %v8651 = vld [vmem:[%s12 + $0x14] sm:$0xf]
    %v8652 = vld [vmem:[%s12 + $0x18] sm:$0xf]
    %v8653 = vld [vmem:[%s12 + $0x1c] sm:$0xf]
    %v8654 = vld [vmem:[%s12 + $0x20] sm:$0xf]
    %v8655 = vld [vmem:[%s12 + $0x24] sm:$0xf]
    %v8656 = vld [vmem:[%s12 + $0x28] sm:$0xf]
    %v8657 = vld [vmem:[%s12 + $0x2c] sm:$0xf]
    %v8658 = vld [vmem:[%s12 + $0x30] sm:$0xf]
    %v8659 = vld [vmem:[%s12 + $0x34] sm:$0xf]
    %v8660 = vld [vmem:[%s12 + $0x38] sm:$0xf]
    %v8661 = vld [vmem:[%s12 + $0x3c] sm:$0xf]
    %v8662 = vld [vmem:[%s12 + $0x40] sm:$0xf]
    %v8663 = vld [vmem:[%s12 + $0x44] sm:$0xf]
    %v8664 = vld [vmem:[%s12 + $0x48] sm:$0xf]
    %v8665 = vld [vmem:[%s12 + $0x4c] sm:$0xf]
    %v8666 = vld [vmem:[%s12 + $0x50] sm:$0xf]
    %v8667 = vld [vmem:[%s12 + $0x54] sm:$0xf]
    %v8668 = vld [vmem:[%s12 + $0x58] sm:$0xf]
    %v8669 = vld [vmem:[%s12 + $0x5c] sm:$0xf]
    %v8670 = vld [vmem:[%s12 + $0x60] sm:$0xf]
    %v8671 = vld [vmem:[%s12 + $0x64] sm:$0xf]
    %v8672 = vld [vmem:[%s12 + $0x68] sm:$0xf]
    %v8673 = vld [vmem:[%s12 + $0x6c] sm:$0xf]
    %v8674 = vld [vmem:[%s12 + $0x70] sm:$0xf]
    %v8675 = vld [vmem:[%s12 + $0x74] sm:$0xf]
    %v8676 = vld [vmem:[%s12 + $0x78] sm:$0xf]
    %v8677 = vld [vmem:[%s12 + $0x7c] sm:$0xf]
    %v8678 = vpack.c.bf16 %v8126, %v8126
    %v8679 = vpack.c.bf16 %v8644, %v8644
    %v8680 = vld [vmem:[%s13] sm:$0x1]
    %v8682 = vlaneseq
    %v8683 = vshrl.u32 %v8682, 7
    %v8684 = vsub.s32 0, %v8683
    %v8685 = vrot.slane %v8680, %v8684
    %v8689 = vrot.slane %v8678, 3
    %v8690 = vrot.slane %v8679, 3
    %v8725 = vunpack.c.l.b16 %v8646
    %v8726 = vunpack.c.l.b16 %v8647
    %v8727 = vunpack.c.l.b16 %v8648
    %v8728 = vunpack.c.l.b16 %v8649
    %v8729 = vunpack.c.l.b16 %v8650
    %v8730 = vunpack.c.l.b16 %v8651
    %v8731 = vunpack.c.l.b16 %v8652
    %v8732 = vunpack.c.l.b16 %v8653
    %v8733 = vunpack.c.l.b16 %v8654
    %v8734 = vunpack.c.l.b16 %v8655
    %v8735 = vunpack.c.l.b16 %v8656
    %v8736 = vunpack.c.l.b16 %v8657
    %v8737 = vunpack.c.l.b16 %v8658
    %v8738 = vunpack.c.l.b16 %v8659
    %v8739 = vunpack.c.l.b16 %v8660
    %v8740 = vunpack.c.l.b16 %v8661
    %v8741 = vunpack.c.l.b16 %v8662
    %v8742 = vunpack.c.l.b16 %v8663
    %v8743 = vunpack.c.l.b16 %v8664
    %v8744 = vunpack.c.l.b16 %v8665
    %v8745 = vunpack.c.l.b16 %v8666
    %v8746 = vunpack.c.l.b16 %v8667
    %v8747 = vunpack.c.l.b16 %v8668
    %v8748 = vunpack.c.l.b16 %v8669
    %v8749 = vunpack.c.l.b16 %v8670
    %v8750 = vunpack.c.l.b16 %v8671
    %v8751 = vunpack.c.l.b16 %v8672
    %v8752 = vunpack.c.l.b16 %v8673
    %v8753 = vunpack.c.l.b16 %v8674
    %v8754 = vunpack.c.l.b16 %v8675
    %v8755 = vunpack.c.l.b16 %v8676
    %v8756 = vunpack.c.l.b16 %v8677
    %v8757 = vpack.c.b16 %v8726, %v8725
    %v8758 = vpack.c.b16 %v8728, %v8727
    %v8759 = vpack.c.b16 %v8730, %v8729
    %v8760 = vpack.c.b16 %v8732, %v8731
    %v8761 = vpack.c.b16 %v8734, %v8733
    %v8762 = vpack.c.b16 %v8736, %v8735
    %v8763 = vpack.c.b16 %v8738, %v8737
    %v8764 = vpack.c.b16 %v8740, %v8739
    %v8765 = vpack.c.b16 %v8742, %v8741
    %v8766 = vpack.c.b16 %v8744, %v8743
    %v8767 = vpack.c.b16 %v8746, %v8745
    %v8768 = vpack.c.b16 %v8748, %v8747
    %v8769 = vpack.c.b16 %v8750, %v8749
    %v8770 = vpack.c.b16 %v8752, %v8751
    %v8771 = vpack.c.b16 %v8754, %v8753
    %v8772 = vpack.c.b16 %v8756, %v8755
    %8789 = vmatprep.subr.bf16.mxu0 0
    %8790 = vmatpush1.bf16.msra.mxu0 %v8764
    %8791 = vmatprep.subr.bf16.mxu0 0
    %8792 = vmatpush1.bf16.msra.mxu0 %v8763
    %8793 = vmatprep.subr.bf16.mxu0 0
    %8794 = vmatpush1.bf16.msra.mxu0 %v8762
    %8795 = vmatprep.subr.bf16.mxu0 0
    %8796 = vmatpush1.bf16.msra.mxu0 %v8761
    %8797 = vmatprep.subr.bf16.mxu0 0
    %8798 = vmatpush1.bf16.msra.mxu0 %v8760
    %8799 = vmatprep.subr.bf16.mxu0 0
    %8800 = vmatpush1.bf16.msra.mxu0 %v8759
    %8801 = vmatprep.subr.bf16.mxu0 0
    %8802 = vmatpush1.bf16.msra.mxu0 %v8758
    %8803 = vmatprep.subr.bf16.mxu0 0
    %8804 = vmatpush1.bf16.msra.mxu0 %v8757
    %8805 = vmatprep.subr.bf16.mxu0 0
    %8806 = vmatpush2.bf16.msra.mxu0 %v8772
    %8807 = vmatprep.subr.bf16.mxu0 0
    %8808 = vmatpush2.bf16.msra.mxu0 %v8771
    %8809 = vmatprep.subr.bf16.mxu0 0
    %8810 = vmatpush2.bf16.msra.mxu0 %v8770
    %8811 = vmatprep.subr.bf16.mxu0 0
    %8812 = vmatpush2.bf16.msra.mxu0 %v8769
    %8813 = vmatprep.subr.bf16.mxu0 0
    %8814 = vmatpush2.bf16.msra.mxu0 %v8768
    %8815 = vmatprep.subr.bf16.mxu0 0
    %8816 = vmatpush2.bf16.msra.mxu0 %v8767
    %8817 = vmatprep.subr.bf16.mxu0 0
    %8818 = vmatpush2.bf16.msra.mxu0 %v8766
    %8819 = vmatprep.subr.bf16.mxu0 0
    %8820 = vmatpush2.bf16.msra.mxu0 %v8765
    %8821 = vmatprep.mubr.bf16.mxu0 %v8690
    %8822 = vmatmul.mubr.bf16.gmra.mxu0 %v8689
    %v8823 = vpop.f32.mrf.mxu0
    %v8824 = vadd.f32 %v8685, %v8823
    %v8825 = vpop.f32.mrf.mxu0
    %v8826 = vpop.f32.mrf.mxu0
    %v8827 = vpop.f32.mrf.mxu0
    %8828 = vdwg.mxu0
    %v8829 = vmax.f32 %v8824, 0.0
    %v8830 = vld [vmem:[%s14] sm:$0xff]
    %v8831 = vld [vmem:[%s14 + $0x8] sm:$0xff]
    %v8832 = vld [vmem:[%s14 + $0x10] sm:$0xff]
    %v8833 = vld [vmem:[%s14 + $0x18] sm:$0xff]
    %v8834 = vld [vmem:[%s14 + $0x20] sm:$0xff]
    %v8835 = vld [vmem:[%s14 + $0x28] sm:$0xff]
    %v8836 = vld [vmem:[%s14 + $0x30] sm:$0xff]
    %v8837 = vld [vmem:[%s14 + $0x38] sm:$0xff]
    %v8838 = vld [vmem:[%s14 + $0x40] sm:$0xff]
    %v8839 = vld [vmem:[%s14 + $0x48] sm:$0xff]
    %v8840 = vld [vmem:[%s14 + $0x50] sm:$0xff]
    %v8841 = vld [vmem:[%s14 + $0x58] sm:$0xff]
    %v8842 = vld [vmem:[%s14 + $0x60] sm:$0xff]
    %v8843 = vld [vmem:[%s14 + $0x68] sm:$0xff]
    %v8844 = vld [vmem:[%s14 + $0x70] sm:$0xff]
    %v8845 = vld [vmem:[%s14 + $0x78] sm:$0xff]
    %v8846 = vld [vmem:[%s15] sm:$0x1]
    %v8848 = vlaneseq
    %v8849 = vshrl.u32 %v8848, 7
    %v8850 = vsub.s32 0, %v8849
    %v8851 = vrot.slane %v8846, %v8850
    %8853 = vmatprep.subr.mxu0 0.0
    %8854 = vmatpush1.msra.mxu0 %v8845
    %8855 = vmatprep.subr.mxu0 0.0
    %8856 = vmatpush1.msra.mxu0 %v8844
    %8857 = vmatprep.subr.mxu0 0.0
    %8858 = vmatpush1.msra.mxu0 %v8843
    %8859 = vmatprep.subr.mxu0 0.0
    %8860 = vmatpush1.msra.mxu0 %v8842
    %8861 = vmatprep.subr.mxu0 0.0
    %8862 = vmatpush1.msra.mxu0 %v8841
    %8863 = vmatprep.subr.mxu0 0.0
    %8864 = vmatpush1.msra.mxu0 %v8840
    %8865 = vmatprep.subr.mxu0 0.0
    %8866 = vmatpush1.msra.mxu0 %v8839
    %8867 = vmatprep.subr.mxu0 0.0
    %8868 = vmatpush1.msra.mxu0 %v8838
    %8869 = vmatprep.subr.mxu0 0.0
    %8870 = vmatpush1.msra.mxu0 %v8837
    %8871 = vmatprep.subr.mxu0 0.0
    %8872 = vmatpush1.msra.mxu0 %v8836
    %8873 = vmatprep.subr.mxu0 0.0
    %8874 = vmatpush1.msra.mxu0 %v8835
    %8875 = vmatprep.subr.mxu0 0.0
    %8876 = vmatpush1.msra.mxu0 %v8834
    %8877 = vmatprep.subr.mxu0 0.0
    %8878 = vmatpush1.msra.mxu0 %v8833
    %8879 = vmatprep.subr.mxu0 0.0
    %8880 = vmatpush1.msra.mxu0 %v8832
    %8881 = vmatprep.subr.mxu0 0.0
    %8882 = vmatpush1.msra.mxu0 %v8831
    %8883 = vmatprep.subr.mxu0 0.0
    %8884 = vmatpush1.msra.mxu0 %v8830
    %8885 = vmatprep.subr.mxu0 0.0
    %8886 = vmatpush2.msra.mxu0 0.0
    %8887 = vmatprep.subr.mxu0 0.0
    %8888 = vmatpush2.msra.mxu0 0.0
    %8889 = vmatprep.subr.mxu0 0.0
    %8890 = vmatpush2.msra.mxu0 0.0
    %8891 = vmatprep.subr.mxu0 0.0
    %8892 = vmatpush2.msra.mxu0 0.0
    %8893 = vmatprep.subr.mxu0 0.0
    %8894 = vmatpush2.msra.mxu0 0.0
    %8895 = vmatprep.subr.mxu0 0.0
    %8896 = vmatpush2.msra.mxu0 0.0
    %8897 = vmatprep.subr.mxu0 0.0
    %8898 = vmatpush2.msra.mxu0 0.0
    %8899 = vmatprep.subr.mxu0 0.0
    %8900 = vmatpush2.msra.mxu0 0.0
    %8901 = vmatprep.subr.mxu0 0.0
    %8902 = vmatpush2.msra.mxu0 0.0
    %8903 = vmatprep.subr.mxu0 0.0
    %8904 = vmatpush2.msra.mxu0 0.0
    %8905 = vmatprep.subr.mxu0 0.0
    %8906 = vmatpush2.msra.mxu0 0.0
    %8907 = vmatprep.subr.mxu0 0.0
    %8908 = vmatpush2.msra.mxu0 0.0
    %8909 = vmatprep.subr.mxu0 0.0
    %8910 = vmatpush2.msra.mxu0 0.0
    %8911 = vmatprep.subr.mxu0 0.0
    %8912 = vmatpush2.msra.mxu0 0.0
    %8913 = vmatprep.subr.mxu0 0.0
    %8914 = vmatpush2.msra.mxu0 0.0
    %8915 = vmatprep.subr.mxu0 0.0
    %8916 = vmatpush2.msra.mxu0 0.0
    %8917 = vmatprep.mubr.f32.mxu0 0.0
    %8918 = vmatmul.mubr.f32.gmra.mxu0 %v8829
    %v8919 = vpop.f32.mrf.mxu0
    %v8920 = vadd.f32 %v8851, %v8919
    %v8921 = vpop.f32.mrf.mxu0
    %8922 = vdwg.mxu0
    %vm8923 = vcmask 402432
    %8924 = vst.msk [vmem:[#allocation5] sm:$0x3] %vm8923, %v8920
    // Predicated region
    $region66: #{vae_bilstm_forward.1} parent=1 // pred_check
      _
    $region67: #{vae_bilstm_forward.1} parent=1 // pred_check_branch
      %8926 = sbr.rel (0) target = $region69
    $region68: #{vae_bilstm_forward.1} parent=1 // pred_region
      %s8928 = ssub.s32 32, 32
      %8929 = vsyncadd [#allocation6], %s8928
      %s8931 = sshll.u32 [#allocation5], 4
      %s8932 = int_to_ptr.vmem [resolvable:$true] %s8931
      %8934 = dma.vmem_to_hbm [thread:$0]  %s8932, 32, %s16, [#allocation6]
    $region69: #{vae_bilstm_forward.1} parent=1 // pred_fallthru
      _
    // Predicated region
    $region70: #{vae_bilstm_forward.1} parent=1 // pred_check
      _
    $region71: #{vae_bilstm_forward.1} parent=1 // pred_check_branch
      %8936 = sbr.rel (0) target = $region73
    $region72: #{vae_bilstm_forward.1} parent=1 // pred_region
      %8937 = dma.done [#allocation6], 32
    $region73: #{vae_bilstm_forward.1} parent=1 // pred_fallthru
      _
    %8938 = vsyncpa [#allocation6], 1

</llo_original>
